<compile_context>
chip_gen: v5e
topology: v5e:2x2
jax: 0.10.0
libtpu: 0.0.40
codegen_flags: <defaults>
</compile_context>

<pallas_src>
import functools
import math

import jax
import jax.numpy as jnp
from jax.experimental import pallas as pl
from jax.experimental.pallas import tpu as pltpu


_VMEM_LIMIT = 48 * 1024 * 1024          # scoped-VMEM budget (fits v7x's 64 MiB)


# ------------------------------ small helpers --------------------------------

def _round_up(x, m):
    return ((x + m - 1) // m) * m


def _row_tiling(m, target=1024):
    """Sublane-aligned (bf16-friendly, mult of 16) row tile and padded rows."""
    m16 = _round_up(m, 16)
    if m16 <= target:
        return m16, m16
    return target, _round_up(m, target)


def _pick_div_tile(n, target=256):
    """Largest multiple-of-8 divisor of n that is <= target, else n (full)."""
    best = None
    t = 8
    while t <= min(target, n):
        if n % t == 0:
            best = t
        t += 8
    return best if best is not None else n


def _lane_tile(n, target=512):
    """Largest multiple-of-128 divisor of n <= target, else n (full)."""
    best = None
    t = 128
    while t <= min(target, n):
        if n % t == 0:
            best = t
        t += 128
    return best if best is not None else n


def _pad_rows(a, mp):
    pad = mp - a.shape[0]
    if pad:
        a = jnp.pad(a, [(0, pad)] + [(0, 0)] * (a.ndim - 1))
    return a


def _leaky(y):
    return jnp.where(y > 0.0, y, 0.01 * y)


# ----------------------------- Pallas kernels --------------------------------

def _conv1_kernel(x_ref, w_ref, b_ref, o_ref):
    """1x1 conv + folded BN + ReLU over a tall row tile."""
    y = jnp.dot(x_ref[...].astype(jnp.bfloat16), w_ref[...],
                preferred_element_type=jnp.float32)
    y = jnp.maximum(y + b_ref[...], 0.0)
    o_ref[...] = y.astype(o_ref.dtype)


def conv1_forward(x, w, b):
    """x: (M, Cin) f32 -> (M, Cout) bf16."""
    m, cin = x.shape
    cout = w.shape[1]
    tm, mp = _row_tiling(m, target=1024)
    xp = _pad_rows(x, mp)
    out = pl.pallas_call(
        _conv1_kernel,
        out_shape=jax.ShapeDtypeStruct((mp, cout), jnp.bfloat16),
        grid=(mp // tm,),
        in_specs=[pl.BlockSpec((tm, cin), lambda i: (i, 0)),
                  pl.BlockSpec((cin, cout), lambda i: (0, 0)),
                  pl.BlockSpec((1, cout), lambda i: (0, 0))],
        out_specs=pl.BlockSpec((tm, cout), lambda i: (i, 0)),
        compiler_params=pltpu.CompilerParams(
            dimension_semantics=("parallel",), vmem_limit_bytes=_VMEM_LIMIT),
    )(xp, w, b)
    return out[:m]


def _neg_pdist_kernel(xq_ref, xa_ref, o_ref):
    """Negative squared pairwise distance for a query row tile (bf16 out)."""
    xq = xq_ref[0]                                                 # (TQ, C) bf16
    xa = xa_ref[0]                                                 # (N, C)  bf16
    xq32 = xq.astype(jnp.float32)
    xa32 = xa.astype(jnp.float32)
    sq_q = jnp.sum(xq32 * xq32, axis=-1, keepdims=True)            # (TQ, 1)
    sq_a = jnp.sum(xa32 * xa32, axis=-1, keepdims=True)            # (N, 1)
    inner = jax.lax.dot_general(xq, xa, (((1,), (1,)), ((), ())),
                                preferred_element_type=jnp.float32)  # (TQ, N)
    o_ref[0] = (2.0 * inner - sq_q - sq_a.T).astype(o_ref.dtype)


def neg_pairwise_dist(x):
    """x: (B, N, C) bf16 -> (B, N, N) bf16 negative squared distances."""
    b, n, c = x.shape
    tq = _pick_div_tile(n)
    return pl.pallas_call(
        _neg_pdist_kernel,
        out_shape=jax.ShapeDtypeStruct((b, n, n), jnp.bfloat16),
        grid=(b, n // tq),
        in_specs=[pl.BlockSpec((1, tq, c), lambda bi, qi: (bi, qi, 0)),
                  pl.BlockSpec((1, n, c), lambda bi, qi: (bi, 0, 0))],
        out_specs=pl.BlockSpec((1, tq, n), lambda bi, qi: (bi, qi, 0)),
        compiler_params=pltpu.CompilerParams(
            dimension_semantics=("parallel", "parallel"),
            vmem_limit_bytes=_VMEM_LIMIT),
    )(x, x)


def _local_graph_kernel(x_ref, nb_ref, wc_ref, wn_ref, wd_ref, b_ref, o_ref, *, k):
    """Graph feature (center|neighbour|dist) + Conv2d(1x1,BN folded) + max_k
    + LeakyReLU.  Max runs before the bias+activation epilogue (monotone)."""
    x = x_ref[...]                                                 # (TP, C) bf16
    yc = jnp.dot(x, wc_ref[...], preferred_element_type=jnp.float32)
    x32 = x.astype(jnp.float32)
    wd = wd_ref[...]                                               # (1, Cout) f32
    best = None
    for j in range(k):                                             # static unroll
        nb_j = nb_ref[j]                                           # (TP, C) bf16
        yn = jnp.dot(nb_j, wn_ref[...], preferred_element_type=jnp.float32)
        diff = nb_j.astype(jnp.float32) - x32
        dist = jnp.sqrt(jnp.sum(diff * diff, axis=-1, keepdims=True))  # (TP, 1)
        cand = yn + dist * wd
        best = cand if best is None else jnp.maximum(best, cand)
    y = _leaky(yc + best + b_ref[...])
    o_ref[...] = y.astype(o_ref.dtype)


def local_graph_conv_max(x_flat, nb_kmc, p, k):
    """x_flat: (M, C) bf16, nb_kmc: (k, M, C) bf16 -> (M, Cout) bf16."""
    m, c = x_flat.shape
    cout = p["wc"].shape[1]
    tp, mp = _row_tiling(m, target=256)
    xp = _pad_rows(x_flat, mp)
    nbp = jnp.pad(nb_kmc, ((0, 0), (0, mp - m), (0, 0))) if mp > m else nb_kmc
    out = pl.pallas_call(
        functools.partial(_local_graph_kernel, k=k),
        out_shape=jax.ShapeDtypeStruct((mp, cout), jnp.bfloat16),
        grid=(mp // tp,),
        in_specs=[
            pl.BlockSpec((tp, c), lambda i: (i, 0)),
            pl.BlockSpec((k, tp, c), lambda i: (0, i, 0)),
            pl.BlockSpec((c, cout), lambda i: (0, 0)),
            pl.BlockSpec((c, cout), lambda i: (0, 0)),
            pl.BlockSpec((1, cout), lambda i: (0, 0)),
            pl.BlockSpec((1, cout), lambda i: (0, 0)),
        ],
        out_specs=pl.BlockSpec((tp, cout), lambda i: (i, 0)),
        compiler_params=pltpu.CompilerParams(
            dimension_semantics=("parallel",), vmem_limit_bytes=_VMEM_LIMIT),
    )(xp, nbp, p["wc"], p["wn"], p["wd"], p["bias"])
    return out[:m]


def _inter_full_kernel(xq_ref, xkv_ref, intra_ref,
                       wq_ref, bq_ref, wk_ref, bk_ref, wv_ref, bv_ref,
                       wsem_ref, bsem_ref, wa_ref, wb_ref, bfull_ref,
                       o_ref, kbuf, vbuf, *, inv_sqrt_d):
    """q/k/v proj + softmax attention + semConv + fullConv, query-row tiled.

    K/V are projected once per batch into VMEM scratch (qi==0); the q tile,
    attention, semConv(BN folded)+Leaky and the concat-free fullConv epilogue
    run per query tile, so neither qkv nor the inter activation hit HBM.
    """
    @pl.when(pl.program_id(1) == 0)
    def _():
        xf = xkv_ref[0]                                            # (N, C) bf16
        kk = jnp.dot(xf, wk_ref[...], preferred_element_type=jnp.float32) + bk_ref[...]
        vv = jnp.dot(xf, wv_ref[...], preferred_element_type=jnp.float32) + bv_ref[...]
        kbuf[...] = kk.astype(jnp.bfloat16)
        vbuf[...] = vv.astype(jnp.bfloat16)

    q = jnp.dot(xq_ref[0], wq_ref[...],
                preferred_element_type=jnp.float32) + bq_ref[...]  # (TQ, C)
    s = jax.lax.dot_general(q.astype(jnp.bfloat16), kbuf[...],
                            (((1,), (1,)), ((), ())),
                            preferred_element_type=jnp.float32) * inv_sqrt_d
    s = s - jnp.max(s, axis=-1, keepdims=True)
    e = jnp.exp(s)
    probs = e * pl.reciprocal(jnp.sum(e, axis=-1, keepdims=True), approx=True)
    fgt = jnp.dot(probs.astype(jnp.bfloat16), vbuf[...],
                  preferred_element_type=jnp.float32)              # (TQ, C)
    inter = _leaky(jnp.dot(fgt.astype(jnp.bfloat16), wsem_ref[...],
                           preferred_element_type=jnp.float32) + bsem_ref[...])
    out = jnp.dot(intra_ref[0], wa_ref[...], preferred_element_type=jnp.float32)
    out = out + jnp.dot(inter.astype(jnp.bfloat16), wb_ref[...],
                        preferred_element_type=jnp.float32)
    out = _leaky(out + bfull_ref[...])
    o_ref[0] = out.astype(o_ref.dtype)


def inter_full_forward(x, intra, p_att, p_sem, p_full):
    """x: (B,N,C) bf16, intra: (B,N,Cout) bf16 -> SemanticConv output bf16."""
    b, n, c = x.shape
    cout = p_sem["w"].shape[1]
    tq = _pick_div_tile(n, target=256)
    kern = functools.partial(_inter_full_kernel, inv_sqrt_d=1.0 / math.sqrt(c))
    cst = lambda bi, qi: (0, 0)
    return pl.pallas_call(
        kern,
        out_shape=jax.ShapeDtypeStruct((b, n, cout), jnp.bfloat16),
        grid=(b, n // tq),
        in_specs=[
            pl.BlockSpec((1, tq, c), lambda bi, qi: (bi, qi, 0)),     # q rows
            pl.BlockSpec((1, n, c), lambda bi, qi: (bi, 0, 0)),       # kv source
            pl.BlockSpec((1, tq, cout), lambda bi, qi: (bi, qi, 0)),  # intra tile
            pl.BlockSpec((c, c), cst), pl.BlockSpec((1, c), cst),
            pl.BlockSpec((c, c), cst), pl.BlockSpec((1, c), cst),
            pl.BlockSpec((c, c), cst), pl.BlockSpec((1, c), cst),
            pl.BlockSpec((c, cout), cst), pl.BlockSpec((1, cout), cst),
            pl.BlockSpec((cout, cout), cst), pl.BlockSpec((cout, cout), cst),
            pl.BlockSpec((1, cout), cst),
        ],
        out_specs=pl.BlockSpec((1, tq, cout), lambda bi, qi: (bi, qi, 0)),
        scratch_shapes=[pltpu.VMEM((n, c), jnp.bfloat16),
                        pltpu.VMEM((n, c), jnp.bfloat16)],
        compiler_params=pltpu.CompilerParams(
            dimension_semantics=("parallel", "arbitrary"),
            vmem_limit_bytes=_VMEM_LIMIT),
    )(x, x, intra, p_att["wq"], p_att["bq"], p_att["wk"], p_att["bk"],
      p_att["wv"], p_att["bv"], p_sem["w"], p_sem["bias"],
      p_full["wa"], p_full["wb"], p_full["bias"])


def _head_kernel(*refs, n_in):
    """concat(x0..x4) + conv2a(+BN+ReLU) + conv2b(+bias), concat-free, with the
    (B,N,emb)->(B,emb,N) layout flip folded into the final trans_b matmul."""
    xs = refs[:n_in]
    ws = refs[n_in:2 * n_in]
    ba_ref, wbt_ref, bb_ref, o_ref = refs[2 * n_in:]
    h = None
    for x_ref, w_ref in zip(xs, ws):
        part = jnp.dot(x_ref[0], w_ref[...], preferred_element_type=jnp.float32)
        h = part if h is None else h + part
    h = jnp.maximum(h + ba_ref[...], 0.0)                          # conv2a epi
    # zt[e, n] = sum_c wbt[e, c] * h[n, c]   (conv2b, output already (emb, TN))
    zt = jax.lax.dot_general(wbt_ref[...], h.astype(jnp.bfloat16),
                             (((1,), (1,)), ((), ())),
                             preferred_element_type=jnp.float32)
    o_ref[0] = (zt + bb_ref[...]).astype(o_ref.dtype)


def head_forward(xs, p2a, p2b):
    """xs: list of (B, N, ci) bf16 slabs (x0..x4) -> (B, emb, N) f32."""
    b, n, _ = xs[0].shape
    emb = p2b["wt"].shape[0]
    tn = _lane_tile(n, target=512)
    n_in = len(xs)
    kern = functools.partial(_head_kernel, n_in=n_in)
    cst = lambda bi, ni: (0, 0)
    in_specs = ([pl.BlockSpec((1, tn, x.shape[2]), lambda bi, ni: (bi, ni, 0))
                 for x in xs]
                + [pl.BlockSpec(w.shape, cst) for w in p2a["ws"]]
                + [pl.BlockSpec((1, emb), cst),
                   pl.BlockSpec((emb, emb), cst),
                   pl.BlockSpec((emb, 1), cst)])
    return pl.pallas_call(
        kern,
        out_shape=jax.ShapeDtypeStruct((b, emb, n), jnp.float32),
        grid=(b, n // tn),
        in_specs=in_specs,
        out_specs=pl.BlockSpec((1, emb, tn), lambda bi, ni: (bi, 0, ni)),
        compiler_params=pltpu.CompilerParams(
            dimension_semantics=("parallel", "parallel"),
            vmem_limit_bytes=_VMEM_LIMIT),
    )(*xs, *p2a["ws"], p2a["bias"], p2b["wt"], p2b["bias_col"])


# ------------------------------ model glue ------------------------------------

def semantic_conv_forward(x, p, k):
    """SemanticConv.forward.  x: (B, N, Cin) bf16 -> (B, N, Cout) bf16."""
    b, n, c = x.shape
    m = b * n
    cout = p["sem"]["w"].shape[1]

    # kNN graph: pairwise distances in Pallas (bf16), selection/gather in XLA.
    pd = neg_pairwise_dist(x)                                      # (B, N, N)
    # TODO(synk): top-k + neighbour gather stay in XLA (no clean Pallas TPU
    # sort/select primitive); an in-kernel scalar-prefetch DMA gather would
    # also remove the (k, M, C) HBM round trip.
    _, idx = jax.lax.top_k(pd, k)                                  # (B, N, k)
    base = (jnp.arange(b, dtype=idx.dtype) * n)[:, None, None]
    idx_flat = (idx + base).reshape(m, k)
    x_flat = x.reshape(m, c)
    nb_kmc = x_flat[idx_flat.T]                                    # (k, M, C) bf16

    # Intra-channel branch: graph feature + localConv + max over k, fused.
    intra = local_graph_conv_max(x_flat, nb_kmc, p["local"], k)    # (M, Cout)
    intra = intra.reshape(b, n, cout)

    # Inter-channel branch + fullConv: one fused kernel (qkv/attention/semConv/
    # fullConv), no qkv or inter HBM round trips.
    return inter_full_forward(x, intra, p["att"], p["sem"], p["full"])


def semantic_cnn_forward(xyz, params, k):
    """SemanticCNN.forward.  xyz: (B, N, raw_dim) f32 -> (B, emb_dim, N) f32."""
    b, n, raw = xyz.shape
    m = b * n
    x0 = conv1_forward(xyz.reshape(m, raw), params["conv1"]["w"],
                       params["conv1"]["bias"]).reshape(b, n, -1)
    x1 = semantic_conv_forward(x0, params["sem1"], k)
    x2 = semantic_conv_forward(x1, params["sem2"], k)
    x3 = semantic_conv_forward(x2, params["sem3"], k)
    x4 = semantic_conv_forward(x3, params["sem4"], k)
    # Head: concat-free conv2a+conv2b with the output transpose folded in.
    return head_forward([x0, x1, x2, x3, x4], params["conv2a"], params["conv2b"])


# --------------------------- parameter construction ---------------------------

def _bn_scale(cout):
    # eval-mode BN with PyTorch defaults (mean=0, var=1, gamma=1, beta=0).
    return jnp.full((cout,), 1.0 / math.sqrt(1.0 + 1e-5), jnp.float32)


def _init_conv(key, cin, cout, *, conv_bias, bn):
    """Returns (scale-folded weight f32 (cin,cout), folded bias f32 (cout,))."""
    kw, kb = jax.random.split(key)
    w = jax.random.normal(kw, (cin, cout), jnp.float32) / math.sqrt(cin)
    cb = (jax.random.normal(kb, (cout,), jnp.float32) * 0.1) if conv_bias \
        else jnp.zeros((cout,), jnp.float32)
    scale = _bn_scale(cout) if bn else jnp.ones((cout,), jnp.float32)
    return w * scale[None, :], cb * scale


def _init_semantic_conv(key, in_dim, out_dim):
    keys = jax.random.split(key, 4)
    wl, bl = _init_conv(keys[0], 2 * in_dim + 1, out_dim, conv_bias=False, bn=True)
    wp, bp = _init_conv(keys[1], in_dim, in_dim, conv_bias=True, bn=False)
    ws, bs = _init_conv(keys[2], in_dim, out_dim, conv_bias=False, bn=True)
    wf, bf_ = _init_conv(keys[3], 2 * out_dim, out_dim, conv_bias=False, bn=True)
    b16 = lambda a: a.astype(jnp.bfloat16)
    row = lambda a: a.reshape(1, -1)
    wp16, bp_row = b16(wp), row(bp)
    return {
        "local": {"wc": b16(wl[:in_dim]), "wn": b16(wl[in_dim:2 * in_dim]),
                  "wd": wl[2 * in_dim:2 * in_dim + 1], "bias": row(bl)},
        # self.proj = [deepcopy(self.semAtt)] * 3 -> identical initial q/k/v.
        "att": {"wq": wp16, "bq": bp_row, "wk": wp16, "bk": bp_row,
                "wv": wp16, "bv": bp_row},
        "sem": {"w": b16(ws), "bias": row(bs)},
        "full": {"wa": b16(wf[:out_dim]), "wb": b16(wf[out_dim:]),
                 "bias": row(bf_)},
    }


def init_semantic_cnn(key, raw_dim, emb_dim):
    keys = jax.random.split(key, 7)
    dims = [emb_dim // 16, emb_dim // 16, emb_dim // 8, emb_dim // 4, emb_dim // 2]
    w1, b1 = _init_conv(keys[0], raw_dim, emb_dim // 16, conv_bias=True, bn=True)
    w2a, b2a = _init_conv(keys[5], emb_dim, emb_dim, conv_bias=True, bn=True)
    w2b, b2b = _init_conv(keys[6], emb_dim, emb_dim, conv_bias=True, bn=False)
    splits, off = [], 0
    for d in dims:                       # weight slabs for the concat-free head
        splits.append(w2a[off:off + d].astype(jnp.bfloat16))
        off += d
    return {
        "conv1": {"w": w1.astype(jnp.bfloat16), "bias": b1.reshape(1, -1)},
        "sem1": _init_semantic_conv(keys[1], emb_dim // 16, emb_dim // 16),
        "sem2": _init_semantic_conv(keys[2], emb_dim // 16, emb_dim // 8),
        "sem3": _init_semantic_conv(keys[3], emb_dim // 8, emb_dim // 4),
        "sem4": _init_semantic_conv(keys[4], emb_dim // 4, emb_dim // 2),
        "conv2a": {"ws": splits, "bias": b2a.reshape(1, -1)},
        "conv2b": {"wt": w2b.T.astype(jnp.bfloat16),      # pre-transposed
                   "bias_col": b2b.reshape(-1, 1)},
    }


# ----------------------------------- main --------------------------------------

if __name__ == "__main__":
    B, N, RAW_DIM, EMB_DIM, K = 2, 16, 3, 32, 4

    root = jax.random.PRNGKey(0)
    k_in, k_param = jax.random.split(root)
    xyz = jax.random.normal(k_in, (B, N, RAW_DIM), jnp.float32)   # (B, N, raw_dim)
    params = init_semantic_cnn(k_param, RAW_DIM, EMB_DIM)

    forward = jax.jit(functools.partial(semantic_cnn_forward, k=K))
    out = jax.block_until_ready(forward(xyz, params))

    assert out.shape == (B, EMB_DIM, N), out.shape
    assert bool(jnp.all(jnp.isfinite(out)))
    print("KERNEL_OK")
</pallas_src>

<mosaic_0001>
module attributes {stable_mosaic.version = 11 : i64} {
  func.func @_neg_pdist_kernel(%arg0: i32, %arg1: i32, %arg2: memref<1x16x2xbf16, #tpu.memory_space<vmem>>, %arg3: memref<1x16x2xbf16, #tpu.memory_space<vmem>>, %arg4: memref<1x16x16xbf16, #tpu.memory_space<vmem>>) attributes {dimension_semantics = [#tpu.dimension_semantics<parallel>, #tpu.dimension_semantics<parallel>], iteration_bounds = array<i64: 2, 1>, scalar_prefetch = 0 : i64, scratch_operands = 0 : i64, tpu.core_type = #tpu.core_type<tc>, window_params = [{transform_indices = @transform_0, window_bounds = array<i64: 1, 16, 2>}, {transform_indices = @transform_1, window_bounds = array<i64: 1, 16, 2>}, {transform_indices = @transform_2, window_bounds = array<i64: 1, 16, 16>}]} {
    %c0 = arith.constant 0 : index
    %c0_0 = arith.constant 0 : index
    %c0_1 = arith.constant 0 : index
    %0 = vector.load %arg2[%c0, %c0_0, %c0_1] : memref<1x16x2xbf16, #tpu.memory_space<vmem>>, vector<1x16x2xbf16>
    %1 = vector.shape_cast %0 : vector<1x16x2xbf16> to vector<16x2xbf16>
    %c0_2 = arith.constant 0 : index
    %c0_3 = arith.constant 0 : index
    %c0_4 = arith.constant 0 : index
    %2 = vector.load %arg3[%c0_2, %c0_3, %c0_4] : memref<1x16x2xbf16, #tpu.memory_space<vmem>>, vector<1x16x2xbf16>
    %3 = vector.shape_cast %2 : vector<1x16x2xbf16> to vector<16x2xbf16>
    %4 = arith.extf %1 : vector<16x2xbf16> to vector<16x2xf32>
    %5 = arith.extf %3 : vector<16x2xbf16> to vector<16x2xf32>
    %6 = arith.mulf %4, %4 : vector<16x2xf32>
    %cst = arith.constant dense<0.000000e+00> : vector<16xf32>
    %7 = vector.multi_reduction <add>, %6, %cst [1] : vector<16x2xf32> to vector<16xf32>
    %8 = vector.shape_cast %7 : vector<16xf32> to vector<16x1xf32>
    %9 = arith.mulf %5, %5 : vector<16x2xf32>
    %cst_5 = arith.constant dense<0.000000e+00> : vector<16xf32>
    %10 = vector.multi_reduction <add>, %9, %cst_5 [1] : vector<16x2xf32> to vector<16xf32>
    %11 = vector.shape_cast %10 : vector<16xf32> to vector<16x1xf32>
    %cst_6 = arith.constant dense<0.000000e+00> : vector<16x16xf32>
    %12 = tpu.matmul %1, %3, %cst_6 {dimension_numbers = #tpu.dot_dimension_numbers<[1], [1], [0], [0], [0, 0, 1, 0], [], []>} : vector<16x2xbf16>, vector<16x2xbf16>, vector<16x16xf32> -> vector<16x16xf32>
    %cst_7 = arith.constant 2.000000e+00 : f32
    %13 = vector.broadcast %cst_7 : f32 to vector<16x16xf32>
    %14 = arith.mulf %13, %12 : vector<16x16xf32>
    %15 = vector.broadcast %8 : vector<16x1xf32> to vector<16x16xf32>
    %16 = arith.subf %14, %15 : vector<16x16xf32>
    %17 = tpu.transpose %11, [1, 0] : vector<16x1xf32> -> vector<1x16xf32>
    %18 = vector.broadcast %17 : vector<1x16xf32> to vector<16x16xf32>
    %19 = arith.subf %16, %18 : vector<16x16xf32>
    %20 = arith.truncf %19 : vector<16x16xf32> to vector<16x16xbf16>
    %c0_8 = arith.constant 0 : index
    %c0_9 = arith.constant 0 : index
    %c0_10 = arith.constant 0 : index
    %21 = vector.load %arg4[%c0_8, %c0_9, %c0_10] : memref<1x16x16xbf16, #tpu.memory_space<vmem>>, vector<1x16x16xbf16>
    %22 = vector.shape_cast %21 : vector<1x16x16xbf16> to vector<16x16xbf16>
    %23 = vector.shape_cast %20 : vector<16x16xbf16> to vector<1x16x16xbf16>
    tpu.vector_store %arg4[%c0_8, %c0_9, %c0_10], %23 {strides = array<i32>} : memref<1x16x16xbf16, #tpu.memory_space<vmem>>, vector<1x16x16xbf16>,
    return
  }
  func.func @transform_0(%arg0: i32, %arg1: i32) -> (i32, i32, i32) {
    %c0_i32 = arith.constant 0 : i32
    %c0_i32_0 = arith.constant 0 : i32
    return %arg0, %arg1, %c0_i32 : i32, i32, i32
  }
  func.func @transform_1(%arg0: i32, %arg1: i32) -> (i32, i32, i32) {
    %c0_i32 = arith.constant 0 : i32
    %c0_i32_0 = arith.constant 0 : i32
    %c0_i32_1 = arith.constant 0 : i32
    return %arg0, %c0_i32, %c0_i32_0 : i32, i32, i32
  }
  func.func @transform_2(%arg0: i32, %arg1: i32) -> (i32, i32, i32) {
    %c0_i32 = arith.constant 0 : i32
    %c0_i32_0 = arith.constant 0 : i32
    return %arg0, %arg1, %c0_i32 : i32, i32, i32
  }
}

module attributes {stable_mosaic.version = 11 : i64} {
  func.func @_conv1_kernel(%arg0: i32, %arg1: memref<32x3xf32, #tpu.memory_space<vmem>>, %arg2: memref<3x2xbf16, #tpu.memory_space<vmem>>, %arg3: memref<1x2xf32, #tpu.memory_space<vmem>>, %arg4: memref<32x2xbf16, #tpu.memory_space<vmem>>) attributes {dimension_semantics = [#tpu.dimension_semantics<parallel>], iteration_bounds = array<i64: 1>, scalar_prefetch = 0 : i64, scratch_operands = 0 : i64, tpu.core_type = #tpu.core_type<tc>, window_params = [{transform_indices = @transform_0, window_bounds = array<i64: 32, 3>}, {pipeline_mode = #tpu.pipeline_mode<synchronous>, transform_indices = @transform_1, window_bounds = array<i64: 3, 2>}, {pipeline_mode = #tpu.pipeline_mode<synchronous>, transform_indices = @transform_2, window_bounds = array<i64: 1, 2>}, {transform_indices = @transform_3, window_bounds = array<i64: 32, 2>}]} {
    %c0 = arith.constant 0 : index
    %c0_0 = arith.constant 0 : index
    %0 = vector.load %arg1[%c0, %c0_0] : memref<32x3xf32, #tpu.memory_space<vmem>>, vector<32x3xf32>
    %1 = arith.truncf %0 : vector<32x3xf32> to vector<32x3xbf16>
    %c0_1 = arith.constant 0 : index
    %c0_2 = arith.constant 0 : index
    %2 = vector.load %arg2[%c0_1, %c0_2] : memref<3x2xbf16, #tpu.memory_space<vmem>>, vector<3x2xbf16>
    %cst = arith.constant dense<0.000000e+00> : vector<32x2xf32>
    %3 = tpu.matmul %1, %2, %cst {dimension_numbers = #tpu.dot_dimension_numbers<[1], [0], [0], [1], [0, 0, 1, 1], [], []>} : vector<32x3xbf16>, vector<3x2xbf16>, vector<32x2xf32> -> vector<32x2xf32>
    %c0_3 = arith.constant 0 : index
    %c0_4 = arith.constant 0 : index
    %4 = vector.load %arg3[%c0_3, %c0_4] : memref<1x2xf32, #tpu.memory_space<vmem>>, vector<1x2xf32>
    %5 = vector.broadcast %4 : vector<1x2xf32> to vector<32x2xf32>
    %6 = arith.addf %3, %5 : vector<32x2xf32>
    %cst_5 = arith.constant 0.000000e+00 : f32
    %7 = vector.broadcast %cst_5 : f32 to vector<32x2xf32>
    %8 = arith.maximumf %6, %7 : vector<32x2xf32>
    %9 = arith.truncf %8 : vector<32x2xf32> to vector<32x2xbf16>
    %c0_6 = arith.constant 0 : index
    %c0_7 = arith.constant 0 : index
    %10 = vector.load %arg4[%c0_6, %c0_7] : memref<32x2xbf16, #tpu.memory_space<vmem>>, vector<32x2xbf16>
    tpu.vector_store %arg4[%c0_6, %c0_7], %9 {strides = array<i32>} : memref<32x2xbf16, #tpu.memory_space<vmem>>, vector<32x2xbf16>,
    return
  }
  func.func @transform_0(%arg0: i32) -> (i32, i32) {
    %c0_i32 = arith.constant 0 : i32
    %c0_i32_0 = arith.constant 0 : i32
    return %arg0, %c0_i32 : i32, i32
  }
  func.func @transform_1(%arg0: i32) -> (i32, i32) {
    %c0_i32 = arith.constant 0 : i32
    %c0_i32_0 = arith.constant 0 : i32
    %c0_i32_1 = arith.constant 0 : i32
    return %c0_i32, %c0_i32_0 : i32, i32
  }
  func.func @transform_2(%arg0: i32) -> (i32, i32) {
    %c0_i32 = arith.constant 0 : i32
    %c0_i32_0 = arith.constant 0 : i32
    %c0_i32_1 = arith.constant 0 : i32
    return %c0_i32, %c0_i32_0 : i32, i32
  }
  func.func @transform_3(%arg0: i32) -> (i32, i32) {
    %c0_i32 = arith.constant 0 : i32
    %c0_i32_0 = arith.constant 0 : i32
    return %arg0, %c0_i32 : i32, i32
  }
}

module attributes {stable_mosaic.version = 11 : i64} {
  func.func @_inter_full_kernel(%arg0: i32, %arg1: i32, %arg2: memref<1x16x2xbf16, #tpu.memory_space<vmem>>, %arg3: memref<1x16x2xbf16, #tpu.memory_space<vmem>>, %arg4: memref<1x16x2xbf16, #tpu.memory_space<vmem>>, %arg5: memref<2x2xbf16, #tpu.memory_space<vmem>>, %arg6: memref<1x2xf32, #tpu.memory_space<vmem>>, %arg7: memref<2x2xbf16, #tpu.memory_space<vmem>>, %arg8: memref<1x2xf32, #tpu.memory_space<vmem>>, %arg9: memref<2x2xbf16, #tpu.memory_space<vmem>>, %arg10: memref<1x2xf32, #tpu.memory_space<vmem>>, %arg11: memref<2x2xbf16, #tpu.memory_space<vmem>>, %arg12: memref<1x2xf32, #tpu.memory_space<vmem>>, %arg13: memref<2x2xbf16, #tpu.memory_space<vmem>>, %arg14: memref<2x2xbf16, #tpu.memory_space<vmem>>, %arg15: memref<1x2xf32, #tpu.memory_space<vmem>>, %arg16: memref<1x16x2xbf16, #tpu.memory_space<vmem>>, %arg17: memref<16x2xbf16, #tpu.memory_space<vmem>>, %arg18: memref<16x2xbf16, #tpu.memory_space<vmem>>) attributes {dimension_semantics = [#tpu.dimension_semantics<parallel>, #tpu.dimension_semantics<arbitrary>], iteration_bounds = array<i64: 2, 1>, scalar_prefetch = 0 : i64, scratch_operands = 2 : i64, tpu.core_type = #tpu.core_type<tc>, window_params = [{transform_indices = @transform_0, window_bounds = array<i64: 1, 16, 2>}, {transform_indices = @transform_1, window_bounds = array<i64: 1, 16, 2>}, {transform_indices = @transform_2, window_bounds = array<i64: 1, 16, 2>}, {pipeline_mode = #tpu.pipeline_mode<synchronous>, transform_indices = @transform_3, window_bounds = array<i64: 2, 2>}, {pipeline_mode = #tpu.pipeline_mode<synchronous>, transform_indices = @transform_4, window_bounds = array<i64: 1, 2>}, {pipeline_mode = #tpu.pipeline_mode<synchronous>, transform_indices = @transform_5, window_bounds = array<i64: 2, 2>}, {pipeline_mode = #tpu.pipeline_mode<synchronous>, transform_indices = @transform_6, window_bounds = array<i64: 1, 2>}, {pipeline_mode = #tpu.pipeline_mode<synchronous>, transform_indices = @transform_7, window_bounds = array<i64: 2, 2>}, {pipeline_mode = #tpu.pipeline_mode<synchronous>, transform_indices = @transform_8, window_bounds = array<i64: 1, 2>}, {pipeline_mode = #tpu.pipeline_mode<synchronous>, transform_indices = @transform_9, window_bounds = array<i64: 2, 2>}, {pipeline_mode = #tpu.pipeline_mode<synchronous>, transform_indices = @transform_10, window_bounds = array<i64: 1, 2>}, {pipeline_mode = #tpu.pipeline_mode<synchronous>, transform_indices = @transform_11, window_bounds = array<i64: 2, 2>}, {pipeline_mode = #tpu.pipeline_mode<synchronous>, transform_indices = @transform_12, window_bounds = array<i64: 2, 2>}, {pipeline_mode = #tpu.pipeline_mode<synchronous>, transform_indices = @transform_13, window_bounds = array<i64: 1, 2>}, {transform_indices = @transform_14, window_bounds = array<i64: 1, 16, 2>}]} {
    %c0_i32 = arith.constant 0 : i32
    %0 = arith.cmpi eq, %arg1, %c0_i32 : i32
    %1 = arith.extui %0 : i1 to i32
    %c0_i32_0 = arith.constant 0 : i32
    %2 = arith.cmpi ne, %1, %c0_i32_0 : i32
    scf.if %2 {
      %c0_39 = arith.constant 0 : index
      %c0_40 = arith.constant 0 : index
      %c0_41 = arith.constant 0 : index
      %59 = vector.load %arg3[%c0_39, %c0_40, %c0_41] : memref<1x16x2xbf16, #tpu.memory_space<vmem>>, vector<1x16x2xbf16>
      %60 = vector.shape_cast %59 : vector<1x16x2xbf16> to vector<16x2xbf16>
      %c0_42 = arith.constant 0 : index
      %c0_43 = arith.constant 0 : index
      %61 = vector.load %arg7[%c0_42, %c0_43] : memref<2x2xbf16, #tpu.memory_space<vmem>>, vector<2x2xbf16>
      %cst_44 = arith.constant dense<0.000000e+00> : vector<16x2xf32>
      %62 = tpu.matmul %60, %61, %cst_44 {dimension_numbers = #tpu.dot_dimension_numbers<[1], [0], [0], [1], [0, 0, 1, 1], [], []>} : vector<16x2xbf16>, vector<2x2xbf16>, vector<16x2xf32> -> vector<16x2xf32>
      %c0_45 = arith.constant 0 : index
      %c0_46 = arith.constant 0 : index
      %63 = vector.load %arg8[%c0_45, %c0_46] : memref<1x2xf32, #tpu.memory_space<vmem>>, vector<1x2xf32>
      %64 = vector.broadcast %63 : vector<1x2xf32> to vector<16x2xf32>
      %65 = arith.addf %62, %64 : vector<16x2xf32>
      %c0_47 = arith.constant 0 : index
      %c0_48 = arith.constant 0 : index
      %66 = vector.load %arg9[%c0_47, %c0_48] : memref<2x2xbf16, #tpu.memory_space<vmem>>, vector<2x2xbf16>
      %cst_49 = arith.constant dense<0.000000e+00> : vector<16x2xf32>
      %67 = tpu.matmul %60, %66, %cst_49 {dimension_numbers = #tpu.dot_dimension_numbers<[1], [0], [0], [1], [0, 0, 1, 1], [], []>} : vector<16x2xbf16>, vector<2x2xbf16>, vector<16x2xf32> -> vector<16x2xf32>
      %c0_50 = arith.constant 0 : index
      %c0_51 = arith.constant 0 : index
      %68 = vector.load %arg10[%c0_50, %c0_51] : memref<1x2xf32, #tpu.memory_space<vmem>>, vector<1x2xf32>
      %69 = vector.broadcast %68 : vector<1x2xf32> to vector<16x2xf32>
      %70 = arith.addf %67, %69 : vector<16x2xf32>
      %71 = arith.truncf %65 : vector<16x2xf32> to vector<16x2xbf16>
      %c0_52 = arith.constant 0 : index
      %c0_53 = arith.constant 0 : index
      %72 = vector.load %arg17[%c0_52, %c0_53] : memref<16x2xbf16, #tpu.memory_space<vmem>>, vector<16x2xbf16>
      tpu.vector_store %arg17[%c0_52, %c0_53], %71 {strides = array<i32>} : memref<16x2xbf16, #tpu.memory_space<vmem>>, vector<16x2xbf16>,
      %73 = arith.truncf %70 : vector<16x2xf32> to vector<16x2xbf16>
      %c0_54 = arith.constant 0 : index
      %c0_55 = arith.constant 0 : index
      %74 = vector.load %arg18[%c0_54, %c0_55] : memref<16x2xbf16, #tpu.memory_space<vmem>>, vector<16x2xbf16>
      tpu.vector_store %arg18[%c0_54, %c0_55], %73 {strides = array<i32>} : memref<16x2xbf16, #tpu.memory_space<vmem>>, vector<16x2xbf16>,
    } else {
    }
    %c0 = arith.constant 0 : index
    %c0_1 = arith.constant 0 : index
    %c0_2 = arith.constant 0 : index
    %3 = vector.load %arg2[%c0, %c0_1, %c0_2] : memref<1x16x2xbf16, #tpu.memory_space<vmem>>, vector<1x16x2xbf16>
    %4 = vector.shape_cast %3 : vector<1x16x2xbf16> to vector<16x2xbf16>
    %c0_3 = arith.constant 0 : index
    %c0_4 = arith.constant 0 : index
    %5 = vector.load %arg5[%c0_3, %c0_4] : memref<2x2xbf16, #tpu.memory_space<vmem>>, vector<2x2xbf16>
    %cst = arith.constant dense<0.000000e+00> : vector<16x2xf32>
    %6 = tpu.matmul %4, %5, %cst {dimension_numbers = #tpu.dot_dimension_numbers<[1], [0], [0], [1], [0, 0, 1, 1], [], []>} : vector<16x2xbf16>, vector<2x2xbf16>, vector<16x2xf32> -> vector<16x2xf32>
    %c0_5 = arith.constant 0 : index
    %c0_6 = arith.constant 0 : index
    %7 = vector.load %arg6[%c0_5, %c0_6] : memref<1x2xf32, #tpu.memory_space<vmem>>, vector<1x2xf32>
    %8 = vector.broadcast %7 : vector<1x2xf32> to vector<16x2xf32>
    %9 = arith.addf %6, %8 : vector<16x2xf32>
    %10 = arith.truncf %9 : vector<16x2xf32> to vector<16x2xbf16>
    %c0_7 = arith.constant 0 : index
    %c0_8 = arith.constant 0 : index
    %11 = vector.load %arg17[%c0_7, %c0_8] : memref<16x2xbf16, #tpu.memory_space<vmem>>, vector<16x2xbf16>
    %cst_9 = arith.constant dense<0.000000e+00> : vector<16x16xf32>
    %12 = tpu.matmul %10, %11, %cst_9 {dimension_numbers = #tpu.dot_dimension_numbers<[1], [1], [0], [0], [0, 0, 1, 0], [], []>} : vector<16x2xbf16>, vector<16x2xbf16>, vector<16x16xf32> -> vector<16x16xf32>
    %cst_10 = arith.constant 0.707106769 : f32
    %13 = vector.broadcast %cst_10 : f32 to vector<16x16xf32>
    %14 = arith.mulf %12, %13 : vector<16x16xf32>
    %cst_11 = arith.constant dense<0xFF800000> : vector<16xf32>
    %15 = vector.multi_reduction <maximumf>, %14, %cst_11 [1] : vector<16x16xf32> to vector<16xf32>
    %16 = vector.shape_cast %15 : vector<16xf32> to vector<16x1xf32>
    %17 = vector.broadcast %16 : vector<16x1xf32> to vector<16x16xf32>
    %18 = arith.subf %14, %17 : vector<16x16xf32>
    %19 = math.exp %18 : vector<16x16xf32>
    %cst_12 = arith.constant dense<0.000000e+00> : vector<16xf32>
    %20 = vector.multi_reduction <add>, %19, %cst_12 [1] : vector<16x16xf32> to vector<16xf32>
    %21 = vector.shape_cast %20 : vector<16xf32> to vector<16x1xf32>
    %22 = tpu.reciprocal %21 {approx = true} : vector<16x1xf32> -> vector<16x1xf32>
    %23 = vector.broadcast %22 : vector<16x1xf32> to vector<16x16xf32>
    %24 = arith.mulf %19, %23 : vector<16x16xf32>
    %25 = arith.truncf %24 : vector<16x16xf32> to vector<16x16xbf16>
    %c0_13 = arith.constant 0 : index
    %c0_14 = arith.constant 0 : index
    %26 = vector.load %arg18[%c0_13, %c0_14] : memref<16x2xbf16, #tpu.memory_space<vmem>>, vector<16x2xbf16>
    %cst_15 = arith.constant dense<0.000000e+00> : vector<16x2xf32>
    %27 = tpu.matmul %25, %26, %cst_15 {dimension_numbers = #tpu.dot_dimension_numbers<[1], [0], [0], [1], [0, 0, 1, 1], [], []>} : vector<16x16xbf16>, vector<16x2xbf16>, vector<16x2xf32> -> vector<16x2xf32>
    %28 = arith.truncf %27 : vector<16x2xf32> to vector<16x2xbf16>
    %c0_16 = arith.constant 0 : index
    %c0_17 = arith.constant 0 : index
    %29 = vector.load %arg11[%c0_16, %c0_17] : memref<2x2xbf16, #tpu.memory_space<vmem>>, vector<2x2xbf16>
    %cst_18 = arith.constant dense<0.000000e+00> : vector<16x2xf32>
    %30 = tpu.matmul %28, %29, %cst_18 {dimension_numbers = #tpu.dot_dimension_numbers<[1], [0], [0], [1], [0, 0, 1, 1], [], []>} : vector<16x2xbf16>, vector<2x2xbf16>, vector<16x2xf32> -> vector<16x2xf32>
    %c0_19 = arith.constant 0 : index
    %c0_20 = arith.constant 0 : index
    %31 = vector.load %arg12[%c0_19, %c0_20] : memref<1x2xf32, #tpu.memory_space<vmem>>, vector<1x2xf32>
    %32 = vector.broadcast %31 : vector<1x2xf32> to vector<16x2xf32>
    %33 = arith.addf %30, %32 : vector<16x2xf32>
    %cst_21 = arith.constant 0.000000e+00 : f32
    %34 = vector.broadcast %cst_21 : f32 to vector<16x2xf32>
    %35 = arith.cmpf ogt, %33, %34 : vector<16x2xf32>
    %cst_22 = arith.constant 0.00999999977 : f32
    %36 = vector.broadcast %cst_22 : f32 to vector<16x2xf32>
    %37 = arith.mulf %36, %33 : vector<16x2xf32>
    %38 = arith.select %35, %33, %37 : vector<16x2xi1>, vector<16x2xf32>
    %c0_23 = arith.constant 0 : index
    %c0_24 = arith.constant 0 : index
    %c0_25 = arith.constant 0 : index
    %39 = vector.load %arg4[%c0_23, %c0_24, %c0_25] : memref<1x16x2xbf16, #tpu.memory_space<vmem>>, vector<1x16x2xbf16>
    %40 = vector.shape_cast %39 : vector<1x16x2xbf16> to vector<16x2xbf16>
    %c0_26 = arith.constant 0 : index
    %c0_27 = arith.constant 0 : index
    %41 = vector.load %arg13[%c0_26, %c0_27] : memref<2x2xbf16, #tpu.memory_space<vmem>>, vector<2x2xbf16>
    %cst_28 = arith.constant dense<0.000000e+00> : vector<16x2xf32>
    %42 = tpu.matmul %40, %41, %cst_28 {dimension_numbers = #tpu.dot_dimension_numbers<[1], [0], [0], [1], [0, 0, 1, 1], [], []>} : vector<16x2xbf16>, vector<2x2xbf16>, vector<16x2xf32> -> vector<16x2xf32>
    %43 = arith.truncf %38 : vector<16x2xf32> to vector<16x2xbf16>
    %c0_29 = arith.constant 0 : index
    %c0_30 = arith.constant 0 : index
    %44 = vector.load %arg14[%c0_29, %c0_30] : memref<2x2xbf16, #tpu.memory_space<vmem>>, vector<2x2xbf16>
    %cst_31 = arith.constant dense<0.000000e+00> : vector<16x2xf32>
    %45 = tpu.matmul %43, %44, %cst_31 {dimension_numbers = #tpu.dot_dimension_numbers<[1], [0], [0], [1], [0, 0, 1, 1], [], []>} : vector<16x2xbf16>, vector<2x2xbf16>, vector<16x2xf32> -> vector<16x2xf32>
    %46 = arith.addf %42, %45 : vector<16x2xf32>
    %c0_32 = arith.constant 0 : index
    %c0_33 = arith.constant 0 : index
    %47 = vector.load %arg15[%c0_32, %c0_33] : memref<1x2xf32, #tpu.memory_space<vmem>>, vector<1x2xf32>
    %48 = vector.broadcast %47 : vector<1x2xf32> to vector<16x2xf32>
    %49 = arith.addf %46, %48 : vector<16x2xf32>
    %cst_34 = arith.constant 0.000000e+00 : f32
    %50 = vector.broadcast %cst_34 : f32 to vector<16x2xf32>
    %51 = arith.cmpf ogt, %49, %50 : vector<16x2xf32>
    %cst_35 = arith.constant 0.00999999977 : f32
    %52 = vector.broadcast %cst_35 : f32 to vector<16x2xf32>
    %53 = arith.mulf %52, %49 : vector<16x2xf32>
    %54 = arith.select %51, %49, %53 : vector<16x2xi1>, vector<16x2xf32>
    %55 = arith.truncf %54 : vector<16x2xf32> to vector<16x2xbf16>
    %c0_36 = arith.constant 0 : index
    %c0_37 = arith.constant 0 : index
    %c0_38 = arith.constant 0 : index
    %56 = vector.load %arg16[%c0_36, %c0_37, %c0_38] : memref<1x16x2xbf16, #tpu.memory_space<vmem>>, vector<1x16x2xbf16>
    %57 = vector.shape_cast %56 : vector<1x16x2xbf16> to vector<16x2xbf16>
    %58 = vector.shape_cast %55 : vector<16x2xbf16> to vector<1x16x2xbf16>
    tpu.vector_store %arg16[%c0_36, %c0_37, %c0_38], %58 {strides = array<i32>} : memref<1x16x2xbf16, #tpu.memory_space<vmem>>, vector<1x16x2xbf16>,
    return
  }
  func.func @transform_0(%arg0: i32, %arg1: i32) -> (i32, i32, i32) {
    %c0_i32 = arith.constant 0 : i32
    %c0_i32_0 = arith.constant 0 : i32
    return %arg0, %arg1, %c0_i32 : i32, i32, i32
  }
  func.func @transform_1(%arg0: i32, %arg1: i32) -> (i32, i32, i32) {
    %c0_i32 = arith.constant 0 : i32
    %c0_i32_0 = arith.constant 0 : i32
    %c0_i32_1 = arith.constant 0 : i32
    return %arg0, %c0_i32, %c0_i32_0 : i32, i32, i32
  }
  func.func @transform_2(%arg0: i32, %arg1: i32) -> (i32, i32, i32) {
    %c0_i32 = arith.constant 0 : i32
    %c0_i32_0 = arith.constant 0 : i32
    return %arg0, %arg1, %c0_i32 : i32, i32, i32
  }
  func.func @transform_3(%arg0: i32, %arg1: i32) -> (i32, i32) {
    %c0_i32 = arith.constant 0 : i32
    %c0_i32_0 = arith.constant 0 : i32
    %c0_i32_1 = arith.constant 0 : i32
    return %c0_i32, %c0_i32_0 : i32, i32
  }
  func.func @transform_4(%arg0: i32, %arg1: i32) -> (i32, i32) {
    %c0_i32 = arith.constant 0 : i32
    %c0_i32_0 = arith.constant 0 : i32
    %c0_i32_1 = arith.constant 0 : i32
    return %c0_i32, %c0_i32_0 : i32, i32
  }
  func.func @transform_5(%arg0: i32, %arg1: i32) -> (i32, i32) {
    %c0_i32 = arith.constant 0 : i32
    %c0_i32_0 = arith.constant 0 : i32
    %c0_i32_1 = arith.constant 0 : i32
    return %c0_i32, %c0_i32_0 : i32, i32
  }
  func.func @transform_6(%arg0: i32, %arg1: i32) -> (i32, i32) {
    %c0_i32 = arith.constant 0 : i32
    %c0_i32_0 = arith.constant 0 : i32
    %c0_i32_1 = arith.constant 0 : i32
    return %c0_i32, %c0_i32_0 : i32, i32
  }
  func.func @transform_7(%arg0: i32, %arg1: i32) -> (i32, i32) {
    %c0_i32 = arith.constant 0 : i32
    %c0_i32_0 = arith.constant 0 : i32
    %c0_i32_1 = arith.constant 0 : i32
    return %c0_i32, %c0_i32_0 : i32, i32
  }
  func.func @transform_8(%arg0: i32, %arg1: i32) -> (i32, i32) {
    %c0_i32 = arith.constant 0 : i32
    %c0_i32_0 = arith.constant 0 : i32
    %c0_i32_1 = arith.constant 0 : i32
    return %c0_i32, %c0_i32_0 : i32, i32
  }
  func.func @transform_9(%arg0: i32, %arg1: i32) -> (i32, i32) {
    %c0_i32 = arith.constant 0 : i32
    %c0_i32_0 = arith.constant 0 : i32
    %c0_i32_1 = arith.constant 0 : i32
    return %c0_i32, %c0_i32_0 : i32, i32
  }
  func.func @transform_10(%arg0: i32, %arg1: i32) -> (i32, i32) {
    %c0_i32 = arith.constant 0 : i32
    %c0_i32_0 = arith.constant 0 : i32
    %c0_i32_1 = arith.constant 0 : i32
    return %c0_i32, %c0_i32_0 : i32, i32
  }
  func.func @transform_11(%arg0: i32, %arg1: i32) -> (i32, i32) {
    %c0_i32 = arith.constant 0 : i32
    %c0_i32_0 = arith.constant 0 : i32
    %c0_i32_1 = arith.constant 0 : i32
    return %c0_i32, %c0_i32_0 : i32, i32
  }
  func.func @transform_12(%arg0: i32, %arg1: i32) -> (i32, i32) {
    %c0_i32 = arith.constant 0 : i32
    %c0_i32_0 = arith.constant 0 : i32
    %c0_i32_1 = arith.constant 0 : i32
    return %c0_i32, %c0_i32_0 : i32, i32
  }
  func.func @transform_13(%arg0: i32, %arg1: i32) -> (i32, i32) {
    %c0_i32 = arith.constant 0 : i32
    %c0_i32_0 = arith.constant 0 : i32
    %c0_i32_1 = arith.constant 0 : i32
    return %c0_i32, %c0_i32_0 : i32, i32
  }
  func.func @transform_14(%arg0: i32, %arg1: i32) -> (i32, i32, i32) {
    %c0_i32 = arith.constant 0 : i32
    %c0_i32_0 = arith.constant 0 : i32
    return %arg0, %arg1, %c0_i32 : i32, i32, i32
  }
}

module attributes {stable_mosaic.version = 11 : i64} {
  func.func @_local_graph_kernel(%arg0: i32, %arg1: memref<32x2xbf16, #tpu.memory_space<vmem>>, %arg2: memref<4x32x2xbf16, #tpu.memory_space<vmem>>, %arg3: memref<2x4xbf16, #tpu.memory_space<vmem>>, %arg4: memref<2x4xbf16, #tpu.memory_space<vmem>>, %arg5: memref<1x4xf32, #tpu.memory_space<vmem>>, %arg6: memref<1x4xf32, #tpu.memory_space<vmem>>, %arg7: memref<32x4xbf16, #tpu.memory_space<vmem>>) attributes {dimension_semantics = [#tpu.dimension_semantics<parallel>], iteration_bounds = array<i64: 1>, scalar_prefetch = 0 : i64, scratch_operands = 0 : i64, tpu.core_type = #tpu.core_type<tc>, window_params = [{transform_indices = @transform_0, window_bounds = array<i64: 32, 2>}, {transform_indices = @transform_1, window_bounds = array<i64: 4, 32, 2>}, {pipeline_mode = #tpu.pipeline_mode<synchronous>, transform_indices = @transform_2, window_bounds = array<i64: 2, 4>}, {pipeline_mode = #tpu.pipeline_mode<synchronous>, transform_indices = @transform_3, window_bounds = array<i64: 2, 4>}, {pipeline_mode = #tpu.pipeline_mode<synchronous>, transform_indices = @transform_4, window_bounds = array<i64: 1, 4>}, {pipeline_mode = #tpu.pipeline_mode<synchronous>, transform_indices = @transform_5, window_bounds = array<i64: 1, 4>}, {transform_indices = @transform_6, window_bounds = array<i64: 32, 4>}]} {
    %c0 = arith.constant 0 : index
    %c0_0 = arith.constant 0 : index
    %0 = vector.load %arg1[%c0, %c0_0] : memref<32x2xbf16, #tpu.memory_space<vmem>>, vector<32x2xbf16>
    %c0_1 = arith.constant 0 : index
    %c0_2 = arith.constant 0 : index
    %1 = vector.load %arg3[%c0_1, %c0_2] : memref<2x4xbf16, #tpu.memory_space<vmem>>, vector<2x4xbf16>
    %cst = arith.constant dense<0.000000e+00> : vector<32x4xf32>
    %2 = tpu.matmul %0, %1, %cst {dimension_numbers = #tpu.dot_dimension_numbers<[1], [0], [0], [1], [0, 0, 1, 1], [], []>} : vector<32x2xbf16>, vector<2x4xbf16>, vector<32x4xf32> -> vector<32x4xf32>
    %3 = arith.extf %0 : vector<32x2xbf16> to vector<32x2xf32>
    %c0_3 = arith.constant 0 : index
    %c0_4 = arith.constant 0 : index
    %4 = vector.load %arg5[%c0_3, %c0_4] : memref<1x4xf32, #tpu.memory_space<vmem>>, vector<1x4xf32>
    %c0_5 = arith.constant 0 : index
    %c0_6 = arith.constant 0 : index
    %c0_7 = arith.constant 0 : index
    %5 = vector.load %arg2[%c0_5, %c0_6, %c0_7] : memref<4x32x2xbf16, #tpu.memory_space<vmem>>, vector<1x32x2xbf16>
    %6 = vector.shape_cast %5 : vector<1x32x2xbf16> to vector<32x2xbf16>
    %c0_8 = arith.constant 0 : index
    %c0_9 = arith.constant 0 : index
    %7 = vector.load %arg4[%c0_8, %c0_9] : memref<2x4xbf16, #tpu.memory_space<vmem>>, vector<2x4xbf16>
    %cst_10 = arith.constant dense<0.000000e+00> : vector<32x4xf32>
    %8 = tpu.matmul %6, %7, %cst_10 {dimension_numbers = #tpu.dot_dimension_numbers<[1], [0], [0], [1], [0, 0, 1, 1], [], []>} : vector<32x2xbf16>, vector<2x4xbf16>, vector<32x4xf32> -> vector<32x4xf32>
    %9 = arith.extf %6 : vector<32x2xbf16> to vector<32x2xf32>
    %10 = arith.subf %9, %3 : vector<32x2xf32>
    %11 = arith.mulf %10, %10 : vector<32x2xf32>
    %cst_11 = arith.constant dense<0.000000e+00> : vector<32xf32>
    %12 = vector.multi_reduction <add>, %11, %cst_11 [1] : vector<32x2xf32> to vector<32xf32>
    %13 = vector.shape_cast %12 : vector<32xf32> to vector<32x1xf32>
    %14 = math.sqrt %13 : vector<32x1xf32>
    %15 = vector.broadcast %14 : vector<32x1xf32> to vector<32x4xf32>
    %16 = vector.broadcast %4 : vector<1x4xf32> to vector<32x4xf32>
    %17 = arith.mulf %15, %16 : vector<32x4xf32>
    %18 = arith.addf %8, %17 : vector<32x4xf32>
    %c1 = arith.constant 1 : index
    %c0_12 = arith.constant 0 : index
    %c0_13 = arith.constant 0 : index
    %19 = vector.load %arg2[%c1, %c0_12, %c0_13] : memref<4x32x2xbf16, #tpu.memory_space<vmem>>, vector<1x32x2xbf16>
    %20 = vector.shape_cast %19 : vector<1x32x2xbf16> to vector<32x2xbf16>
    %c0_14 = arith.constant 0 : index
    %c0_15 = arith.constant 0 : index
    %21 = vector.load %arg4[%c0_14, %c0_15] : memref<2x4xbf16, #tpu.memory_space<vmem>>, vector<2x4xbf16>
    %cst_16 = arith.constant dense<0.000000e+00> : vector<32x4xf32>
    %22 = tpu.matmul %20, %21, %cst_16 {dimension_numbers = #tpu.dot_dimension_numbers<[1], [0], [0], [1], [0, 0, 1, 1], [], []>} : vector<32x2xbf16>, vector<2x4xbf16>, vector<32x4xf32> -> vector<32x4xf32>
    %23 = arith.extf %20 : vector<32x2xbf16> to vector<32x2xf32>
    %24 = arith.subf %23, %3 : vector<32x2xf32>
    %25 = arith.mulf %24, %24 : vector<32x2xf32>
    %cst_17 = arith.constant dense<0.000000e+00> : vector<32xf32>
    %26 = vector.multi_reduction <add>, %25, %cst_17 [1] : vector<32x2xf32> to vector<32xf32>
    %27 = vector.shape_cast %26 : vector<32xf32> to vector<32x1xf32>
    %28 = math.sqrt %27 : vector<32x1xf32>
    %29 = vector.broadcast %28 : vector<32x1xf32> to vector<32x4xf32>
    %30 = vector.broadcast %4 : vector<1x4xf32> to vector<32x4xf32>
    %31 = arith.mulf %29, %30 : vector<32x4xf32>
    %32 = arith.addf %22, %31 : vector<32x4xf32>
    %33 = arith.maximumf %18, %32 : vector<32x4xf32>
    %c2 = arith.constant 2 : index
    %c0_18 = arith.constant 0 : index
    %c0_19 = arith.constant 0 : index
    %34 = vector.load %arg2[%c2, %c0_18, %c0_19] : memref<4x32x2xbf16, #tpu.memory_space<vmem>>, vector<1x32x2xbf16>
    %35 = vector.shape_cast %34 : vector<1x32x2xbf16> to vector<32x2xbf16>
    %c0_20 = arith.constant 0 : index
    %c0_21 = arith.constant 0 : index
    %36 = vector.load %arg4[%c0_20, %c0_21] : memref<2x4xbf16, #tpu.memory_space<vmem>>, vector<2x4xbf16>
    %cst_22 = arith.constant dense<0.000000e+00> : vector<32x4xf32>
    %37 = tpu.matmul %35, %36, %cst_22 {dimension_numbers = #tpu.dot_dimension_numbers<[1], [0], [0], [1], [0, 0, 1, 1], [], []>} : vector<32x2xbf16>, vector<2x4xbf16>, vector<32x4xf32> -> vector<32x4xf32>
    %38 = arith.extf %35 : vector<32x2xbf16> to vector<32x2xf32>
    %39 = arith.subf %38, %3 : vector<32x2xf32>
    %40 = arith.mulf %39, %39 : vector<32x2xf32>
    %cst_23 = arith.constant dense<0.000000e+00> : vector<32xf32>
    %41 = vector.multi_reduction <add>, %40, %cst_23 [1] : vector<32x2xf32> to vector<32xf32>
    %42 = vector.shape_cast %41 : vector<32xf32> to vector<32x1xf32>
    %43 = math.sqrt %42 : vector<32x1xf32>
    %44 = vector.broadcast %43 : vector<32x1xf32> to vector<32x4xf32>
    %45 = vector.broadcast %4 : vector<1x4xf32> to vector<32x4xf32>
    %46 = arith.mulf %44, %45 : vector<32x4xf32>
    %47 = arith.addf %37, %46 : vector<32x4xf32>
    %48 = arith.maximumf %33, %47 : vector<32x4xf32>
    %c3 = arith.constant 3 : index
    %c0_24 = arith.constant 0 : index
    %c0_25 = arith.constant 0 : index
    %49 = vector.load %arg2[%c3, %c0_24, %c0_25] : memref<4x32x2xbf16, #tpu.memory_space<vmem>>, vector<1x32x2xbf16>
    %50 = vector.shape_cast %49 : vector<1x32x2xbf16> to vector<32x2xbf16>
    %c0_26 = arith.constant 0 : index
    %c0_27 = arith.constant 0 : index
    %51 = vector.load %arg4[%c0_26, %c0_27] : memref<2x4xbf16, #tpu.memory_space<vmem>>, vector<2x4xbf16>
    %cst_28 = arith.constant dense<0.000000e+00> : vector<32x4xf32>
    %52 = tpu.matmul %50, %51, %cst_28 {dimension_numbers = #tpu.dot_dimension_numbers<[1], [0], [0], [1], [0, 0, 1, 1], [], []>} : vector<32x2xbf16>, vector<2x4xbf16>, vector<32x4xf32> -> vector<32x4xf32>
    %53 = arith.extf %50 : vector<32x2xbf16> to vector<32x2xf32>
    %54 = arith.subf %53, %3 : vector<32x2xf32>
    %55 = arith.mulf %54, %54 : vector<32x2xf32>
    %cst_29 = arith.constant dense<0.000000e+00> : vector<32xf32>
    %56 = vector.multi_reduction <add>, %55, %cst_29 [1] : vector<32x2xf32> to vector<32xf32>
    %57 = vector.shape_cast %56 : vector<32xf32> to vector<32x1xf32>
    %58 = math.sqrt %57 : vector<32x1xf32>
    %59 = vector.broadcast %58 : vector<32x1xf32> to vector<32x4xf32>
    %60 = vector.broadcast %4 : vector<1x4xf32> to vector<32x4xf32>
    %61 = arith.mulf %59, %60 : vector<32x4xf32>
    %62 = arith.addf %52, %61 : vector<32x4xf32>
    %63 = arith.maximumf %48, %62 : vector<32x4xf32>
    %64 = arith.addf %2, %63 : vector<32x4xf32>
    %c0_30 = arith.constant 0 : index
    %c0_31 = arith.constant 0 : index
    %65 = vector.load %arg6[%c0_30, %c0_31] : memref<1x4xf32, #tpu.memory_space<vmem>>, vector<1x4xf32>
    %66 = vector.broadcast %65 : vector<1x4xf32> to vector<32x4xf32>
    %67 = arith.addf %64, %66 : vector<32x4xf32>
    %cst_32 = arith.constant 0.000000e+00 : f32
    %68 = vector.broadcast %cst_32 : f32 to vector<32x4xf32>
    %69 = arith.cmpf ogt, %67, %68 : vector<32x4xf32>
    %cst_33 = arith.constant 0.00999999977 : f32
    %70 = vector.broadcast %cst_33 : f32 to vector<32x4xf32>
    %71 = arith.mulf %70, %67 : vector<32x4xf32>
    %72 = arith.select %69, %67, %71 : vector<32x4xi1>, vector<32x4xf32>
    %73 = arith.truncf %72 : vector<32x4xf32> to vector<32x4xbf16>
    %c0_34 = arith.constant 0 : index
    %c0_35 = arith.constant 0 : index
    %74 = vector.load %arg7[%c0_34, %c0_35] : memref<32x4xbf16, #tpu.memory_space<vmem>>, vector<32x4xbf16>
    tpu.vector_store %arg7[%c0_34, %c0_35], %73 {strides = array<i32>} : memref<32x4xbf16, #tpu.memory_space<vmem>>, vector<32x4xbf16>,
    return
  }
  func.func @transform_0(%arg0: i32) -> (i32, i32) {
    %c0_i32 = arith.constant 0 : i32
    %c0_i32_0 = arith.constant 0 : i32
    return %arg0, %c0_i32 : i32, i32
  }
  func.func @transform_1(%arg0: i32) -> (i32, i32, i32) {
    %c0_i32 = arith.constant 0 : i32
    %c0_i32_0 = arith.constant 0 : i32
    %c0_i32_1 = arith.constant 0 : i32
    return %c0_i32, %arg0, %c0_i32_0 : i32, i32, i32
  }
  func.func @transform_2(%arg0: i32) -> (i32, i32) {
    %c0_i32 = arith.constant 0 : i32
    %c0_i32_0 = arith.constant 0 : i32
    %c0_i32_1 = arith.constant 0 : i32
    return %c0_i32, %c0_i32_0 : i32, i32
  }
  func.func @transform_3(%arg0: i32) -> (i32, i32) {
    %c0_i32 = arith.constant 0 : i32
    %c0_i32_0 = arith.constant 0 : i32
    %c0_i32_1 = arith.constant 0 : i32
    return %c0_i32, %c0_i32_0 : i32, i32
  }
  func.func @transform_4(%arg0: i32) -> (i32, i32) {
    %c0_i32 = arith.constant 0 : i32
    %c0_i32_0 = arith.constant 0 : i32
    %c0_i32_1 = arith.constant 0 : i32
    return %c0_i32, %c0_i32_0 : i32, i32
  }
  func.func @transform_5(%arg0: i32) -> (i32, i32) {
    %c0_i32 = arith.constant 0 : i32
    %c0_i32_0 = arith.constant 0 : i32
    %c0_i32_1 = arith.constant 0 : i32
    return %c0_i32, %c0_i32_0 : i32, i32
  }
  func.func @transform_6(%arg0: i32) -> (i32, i32) {
    %c0_i32 = arith.constant 0 : i32
    %c0_i32_0 = arith.constant 0 : i32
    return %arg0, %c0_i32 : i32, i32
  }
}

module attributes {stable_mosaic.version = 11 : i64} {
  func.func @_local_graph_kernel(%arg0: i32, %arg1: memref<32x2xbf16, #tpu.memory_space<vmem>>, %arg2: memref<4x32x2xbf16, #tpu.memory_space<vmem>>, %arg3: memref<2x2xbf16, #tpu.memory_space<vmem>>, %arg4: memref<2x2xbf16, #tpu.memory_space<vmem>>, %arg5: memref<1x2xf32, #tpu.memory_space<vmem>>, %arg6: memref<1x2xf32, #tpu.memory_space<vmem>>, %arg7: memref<32x2xbf16, #tpu.memory_space<vmem>>) attributes {dimension_semantics = [#tpu.dimension_semantics<parallel>], iteration_bounds = array<i64: 1>, scalar_prefetch = 0 : i64, scratch_operands = 0 : i64, tpu.core_type = #tpu.core_type<tc>, window_params = [{transform_indices = @transform_0, window_bounds = array<i64: 32, 2>}, {transform_indices = @transform_1, window_bounds = array<i64: 4, 32, 2>}, {pipeline_mode = #tpu.pipeline_mode<synchronous>, transform_indices = @transform_2, window_bounds = array<i64: 2, 2>}, {pipeline_mode = #tpu.pipeline_mode<synchronous>, transform_indices = @transform_3, window_bounds = array<i64: 2, 2>}, {pipeline_mode = #tpu.pipeline_mode<synchronous>, transform_indices = @transform_4, window_bounds = array<i64: 1, 2>}, {pipeline_mode = #tpu.pipeline_mode<synchronous>, transform_indices = @transform_5, window_bounds = array<i64: 1, 2>}, {transform_indices = @transform_6, window_bounds = array<i64: 32, 2>}]} {
    %c0 = arith.constant 0 : index
    %c0_0 = arith.constant 0 : index
    %0 = vector.load %arg1[%c0, %c0_0] : memref<32x2xbf16, #tpu.memory_space<vmem>>, vector<32x2xbf16>
    %c0_1 = arith.constant 0 : index
    %c0_2 = arith.constant 0 : index
    %1 = vector.load %arg3[%c0_1, %c0_2] : memref<2x2xbf16, #tpu.memory_space<vmem>>, vector<2x2xbf16>
    %cst = arith.constant dense<0.000000e+00> : vector<32x2xf32>
    %2 = tpu.matmul %0, %1, %cst {dimension_numbers = #tpu.dot_dimension_numbers<[1], [0], [0], [1], [0, 0, 1, 1], [], []>} : vector<32x2xbf16>, vector<2x2xbf16>, vector<32x2xf32> -> vector<32x2xf32>
    %3 = arith.extf %0 : vector<32x2xbf16> to vector<32x2xf32>
    %c0_3 = arith.constant 0 : index
    %c0_4 = arith.constant 0 : index
    %4 = vector.load %arg5[%c0_3, %c0_4] : memref<1x2xf32, #tpu.memory_space<vmem>>, vector<1x2xf32>
    %c0_5 = arith.constant 0 : index
    %c0_6 = arith.constant 0 : index
    %c0_7 = arith.constant 0 : index
    %5 = vector.load %arg2[%c0_5, %c0_6, %c0_7] : memref<4x32x2xbf16, #tpu.memory_space<vmem>>, vector<1x32x2xbf16>
    %6 = vector.shape_cast %5 : vector<1x32x2xbf16> to vector<32x2xbf16>
    %c0_8 = arith.constant 0 : index
    %c0_9 = arith.constant 0 : index
    %7 = vector.load %arg4[%c0_8, %c0_9] : memref<2x2xbf16, #tpu.memory_space<vmem>>, vector<2x2xbf16>
    %cst_10 = arith.constant dense<0.000000e+00> : vector<32x2xf32>
    %8 = tpu.matmul %6, %7, %cst_10 {dimension_numbers = #tpu.dot_dimension_numbers<[1], [0], [0], [1], [0, 0, 1, 1], [], []>} : vector<32x2xbf16>, vector<2x2xbf16>, vector<32x2xf32> -> vector<32x2xf32>
    %9 = arith.extf %6 : vector<32x2xbf16> to vector<32x2xf32>
    %10 = arith.subf %9, %3 : vector<32x2xf32>
    %11 = arith.mulf %10, %10 : vector<32x2xf32>
    %cst_11 = arith.constant dense<0.000000e+00> : vector<32xf32>
    %12 = vector.multi_reduction <add>, %11, %cst_11 [1] : vector<32x2xf32> to vector<32xf32>
    %13 = vector.shape_cast %12 : vector<32xf32> to vector<32x1xf32>
    %14 = math.sqrt %13 : vector<32x1xf32>
    %15 = vector.broadcast %14 : vector<32x1xf32> to vector<32x2xf32>
    %16 = vector.broadcast %4 : vector<1x2xf32> to vector<32x2xf32>
    %17 = arith.mulf %15, %16 : vector<32x2xf32>
    %18 = arith.addf %8, %17 : vector<32x2xf32>
    %c1 = arith.constant 1 : index
    %c0_12 = arith.constant 0 : index
    %c0_13 = arith.constant 0 : index
    %19 = vector.load %arg2[%c1, %c0_12, %c0_13] : memref<4x32x2xbf16, #tpu.memory_space<vmem>>, vector<1x32x2xbf16>
    %20 = vector.shape_cast %19 : vector<1x32x2xbf16> to vector<32x2xbf16>
    %c0_14 = arith.constant 0 : index
    %c0_15 = arith.constant 0 : index
    %21 = vector.load %arg4[%c0_14, %c0_15] : memref<2x2xbf16, #tpu.memory_space<vmem>>, vector<2x2xbf16>
    %cst_16 = arith.constant dense<0.000000e+00> : vector<32x2xf32>
    %22 = tpu.matmul %20, %21, %cst_16 {dimension_numbers = #tpu.dot_dimension_numbers<[1], [0], [0], [1], [0, 0, 1, 1], [], []>} : vector<32x2xbf16>, vector<2x2xbf16>, vector<32x2xf32> -> vector<32x2xf32>
    %23 = arith.extf %20 : vector<32x2xbf16> to vector<32x2xf32>
    %24 = arith.subf %23, %3 : vector<32x2xf32>
    %25 = arith.mulf %24, %24 : vector<32x2xf32>
    %cst_17 = arith.constant dense<0.000000e+00> : vector<32xf32>
    %26 = vector.multi_reduction <add>, %25, %cst_17 [1] : vector<32x2xf32> to vector<32xf32>
    %27 = vector.shape_cast %26 : vector<32xf32> to vector<32x1xf32>
    %28 = math.sqrt %27 : vector<32x1xf32>
    %29 = vector.broadcast %28 : vector<32x1xf32> to vector<32x2xf32>
    %30 = vector.broadcast %4 : vector<1x2xf32> to vector<32x2xf32>
    %31 = arith.mulf %29, %30 : vector<32x2xf32>
    %32 = arith.addf %22, %31 : vector<32x2xf32>
    %33 = arith.maximumf %18, %32 : vector<32x2xf32>
    %c2 = arith.constant 2 : index
    %c0_18 = arith.constant 0 : index
    %c0_19 = arith.constant 0 : index
    %34 = vector.load %arg2[%c2, %c0_18, %c0_19] : memref<4x32x2xbf16, #tpu.memory_space<vmem>>, vector<1x32x2xbf16>
    %35 = vector.shape_cast %34 : vector<1x32x2xbf16> to vector<32x2xbf16>
    %c0_20 = arith.constant 0 : index
    %c0_21 = arith.constant 0 : index
    %36 = vector.load %arg4[%c0_20, %c0_21] : memref<2x2xbf16, #tpu.memory_space<vmem>>, vector<2x2xbf16>
    %cst_22 = arith.constant dense<0.000000e+00> : vector<32x2xf32>
    %37 = tpu.matmul %35, %36, %cst_22 {dimension_numbers = #tpu.dot_dimension_numbers<[1], [0], [0], [1], [0, 0, 1, 1], [], []>} : vector<32x2xbf16>, vector<2x2xbf16>, vector<32x2xf32> -> vector<32x2xf32>
    %38 = arith.extf %35 : vector<32x2xbf16> to vector<32x2xf32>
    %39 = arith.subf %38, %3 : vector<32x2xf32>
    %40 = arith.mulf %39, %39 : vector<32x2xf32>
    %cst_23 = arith.constant dense<0.000000e+00> : vector<32xf32>
    %41 = vector.multi_reduction <add>, %40, %cst_23 [1] : vector<32x2xf32> to vector<32xf32>
    %42 = vector.shape_cast %41 : vector<32xf32> to vector<32x1xf32>
    %43 = math.sqrt %42 : vector<32x1xf32>
    %44 = vector.broadcast %43 : vector<32x1xf32> to vector<32x2xf32>
    %45 = vector.broadcast %4 : vector<1x2xf32> to vector<32x2xf32>
    %46 = arith.mulf %44, %45 : vector<32x2xf32>
    %47 = arith.addf %37, %46 : vector<32x2xf32>
    %48 = arith.maximumf %33, %47 : vector<32x2xf32>
    %c3 = arith.constant 3 : index
    %c0_24 = arith.constant 0 : index
    %c0_25 = arith.constant 0 : index
    %49 = vector.load %arg2[%c3, %c0_24, %c0_25] : memref<4x32x2xbf16, #tpu.memory_space<vmem>>, vector<1x32x2xbf16>
    %50 = vector.shape_cast %49 : vector<1x32x2xbf16> to vector<32x2xbf16>
    %c0_26 = arith.constant 0 : index
    %c0_27 = arith.constant 0 : index
    %51 = vector.load %arg4[%c0_26, %c0_27] : memref<2x2xbf16, #tpu.memory_space<vmem>>, vector<2x2xbf16>
    %cst_28 = arith.constant dense<0.000000e+00> : vector<32x2xf32>
    %52 = tpu.matmul %50, %51, %cst_28 {dimension_numbers = #tpu.dot_dimension_numbers<[1], [0], [0], [1], [0, 0, 1, 1], [], []>} : vector<32x2xbf16>, vector<2x2xbf16>, vector<32x2xf32> -> vector<32x2xf32>
    %53 = arith.extf %50 : vector<32x2xbf16> to vector<32x2xf32>
    %54 = arith.subf %53, %3 : vector<32x2xf32>
    %55 = arith.mulf %54, %54 : vector<32x2xf32>
    %cst_29 = arith.constant dense<0.000000e+00> : vector<32xf32>
    %56 = vector.multi_reduction <add>, %55, %cst_29 [1] : vector<32x2xf32> to vector<32xf32>
    %57 = vector.shape_cast %56 : vector<32xf32> to vector<32x1xf32>
    %58 = math.sqrt %57 : vector<32x1xf32>
    %59 = vector.broadcast %58 : vector<32x1xf32> to vector<32x2xf32>
    %60 = vector.broadcast %4 : vector<1x2xf32> to vector<32x2xf32>
    %61 = arith.mulf %59, %60 : vector<32x2xf32>
    %62 = arith.addf %52, %61 : vector<32x2xf32>
    %63 = arith.maximumf %48, %62 : vector<32x2xf32>
    %64 = arith.addf %2, %63 : vector<32x2xf32>
    %c0_30 = arith.constant 0 : index
    %c0_31 = arith.constant 0 : index
    %65 = vector.load %arg6[%c0_30, %c0_31] : memref<1x2xf32, #tpu.memory_space<vmem>>, vector<1x2xf32>
    %66 = vector.broadcast %65 : vector<1x2xf32> to vector<32x2xf32>
    %67 = arith.addf %64, %66 : vector<32x2xf32>
    %cst_32 = arith.constant 0.000000e+00 : f32
    %68 = vector.broadcast %cst_32 : f32 to vector<32x2xf32>
    %69 = arith.cmpf ogt, %67, %68 : vector<32x2xf32>
    %cst_33 = arith.constant 0.00999999977 : f32
    %70 = vector.broadcast %cst_33 : f32 to vector<32x2xf32>
    %71 = arith.mulf %70, %67 : vector<32x2xf32>
    %72 = arith.select %69, %67, %71 : vector<32x2xi1>, vector<32x2xf32>
    %73 = arith.truncf %72 : vector<32x2xf32> to vector<32x2xbf16>
    %c0_34 = arith.constant 0 : index
    %c0_35 = arith.constant 0 : index
    %74 = vector.load %arg7[%c0_34, %c0_35] : memref<32x2xbf16, #tpu.memory_space<vmem>>, vector<32x2xbf16>
    tpu.vector_store %arg7[%c0_34, %c0_35], %73 {strides = array<i32>} : memref<32x2xbf16, #tpu.memory_space<vmem>>, vector<32x2xbf16>,
    return
  }
  func.func @transform_0(%arg0: i32) -> (i32, i32) {
    %c0_i32 = arith.constant 0 : i32
    %c0_i32_0 = arith.constant 0 : i32
    return %arg0, %c0_i32 : i32, i32
  }
  func.func @transform_1(%arg0: i32) -> (i32, i32, i32) {
    %c0_i32 = arith.constant 0 : i32
    %c0_i32_0 = arith.constant 0 : i32
    %c0_i32_1 = arith.constant 0 : i32
    return %c0_i32, %arg0, %c0_i32_0 : i32, i32, i32
  }
  func.func @transform_2(%arg0: i32) -> (i32, i32) {
    %c0_i32 = arith.constant 0 : i32
    %c0_i32_0 = arith.constant 0 : i32
    %c0_i32_1 = arith.constant 0 : i32
    return %c0_i32, %c0_i32_0 : i32, i32
  }
  func.func @transform_3(%arg0: i32) -> (i32, i32) {
    %c0_i32 = arith.constant 0 : i32
    %c0_i32_0 = arith.constant 0 : i32
    %c0_i32_1 = arith.constant 0 : i32
    return %c0_i32, %c0_i32_0 : i32, i32
  }
  func.func @transform_4(%arg0: i32) -> (i32, i32) {
    %c0_i32 = arith.constant 0 : i32
    %c0_i32_0 = arith.constant 0 : i32
    %c0_i32_1 = arith.constant 0 : i32
    return %c0_i32, %c0_i32_0 : i32, i32
  }
  func.func @transform_5(%arg0: i32) -> (i32, i32) {
    %c0_i32 = arith.constant 0 : i32
    %c0_i32_0 = arith.constant 0 : i32
    %c0_i32_1 = arith.constant 0 : i32
    return %c0_i32, %c0_i32_0 : i32, i32
  }
  func.func @transform_6(%arg0: i32) -> (i32, i32) {
    %c0_i32 = arith.constant 0 : i32
    %c0_i32_0 = arith.constant 0 : i32
    return %arg0, %c0_i32 : i32, i32
  }
}

module attributes {stable_mosaic.version = 11 : i64} {
  func.func @_inter_full_kernel(%arg0: i32, %arg1: i32, %arg2: memref<1x16x2xbf16, #tpu.memory_space<vmem>>, %arg3: memref<1x16x2xbf16, #tpu.memory_space<vmem>>, %arg4: memref<1x16x4xbf16, #tpu.memory_space<vmem>>, %arg5: memref<2x2xbf16, #tpu.memory_space<vmem>>, %arg6: memref<1x2xf32, #tpu.memory_space<vmem>>, %arg7: memref<2x2xbf16, #tpu.memory_space<vmem>>, %arg8: memref<1x2xf32, #tpu.memory_space<vmem>>, %arg9: memref<2x2xbf16, #tpu.memory_space<vmem>>, %arg10: memref<1x2xf32, #tpu.memory_space<vmem>>, %arg11: memref<2x4xbf16, #tpu.memory_space<vmem>>, %arg12: memref<1x4xf32, #tpu.memory_space<vmem>>, %arg13: memref<4x4xbf16, #tpu.memory_space<vmem>>, %arg14: memref<4x4xbf16, #tpu.memory_space<vmem>>, %arg15: memref<1x4xf32, #tpu.memory_space<vmem>>, %arg16: memref<1x16x4xbf16, #tpu.memory_space<vmem>>, %arg17: memref<16x2xbf16, #tpu.memory_space<vmem>>, %arg18: memref<16x2xbf16, #tpu.memory_space<vmem>>) attributes {dimension_semantics = [#tpu.dimension_semantics<parallel>, #tpu.dimension_semantics<arbitrary>], iteration_bounds = array<i64: 2, 1>, scalar_prefetch = 0 : i64, scratch_operands = 2 : i64, tpu.core_type = #tpu.core_type<tc>, window_params = [{transform_indices = @transform_0, window_bounds = array<i64: 1, 16, 2>}, {transform_indices = @transform_1, window_bounds = array<i64: 1, 16, 2>}, {transform_indices = @transform_2, window_bounds = array<i64: 1, 16, 4>}, {pipeline_mode = #tpu.pipeline_mode<synchronous>, transform_indices = @transform_3, window_bounds = array<i64: 2, 2>}, {pipeline_mode = #tpu.pipeline_mode<synchronous>, transform_indices = @transform_4, window_bounds = array<i64: 1, 2>}, {pipeline_mode = #tpu.pipeline_mode<synchronous>, transform_indices = @transform_5, window_bounds = array<i64: 2, 2>}, {pipeline_mode = #tpu.pipeline_mode<synchronous>, transform_indices = @transform_6, window_bounds = array<i64: 1, 2>}, {pipeline_mode = #tpu.pipeline_mode<synchronous>, transform_indices = @transform_7, window_bounds = array<i64: 2, 2>}, {pipeline_mode = #tpu.pipeline_mode<synchronous>, transform_indices = @transform_8, window_bounds = array<i64: 1, 2>}, {pipeline_mode = #tpu.pipeline_mode<synchronous>, transform_indices = @transform_9, window_bounds = array<i64: 2, 4>}, {pipeline_mode = #tpu.pipeline_mode<synchronous>, transform_indices = @transform_10, window_bounds = array<i64: 1, 4>}, {pipeline_mode = #tpu.pipeline_mode<synchronous>, transform_indices = @transform_11, window_bounds = array<i64: 4, 4>}, {pipeline_mode = #tpu.pipeline_mode<synchronous>, transform_indices = @transform_12, window_bounds = array<i64: 4, 4>}, {pipeline_mode = #tpu.pipeline_mode<synchronous>, transform_indices = @transform_13, window_bounds = array<i64: 1, 4>}, {transform_indices = @transform_14, window_bounds = array<i64: 1, 16, 4>}]} {
    %c0_i32 = arith.constant 0 : i32
    %0 = arith.cmpi eq, %arg1, %c0_i32 : i32
    %1 = arith.extui %0 : i1 to i32
    %c0_i32_0 = arith.constant 0 : i32
    %2 = arith.cmpi ne, %1, %c0_i32_0 : i32
    scf.if %2 {
      %c0_39 = arith.constant 0 : index
      %c0_40 = arith.constant 0 : index
      %c0_41 = arith.constant 0 : index
      %59 = vector.load %arg3[%c0_39, %c0_40, %c0_41] : memref<1x16x2xbf16, #tpu.memory_space<vmem>>, vector<1x16x2xbf16>
      %60 = vector.shape_cast %59 : vector<1x16x2xbf16> to vector<16x2xbf16>
      %c0_42 = arith.constant 0 : index
      %c0_43 = arith.constant 0 : index
      %61 = vector.load %arg7[%c0_42, %c0_43] : memref<2x2xbf16, #tpu.memory_space<vmem>>, vector<2x2xbf16>
      %cst_44 = arith.constant dense<0.000000e+00> : vector<16x2xf32>
      %62 = tpu.matmul %60, %61, %cst_44 {dimension_numbers = #tpu.dot_dimension_numbers<[1], [0], [0], [1], [0, 0, 1, 1], [], []>} : vector<16x2xbf16>, vector<2x2xbf16>, vector<16x2xf32> -> vector<16x2xf32>
      %c0_45 = arith.constant 0 : index
      %c0_46 = arith.constant 0 : index
      %63 = vector.load %arg8[%c0_45, %c0_46] : memref<1x2xf32, #tpu.memory_space<vmem>>, vector<1x2xf32>
      %64 = vector.broadcast %63 : vector<1x2xf32> to vector<16x2xf32>
      %65 = arith.addf %62, %64 : vector<16x2xf32>
      %c0_47 = arith.constant 0 : index
      %c0_48 = arith.constant 0 : index
      %66 = vector.load %arg9[%c0_47, %c0_48] : memref<2x2xbf16, #tpu.memory_space<vmem>>, vector<2x2xbf16>
      %cst_49 = arith.constant dense<0.000000e+00> : vector<16x2xf32>
      %67 = tpu.matmul %60, %66, %cst_49 {dimension_numbers = #tpu.dot_dimension_numbers<[1], [0], [0], [1], [0, 0, 1, 1], [], []>} : vector<16x2xbf16>, vector<2x2xbf16>, vector<16x2xf32> -> vector<16x2xf32>
      %c0_50 = arith.constant 0 : index
      %c0_51 = arith.constant 0 : index
      %68 = vector.load %arg10[%c0_50, %c0_51] : memref<1x2xf32, #tpu.memory_space<vmem>>, vector<1x2xf32>
      %69 = vector.broadcast %68 : vector<1x2xf32> to vector<16x2xf32>
      %70 = arith.addf %67, %69 : vector<16x2xf32>
      %71 = arith.truncf %65 : vector<16x2xf32> to vector<16x2xbf16>
      %c0_52 = arith.constant 0 : index
      %c0_53 = arith.constant 0 : index
      %72 = vector.load %arg17[%c0_52, %c0_53] : memref<16x2xbf16, #tpu.memory_space<vmem>>, vector<16x2xbf16>
      tpu.vector_store %arg17[%c0_52, %c0_53], %71 {strides = array<i32>} : memref<16x2xbf16, #tpu.memory_space<vmem>>, vector<16x2xbf16>,
      %73 = arith.truncf %70 : vector<16x2xf32> to vector<16x2xbf16>
      %c0_54 = arith.constant 0 : index
      %c0_55 = arith.constant 0 : index
      %74 = vector.load %arg18[%c0_54, %c0_55] : memref<16x2xbf16, #tpu.memory_space<vmem>>, vector<16x2xbf16>
      tpu.vector_store %arg18[%c0_54, %c0_55], %73 {strides = array<i32>} : memref<16x2xbf16, #tpu.memory_space<vmem>>, vector<16x2xbf16>,
    } else {
    }
    %c0 = arith.constant 0 : index
    %c0_1 = arith.constant 0 : index
    %c0_2 = arith.constant 0 : index
    %3 = vector.load %arg2[%c0, %c0_1, %c0_2] : memref<1x16x2xbf16, #tpu.memory_space<vmem>>, vector<1x16x2xbf16>
    %4 = vector.shape_cast %3 : vector<1x16x2xbf16> to vector<16x2xbf16>
    %c0_3 = arith.constant 0 : index
    %c0_4 = arith.constant 0 : index
    %5 = vector.load %arg5[%c0_3, %c0_4] : memref<2x2xbf16, #tpu.memory_space<vmem>>, vector<2x2xbf16>
    %cst = arith.constant dense<0.000000e+00> : vector<16x2xf32>
    %6 = tpu.matmul %4, %5, %cst {dimension_numbers = #tpu.dot_dimension_numbers<[1], [0], [0], [1], [0, 0, 1, 1], [], []>} : vector<16x2xbf16>, vector<2x2xbf16>, vector<16x2xf32> -> vector<16x2xf32>
    %c0_5 = arith.constant 0 : index
    %c0_6 = arith.constant 0 : index
    %7 = vector.load %arg6[%c0_5, %c0_6] : memref<1x2xf32, #tpu.memory_space<vmem>>, vector<1x2xf32>
    %8 = vector.broadcast %7 : vector<1x2xf32> to vector<16x2xf32>
    %9 = arith.addf %6, %8 : vector<16x2xf32>
    %10 = arith.truncf %9 : vector<16x2xf32> to vector<16x2xbf16>
    %c0_7 = arith.constant 0 : index
    %c0_8 = arith.constant 0 : index
    %11 = vector.load %arg17[%c0_7, %c0_8] : memref<16x2xbf16, #tpu.memory_space<vmem>>, vector<16x2xbf16>
    %cst_9 = arith.constant dense<0.000000e+00> : vector<16x16xf32>
    %12 = tpu.matmul %10, %11, %cst_9 {dimension_numbers = #tpu.dot_dimension_numbers<[1], [1], [0], [0], [0, 0, 1, 0], [], []>} : vector<16x2xbf16>, vector<16x2xbf16>, vector<16x16xf32> -> vector<16x16xf32>
    %cst_10 = arith.constant 0.707106769 : f32
    %13 = vector.broadcast %cst_10 : f32 to vector<16x16xf32>
    %14 = arith.mulf %12, %13 : vector<16x16xf32>
    %cst_11 = arith.constant dense<0xFF800000> : vector<16xf32>
    %15 = vector.multi_reduction <maximumf>, %14, %cst_11 [1] : vector<16x16xf32> to vector<16xf32>
    %16 = vector.shape_cast %15 : vector<16xf32> to vector<16x1xf32>
    %17 = vector.broadcast %16 : vector<16x1xf32> to vector<16x16xf32>
    %18 = arith.subf %14, %17 : vector<16x16xf32>
    %19 = math.exp %18 : vector<16x16xf32>
    %cst_12 = arith.constant dense<0.000000e+00> : vector<16xf32>
    %20 = vector.multi_reduction <add>, %19, %cst_12 [1] : vector<16x16xf32> to vector<16xf32>
    %21 = vector.shape_cast %20 : vector<16xf32> to vector<16x1xf32>
    %22 = tpu.reciprocal %21 {approx = true} : vector<16x1xf32> -> vector<16x1xf32>
    %23 = vector.broadcast %22 : vector<16x1xf32> to vector<16x16xf32>
    %24 = arith.mulf %19, %23 : vector<16x16xf32>
    %25 = arith.truncf %24 : vector<16x16xf32> to vector<16x16xbf16>
    %c0_13 = arith.constant 0 : index
    %c0_14 = arith.constant 0 : index
    %26 = vector.load %arg18[%c0_13, %c0_14] : memref<16x2xbf16, #tpu.memory_space<vmem>>, vector<16x2xbf16>
    %cst_15 = arith.constant dense<0.000000e+00> : vector<16x2xf32>
    %27 = tpu.matmul %25, %26, %cst_15 {dimension_numbers = #tpu.dot_dimension_numbers<[1], [0], [0], [1], [0, 0, 1, 1], [], []>} : vector<16x16xbf16>, vector<16x2xbf16>, vector<16x2xf32> -> vector<16x2xf32>
    %28 = arith.truncf %27 : vector<16x2xf32> to vector<16x2xbf16>
    %c0_16 = arith.constant 0 : index
    %c0_17 = arith.constant 0 : index
    %29 = vector.load %arg11[%c0_16, %c0_17] : memref<2x4xbf16, #tpu.memory_space<vmem>>, vector<2x4xbf16>
    %cst_18 = arith.constant dense<0.000000e+00> : vector<16x4xf32>
    %30 = tpu.matmul %28, %29, %cst_18 {dimension_numbers = #tpu.dot_dimension_numbers<[1], [0], [0], [1], [0, 0, 1, 1], [], []>} : vector<16x2xbf16>, vector<2x4xbf16>, vector<16x4xf32> -> vector<16x4xf32>
    %c0_19 = arith.constant 0 : index
    %c0_20 = arith.constant 0 : index
    %31 = vector.load %arg12[%c0_19, %c0_20] : memref<1x4xf32, #tpu.memory_space<vmem>>, vector<1x4xf32>
    %32 = vector.broadcast %31 : vector<1x4xf32> to vector<16x4xf32>
    %33 = arith.addf %30, %32 : vector<16x4xf32>
    %cst_21 = arith.constant 0.000000e+00 : f32
    %34 = vector.broadcast %cst_21 : f32 to vector<16x4xf32>
    %35 = arith.cmpf ogt, %33, %34 : vector<16x4xf32>
    %cst_22 = arith.constant 0.00999999977 : f32
    %36 = vector.broadcast %cst_22 : f32 to vector<16x4xf32>
    %37 = arith.mulf %36, %33 : vector<16x4xf32>
    %38 = arith.select %35, %33, %37 : vector<16x4xi1>, vector<16x4xf32>
    %c0_23 = arith.constant 0 : index
    %c0_24 = arith.constant 0 : index
    %c0_25 = arith.constant 0 : index
    %39 = vector.load %arg4[%c0_23, %c0_24, %c0_25] : memref<1x16x4xbf16, #tpu.memory_space<vmem>>, vector<1x16x4xbf16>
    %40 = vector.shape_cast %39 : vector<1x16x4xbf16> to vector<16x4xbf16>
    %c0_26 = arith.constant 0 : index
    %c0_27 = arith.constant 0 : index
    %41 = vector.load %arg13[%c0_26, %c0_27] : memref<4x4xbf16, #tpu.memory_space<vmem>>, vector<4x4xbf16>
    %cst_28 = arith.constant dense<0.000000e+00> : vector<16x4xf32>
    %42 = tpu.matmul %40, %41, %cst_28 {dimension_numbers = #tpu.dot_dimension_numbers<[1], [0], [0], [1], [0, 0, 1, 1], [], []>} : vector<16x4xbf16>, vector<4x4xbf16>, vector<16x4xf32> -> vector<16x4xf32>
    %43 = arith.truncf %38 : vector<16x4xf32> to vector<16x4xbf16>
    %c0_29 = arith.constant 0 : index
    %c0_30 = arith.constant 0 : index
    %44 = vector.load %arg14[%c0_29, %c0_30] : memref<4x4xbf16, #tpu.memory_space<vmem>>, vector<4x4xbf16>
    %cst_31 = arith.constant dense<0.000000e+00> : vector<16x4xf32>
    %45 = tpu.matmul %43, %44, %cst_31 {dimension_numbers = #tpu.dot_dimension_numbers<[1], [0], [0], [1], [0, 0, 1, 1], [], []>} : vector<16x4xbf16>, vector<4x4xbf16>, vector<16x4xf32> -> vector<16x4xf32>
    %46 = arith.addf %42, %45 : vector<16x4xf32>
    %c0_32 = arith.constant 0 : index
    %c0_33 = arith.constant 0 : index
    %47 = vector.load %arg15[%c0_32, %c0_33] : memref<1x4xf32, #tpu.memory_space<vmem>>, vector<1x4xf32>
    %48 = vector.broadcast %47 : vector<1x4xf32> to vector<16x4xf32>
    %49 = arith.addf %46, %48 : vector<16x4xf32>
    %cst_34 = arith.constant 0.000000e+00 : f32
    %50 = vector.broadcast %cst_34 : f32 to vector<16x4xf32>
    %51 = arith.cmpf ogt, %49, %50 : vector<16x4xf32>
    %cst_35 = arith.constant 0.00999999977 : f32
    %52 = vector.broadcast %cst_35 : f32 to vector<16x4xf32>
    %53 = arith.mulf %52, %49 : vector<16x4xf32>
    %54 = arith.select %51, %49, %53 : vector<16x4xi1>, vector<16x4xf32>
    %55 = arith.truncf %54 : vector<16x4xf32> to vector<16x4xbf16>
    %c0_36 = arith.constant 0 : index
    %c0_37 = arith.constant 0 : index
    %c0_38 = arith.constant 0 : index
    %56 = vector.load %arg16[%c0_36, %c0_37, %c0_38] : memref<1x16x4xbf16, #tpu.memory_space<vmem>>, vector<1x16x4xbf16>
    %57 = vector.shape_cast %56 : vector<1x16x4xbf16> to vector<16x4xbf16>
    %58 = vector.shape_cast %55 : vector<16x4xbf16> to vector<1x16x4xbf16>
    tpu.vector_store %arg16[%c0_36, %c0_37, %c0_38], %58 {strides = array<i32>} : memref<1x16x4xbf16, #tpu.memory_space<vmem>>, vector<1x16x4xbf16>,
    return
  }
  func.func @transform_0(%arg0: i32, %arg1: i32) -> (i32, i32, i32) {
    %c0_i32 = arith.constant 0 : i32
    %c0_i32_0 = arith.constant 0 : i32
    return %arg0, %arg1, %c0_i32 : i32, i32, i32
  }
  func.func @transform_1(%arg0: i32, %arg1: i32) -> (i32, i32, i32) {
    %c0_i32 = arith.constant 0 : i32
    %c0_i32_0 = arith.constant 0 : i32
    %c0_i32_1 = arith.constant 0 : i32
    return %arg0, %c0_i32, %c0_i32_0 : i32, i32, i32
  }
  func.func @transform_2(%arg0: i32, %arg1: i32) -> (i32, i32, i32) {
    %c0_i32 = arith.constant 0 : i32
    %c0_i32_0 = arith.constant 0 : i32
    return %arg0, %arg1, %c0_i32 : i32, i32, i32
  }
  func.func @transform_3(%arg0: i32, %arg1: i32) -> (i32, i32) {
    %c0_i32 = arith.constant 0 : i32
    %c0_i32_0 = arith.constant 0 : i32
    %c0_i32_1 = arith.constant 0 : i32
    return %c0_i32, %c0_i32_0 : i32, i32
  }
  func.func @transform_4(%arg0: i32, %arg1: i32) -> (i32, i32) {
    %c0_i32 = arith.constant 0 : i32
    %c0_i32_0 = arith.constant 0 : i32
    %c0_i32_1 = arith.constant 0 : i32
    return %c0_i32, %c0_i32_0 : i32, i32
  }
  func.func @transform_5(%arg0: i32, %arg1: i32) -> (i32, i32) {
    %c0_i32 = arith.constant 0 : i32
    %c0_i32_0 = arith.constant 0 : i32
    %c0_i32_1 = arith.constant 0 : i32
    return %c0_i32, %c0_i32_0 : i32, i32
  }
  func.func @transform_6(%arg0: i32, %arg1: i32) -> (i32, i32) {
    %c0_i32 = arith.constant 0 : i32
    %c0_i32_0 = arith.constant 0 : i32
    %c0_i32_1 = arith.constant 0 : i32
    return %c0_i32, %c0_i32_0 : i32, i32
  }
  func.func @transform_7(%arg0: i32, %arg1: i32) -> (i32, i32) {
    %c0_i32 = arith.constant 0 : i32
    %c0_i32_0 = arith.constant 0 : i32
    %c0_i32_1 = arith.constant 0 : i32
    return %c0_i32, %c0_i32_0 : i32, i32
  }
  func.func @transform_8(%arg0: i32, %arg1: i32) -> (i32, i32) {
    %c0_i32 = arith.constant 0 : i32
    %c0_i32_0 = arith.constant 0 : i32
    %c0_i32_1 = arith.constant 0 : i32
    return %c0_i32, %c0_i32_0 : i32, i32
  }
  func.func @transform_9(%arg0: i32, %arg1: i32) -> (i32, i32) {
    %c0_i32 = arith.constant 0 : i32
    %c0_i32_0 = arith.constant 0 : i32
    %c0_i32_1 = arith.constant 0 : i32
    return %c0_i32, %c0_i32_0 : i32, i32
  }
  func.func @transform_10(%arg0: i32, %arg1: i32) -> (i32, i32) {
    %c0_i32 = arith.constant 0 : i32
    %c0_i32_0 = arith.constant 0 : i32
    %c0_i32_1 = arith.constant 0 : i32
    return %c0_i32, %c0_i32_0 : i32, i32
  }
  func.func @transform_11(%arg0: i32, %arg1: i32) -> (i32, i32) {
    %c0_i32 = arith.constant 0 : i32
    %c0_i32_0 = arith.constant 0 : i32
    %c0_i32_1 = arith.constant 0 : i32
    return %c0_i32, %c0_i32_0 : i32, i32
  }
  func.func @transform_12(%arg0: i32, %arg1: i32) -> (i32, i32) {
    %c0_i32 = arith.constant 0 : i32
    %c0_i32_0 = arith.constant 0 : i32
    %c0_i32_1 = arith.constant 0 : i32
    return %c0_i32, %c0_i32_0 : i32, i32
  }
  func.func @transform_13(%arg0: i32, %arg1: i32) -> (i32, i32) {
    %c0_i32 = arith.constant 0 : i32
    %c0_i32_0 = arith.constant 0 : i32
    %c0_i32_1 = arith.constant 0 : i32
    return %c0_i32, %c0_i32_0 : i32, i32
  }
  func.func @transform_14(%arg0: i32, %arg1: i32) -> (i32, i32, i32) {
    %c0_i32 = arith.constant 0 : i32
    %c0_i32_0 = arith.constant 0 : i32
    return %arg0, %arg1, %c0_i32 : i32, i32, i32
  }
}

module attributes {stable_mosaic.version = 11 : i64} {
  func.func @_neg_pdist_kernel(%arg0: i32, %arg1: i32, %arg2: memref<1x16x4xbf16, #tpu.memory_space<vmem>>, %arg3: memref<1x16x4xbf16, #tpu.memory_space<vmem>>, %arg4: memref<1x16x16xbf16, #tpu.memory_space<vmem>>) attributes {dimension_semantics = [#tpu.dimension_semantics<parallel>, #tpu.dimension_semantics<parallel>], iteration_bounds = array<i64: 2, 1>, scalar_prefetch = 0 : i64, scratch_operands = 0 : i64, tpu.core_type = #tpu.core_type<tc>, window_params = [{transform_indices = @transform_0, window_bounds = array<i64: 1, 16, 4>}, {transform_indices = @transform_1, window_bounds = array<i64: 1, 16, 4>}, {transform_indices = @transform_2, window_bounds = array<i64: 1, 16, 16>}]} {
    %c0 = arith.constant 0 : index
    %c0_0 = arith.constant 0 : index
    %c0_1 = arith.constant 0 : index
    %0 = vector.load %arg2[%c0, %c0_0, %c0_1] : memref<1x16x4xbf16, #tpu.memory_space<vmem>>, vector<1x16x4xbf16>
    %1 = vector.shape_cast %0 : vector<1x16x4xbf16> to vector<16x4xbf16>
    %c0_2 = arith.constant 0 : index
    %c0_3 = arith.constant 0 : index
    %c0_4 = arith.constant 0 : index
    %2 = vector.load %arg3[%c0_2, %c0_3, %c0_4] : memref<1x16x4xbf16, #tpu.memory_space<vmem>>, vector<1x16x4xbf16>
    %3 = vector.shape_cast %2 : vector<1x16x4xbf16> to vector<16x4xbf16>
    %4 = arith.extf %1 : vector<16x4xbf16> to vector<16x4xf32>
    %5 = arith.extf %3 : vector<16x4xbf16> to vector<16x4xf32>
    %6 = arith.mulf %4, %4 : vector<16x4xf32>
    %cst = arith.constant dense<0.000000e+00> : vector<16xf32>
    %7 = vector.multi_reduction <add>, %6, %cst [1] : vector<16x4xf32> to vector<16xf32>
    %8 = vector.shape_cast %7 : vector<16xf32> to vector<16x1xf32>
    %9 = arith.mulf %5, %5 : vector<16x4xf32>
    %cst_5 = arith.constant dense<0.000000e+00> : vector<16xf32>
    %10 = vector.multi_reduction <add>, %9, %cst_5 [1] : vector<16x4xf32> to vector<16xf32>
    %11 = vector.shape_cast %10 : vector<16xf32> to vector<16x1xf32>
    %cst_6 = arith.constant dense<0.000000e+00> : vector<16x16xf32>
    %12 = tpu.matmul %1, %3, %cst_6 {dimension_numbers = #tpu.dot_dimension_numbers<[1], [1], [0], [0], [0, 0, 1, 0], [], []>} : vector<16x4xbf16>, vector<16x4xbf16>, vector<16x16xf32> -> vector<16x16xf32>
    %cst_7 = arith.constant 2.000000e+00 : f32
    %13 = vector.broadcast %cst_7 : f32 to vector<16x16xf32>
    %14 = arith.mulf %13, %12 : vector<16x16xf32>
    %15 = vector.broadcast %8 : vector<16x1xf32> to vector<16x16xf32>
    %16 = arith.subf %14, %15 : vector<16x16xf32>
    %17 = tpu.transpose %11, [1, 0] : vector<16x1xf32> -> vector<1x16xf32>
    %18 = vector.broadcast %17 : vector<1x16xf32> to vector<16x16xf32>
    %19 = arith.subf %16, %18 : vector<16x16xf32>
    %20 = arith.truncf %19 : vector<16x16xf32> to vector<16x16xbf16>
    %c0_8 = arith.constant 0 : index
    %c0_9 = arith.constant 0 : index
    %c0_10 = arith.constant 0 : index
    %21 = vector.load %arg4[%c0_8, %c0_9, %c0_10] : memref<1x16x16xbf16, #tpu.memory_space<vmem>>, vector<1x16x16xbf16>
    %22 = vector.shape_cast %21 : vector<1x16x16xbf16> to vector<16x16xbf16>
    %23 = vector.shape_cast %20 : vector<16x16xbf16> to vector<1x16x16xbf16>
    tpu.vector_store %arg4[%c0_8, %c0_9, %c0_10], %23 {strides = array<i32>} : memref<1x16x16xbf16, #tpu.memory_space<vmem>>, vector<1x16x16xbf16>,
    return
  }
  func.func @transform_0(%arg0: i32, %arg1: i32) -> (i32, i32, i32) {
    %c0_i32 = arith.constant 0 : i32
    %c0_i32_0 = arith.constant 0 : i32
    return %arg0, %arg1, %c0_i32 : i32, i32, i32
  }
  func.func @transform_1(%arg0: i32, %arg1: i32) -> (i32, i32, i32) {
    %c0_i32 = arith.constant 0 : i32
    %c0_i32_0 = arith.constant 0 : i32
    %c0_i32_1 = arith.constant 0 : i32
    return %arg0, %c0_i32, %c0_i32_0 : i32, i32, i32
  }
  func.func @transform_2(%arg0: i32, %arg1: i32) -> (i32, i32, i32) {
    %c0_i32 = arith.constant 0 : i32
    %c0_i32_0 = arith.constant 0 : i32
    return %arg0, %arg1, %c0_i32 : i32, i32, i32
  }
}

module attributes {stable_mosaic.version = 11 : i64} {
  func.func @_local_graph_kernel(%arg0: i32, %arg1: memref<32x4xbf16, #tpu.memory_space<vmem>>, %arg2: memref<4x32x4xbf16, #tpu.memory_space<vmem>>, %arg3: memref<4x8xbf16, #tpu.memory_space<vmem>>, %arg4: memref<4x8xbf16, #tpu.memory_space<vmem>>, %arg5: memref<1x8xf32, #tpu.memory_space<vmem>>, %arg6: memref<1x8xf32, #tpu.memory_space<vmem>>, %arg7: memref<32x8xbf16, #tpu.memory_space<vmem>>) attributes {dimension_semantics = [#tpu.dimension_semantics<parallel>], iteration_bounds = array<i64: 1>, scalar_prefetch = 0 : i64, scratch_operands = 0 : i64, tpu.core_type = #tpu.core_type<tc>, window_params = [{transform_indices = @transform_0, window_bounds = array<i64: 32, 4>}, {transform_indices = @transform_1, window_bounds = array<i64: 4, 32, 4>}, {pipeline_mode = #tpu.pipeline_mode<synchronous>, transform_indices = @transform_2, window_bounds = array<i64: 4, 8>}, {pipeline_mode = #tpu.pipeline_mode<synchronous>, transform_indices = @transform_3, window_bounds = array<i64: 4, 8>}, {pipeline_mode = #tpu.pipeline_mode<synchronous>, transform_indices = @transform_4, window_bounds = array<i64: 1, 8>}, {pipeline_mode = #tpu.pipeline_mode<synchronous>, transform_indices = @transform_5, window_bounds = array<i64: 1, 8>}, {transform_indices = @transform_6, window_bounds = array<i64: 32, 8>}]} {
    %c0 = arith.constant 0 : index
    %c0_0 = arith.constant 0 : index
    %0 = vector.load %arg1[%c0, %c0_0] : memref<32x4xbf16, #tpu.memory_space<vmem>>, vector<32x4xbf16>
    %c0_1 = arith.constant 0 : index
    %c0_2 = arith.constant 0 : index
    %1 = vector.load %arg3[%c0_1, %c0_2] : memref<4x8xbf16, #tpu.memory_space<vmem>>, vector<4x8xbf16>
    %cst = arith.constant dense<0.000000e+00> : vector<32x8xf32>
    %2 = tpu.matmul %0, %1, %cst {dimension_numbers = #tpu.dot_dimension_numbers<[1], [0], [0], [1], [0, 0, 1, 1], [], []>} : vector<32x4xbf16>, vector<4x8xbf16>, vector<32x8xf32> -> vector<32x8xf32>
    %3 = arith.extf %0 : vector<32x4xbf16> to vector<32x4xf32>
    %c0_3 = arith.constant 0 : index
    %c0_4 = arith.constant 0 : index
    %4 = vector.load %arg5[%c0_3, %c0_4] : memref<1x8xf32, #tpu.memory_space<vmem>>, vector<1x8xf32>
    %c0_5 = arith.constant 0 : index
    %c0_6 = arith.constant 0 : index
    %c0_7 = arith.constant 0 : index
    %5 = vector.load %arg2[%c0_5, %c0_6, %c0_7] : memref<4x32x4xbf16, #tpu.memory_space<vmem>>, vector<1x32x4xbf16>
    %6 = vector.shape_cast %5 : vector<1x32x4xbf16> to vector<32x4xbf16>
    %c0_8 = arith.constant 0 : index
    %c0_9 = arith.constant 0 : index
    %7 = vector.load %arg4[%c0_8, %c0_9] : memref<4x8xbf16, #tpu.memory_space<vmem>>, vector<4x8xbf16>
    %cst_10 = arith.constant dense<0.000000e+00> : vector<32x8xf32>
    %8 = tpu.matmul %6, %7, %cst_10 {dimension_numbers = #tpu.dot_dimension_numbers<[1], [0], [0], [1], [0, 0, 1, 1], [], []>} : vector<32x4xbf16>, vector<4x8xbf16>, vector<32x8xf32> -> vector<32x8xf32>
    %9 = arith.extf %6 : vector<32x4xbf16> to vector<32x4xf32>
    %10 = arith.subf %9, %3 : vector<32x4xf32>
    %11 = arith.mulf %10, %10 : vector<32x4xf32>
    %cst_11 = arith.constant dense<0.000000e+00> : vector<32xf32>
    %12 = vector.multi_reduction <add>, %11, %cst_11 [1] : vector<32x4xf32> to vector<32xf32>
    %13 = vector.shape_cast %12 : vector<32xf32> to vector<32x1xf32>
    %14 = math.sqrt %13 : vector<32x1xf32>
    %15 = vector.broadcast %14 : vector<32x1xf32> to vector<32x8xf32>
    %16 = vector.broadcast %4 : vector<1x8xf32> to vector<32x8xf32>
    %17 = arith.mulf %15, %16 : vector<32x8xf32>
    %18 = arith.addf %8, %17 : vector<32x8xf32>
    %c1 = arith.constant 1 : index
    %c0_12 = arith.constant 0 : index
    %c0_13 = arith.constant 0 : index
    %19 = vector.load %arg2[%c1, %c0_12, %c0_13] : memref<4x32x4xbf16, #tpu.memory_space<vmem>>, vector<1x32x4xbf16>
    %20 = vector.shape_cast %19 : vector<1x32x4xbf16> to vector<32x4xbf16>
    %c0_14 = arith.constant 0 : index
    %c0_15 = arith.constant 0 : index
    %21 = vector.load %arg4[%c0_14, %c0_15] : memref<4x8xbf16, #tpu.memory_space<vmem>>, vector<4x8xbf16>
    %cst_16 = arith.constant dense<0.000000e+00> : vector<32x8xf32>
    %22 = tpu.matmul %20, %21, %cst_16 {dimension_numbers = #tpu.dot_dimension_numbers<[1], [0], [0], [1], [0, 0, 1, 1], [], []>} : vector<32x4xbf16>, vector<4x8xbf16>, vector<32x8xf32> -> vector<32x8xf32>
    %23 = arith.extf %20 : vector<32x4xbf16> to vector<32x4xf32>
    %24 = arith.subf %23, %3 : vector<32x4xf32>
    %25 = arith.mulf %24, %24 : vector<32x4xf32>
    %cst_17 = arith.constant dense<0.000000e+00> : vector<32xf32>
    %26 = vector.multi_reduction <add>, %25, %cst_17 [1] : vector<32x4xf32> to vector<32xf32>
    %27 = vector.shape_cast %26 : vector<32xf32> to vector<32x1xf32>
    %28 = math.sqrt %27 : vector<32x1xf32>
    %29 = vector.broadcast %28 : vector<32x1xf32> to vector<32x8xf32>
    %30 = vector.broadcast %4 : vector<1x8xf32> to vector<32x8xf32>
    %31 = arith.mulf %29, %30 : vector<32x8xf32>
    %32 = arith.addf %22, %31 : vector<32x8xf32>
    %33 = arith.maximumf %18, %32 : vector<32x8xf32>
    %c2 = arith.constant 2 : index
    %c0_18 = arith.constant 0 : index
    %c0_19 = arith.constant 0 : index
    %34 = vector.load %arg2[%c2, %c0_18, %c0_19] : memref<4x32x4xbf16, #tpu.memory_space<vmem>>, vector<1x32x4xbf16>
    %35 = vector.shape_cast %34 : vector<1x32x4xbf16> to vector<32x4xbf16>
    %c0_20 = arith.constant 0 : index
    %c0_21 = arith.constant 0 : index
    %36 = vector.load %arg4[%c0_20, %c0_21] : memref<4x8xbf16, #tpu.memory_space<vmem>>, vector<4x8xbf16>
    %cst_22 = arith.constant dense<0.000000e+00> : vector<32x8xf32>
    %37 = tpu.matmul %35, %36, %cst_22 {dimension_numbers = #tpu.dot_dimension_numbers<[1], [0], [0], [1], [0, 0, 1, 1], [], []>} : vector<32x4xbf16>, vector<4x8xbf16>, vector<32x8xf32> -> vector<32x8xf32>
    %38 = arith.extf %35 : vector<32x4xbf16> to vector<32x4xf32>
    %39 = arith.subf %38, %3 : vector<32x4xf32>
    %40 = arith.mulf %39, %39 : vector<32x4xf32>
    %cst_23 = arith.constant dense<0.000000e+00> : vector<32xf32>
    %41 = vector.multi_reduction <add>, %40, %cst_23 [1] : vector<32x4xf32> to vector<32xf32>
    %42 = vector.shape_cast %41 : vector<32xf32> to vector<32x1xf32>
    %43 = math.sqrt %42 : vector<32x1xf32>
    %44 = vector.broadcast %43 : vector<32x1xf32> to vector<32x8xf32>
    %45 = vector.broadcast %4 : vector<1x8xf32> to vector<32x8xf32>
    %46 = arith.mulf %44, %45 : vector<32x8xf32>
    %47 = arith.addf %37, %46 : vector<32x8xf32>
    %48 = arith.maximumf %33, %47 : vector<32x8xf32>
    %c3 = arith.constant 3 : index
    %c0_24 = arith.constant 0 : index
    %c0_25 = arith.constant 0 : index
    %49 = vector.load %arg2[%c3, %c0_24, %c0_25] : memref<4x32x4xbf16, #tpu.memory_space<vmem>>, vector<1x32x4xbf16>
    %50 = vector.shape_cast %49 : vector<1x32x4xbf16> to vector<32x4xbf16>
    %c0_26 = arith.constant 0 : index
    %c0_27 = arith.constant 0 : index
    %51 = vector.load %arg4[%c0_26, %c0_27] : memref<4x8xbf16, #tpu.memory_space<vmem>>, vector<4x8xbf16>
    %cst_28 = arith.constant dense<0.000000e+00> : vector<32x8xf32>
    %52 = tpu.matmul %50, %51, %cst_28 {dimension_numbers = #tpu.dot_dimension_numbers<[1], [0], [0], [1], [0, 0, 1, 1], [], []>} : vector<32x4xbf16>, vector<4x8xbf16>, vector<32x8xf32> -> vector<32x8xf32>
    %53 = arith.extf %50 : vector<32x4xbf16> to vector<32x4xf32>
    %54 = arith.subf %53, %3 : vector<32x4xf32>
    %55 = arith.mulf %54, %54 : vector<32x4xf32>
    %cst_29 = arith.constant dense<0.000000e+00> : vector<32xf32>
    %56 = vector.multi_reduction <add>, %55, %cst_29 [1] : vector<32x4xf32> to vector<32xf32>
    %57 = vector.shape_cast %56 : vector<32xf32> to vector<32x1xf32>
    %58 = math.sqrt %57 : vector<32x1xf32>
    %59 = vector.broadcast %58 : vector<32x1xf32> to vector<32x8xf32>
    %60 = vector.broadcast %4 : vector<1x8xf32> to vector<32x8xf32>
    %61 = arith.mulf %59, %60 : vector<32x8xf32>
    %62 = arith.addf %52, %61 : vector<32x8xf32>
    %63 = arith.maximumf %48, %62 : vector<32x8xf32>
    %64 = arith.addf %2, %63 : vector<32x8xf32>
    %c0_30 = arith.constant 0 : index
    %c0_31 = arith.constant 0 : index
    %65 = vector.load %arg6[%c0_30, %c0_31] : memref<1x8xf32, #tpu.memory_space<vmem>>, vector<1x8xf32>
    %66 = vector.broadcast %65 : vector<1x8xf32> to vector<32x8xf32>
    %67 = arith.addf %64, %66 : vector<32x8xf32>
    %cst_32 = arith.constant 0.000000e+00 : f32
    %68 = vector.broadcast %cst_32 : f32 to vector<32x8xf32>
    %69 = arith.cmpf ogt, %67, %68 : vector<32x8xf32>
    %cst_33 = arith.constant 0.00999999977 : f32
    %70 = vector.broadcast %cst_33 : f32 to vector<32x8xf32>
    %71 = arith.mulf %70, %67 : vector<32x8xf32>
    %72 = arith.select %69, %67, %71 : vector<32x8xi1>, vector<32x8xf32>
    %73 = arith.truncf %72 : vector<32x8xf32> to vector<32x8xbf16>
    %c0_34 = arith.constant 0 : index
    %c0_35 = arith.constant 0 : index
    %74 = vector.load %arg7[%c0_34, %c0_35] : memref<32x8xbf16, #tpu.memory_space<vmem>>, vector<32x8xbf16>
    tpu.vector_store %arg7[%c0_34, %c0_35], %73 {strides = array<i32>} : memref<32x8xbf16, #tpu.memory_space<vmem>>, vector<32x8xbf16>,
    return
  }
  func.func @transform_0(%arg0: i32) -> (i32, i32) {
    %c0_i32 = arith.constant 0 : i32
    %c0_i32_0 = arith.constant 0 : i32
    return %arg0, %c0_i32 : i32, i32
  }
  func.func @transform_1(%arg0: i32) -> (i32, i32, i32) {
    %c0_i32 = arith.constant 0 : i32
    %c0_i32_0 = arith.constant 0 : i32
    %c0_i32_1 = arith.constant 0 : i32
    return %c0_i32, %arg0, %c0_i32_0 : i32, i32, i32
  }
  func.func @transform_2(%arg0: i32) -> (i32, i32) {
    %c0_i32 = arith.constant 0 : i32
    %c0_i32_0 = arith.constant 0 : i32
    %c0_i32_1 = arith.constant 0 : i32
    return %c0_i32, %c0_i32_0 : i32, i32
  }
  func.func @transform_3(%arg0: i32) -> (i32, i32) {
    %c0_i32 = arith.constant 0 : i32
    %c0_i32_0 = arith.constant 0 : i32
    %c0_i32_1 = arith.constant 0 : i32
    return %c0_i32, %c0_i32_0 : i32, i32
  }
  func.func @transform_4(%arg0: i32) -> (i32, i32) {
    %c0_i32 = arith.constant 0 : i32
    %c0_i32_0 = arith.constant 0 : i32
    %c0_i32_1 = arith.constant 0 : i32
    return %c0_i32, %c0_i32_0 : i32, i32
  }
  func.func @transform_5(%arg0: i32) -> (i32, i32) {
    %c0_i32 = arith.constant 0 : i32
    %c0_i32_0 = arith.constant 0 : i32
    %c0_i32_1 = arith.constant 0 : i32
    return %c0_i32, %c0_i32_0 : i32, i32
  }
  func.func @transform_6(%arg0: i32) -> (i32, i32) {
    %c0_i32 = arith.constant 0 : i32
    %c0_i32_0 = arith.constant 0 : i32
    return %arg0, %c0_i32 : i32, i32
  }
}

module attributes {stable_mosaic.version = 11 : i64} {
  func.func @_neg_pdist_kernel(%arg0: i32, %arg1: i32, %arg2: memref<1x16x8xbf16, #tpu.memory_space<vmem>>, %arg3: memref<1x16x8xbf16, #tpu.memory_space<vmem>>, %arg4: memref<1x16x16xbf16, #tpu.memory_space<vmem>>) attributes {dimension_semantics = [#tpu.dimension_semantics<parallel>, #tpu.dimension_semantics<parallel>], iteration_bounds = array<i64: 2, 1>, scalar_prefetch = 0 : i64, scratch_operands = 0 : i64, tpu.core_type = #tpu.core_type<tc>, window_params = [{transform_indices = @transform_0, window_bounds = array<i64: 1, 16, 8>}, {transform_indices = @transform_1, window_bounds = array<i64: 1, 16, 8>}, {transform_indices = @transform_2, window_bounds = array<i64: 1, 16, 16>}]} {
    %c0 = arith.constant 0 : index
    %c0_0 = arith.constant 0 : index
    %c0_1 = arith.constant 0 : index
    %0 = vector.load %arg2[%c0, %c0_0, %c0_1] : memref<1x16x8xbf16, #tpu.memory_space<vmem>>, vector<1x16x8xbf16>
    %1 = vector.shape_cast %0 : vector<1x16x8xbf16> to vector<16x8xbf16>
    %c0_2 = arith.constant 0 : index
    %c0_3 = arith.constant 0 : index
    %c0_4 = arith.constant 0 : index
    %2 = vector.load %arg3[%c0_2, %c0_3, %c0_4] : memref<1x16x8xbf16, #tpu.memory_space<vmem>>, vector<1x16x8xbf16>
    %3 = vector.shape_cast %2 : vector<1x16x8xbf16> to vector<16x8xbf16>
    %4 = arith.extf %1 : vector<16x8xbf16> to vector<16x8xf32>
    %5 = arith.extf %3 : vector<16x8xbf16> to vector<16x8xf32>
    %6 = arith.mulf %4, %4 : vector<16x8xf32>
    %cst = arith.constant dense<0.000000e+00> : vector<16xf32>
    %7 = vector.multi_reduction <add>, %6, %cst [1] : vector<16x8xf32> to vector<16xf32>
    %8 = vector.shape_cast %7 : vector<16xf32> to vector<16x1xf32>
    %9 = arith.mulf %5, %5 : vector<16x8xf32>
    %cst_5 = arith.constant dense<0.000000e+00> : vector<16xf32>
    %10 = vector.multi_reduction <add>, %9, %cst_5 [1] : vector<16x8xf32> to vector<16xf32>
    %11 = vector.shape_cast %10 : vector<16xf32> to vector<16x1xf32>
    %cst_6 = arith.constant dense<0.000000e+00> : vector<16x16xf32>
    %12 = tpu.matmul %1, %3, %cst_6 {dimension_numbers = #tpu.dot_dimension_numbers<[1], [1], [0], [0], [0, 0, 1, 0], [], []>} : vector<16x8xbf16>, vector<16x8xbf16>, vector<16x16xf32> -> vector<16x16xf32>
    %cst_7 = arith.constant 2.000000e+00 : f32
    %13 = vector.broadcast %cst_7 : f32 to vector<16x16xf32>
    %14 = arith.mulf %13, %12 : vector<16x16xf32>
    %15 = vector.broadcast %8 : vector<16x1xf32> to vector<16x16xf32>
    %16 = arith.subf %14, %15 : vector<16x16xf32>
    %17 = tpu.transpose %11, [1, 0] : vector<16x1xf32> -> vector<1x16xf32>
    %18 = vector.broadcast %17 : vector<1x16xf32> to vector<16x16xf32>
    %19 = arith.subf %16, %18 : vector<16x16xf32>
    %20 = arith.truncf %19 : vector<16x16xf32> to vector<16x16xbf16>
    %c0_8 = arith.constant 0 : index
    %c0_9 = arith.constant 0 : index
    %c0_10 = arith.constant 0 : index
    %21 = vector.load %arg4[%c0_8, %c0_9, %c0_10] : memref<1x16x16xbf16, #tpu.memory_space<vmem>>, vector<1x16x16xbf16>
    %22 = vector.shape_cast %21 : vector<1x16x16xbf16> to vector<16x16xbf16>
    %23 = vector.shape_cast %20 : vector<16x16xbf16> to vector<1x16x16xbf16>
    tpu.vector_store %arg4[%c0_8, %c0_9, %c0_10], %23 {strides = array<i32>} : memref<1x16x16xbf16, #tpu.memory_space<vmem>>, vector<1x16x16xbf16>,
    return
  }
  func.func @transform_0(%arg0: i32, %arg1: i32) -> (i32, i32, i32) {
    %c0_i32 = arith.constant 0 : i32
    %c0_i32_0 = arith.constant 0 : i32
    return %arg0, %arg1, %c0_i32 : i32, i32, i32
  }
  func.func @transform_1(%arg0: i32, %arg1: i32) -> (i32, i32, i32) {
    %c0_i32 = arith.constant 0 : i32
    %c0_i32_0 = arith.constant 0 : i32
    %c0_i32_1 = arith.constant 0 : i32
    return %arg0, %c0_i32, %c0_i32_0 : i32, i32, i32
  }
  func.func @transform_2(%arg0: i32, %arg1: i32) -> (i32, i32, i32) {
    %c0_i32 = arith.constant 0 : i32
    %c0_i32_0 = arith.constant 0 : i32
    return %arg0, %arg1, %c0_i32 : i32, i32, i32
  }
}

module attributes {stable_mosaic.version = 11 : i64} {
  func.func @_inter_full_kernel(%arg0: i32, %arg1: i32, %arg2: memref<1x16x4xbf16, #tpu.memory_space<vmem>>, %arg3: memref<1x16x4xbf16, #tpu.memory_space<vmem>>, %arg4: memref<1x16x8xbf16, #tpu.memory_space<vmem>>, %arg5: memref<4x4xbf16, #tpu.memory_space<vmem>>, %arg6: memref<1x4xf32, #tpu.memory_space<vmem>>, %arg7: memref<4x4xbf16, #tpu.memory_space<vmem>>, %arg8: memref<1x4xf32, #tpu.memory_space<vmem>>, %arg9: memref<4x4xbf16, #tpu.memory_space<vmem>>, %arg10: memref<1x4xf32, #tpu.memory_space<vmem>>, %arg11: memref<4x8xbf16, #tpu.memory_space<vmem>>, %arg12: memref<1x8xf32, #tpu.memory_space<vmem>>, %arg13: memref<8x8xbf16, #tpu.memory_space<vmem>>, %arg14: memref<8x8xbf16, #tpu.memory_space<vmem>>, %arg15: memref<1x8xf32, #tpu.memory_space<vmem>>, %arg16: memref<1x16x8xbf16, #tpu.memory_space<vmem>>, %arg17: memref<16x4xbf16, #tpu.memory_space<vmem>>, %arg18: memref<16x4xbf16, #tpu.memory_space<vmem>>) attributes {dimension_semantics = [#tpu.dimension_semantics<parallel>, #tpu.dimension_semantics<arbitrary>], iteration_bounds = array<i64: 2, 1>, scalar_prefetch = 0 : i64, scratch_operands = 2 : i64, tpu.core_type = #tpu.core_type<tc>, window_params = [{transform_indices = @transform_0, window_bounds = array<i64: 1, 16, 4>}, {transform_indices = @transform_1, window_bounds = array<i64: 1, 16, 4>}, {transform_indices = @transform_2, window_bounds = array<i64: 1, 16, 8>}, {pipeline_mode = #tpu.pipeline_mode<synchronous>, transform_indices = @transform_3, window_bounds = array<i64: 4, 4>}, {pipeline_mode = #tpu.pipeline_mode<synchronous>, transform_indices = @transform_4, window_bounds = array<i64: 1, 4>}, {pipeline_mode = #tpu.pipeline_mode<synchronous>, transform_indices = @transform_5, window_bounds = array<i64: 4, 4>}, {pipeline_mode = #tpu.pipeline_mode<synchronous>, transform_indices = @transform_6, window_bounds = array<i64: 1, 4>}, {pipeline_mode = #tpu.pipeline_mode<synchronous>, transform_indices = @transform_7, window_bounds = array<i64: 4, 4>}, {pipeline_mode = #tpu.pipeline_mode<synchronous>, transform_indices = @transform_8, window_bounds = array<i64: 1, 4>}, {pipeline_mode = #tpu.pipeline_mode<synchronous>, transform_indices = @transform_9, window_bounds = array<i64: 4, 8>}, {pipeline_mode = #tpu.pipeline_mode<synchronous>, transform_indices = @transform_10, window_bounds = array<i64: 1, 8>}, {pipeline_mode = #tpu.pipeline_mode<synchronous>, transform_indices = @transform_11, window_bounds = array<i64: 8, 8>}, {pipeline_mode = #tpu.pipeline_mode<synchronous>, transform_indices = @transform_12, window_bounds = array<i64: 8, 8>}, {pipeline_mode = #tpu.pipeline_mode<synchronous>, transform_indices = @transform_13, window_bounds = array<i64: 1, 8>}, {transform_indices = @transform_14, window_bounds = array<i64: 1, 16, 8>}]} {
    %c0_i32 = arith.constant 0 : i32
    %0 = arith.cmpi eq, %arg1, %c0_i32 : i32
    %1 = arith.extui %0 : i1 to i32
    %c0_i32_0 = arith.constant 0 : i32
    %2 = arith.cmpi ne, %1, %c0_i32_0 : i32
    scf.if %2 {
      %c0_39 = arith.constant 0 : index
      %c0_40 = arith.constant 0 : index
      %c0_41 = arith.constant 0 : index
      %59 = vector.load %arg3[%c0_39, %c0_40, %c0_41] : memref<1x16x4xbf16, #tpu.memory_space<vmem>>, vector<1x16x4xbf16>
      %60 = vector.shape_cast %59 : vector<1x16x4xbf16> to vector<16x4xbf16>
      %c0_42 = arith.constant 0 : index
      %c0_43 = arith.constant 0 : index
      %61 = vector.load %arg7[%c0_42, %c0_43] : memref<4x4xbf16, #tpu.memory_space<vmem>>, vector<4x4xbf16>
      %cst_44 = arith.constant dense<0.000000e+00> : vector<16x4xf32>
      %62 = tpu.matmul %60, %61, %cst_44 {dimension_numbers = #tpu.dot_dimension_numbers<[1], [0], [0], [1], [0, 0, 1, 1], [], []>} : vector<16x4xbf16>, vector<4x4xbf16>, vector<16x4xf32> -> vector<16x4xf32>
      %c0_45 = arith.constant 0 : index
      %c0_46 = arith.constant 0 : index
      %63 = vector.load %arg8[%c0_45, %c0_46] : memref<1x4xf32, #tpu.memory_space<vmem>>, vector<1x4xf32>
      %64 = vector.broadcast %63 : vector<1x4xf32> to vector<16x4xf32>
      %65 = arith.addf %62, %64 : vector<16x4xf32>
      %c0_47 = arith.constant 0 : index
      %c0_48 = arith.constant 0 : index
      %66 = vector.load %arg9[%c0_47, %c0_48] : memref<4x4xbf16, #tpu.memory_space<vmem>>, vector<4x4xbf16>
      %cst_49 = arith.constant dense<0.000000e+00> : vector<16x4xf32>
      %67 = tpu.matmul %60, %66, %cst_49 {dimension_numbers = #tpu.dot_dimension_numbers<[1], [0], [0], [1], [0, 0, 1, 1], [], []>} : vector<16x4xbf16>, vector<4x4xbf16>, vector<16x4xf32> -> vector<16x4xf32>
      %c0_50 = arith.constant 0 : index
      %c0_51 = arith.constant 0 : index
      %68 = vector.load %arg10[%c0_50, %c0_51] : memref<1x4xf32, #tpu.memory_space<vmem>>, vector<1x4xf32>
      %69 = vector.broadcast %68 : vector<1x4xf32> to vector<16x4xf32>
      %70 = arith.addf %67, %69 : vector<16x4xf32>
      %71 = arith.truncf %65 : vector<16x4xf32> to vector<16x4xbf16>
      %c0_52 = arith.constant 0 : index
      %c0_53 = arith.constant 0 : index
      %72 = vector.load %arg17[%c0_52, %c0_53] : memref<16x4xbf16, #tpu.memory_space<vmem>>, vector<16x4xbf16>
      tpu.vector_store %arg17[%c0_52, %c0_53], %71 {strides = array<i32>} : memref<16x4xbf16, #tpu.memory_space<vmem>>, vector<16x4xbf16>,
      %73 = arith.truncf %70 : vector<16x4xf32> to vector<16x4xbf16>
      %c0_54 = arith.constant 0 : index
      %c0_55 = arith.constant 0 : index
      %74 = vector.load %arg18[%c0_54, %c0_55] : memref<16x4xbf16, #tpu.memory_space<vmem>>, vector<16x4xbf16>
      tpu.vector_store %arg18[%c0_54, %c0_55], %73 {strides = array<i32>} : memref<16x4xbf16, #tpu.memory_space<vmem>>, vector<16x4xbf16>,
    } else {
    }
    %c0 = arith.constant 0 : index
    %c0_1 = arith.constant 0 : index
    %c0_2 = arith.constant 0 : index
    %3 = vector.load %arg2[%c0, %c0_1, %c0_2] : memref<1x16x4xbf16, #tpu.memory_space<vmem>>, vector<1x16x4xbf16>
    %4 = vector.shape_cast %3 : vector<1x16x4xbf16> to vector<16x4xbf16>
    %c0_3 = arith.constant 0 : index
    %c0_4 = arith.constant 0 : index
    %5 = vector.load %arg5[%c0_3, %c0_4] : memref<4x4xbf16, #tpu.memory_space<vmem>>, vector<4x4xbf16>
    %cst = arith.constant dense<0.000000e+00> : vector<16x4xf32>
    %6 = tpu.matmul %4, %5, %cst {dimension_numbers = #tpu.dot_dimension_numbers<[1], [0], [0], [1], [0, 0, 1, 1], [], []>} : vector<16x4xbf16>, vector<4x4xbf16>, vector<16x4xf32> -> vector<16x4xf32>
    %c0_5 = arith.constant 0 : index
    %c0_6 = arith.constant 0 : index
    %7 = vector.load %arg6[%c0_5, %c0_6] : memref<1x4xf32, #tpu.memory_space<vmem>>, vector<1x4xf32>
    %8 = vector.broadcast %7 : vector<1x4xf32> to vector<16x4xf32>
    %9 = arith.addf %6, %8 : vector<16x4xf32>
    %10 = arith.truncf %9 : vector<16x4xf32> to vector<16x4xbf16>
    %c0_7 = arith.constant 0 : index
    %c0_8 = arith.constant 0 : index
    %11 = vector.load %arg17[%c0_7, %c0_8] : memref<16x4xbf16, #tpu.memory_space<vmem>>, vector<16x4xbf16>
    %cst_9 = arith.constant dense<0.000000e+00> : vector<16x16xf32>
    %12 = tpu.matmul %10, %11, %cst_9 {dimension_numbers = #tpu.dot_dimension_numbers<[1], [1], [0], [0], [0, 0, 1, 0], [], []>} : vector<16x4xbf16>, vector<16x4xbf16>, vector<16x16xf32> -> vector<16x16xf32>
    %cst_10 = arith.constant 5.000000e-01 : f32
    %13 = vector.broadcast %cst_10 : f32 to vector<16x16xf32>
    %14 = arith.mulf %12, %13 : vector<16x16xf32>
    %cst_11 = arith.constant dense<0xFF800000> : vector<16xf32>
    %15 = vector.multi_reduction <maximumf>, %14, %cst_11 [1] : vector<16x16xf32> to vector<16xf32>
    %16 = vector.shape_cast %15 : vector<16xf32> to vector<16x1xf32>
    %17 = vector.broadcast %16 : vector<16x1xf32> to vector<16x16xf32>
    %18 = arith.subf %14, %17 : vector<16x16xf32>
    %19 = math.exp %18 : vector<16x16xf32>
    %cst_12 = arith.constant dense<0.000000e+00> : vector<16xf32>
    %20 = vector.multi_reduction <add>, %19, %cst_12 [1] : vector<16x16xf32> to vector<16xf32>
    %21 = vector.shape_cast %20 : vector<16xf32> to vector<16x1xf32>
    %22 = tpu.reciprocal %21 {approx = true} : vector<16x1xf32> -> vector<16x1xf32>
    %23 = vector.broadcast %22 : vector<16x1xf32> to vector<16x16xf32>
    %24 = arith.mulf %19, %23 : vector<16x16xf32>
    %25 = arith.truncf %24 : vector<16x16xf32> to vector<16x16xbf16>
    %c0_13 = arith.constant 0 : index
    %c0_14 = arith.constant 0 : index
    %26 = vector.load %arg18[%c0_13, %c0_14] : memref<16x4xbf16, #tpu.memory_space<vmem>>, vector<16x4xbf16>
    %cst_15 = arith.constant dense<0.000000e+00> : vector<16x4xf32>
    %27 = tpu.matmul %25, %26, %cst_15 {dimension_numbers = #tpu.dot_dimension_numbers<[1], [0], [0], [1], [0, 0, 1, 1], [], []>} : vector<16x16xbf16>, vector<16x4xbf16>, vector<16x4xf32> -> vector<16x4xf32>
    %28 = arith.truncf %27 : vector<16x4xf32> to vector<16x4xbf16>
    %c0_16 = arith.constant 0 : index
    %c0_17 = arith.constant 0 : index
    %29 = vector.load %arg11[%c0_16, %c0_17] : memref<4x8xbf16, #tpu.memory_space<vmem>>, vector<4x8xbf16>
    %cst_18 = arith.constant dense<0.000000e+00> : vector<16x8xf32>
    %30 = tpu.matmul %28, %29, %cst_18 {dimension_numbers = #tpu.dot_dimension_numbers<[1], [0], [0], [1], [0, 0, 1, 1], [], []>} : vector<16x4xbf16>, vector<4x8xbf16>, vector<16x8xf32> -> vector<16x8xf32>
    %c0_19 = arith.constant 0 : index
    %c0_20 = arith.constant 0 : index
    %31 = vector.load %arg12[%c0_19, %c0_20] : memref<1x8xf32, #tpu.memory_space<vmem>>, vector<1x8xf32>
    %32 = vector.broadcast %31 : vector<1x8xf32> to vector<16x8xf32>
    %33 = arith.addf %30, %32 : vector<16x8xf32>
    %cst_21 = arith.constant 0.000000e+00 : f32
    %34 = vector.broadcast %cst_21 : f32 to vector<16x8xf32>
    %35 = arith.cmpf ogt, %33, %34 : vector<16x8xf32>
    %cst_22 = arith.constant 0.00999999977 : f32
    %36 = vector.broadcast %cst_22 : f32 to vector<16x8xf32>
    %37 = arith.mulf %36, %33 : vector<16x8xf32>
    %38 = arith.select %35, %33, %37 : vector<16x8xi1>, vector<16x8xf32>
    %c0_23 = arith.constant 0 : index
    %c0_24 = arith.constant 0 : index
    %c0_25 = arith.constant 0 : index
    %39 = vector.load %arg4[%c0_23, %c0_24, %c0_25] : memref<1x16x8xbf16, #tpu.memory_space<vmem>>, vector<1x16x8xbf16>
    %40 = vector.shape_cast %39 : vector<1x16x8xbf16> to vector<16x8xbf16>
    %c0_26 = arith.constant 0 : index
    %c0_27 = arith.constant 0 : index
    %41 = vector.load %arg13[%c0_26, %c0_27] : memref<8x8xbf16, #tpu.memory_space<vmem>>, vector<8x8xbf16>
    %cst_28 = arith.constant dense<0.000000e+00> : vector<16x8xf32>
    %42 = tpu.matmul %40, %41, %cst_28 {dimension_numbers = #tpu.dot_dimension_numbers<[1], [0], [0], [1], [0, 0, 1, 1], [], []>} : vector<16x8xbf16>, vector<8x8xbf16>, vector<16x8xf32> -> vector<16x8xf32>
    %43 = arith.truncf %38 : vector<16x8xf32> to vector<16x8xbf16>
    %c0_29 = arith.constant 0 : index
    %c0_30 = arith.constant 0 : index
    %44 = vector.load %arg14[%c0_29, %c0_30] : memref<8x8xbf16, #tpu.memory_space<vmem>>, vector<8x8xbf16>
    %cst_31 = arith.constant dense<0.000000e+00> : vector<16x8xf32>
    %45 = tpu.matmul %43, %44, %cst_31 {dimension_numbers = #tpu.dot_dimension_numbers<[1], [0], [0], [1], [0, 0, 1, 1], [], []>} : vector<16x8xbf16>, vector<8x8xbf16>, vector<16x8xf32> -> vector<16x8xf32>
    %46 = arith.addf %42, %45 : vector<16x8xf32>
    %c0_32 = arith.constant 0 : index
    %c0_33 = arith.constant 0 : index
    %47 = vector.load %arg15[%c0_32, %c0_33] : memref<1x8xf32, #tpu.memory_space<vmem>>, vector<1x8xf32>
    %48 = vector.broadcast %47 : vector<1x8xf32> to vector<16x8xf32>
    %49 = arith.addf %46, %48 : vector<16x8xf32>
    %cst_34 = arith.constant 0.000000e+00 : f32
    %50 = vector.broadcast %cst_34 : f32 to vector<16x8xf32>
    %51 = arith.cmpf ogt, %49, %50 : vector<16x8xf32>
    %cst_35 = arith.constant 0.00999999977 : f32
    %52 = vector.broadcast %cst_35 : f32 to vector<16x8xf32>
    %53 = arith.mulf %52, %49 : vector<16x8xf32>
    %54 = arith.select %51, %49, %53 : vector<16x8xi1>, vector<16x8xf32>
    %55 = arith.truncf %54 : vector<16x8xf32> to vector<16x8xbf16>
    %c0_36 = arith.constant 0 : index
    %c0_37 = arith.constant 0 : index
    %c0_38 = arith.constant 0 : index
    %56 = vector.load %arg16[%c0_36, %c0_37, %c0_38] : memref<1x16x8xbf16, #tpu.memory_space<vmem>>, vector<1x16x8xbf16>
    %57 = vector.shape_cast %56 : vector<1x16x8xbf16> to vector<16x8xbf16>
    %58 = vector.shape_cast %55 : vector<16x8xbf16> to vector<1x16x8xbf16>
    tpu.vector_store %arg16[%c0_36, %c0_37, %c0_38], %58 {strides = array<i32>} : memref<1x16x8xbf16, #tpu.memory_space<vmem>>, vector<1x16x8xbf16>,
    return
  }
  func.func @transform_0(%arg0: i32, %arg1: i32) -> (i32, i32, i32) {
    %c0_i32 = arith.constant 0 : i32
    %c0_i32_0 = arith.constant 0 : i32
    return %arg0, %arg1, %c0_i32 : i32, i32, i32
  }
  func.func @transform_1(%arg0: i32, %arg1: i32) -> (i32, i32, i32) {
    %c0_i32 = arith.constant 0 : i32
    %c0_i32_0 = arith.constant 0 : i32
    %c0_i32_1 = arith.constant 0 : i32
    return %arg0, %c0_i32, %c0_i32_0 : i32, i32, i32
  }
  func.func @transform_2(%arg0: i32, %arg1: i32) -> (i32, i32, i32) {
    %c0_i32 = arith.constant 0 : i32
    %c0_i32_0 = arith.constant 0 : i32
    return %arg0, %arg1, %c0_i32 : i32, i32, i32
  }
  func.func @transform_3(%arg0: i32, %arg1: i32) -> (i32, i32) {
    %c0_i32 = arith.constant 0 : i32
    %c0_i32_0 = arith.constant 0 : i32
    %c0_i32_1 = arith.constant 0 : i32
    return %c0_i32, %c0_i32_0 : i32, i32
  }
  func.func @transform_4(%arg0: i32, %arg1: i32) -> (i32, i32) {
    %c0_i32 = arith.constant 0 : i32
    %c0_i32_0 = arith.constant 0 : i32
    %c0_i32_1 = arith.constant 0 : i32
    return %c0_i32, %c0_i32_0 : i32, i32
  }
  func.func @transform_5(%arg0: i32, %arg1: i32) -> (i32, i32) {
    %c0_i32 = arith.constant 0 : i32
    %c0_i32_0 = arith.constant 0 : i32
    %c0_i32_1 = arith.constant 0 : i32
    return %c0_i32, %c0_i32_0 : i32, i32
  }
  func.func @transform_6(%arg0: i32, %arg1: i32) -> (i32, i32) {
    %c0_i32 = arith.constant 0 : i32
    %c0_i32_0 = arith.constant 0 : i32
    %c0_i32_1 = arith.constant 0 : i32
    return %c0_i32, %c0_i32_0 : i32, i32
  }
  func.func @transform_7(%arg0: i32, %arg1: i32) -> (i32, i32) {
    %c0_i32 = arith.constant 0 : i32
    %c0_i32_0 = arith.constant 0 : i32
    %c0_i32_1 = arith.constant 0 : i32
    return %c0_i32, %c0_i32_0 : i32, i32
  }
  func.func @transform_8(%arg0: i32, %arg1: i32) -> (i32, i32) {
    %c0_i32 = arith.constant 0 : i32
    %c0_i32_0 = arith.constant 0 : i32
    %c0_i32_1 = arith.constant 0 : i32
    return %c0_i32, %c0_i32_0 : i32, i32
  }
  func.func @transform_9(%arg0: i32, %arg1: i32) -> (i32, i32) {
    %c0_i32 = arith.constant 0 : i32
    %c0_i32_0 = arith.constant 0 : i32
    %c0_i32_1 = arith.constant 0 : i32
    return %c0_i32, %c0_i32_0 : i32, i32
  }
  func.func @transform_10(%arg0: i32, %arg1: i32) -> (i32, i32) {
    %c0_i32 = arith.constant 0 : i32
    %c0_i32_0 = arith.constant 0 : i32
    %c0_i32_1 = arith.constant 0 : i32
    return %c0_i32, %c0_i32_0 : i32, i32
  }
  func.func @transform_11(%arg0: i32, %arg1: i32) -> (i32, i32) {
    %c0_i32 = arith.constant 0 : i32
    %c0_i32_0 = arith.constant 0 : i32
    %c0_i32_1 = arith.constant 0 : i32
    return %c0_i32, %c0_i32_0 : i32, i32
  }
  func.func @transform_12(%arg0: i32, %arg1: i32) -> (i32, i32) {
    %c0_i32 = arith.constant 0 : i32
    %c0_i32_0 = arith.constant 0 : i32
    %c0_i32_1 = arith.constant 0 : i32
    return %c0_i32, %c0_i32_0 : i32, i32
  }
  func.func @transform_13(%arg0: i32, %arg1: i32) -> (i32, i32) {
    %c0_i32 = arith.constant 0 : i32
    %c0_i32_0 = arith.constant 0 : i32
    %c0_i32_1 = arith.constant 0 : i32
    return %c0_i32, %c0_i32_0 : i32, i32
  }
  func.func @transform_14(%arg0: i32, %arg1: i32) -> (i32, i32, i32) {
    %c0_i32 = arith.constant 0 : i32
    %c0_i32_0 = arith.constant 0 : i32
    return %arg0, %arg1, %c0_i32 : i32, i32, i32
  }
}

module attributes {stable_mosaic.version = 11 : i64} {
  func.func @_local_graph_kernel(%arg0: i32, %arg1: memref<32x8xbf16, #tpu.memory_space<vmem>>, %arg2: memref<4x32x8xbf16, #tpu.memory_space<vmem>>, %arg3: memref<8x16xbf16, #tpu.memory_space<vmem>>, %arg4: memref<8x16xbf16, #tpu.memory_space<vmem>>, %arg5: memref<1x16xf32, #tpu.memory_space<vmem>>, %arg6: memref<1x16xf32, #tpu.memory_space<vmem>>, %arg7: memref<32x16xbf16, #tpu.memory_space<vmem>>) attributes {dimension_semantics = [#tpu.dimension_semantics<parallel>], iteration_bounds = array<i64: 1>, scalar_prefetch = 0 : i64, scratch_operands = 0 : i64, tpu.core_type = #tpu.core_type<tc>, window_params = [{transform_indices = @transform_0, window_bounds = array<i64: 32, 8>}, {transform_indices = @transform_1, window_bounds = array<i64: 4, 32, 8>}, {pipeline_mode = #tpu.pipeline_mode<synchronous>, transform_indices = @transform_2, window_bounds = array<i64: 8, 16>}, {pipeline_mode = #tpu.pipeline_mode<synchronous>, transform_indices = @transform_3, window_bounds = array<i64: 8, 16>}, {pipeline_mode = #tpu.pipeline_mode<synchronous>, transform_indices = @transform_4, window_bounds = array<i64: 1, 16>}, {pipeline_mode = #tpu.pipeline_mode<synchronous>, transform_indices = @transform_5, window_bounds = array<i64: 1, 16>}, {transform_indices = @transform_6, window_bounds = array<i64: 32, 16>}]} {
    %c0 = arith.constant 0 : index
    %c0_0 = arith.constant 0 : index
    %0 = vector.load %arg1[%c0, %c0_0] : memref<32x8xbf16, #tpu.memory_space<vmem>>, vector<32x8xbf16>
    %c0_1 = arith.constant 0 : index
    %c0_2 = arith.constant 0 : index
    %1 = vector.load %arg3[%c0_1, %c0_2] : memref<8x16xbf16, #tpu.memory_space<vmem>>, vector<8x16xbf16>
    %cst = arith.constant dense<0.000000e+00> : vector<32x16xf32>
    %2 = tpu.matmul %0, %1, %cst {dimension_numbers = #tpu.dot_dimension_numbers<[1], [0], [0], [1], [0, 0, 1, 1], [], []>} : vector<32x8xbf16>, vector<8x16xbf16>, vector<32x16xf32> -> vector<32x16xf32>
    %3 = arith.extf %0 : vector<32x8xbf16> to vector<32x8xf32>
    %c0_3 = arith.constant 0 : index
    %c0_4 = arith.constant 0 : index
    %4 = vector.load %arg5[%c0_3, %c0_4] : memref<1x16xf32, #tpu.memory_space<vmem>>, vector<1x16xf32>
    %c0_5 = arith.constant 0 : index
    %c0_6 = arith.constant 0 : index
    %c0_7 = arith.constant 0 : index
    %5 = vector.load %arg2[%c0_5, %c0_6, %c0_7] : memref<4x32x8xbf16, #tpu.memory_space<vmem>>, vector<1x32x8xbf16>
    %6 = vector.shape_cast %5 : vector<1x32x8xbf16> to vector<32x8xbf16>
    %c0_8 = arith.constant 0 : index
    %c0_9 = arith.constant 0 : index
    %7 = vector.load %arg4[%c0_8, %c0_9] : memref<8x16xbf16, #tpu.memory_space<vmem>>, vector<8x16xbf16>
    %cst_10 = arith.constant dense<0.000000e+00> : vector<32x16xf32>
    %8 = tpu.matmul %6, %7, %cst_10 {dimension_numbers = #tpu.dot_dimension_numbers<[1], [0], [0], [1], [0, 0, 1, 1], [], []>} : vector<32x8xbf16>, vector<8x16xbf16>, vector<32x16xf32> -> vector<32x16xf32>
    %9 = arith.extf %6 : vector<32x8xbf16> to vector<32x8xf32>
    %10 = arith.subf %9, %3 : vector<32x8xf32>
    %11 = arith.mulf %10, %10 : vector<32x8xf32>
    %cst_11 = arith.constant dense<0.000000e+00> : vector<32xf32>
    %12 = vector.multi_reduction <add>, %11, %cst_11 [1] : vector<32x8xf32> to vector<32xf32>
    %13 = vector.shape_cast %12 : vector<32xf32> to vector<32x1xf32>
    %14 = math.sqrt %13 : vector<32x1xf32>
    %15 = vector.broadcast %14 : vector<32x1xf32> to vector<32x16xf32>
    %16 = vector.broadcast %4 : vector<1x16xf32> to vector<32x16xf32>
    %17 = arith.mulf %15, %16 : vector<32x16xf32>
    %18 = arith.addf %8, %17 : vector<32x16xf32>
    %c1 = arith.constant 1 : index
    %c0_12 = arith.constant 0 : index
    %c0_13 = arith.constant 0 : index
    %19 = vector.load %arg2[%c1, %c0_12, %c0_13] : memref<4x32x8xbf16, #tpu.memory_space<vmem>>, vector<1x32x8xbf16>
    %20 = vector.shape_cast %19 : vector<1x32x8xbf16> to vector<32x8xbf16>
    %c0_14 = arith.constant 0 : index
    %c0_15 = arith.constant 0 : index
    %21 = vector.load %arg4[%c0_14, %c0_15] : memref<8x16xbf16, #tpu.memory_space<vmem>>, vector<8x16xbf16>
    %cst_16 = arith.constant dense<0.000000e+00> : vector<32x16xf32>
    %22 = tpu.matmul %20, %21, %cst_16 {dimension_numbers = #tpu.dot_dimension_numbers<[1], [0], [0], [1], [0, 0, 1, 1], [], []>} : vector<32x8xbf16>, vector<8x16xbf16>, vector<32x16xf32> -> vector<32x16xf32>
    %23 = arith.extf %20 : vector<32x8xbf16> to vector<32x8xf32>
    %24 = arith.subf %23, %3 : vector<32x8xf32>
    %25 = arith.mulf %24, %24 : vector<32x8xf32>
    %cst_17 = arith.constant dense<0.000000e+00> : vector<32xf32>
    %26 = vector.multi_reduction <add>, %25, %cst_17 [1] : vector<32x8xf32> to vector<32xf32>
    %27 = vector.shape_cast %26 : vector<32xf32> to vector<32x1xf32>
    %28 = math.sqrt %27 : vector<32x1xf32>
    %29 = vector.broadcast %28 : vector<32x1xf32> to vector<32x16xf32>
    %30 = vector.broadcast %4 : vector<1x16xf32> to vector<32x16xf32>
    %31 = arith.mulf %29, %30 : vector<32x16xf32>
    %32 = arith.addf %22, %31 : vector<32x16xf32>
    %33 = arith.maximumf %18, %32 : vector<32x16xf32>
    %c2 = arith.constant 2 : index
    %c0_18 = arith.constant 0 : index
    %c0_19 = arith.constant 0 : index
    %34 = vector.load %arg2[%c2, %c0_18, %c0_19] : memref<4x32x8xbf16, #tpu.memory_space<vmem>>, vector<1x32x8xbf16>
    %35 = vector.shape_cast %34 : vector<1x32x8xbf16> to vector<32x8xbf16>
    %c0_20 = arith.constant 0 : index
    %c0_21 = arith.constant 0 : index
    %36 = vector.load %arg4[%c0_20, %c0_21] : memref<8x16xbf16, #tpu.memory_space<vmem>>, vector<8x16xbf16>
    %cst_22 = arith.constant dense<0.000000e+00> : vector<32x16xf32>
    %37 = tpu.matmul %35, %36, %cst_22 {dimension_numbers = #tpu.dot_dimension_numbers<[1], [0], [0], [1], [0, 0, 1, 1], [], []>} : vector<32x8xbf16>, vector<8x16xbf16>, vector<32x16xf32> -> vector<32x16xf32>
    %38 = arith.extf %35 : vector<32x8xbf16> to vector<32x8xf32>
    %39 = arith.subf %38, %3 : vector<32x8xf32>
    %40 = arith.mulf %39, %39 : vector<32x8xf32>
    %cst_23 = arith.constant dense<0.000000e+00> : vector<32xf32>
    %41 = vector.multi_reduction <add>, %40, %cst_23 [1] : vector<32x8xf32> to vector<32xf32>
    %42 = vector.shape_cast %41 : vector<32xf32> to vector<32x1xf32>
    %43 = math.sqrt %42 : vector<32x1xf32>
    %44 = vector.broadcast %43 : vector<32x1xf32> to vector<32x16xf32>
    %45 = vector.broadcast %4 : vector<1x16xf32> to vector<32x16xf32>
    %46 = arith.mulf %44, %45 : vector<32x16xf32>
    %47 = arith.addf %37, %46 : vector<32x16xf32>
    %48 = arith.maximumf %33, %47 : vector<32x16xf32>
    %c3 = arith.constant 3 : index
    %c0_24 = arith.constant 0 : index
    %c0_25 = arith.constant 0 : index
    %49 = vector.load %arg2[%c3, %c0_24, %c0_25] : memref<4x32x8xbf16, #tpu.memory_space<vmem>>, vector<1x32x8xbf16>
    %50 = vector.shape_cast %49 : vector<1x32x8xbf16> to vector<32x8xbf16>
    %c0_26 = arith.constant 0 : index
    %c0_27 = arith.constant 0 : index
    %51 = vector.load %arg4[%c0_26, %c0_27] : memref<8x16xbf16, #tpu.memory_space<vmem>>, vector<8x16xbf16>
    %cst_28 = arith.constant dense<0.000000e+00> : vector<32x16xf32>
    %52 = tpu.matmul %50, %51, %cst_28 {dimension_numbers = #tpu.dot_dimension_numbers<[1], [0], [0], [1], [0, 0, 1, 1], [], []>} : vector<32x8xbf16>, vector<8x16xbf16>, vector<32x16xf32> -> vector<32x16xf32>
    %53 = arith.extf %50 : vector<32x8xbf16> to vector<32x8xf32>
    %54 = arith.subf %53, %3 : vector<32x8xf32>
    %55 = arith.mulf %54, %54 : vector<32x8xf32>
    %cst_29 = arith.constant dense<0.000000e+00> : vector<32xf32>
    %56 = vector.multi_reduction <add>, %55, %cst_29 [1] : vector<32x8xf32> to vector<32xf32>
    %57 = vector.shape_cast %56 : vector<32xf32> to vector<32x1xf32>
    %58 = math.sqrt %57 : vector<32x1xf32>
    %59 = vector.broadcast %58 : vector<32x1xf32> to vector<32x16xf32>
    %60 = vector.broadcast %4 : vector<1x16xf32> to vector<32x16xf32>
    %61 = arith.mulf %59, %60 : vector<32x16xf32>
    %62 = arith.addf %52, %61 : vector<32x16xf32>
    %63 = arith.maximumf %48, %62 : vector<32x16xf32>
    %64 = arith.addf %2, %63 : vector<32x16xf32>
    %c0_30 = arith.constant 0 : index
    %c0_31 = arith.constant 0 : index
    %65 = vector.load %arg6[%c0_30, %c0_31] : memref<1x16xf32, #tpu.memory_space<vmem>>, vector<1x16xf32>
    %66 = vector.broadcast %65 : vector<1x16xf32> to vector<32x16xf32>
    %67 = arith.addf %64, %66 : vector<32x16xf32>
    %cst_32 = arith.constant 0.000000e+00 : f32
    %68 = vector.broadcast %cst_32 : f32 to vector<32x16xf32>
    %69 = arith.cmpf ogt, %67, %68 : vector<32x16xf32>
    %cst_33 = arith.constant 0.00999999977 : f32
    %70 = vector.broadcast %cst_33 : f32 to vector<32x16xf32>
    %71 = arith.mulf %70, %67 : vector<32x16xf32>
    %72 = arith.select %69, %67, %71 : vector<32x16xi1>, vector<32x16xf32>
    %73 = arith.truncf %72 : vector<32x16xf32> to vector<32x16xbf16>
    %c0_34 = arith.constant 0 : index
    %c0_35 = arith.constant 0 : index
    %74 = vector.load %arg7[%c0_34, %c0_35] : memref<32x16xbf16, #tpu.memory_space<vmem>>, vector<32x16xbf16>
    tpu.vector_store %arg7[%c0_34, %c0_35], %73 {strides = array<i32>} : memref<32x16xbf16, #tpu.memory_space<vmem>>, vector<32x16xbf16>,
    return
  }
  func.func @transform_0(%arg0: i32) -> (i32, i32) {
    %c0_i32 = arith.constant 0 : i32
    %c0_i32_0 = arith.constant 0 : i32
    return %arg0, %c0_i32 : i32, i32
  }
  func.func @transform_1(%arg0: i32) -> (i32, i32, i32) {
    %c0_i32 = arith.constant 0 : i32
    %c0_i32_0 = arith.constant 0 : i32
    %c0_i32_1 = arith.constant 0 : i32
    return %c0_i32, %arg0, %c0_i32_0 : i32, i32, i32
  }
  func.func @transform_2(%arg0: i32) -> (i32, i32) {
    %c0_i32 = arith.constant 0 : i32
    %c0_i32_0 = arith.constant 0 : i32
    %c0_i32_1 = arith.constant 0 : i32
    return %c0_i32, %c0_i32_0 : i32, i32
  }
  func.func @transform_3(%arg0: i32) -> (i32, i32) {
    %c0_i32 = arith.constant 0 : i32
    %c0_i32_0 = arith.constant 0 : i32
    %c0_i32_1 = arith.constant 0 : i32
    return %c0_i32, %c0_i32_0 : i32, i32
  }
  func.func @transform_4(%arg0: i32) -> (i32, i32) {
    %c0_i32 = arith.constant 0 : i32
    %c0_i32_0 = arith.constant 0 : i32
    %c0_i32_1 = arith.constant 0 : i32
    return %c0_i32, %c0_i32_0 : i32, i32
  }
  func.func @transform_5(%arg0: i32) -> (i32, i32) {
    %c0_i32 = arith.constant 0 : i32
    %c0_i32_0 = arith.constant 0 : i32
    %c0_i32_1 = arith.constant 0 : i32
    return %c0_i32, %c0_i32_0 : i32, i32
  }
  func.func @transform_6(%arg0: i32) -> (i32, i32) {
    %c0_i32 = arith.constant 0 : i32
    %c0_i32_0 = arith.constant 0 : i32
    return %arg0, %c0_i32 : i32, i32
  }
}

module attributes {stable_mosaic.version = 11 : i64} {
  func.func @_inter_full_kernel(%arg0: i32, %arg1: i32, %arg2: memref<1x16x8xbf16, #tpu.memory_space<vmem>>, %arg3: memref<1x16x8xbf16, #tpu.memory_space<vmem>>, %arg4: memref<1x16x16xbf16, #tpu.memory_space<vmem>>, %arg5: memref<8x8xbf16, #tpu.memory_space<vmem>>, %arg6: memref<1x8xf32, #tpu.memory_space<vmem>>, %arg7: memref<8x8xbf16, #tpu.memory_space<vmem>>, %arg8: memref<1x8xf32, #tpu.memory_space<vmem>>, %arg9: memref<8x8xbf16, #tpu.memory_space<vmem>>, %arg10: memref<1x8xf32, #tpu.memory_space<vmem>>, %arg11: memref<8x16xbf16, #tpu.memory_space<vmem>>, %arg12: memref<1x16xf32, #tpu.memory_space<vmem>>, %arg13: memref<16x16xbf16, #tpu.memory_space<vmem>>, %arg14: memref<16x16xbf16, #tpu.memory_space<vmem>>, %arg15: memref<1x16xf32, #tpu.memory_space<vmem>>, %arg16: memref<1x16x16xbf16, #tpu.memory_space<vmem>>, %arg17: memref<16x8xbf16, #tpu.memory_space<vmem>>, %arg18: memref<16x8xbf16, #tpu.memory_space<vmem>>) attributes {dimension_semantics = [#tpu.dimension_semantics<parallel>, #tpu.dimension_semantics<arbitrary>], iteration_bounds = array<i64: 2, 1>, scalar_prefetch = 0 : i64, scratch_operands = 2 : i64, tpu.core_type = #tpu.core_type<tc>, window_params = [{transform_indices = @transform_0, window_bounds = array<i64: 1, 16, 8>}, {transform_indices = @transform_1, window_bounds = array<i64: 1, 16, 8>}, {transform_indices = @transform_2, window_bounds = array<i64: 1, 16, 16>}, {pipeline_mode = #tpu.pipeline_mode<synchronous>, transform_indices = @transform_3, window_bounds = array<i64: 8, 8>}, {pipeline_mode = #tpu.pipeline_mode<synchronous>, transform_indices = @transform_4, window_bounds = array<i64: 1, 8>}, {pipeline_mode = #tpu.pipeline_mode<synchronous>, transform_indices = @transform_5, window_bounds = array<i64: 8, 8>}, {pipeline_mode = #tpu.pipeline_mode<synchronous>, transform_indices = @transform_6, window_bounds = array<i64: 1, 8>}, {pipeline_mode = #tpu.pipeline_mode<synchronous>, transform_indices = @transform_7, window_bounds = array<i64: 8, 8>}, {pipeline_mode = #tpu.pipeline_mode<synchronous>, transform_indices = @transform_8, window_bounds = array<i64: 1, 8>}, {pipeline_mode = #tpu.pipeline_mode<synchronous>, transform_indices = @transform_9, window_bounds = array<i64: 8, 16>}, {pipeline_mode = #tpu.pipeline_mode<synchronous>, transform_indices = @transform_10, window_bounds = array<i64: 1, 16>}, {pipeline_mode = #tpu.pipeline_mode<synchronous>, transform_indices = @transform_11, window_bounds = array<i64: 16, 16>}, {pipeline_mode = #tpu.pipeline_mode<synchronous>, transform_indices = @transform_12, window_bounds = array<i64: 16, 16>}, {pipeline_mode = #tpu.pipeline_mode<synchronous>, transform_indices = @transform_13, window_bounds = array<i64: 1, 16>}, {transform_indices = @transform_14, window_bounds = array<i64: 1, 16, 16>}]} {
    %c0_i32 = arith.constant 0 : i32
    %0 = arith.cmpi eq, %arg1, %c0_i32 : i32
    %1 = arith.extui %0 : i1 to i32
    %c0_i32_0 = arith.constant 0 : i32
    %2 = arith.cmpi ne, %1, %c0_i32_0 : i32
    scf.if %2 {
      %c0_39 = arith.constant 0 : index
      %c0_40 = arith.constant 0 : index
      %c0_41 = arith.constant 0 : index
      %59 = vector.load %arg3[%c0_39, %c0_40, %c0_41] : memref<1x16x8xbf16, #tpu.memory_space<vmem>>, vector<1x16x8xbf16>
      %60 = vector.shape_cast %59 : vector<1x16x8xbf16> to vector<16x8xbf16>
      %c0_42 = arith.constant 0 : index
      %c0_43 = arith.constant 0 : index
      %61 = vector.load %arg7[%c0_42, %c0_43] : memref<8x8xbf16, #tpu.memory_space<vmem>>, vector<8x8xbf16>
      %cst_44 = arith.constant dense<0.000000e+00> : vector<16x8xf32>
      %62 = tpu.matmul %60, %61, %cst_44 {dimension_numbers = #tpu.dot_dimension_numbers<[1], [0], [0], [1], [0, 0, 1, 1], [], []>} : vector<16x8xbf16>, vector<8x8xbf16>, vector<16x8xf32> -> vector<16x8xf32>
      %c0_45 = arith.constant 0 : index
      %c0_46 = arith.constant 0 : index
      %63 = vector.load %arg8[%c0_45, %c0_46] : memref<1x8xf32, #tpu.memory_space<vmem>>, vector<1x8xf32>
      %64 = vector.broadcast %63 : vector<1x8xf32> to vector<16x8xf32>
      %65 = arith.addf %62, %64 : vector<16x8xf32>
      %c0_47 = arith.constant 0 : index
      %c0_48 = arith.constant 0 : index
      %66 = vector.load %arg9[%c0_47, %c0_48] : memref<8x8xbf16, #tpu.memory_space<vmem>>, vector<8x8xbf16>
      %cst_49 = arith.constant dense<0.000000e+00> : vector<16x8xf32>
      %67 = tpu.matmul %60, %66, %cst_49 {dimension_numbers = #tpu.dot_dimension_numbers<[1], [0], [0], [1], [0, 0, 1, 1], [], []>} : vector<16x8xbf16>, vector<8x8xbf16>, vector<16x8xf32> -> vector<16x8xf32>
      %c0_50 = arith.constant 0 : index
      %c0_51 = arith.constant 0 : index
      %68 = vector.load %arg10[%c0_50, %c0_51] : memref<1x8xf32, #tpu.memory_space<vmem>>, vector<1x8xf32>
      %69 = vector.broadcast %68 : vector<1x8xf32> to vector<16x8xf32>
      %70 = arith.addf %67, %69 : vector<16x8xf32>
      %71 = arith.truncf %65 : vector<16x8xf32> to vector<16x8xbf16>
      %c0_52 = arith.constant 0 : index
      %c0_53 = arith.constant 0 : index
      %72 = vector.load %arg17[%c0_52, %c0_53] : memref<16x8xbf16, #tpu.memory_space<vmem>>, vector<16x8xbf16>
      tpu.vector_store %arg17[%c0_52, %c0_53], %71 {strides = array<i32>} : memref<16x8xbf16, #tpu.memory_space<vmem>>, vector<16x8xbf16>,
      %73 = arith.truncf %70 : vector<16x8xf32> to vector<16x8xbf16>
      %c0_54 = arith.constant 0 : index
      %c0_55 = arith.constant 0 : index
      %74 = vector.load %arg18[%c0_54, %c0_55] : memref<16x8xbf16, #tpu.memory_space<vmem>>, vector<16x8xbf16>
      tpu.vector_store %arg18[%c0_54, %c0_55], %73 {strides = array<i32>} : memref<16x8xbf16, #tpu.memory_space<vmem>>, vector<16x8xbf16>,
    } else {
    }
    %c0 = arith.constant 0 : index
    %c0_1 = arith.constant 0 : index
    %c0_2 = arith.constant 0 : index
    %3 = vector.load %arg2[%c0, %c0_1, %c0_2] : memref<1x16x8xbf16, #tpu.memory_space<vmem>>, vector<1x16x8xbf16>
    %4 = vector.shape_cast %3 : vector<1x16x8xbf16> to vector<16x8xbf16>
    %c0_3 = arith.constant 0 : index
    %c0_4 = arith.constant 0 : index
    %5 = vector.load %arg5[%c0_3, %c0_4] : memref<8x8xbf16, #tpu.memory_space<vmem>>, vector<8x8xbf16>
    %cst = arith.constant dense<0.000000e+00> : vector<16x8xf32>
    %6 = tpu.matmul %4, %5, %cst {dimension_numbers = #tpu.dot_dimension_numbers<[1], [0], [0], [1], [0, 0, 1, 1], [], []>} : vector<16x8xbf16>, vector<8x8xbf16>, vector<16x8xf32> -> vector<16x8xf32>
    %c0_5 = arith.constant 0 : index
    %c0_6 = arith.constant 0 : index
    %7 = vector.load %arg6[%c0_5, %c0_6] : memref<1x8xf32, #tpu.memory_space<vmem>>, vector<1x8xf32>
    %8 = vector.broadcast %7 : vector<1x8xf32> to vector<16x8xf32>
    %9 = arith.addf %6, %8 : vector<16x8xf32>
    %10 = arith.truncf %9 : vector<16x8xf32> to vector<16x8xbf16>
    %c0_7 = arith.constant 0 : index
    %c0_8 = arith.constant 0 : index
    %11 = vector.load %arg17[%c0_7, %c0_8] : memref<16x8xbf16, #tpu.memory_space<vmem>>, vector<16x8xbf16>
    %cst_9 = arith.constant dense<0.000000e+00> : vector<16x16xf32>
    %12 = tpu.matmul %10, %11, %cst_9 {dimension_numbers = #tpu.dot_dimension_numbers<[1], [1], [0], [0], [0, 0, 1, 0], [], []>} : vector<16x8xbf16>, vector<16x8xbf16>, vector<16x16xf32> -> vector<16x16xf32>
    %cst_10 = arith.constant 0.353553385 : f32
    %13 = vector.broadcast %cst_10 : f32 to vector<16x16xf32>
    %14 = arith.mulf %12, %13 : vector<16x16xf32>
    %cst_11 = arith.constant dense<0xFF800000> : vector<16xf32>
    %15 = vector.multi_reduction <maximumf>, %14, %cst_11 [1] : vector<16x16xf32> to vector<16xf32>
    %16 = vector.shape_cast %15 : vector<16xf32> to vector<16x1xf32>
    %17 = vector.broadcast %16 : vector<16x1xf32> to vector<16x16xf32>
    %18 = arith.subf %14, %17 : vector<16x16xf32>
    %19 = math.exp %18 : vector<16x16xf32>
    %cst_12 = arith.constant dense<0.000000e+00> : vector<16xf32>
    %20 = vector.multi_reduction <add>, %19, %cst_12 [1] : vector<16x16xf32> to vector<16xf32>
    %21 = vector.shape_cast %20 : vector<16xf32> to vector<16x1xf32>
    %22 = tpu.reciprocal %21 {approx = true} : vector<16x1xf32> -> vector<16x1xf32>
    %23 = vector.broadcast %22 : vector<16x1xf32> to vector<16x16xf32>
    %24 = arith.mulf %19, %23 : vector<16x16xf32>
    %25 = arith.truncf %24 : vector<16x16xf32> to vector<16x16xbf16>
    %c0_13 = arith.constant 0 : index
    %c0_14 = arith.constant 0 : index
    %26 = vector.load %arg18[%c0_13, %c0_14] : memref<16x8xbf16, #tpu.memory_space<vmem>>, vector<16x8xbf16>
    %cst_15 = arith.constant dense<0.000000e+00> : vector<16x8xf32>
    %27 = tpu.matmul %25, %26, %cst_15 {dimension_numbers = #tpu.dot_dimension_numbers<[1], [0], [0], [1], [0, 0, 1, 1], [], []>} : vector<16x16xbf16>, vector<16x8xbf16>, vector<16x8xf32> -> vector<16x8xf32>
    %28 = arith.truncf %27 : vector<16x8xf32> to vector<16x8xbf16>
    %c0_16 = arith.constant 0 : index
    %c0_17 = arith.constant 0 : index
    %29 = vector.load %arg11[%c0_16, %c0_17] : memref<8x16xbf16, #tpu.memory_space<vmem>>, vector<8x16xbf16>
    %cst_18 = arith.constant dense<0.000000e+00> : vector<16x16xf32>
    %30 = tpu.matmul %28, %29, %cst_18 {dimension_numbers = #tpu.dot_dimension_numbers<[1], [0], [0], [1], [0, 0, 1, 1], [], []>} : vector<16x8xbf16>, vector<8x16xbf16>, vector<16x16xf32> -> vector<16x16xf32>
    %c0_19 = arith.constant 0 : index
    %c0_20 = arith.constant 0 : index
    %31 = vector.load %arg12[%c0_19, %c0_20] : memref<1x16xf32, #tpu.memory_space<vmem>>, vector<1x16xf32>
    %32 = vector.broadcast %31 : vector<1x16xf32> to vector<16x16xf32>
    %33 = arith.addf %30, %32 : vector<16x16xf32>
    %cst_21 = arith.constant 0.000000e+00 : f32
    %34 = vector.broadcast %cst_21 : f32 to vector<16x16xf32>
    %35 = arith.cmpf ogt, %33, %34 : vector<16x16xf32>
    %cst_22 = arith.constant 0.00999999977 : f32
    %36 = vector.broadcast %cst_22 : f32 to vector<16x16xf32>
    %37 = arith.mulf %36, %33 : vector<16x16xf32>
    %38 = arith.select %35, %33, %37 : vector<16x16xi1>, vector<16x16xf32>
    %c0_23 = arith.constant 0 : index
    %c0_24 = arith.constant 0 : index
    %c0_25 = arith.constant 0 : index
    %39 = vector.load %arg4[%c0_23, %c0_24, %c0_25] : memref<1x16x16xbf16, #tpu.memory_space<vmem>>, vector<1x16x16xbf16>
    %40 = vector.shape_cast %39 : vector<1x16x16xbf16> to vector<16x16xbf16>
    %c0_26 = arith.constant 0 : index
    %c0_27 = arith.constant 0 : index
    %41 = vector.load %arg13[%c0_26, %c0_27] : memref<16x16xbf16, #tpu.memory_space<vmem>>, vector<16x16xbf16>
    %cst_28 = arith.constant dense<0.000000e+00> : vector<16x16xf32>
    %42 = tpu.matmul %40, %41, %cst_28 {dimension_numbers = #tpu.dot_dimension_numbers<[1], [0], [0], [1], [0, 0, 1, 1], [], []>} : vector<16x16xbf16>, vector<16x16xbf16>, vector<16x16xf32> -> vector<16x16xf32>
    %43 = arith.truncf %38 : vector<16x16xf32> to vector<16x16xbf16>
    %c0_29 = arith.constant 0 : index
    %c0_30 = arith.constant 0 : index
    %44 = vector.load %arg14[%c0_29, %c0_30] : memref<16x16xbf16, #tpu.memory_space<vmem>>, vector<16x16xbf16>
    %cst_31 = arith.constant dense<0.000000e+00> : vector<16x16xf32>
    %45 = tpu.matmul %43, %44, %cst_31 {dimension_numbers = #tpu.dot_dimension_numbers<[1], [0], [0], [1], [0, 0, 1, 1], [], []>} : vector<16x16xbf16>, vector<16x16xbf16>, vector<16x16xf32> -> vector<16x16xf32>
    %46 = arith.addf %42, %45 : vector<16x16xf32>
    %c0_32 = arith.constant 0 : index
    %c0_33 = arith.constant 0 : index
    %47 = vector.load %arg15[%c0_32, %c0_33] : memref<1x16xf32, #tpu.memory_space<vmem>>, vector<1x16xf32>
    %48 = vector.broadcast %47 : vector<1x16xf32> to vector<16x16xf32>
    %49 = arith.addf %46, %48 : vector<16x16xf32>
    %cst_34 = arith.constant 0.000000e+00 : f32
    %50 = vector.broadcast %cst_34 : f32 to vector<16x16xf32>
    %51 = arith.cmpf ogt, %49, %50 : vector<16x16xf32>
    %cst_35 = arith.constant 0.00999999977 : f32
    %52 = vector.broadcast %cst_35 : f32 to vector<16x16xf32>
    %53 = arith.mulf %52, %49 : vector<16x16xf32>
    %54 = arith.select %51, %49, %53 : vector<16x16xi1>, vector<16x16xf32>
    %55 = arith.truncf %54 : vector<16x16xf32> to vector<16x16xbf16>
    %c0_36 = arith.constant 0 : index
    %c0_37 = arith.constant 0 : index
    %c0_38 = arith.constant 0 : index
    %56 = vector.load %arg16[%c0_36, %c0_37, %c0_38] : memref<1x16x16xbf16, #tpu.memory_space<vmem>>, vector<1x16x16xbf16>
    %57 = vector.shape_cast %56 : vector<1x16x16xbf16> to vector<16x16xbf16>
    %58 = vector.shape_cast %55 : vector<16x16xbf16> to vector<1x16x16xbf16>
    tpu.vector_store %arg16[%c0_36, %c0_37, %c0_38], %58 {strides = array<i32>} : memref<1x16x16xbf16, #tpu.memory_space<vmem>>, vector<1x16x16xbf16>,
    return
  }
  func.func @transform_0(%arg0: i32, %arg1: i32) -> (i32, i32, i32) {
    %c0_i32 = arith.constant 0 : i32
    %c0_i32_0 = arith.constant 0 : i32
    return %arg0, %arg1, %c0_i32 : i32, i32, i32
  }
  func.func @transform_1(%arg0: i32, %arg1: i32) -> (i32, i32, i32) {
    %c0_i32 = arith.constant 0 : i32
    %c0_i32_0 = arith.constant 0 : i32
    %c0_i32_1 = arith.constant 0 : i32
    return %arg0, %c0_i32, %c0_i32_0 : i32, i32, i32
  }
  func.func @transform_2(%arg0: i32, %arg1: i32) -> (i32, i32, i32) {
    %c0_i32 = arith.constant 0 : i32
    %c0_i32_0 = arith.constant 0 : i32
    return %arg0, %arg1, %c0_i32 : i32, i32, i32
  }
  func.func @transform_3(%arg0: i32, %arg1: i32) -> (i32, i32) {
    %c0_i32 = arith.constant 0 : i32
    %c0_i32_0 = arith.constant 0 : i32
    %c0_i32_1 = arith.constant 0 : i32
    return %c0_i32, %c0_i32_0 : i32, i32
  }
  func.func @transform_4(%arg0: i32, %arg1: i32) -> (i32, i32) {
    %c0_i32 = arith.constant 0 : i32
    %c0_i32_0 = arith.constant 0 : i32
    %c0_i32_1 = arith.constant 0 : i32
    return %c0_i32, %c0_i32_0 : i32, i32
  }
  func.func @transform_5(%arg0: i32, %arg1: i32) -> (i32, i32) {
    %c0_i32 = arith.constant 0 : i32
    %c0_i32_0 = arith.constant 0 : i32
    %c0_i32_1 = arith.constant 0 : i32
    return %c0_i32, %c0_i32_0 : i32, i32
  }
  func.func @transform_6(%arg0: i32, %arg1: i32) -> (i32, i32) {
    %c0_i32 = arith.constant 0 : i32
    %c0_i32_0 = arith.constant 0 : i32
    %c0_i32_1 = arith.constant 0 : i32
    return %c0_i32, %c0_i32_0 : i32, i32
  }
  func.func @transform_7(%arg0: i32, %arg1: i32) -> (i32, i32) {
    %c0_i32 = arith.constant 0 : i32
    %c0_i32_0 = arith.constant 0 : i32
    %c0_i32_1 = arith.constant 0 : i32
    return %c0_i32, %c0_i32_0 : i32, i32
  }
  func.func @transform_8(%arg0: i32, %arg1: i32) -> (i32, i32) {
    %c0_i32 = arith.constant 0 : i32
    %c0_i32_0 = arith.constant 0 : i32
    %c0_i32_1 = arith.constant 0 : i32
    return %c0_i32, %c0_i32_0 : i32, i32
  }
  func.func @transform_9(%arg0: i32, %arg1: i32) -> (i32, i32) {
    %c0_i32 = arith.constant 0 : i32
    %c0_i32_0 = arith.constant 0 : i32
    %c0_i32_1 = arith.constant 0 : i32
    return %c0_i32, %c0_i32_0 : i32, i32
  }
  func.func @transform_10(%arg0: i32, %arg1: i32) -> (i32, i32) {
    %c0_i32 = arith.constant 0 : i32
    %c0_i32_0 = arith.constant 0 : i32
    %c0_i32_1 = arith.constant 0 : i32
    return %c0_i32, %c0_i32_0 : i32, i32
  }
  func.func @transform_11(%arg0: i32, %arg1: i32) -> (i32, i32) {
    %c0_i32 = arith.constant 0 : i32
    %c0_i32_0 = arith.constant 0 : i32
    %c0_i32_1 = arith.constant 0 : i32
    return %c0_i32, %c0_i32_0 : i32, i32
  }
  func.func @transform_12(%arg0: i32, %arg1: i32) -> (i32, i32) {
    %c0_i32 = arith.constant 0 : i32
    %c0_i32_0 = arith.constant 0 : i32
    %c0_i32_1 = arith.constant 0 : i32
    return %c0_i32, %c0_i32_0 : i32, i32
  }
  func.func @transform_13(%arg0: i32, %arg1: i32) -> (i32, i32) {
    %c0_i32 = arith.constant 0 : i32
    %c0_i32_0 = arith.constant 0 : i32
    %c0_i32_1 = arith.constant 0 : i32
    return %c0_i32, %c0_i32_0 : i32, i32
  }
  func.func @transform_14(%arg0: i32, %arg1: i32) -> (i32, i32, i32) {
    %c0_i32 = arith.constant 0 : i32
    %c0_i32_0 = arith.constant 0 : i32
    return %arg0, %arg1, %c0_i32 : i32, i32, i32
  }
}

module attributes {stable_mosaic.version = 11 : i64} {
  func.func @_head_kernel(%arg0: i32, %arg1: i32, %arg2: memref<1x16x2xbf16, #tpu.memory_space<vmem>>, %arg3: memref<1x16x2xbf16, #tpu.memory_space<vmem>>, %arg4: memref<1x16x4xbf16, #tpu.memory_space<vmem>>, %arg5: memref<1x16x8xbf16, #tpu.memory_space<vmem>>, %arg6: memref<1x16x16xbf16, #tpu.memory_space<vmem>>, %arg7: memref<2x32xbf16, #tpu.memory_space<vmem>>, %arg8: memref<2x32xbf16, #tpu.memory_space<vmem>>, %arg9: memref<4x32xbf16, #tpu.memory_space<vmem>>, %arg10: memref<8x32xbf16, #tpu.memory_space<vmem>>, %arg11: memref<16x32xbf16, #tpu.memory_space<vmem>>, %arg12: memref<1x32xf32, #tpu.memory_space<vmem>>, %arg13: memref<32x32xbf16, #tpu.memory_space<vmem>>, %arg14: memref<32x1xf32, #tpu.memory_space<vmem>>, %arg15: memref<1x32x16xf32, #tpu.memory_space<vmem>>) attributes {dimension_semantics = [#tpu.dimension_semantics<parallel>, #tpu.dimension_semantics<parallel>], iteration_bounds = array<i64: 2, 1>, scalar_prefetch = 0 : i64, scratch_operands = 0 : i64, tpu.core_type = #tpu.core_type<tc>, window_params = [{transform_indices = @transform_0, window_bounds = array<i64: 1, 16, 2>}, {transform_indices = @transform_1, window_bounds = array<i64: 1, 16, 2>}, {transform_indices = @transform_2, window_bounds = array<i64: 1, 16, 4>}, {transform_indices = @transform_3, window_bounds = array<i64: 1, 16, 8>}, {transform_indices = @transform_4, window_bounds = array<i64: 1, 16, 16>}, {pipeline_mode = #tpu.pipeline_mode<synchronous>, transform_indices = @transform_5, window_bounds = array<i64: 2, 32>}, {pipeline_mode = #tpu.pipeline_mode<synchronous>, transform_indices = @transform_6, window_bounds = array<i64: 2, 32>}, {pipeline_mode = #tpu.pipeline_mode<synchronous>, transform_indices = @transform_7, window_bounds = array<i64: 4, 32>}, {pipeline_mode = #tpu.pipeline_mode<synchronous>, transform_indices = @transform_8, window_bounds = array<i64: 8, 32>}, {pipeline_mode = #tpu.pipeline_mode<synchronous>, transform_indices = @transform_9, window_bounds = array<i64: 16, 32>}, {pipeline_mode = #tpu.pipeline_mode<synchronous>, transform_indices = @transform_10, window_bounds = array<i64: 1, 32>}, {pipeline_mode = #tpu.pipeline_mode<synchronous>, transform_indices = @transform_11, window_bounds = array<i64: 32, 32>}, {pipeline_mode = #tpu.pipeline_mode<synchronous>, transform_indices = @transform_12, window_bounds = array<i64: 32, 1>}, {transform_indices = @transform_13, window_bounds = array<i64: 1, 32, 16>}]} {
    %c0 = arith.constant 0 : index
    %c0_0 = arith.constant 0 : index
    %c0_1 = arith.constant 0 : index
    %0 = vector.load %arg2[%c0, %c0_0, %c0_1] : memref<1x16x2xbf16, #tpu.memory_space<vmem>>, vector<1x16x2xbf16>
    %1 = vector.shape_cast %0 : vector<1x16x2xbf16> to vector<16x2xbf16>
    %c0_2 = arith.constant 0 : index
    %c0_3 = arith.constant 0 : index
    %2 = vector.load %arg7[%c0_2, %c0_3] : memref<2x32xbf16, #tpu.memory_space<vmem>>, vector<2x32xbf16>
    %cst = arith.constant dense<0.000000e+00> : vector<16x32xf32>
    %3 = tpu.matmul %1, %2, %cst {dimension_numbers = #tpu.dot_dimension_numbers<[1], [0], [0], [1], [0, 0, 1, 1], [], []>} : vector<16x2xbf16>, vector<2x32xbf16>, vector<16x32xf32> -> vector<16x32xf32>
    %c0_4 = arith.constant 0 : index
    %c0_5 = arith.constant 0 : index
    %c0_6 = arith.constant 0 : index
    %4 = vector.load %arg3[%c0_4, %c0_5, %c0_6] : memref<1x16x2xbf16, #tpu.memory_space<vmem>>, vector<1x16x2xbf16>
    %5 = vector.shape_cast %4 : vector<1x16x2xbf16> to vector<16x2xbf16>
    %c0_7 = arith.constant 0 : index
    %c0_8 = arith.constant 0 : index
    %6 = vector.load %arg8[%c0_7, %c0_8] : memref<2x32xbf16, #tpu.memory_space<vmem>>, vector<2x32xbf16>
    %cst_9 = arith.constant dense<0.000000e+00> : vector<16x32xf32>
    %7 = tpu.matmul %5, %6, %cst_9 {dimension_numbers = #tpu.dot_dimension_numbers<[1], [0], [0], [1], [0, 0, 1, 1], [], []>} : vector<16x2xbf16>, vector<2x32xbf16>, vector<16x32xf32> -> vector<16x32xf32>
    %8 = arith.addf %3, %7 : vector<16x32xf32>
    %c0_10 = arith.constant 0 : index
    %c0_11 = arith.constant 0 : index
    %c0_12 = arith.constant 0 : index
    %9 = vector.load %arg4[%c0_10, %c0_11, %c0_12] : memref<1x16x4xbf16, #tpu.memory_space<vmem>>, vector<1x16x4xbf16>
    %10 = vector.shape_cast %9 : vector<1x16x4xbf16> to vector<16x4xbf16>
    %c0_13 = arith.constant 0 : index
    %c0_14 = arith.constant 0 : index
    %11 = vector.load %arg9[%c0_13, %c0_14] : memref<4x32xbf16, #tpu.memory_space<vmem>>, vector<4x32xbf16>
    %cst_15 = arith.constant dense<0.000000e+00> : vector<16x32xf32>
    %12 = tpu.matmul %10, %11, %cst_15 {dimension_numbers = #tpu.dot_dimension_numbers<[1], [0], [0], [1], [0, 0, 1, 1], [], []>} : vector<16x4xbf16>, vector<4x32xbf16>, vector<16x32xf32> -> vector<16x32xf32>
    %13 = arith.addf %8, %12 : vector<16x32xf32>
    %c0_16 = arith.constant 0 : index
    %c0_17 = arith.constant 0 : index
    %c0_18 = arith.constant 0 : index
    %14 = vector.load %arg5[%c0_16, %c0_17, %c0_18] : memref<1x16x8xbf16, #tpu.memory_space<vmem>>, vector<1x16x8xbf16>
    %15 = vector.shape_cast %14 : vector<1x16x8xbf16> to vector<16x8xbf16>
    %c0_19 = arith.constant 0 : index
    %c0_20 = arith.constant 0 : index
    %16 = vector.load %arg10[%c0_19, %c0_20] : memref<8x32xbf16, #tpu.memory_space<vmem>>, vector<8x32xbf16>
    %cst_21 = arith.constant dense<0.000000e+00> : vector<16x32xf32>
    %17 = tpu.matmul %15, %16, %cst_21 {dimension_numbers = #tpu.dot_dimension_numbers<[1], [0], [0], [1], [0, 0, 1, 1], [], []>} : vector<16x8xbf16>, vector<8x32xbf16>, vector<16x32xf32> -> vector<16x32xf32>
    %18 = arith.addf %13, %17 : vector<16x32xf32>
    %c0_22 = arith.constant 0 : index
    %c0_23 = arith.constant 0 : index
    %c0_24 = arith.constant 0 : index
    %19 = vector.load %arg6[%c0_22, %c0_23, %c0_24] : memref<1x16x16xbf16, #tpu.memory_space<vmem>>, vector<1x16x16xbf16>
    %20 = vector.shape_cast %19 : vector<1x16x16xbf16> to vector<16x16xbf16>
    %c0_25 = arith.constant 0 : index
    %c0_26 = arith.constant 0 : index
    %21 = vector.load %arg11[%c0_25, %c0_26] : memref<16x32xbf16, #tpu.memory_space<vmem>>, vector<16x32xbf16>
    %cst_27 = arith.constant dense<0.000000e+00> : vector<16x32xf32>
    %22 = tpu.matmul %20, %21, %cst_27 {dimension_numbers = #tpu.dot_dimension_numbers<[1], [0], [0], [1], [0, 0, 1, 1], [], []>} : vector<16x16xbf16>, vector<16x32xbf16>, vector<16x32xf32> -> vector<16x32xf32>
    %23 = arith.addf %18, %22 : vector<16x32xf32>
    %c0_28 = arith.constant 0 : index
    %c0_29 = arith.constant 0 : index
    %24 = vector.load %arg12[%c0_28, %c0_29] : memref<1x32xf32, #tpu.memory_space<vmem>>, vector<1x32xf32>
    %25 = vector.broadcast %24 : vector<1x32xf32> to vector<16x32xf32>
    %26 = arith.addf %23, %25 : vector<16x32xf32>
    %cst_30 = arith.constant 0.000000e+00 : f32
    %27 = vector.broadcast %cst_30 : f32 to vector<16x32xf32>
    %28 = arith.maximumf %26, %27 : vector<16x32xf32>
    %c0_31 = arith.constant 0 : index
    %c0_32 = arith.constant 0 : index
    %29 = vector.load %arg13[%c0_31, %c0_32] : memref<32x32xbf16, #tpu.memory_space<vmem>>, vector<32x32xbf16>
    %30 = arith.truncf %28 : vector<16x32xf32> to vector<16x32xbf16>
    %cst_33 = arith.constant dense<0.000000e+00> : vector<32x16xf32>
    %31 = tpu.matmul %29, %30, %cst_33 {dimension_numbers = #tpu.dot_dimension_numbers<[1], [1], [0], [0], [0, 0, 1, 0], [], []>} : vector<32x32xbf16>, vector<16x32xbf16>, vector<32x16xf32> -> vector<32x16xf32>
    %c0_34 = arith.constant 0 : index
    %c0_35 = arith.constant 0 : index
    %32 = vector.load %arg14[%c0_34, %c0_35] : memref<32x1xf32, #tpu.memory_space<vmem>>, vector<32x1xf32>
    %33 = vector.broadcast %32 : vector<32x1xf32> to vector<32x16xf32>
    %34 = arith.addf %31, %33 : vector<32x16xf32>
    %c0_36 = arith.constant 0 : index
    %c0_37 = arith.constant 0 : index
    %c0_38 = arith.constant 0 : index
    %35 = vector.load %arg15[%c0_36, %c0_37, %c0_38] : memref<1x32x16xf32, #tpu.memory_space<vmem>>, vector<1x32x16xf32>
    %36 = vector.shape_cast %35 : vector<1x32x16xf32> to vector<32x16xf32>
    %37 = vector.shape_cast %34 : vector<32x16xf32> to vector<1x32x16xf32>
    tpu.vector_store %arg15[%c0_36, %c0_37, %c0_38], %37 {strides = array<i32>} : memref<1x32x16xf32, #tpu.memory_space<vmem>>, vector<1x32x16xf32>,
    return
  }
  func.func @transform_0(%arg0: i32, %arg1: i32) -> (i32, i32, i32) {
    %c0_i32 = arith.constant 0 : i32
    %c0_i32_0 = arith.constant 0 : i32
    return %arg0, %arg1, %c0_i32 : i32, i32, i32
  }
  func.func @transform_1(%arg0: i32, %arg1: i32) -> (i32, i32, i32) {
    %c0_i32 = arith.constant 0 : i32
    %c0_i32_0 = arith.constant 0 : i32
    return %arg0, %arg1, %c0_i32 : i32, i32, i32
  }
  func.func @transform_2(%arg0: i32, %arg1: i32) -> (i32, i32, i32) {
    %c0_i32 = arith.constant 0 : i32
    %c0_i32_0 = arith.constant 0 : i32
    return %arg0, %arg1, %c0_i32 : i32, i32, i32
  }
  func.func @transform_3(%arg0: i32, %arg1: i32) -> (i32, i32, i32) {
    %c0_i32 = arith.constant 0 : i32
    %c0_i32_0 = arith.constant 0 : i32
    return %arg0, %arg1, %c0_i32 : i32, i32, i32
  }
  func.func @transform_4(%arg0: i32, %arg1: i32) -> (i32, i32, i32) {
    %c0_i32 = arith.constant 0 : i32
    %c0_i32_0 = arith.constant 0 : i32
    return %arg0, %arg1, %c0_i32 : i32, i32, i32
  }
  func.func @transform_5(%arg0: i32, %arg1: i32) -> (i32, i32) {
    %c0_i32 = arith.constant 0 : i32
    %c0_i32_0 = arith.constant 0 : i32
    %c0_i32_1 = arith.constant 0 : i32
    return %c0_i32, %c0_i32_0 : i32, i32
  }
  func.func @transform_6(%arg0: i32, %arg1: i32) -> (i32, i32) {
    %c0_i32 = arith.constant 0 : i32
    %c0_i32_0 = arith.constant 0 : i32
    %c0_i32_1 = arith.constant 0 : i32
    return %c0_i32, %c0_i32_0 : i32, i32
  }
  func.func @transform_7(%arg0: i32, %arg1: i32) -> (i32, i32) {
    %c0_i32 = arith.constant 0 : i32
    %c0_i32_0 = arith.constant 0 : i32
    %c0_i32_1 = arith.constant 0 : i32
    return %c0_i32, %c0_i32_0 : i32, i32
  }
  func.func @transform_8(%arg0: i32, %arg1: i32) -> (i32, i32) {
    %c0_i32 = arith.constant 0 : i32
    %c0_i32_0 = arith.constant 0 : i32
    %c0_i32_1 = arith.constant 0 : i32
    return %c0_i32, %c0_i32_0 : i32, i32
  }
  func.func @transform_9(%arg0: i32, %arg1: i32) -> (i32, i32) {
    %c0_i32 = arith.constant 0 : i32
    %c0_i32_0 = arith.constant 0 : i32
    %c0_i32_1 = arith.constant 0 : i32
    return %c0_i32, %c0_i32_0 : i32, i32
  }
  func.func @transform_10(%arg0: i32, %arg1: i32) -> (i32, i32) {
    %c0_i32 = arith.constant 0 : i32
    %c0_i32_0 = arith.constant 0 : i32
    %c0_i32_1 = arith.constant 0 : i32
    return %c0_i32, %c0_i32_0 : i32, i32
  }
  func.func @transform_11(%arg0: i32, %arg1: i32) -> (i32, i32) {
    %c0_i32 = arith.constant 0 : i32
    %c0_i32_0 = arith.constant 0 : i32
    %c0_i32_1 = arith.constant 0 : i32
    return %c0_i32, %c0_i32_0 : i32, i32
  }
  func.func @transform_12(%arg0: i32, %arg1: i32) -> (i32, i32) {
    %c0_i32 = arith.constant 0 : i32
    %c0_i32_0 = arith.constant 0 : i32
    %c0_i32_1 = arith.constant 0 : i32
    return %c0_i32, %c0_i32_0 : i32, i32
  }
  func.func @transform_13(%arg0: i32, %arg1: i32) -> (i32, i32, i32) {
    %c0_i32 = arith.constant 0 : i32
    %c0_i32_0 = arith.constant 0 : i32
    return %arg0, %c0_i32, %arg1 : i32, i32, i32
  }
}

</mosaic_0001>

<llo_original>
// kernel: semantic_cnn_forward.14
$region0: #{semantic_cnn_forward.14}
  #allocation0 [shape = 'u32[]', space=smem, size = 0x4, offset = 0x4, fixed_abs, tag = 'smem constant byte address 0x4 - core index']
  #allocation1 [shape = 'u32[72,128]{1,0:T(1,128)}', space=vmem, size = 0x9000, scoped, tag = 'internal scratch']
  %s0 = inlined_call_operand.vmem [shape: f32[32,3], index: 0, kind: input, shape index: {}]
  %s1 = inlined_call_operand.vmem [shape: bf16[3,2], index: 1, kind: input, shape index: {}]
  %s2 = inlined_call_operand.vmem [shape: f32[1,2], index: 2, kind: input, shape index: {}]
  %s3 = inlined_call_operand.vmem [shape: bf16[32,2], index: 3, kind: output, shape index: {}]
  %s4 = sld [smem:[#allocation0]]
  $region22: #{semantic_cnn_forward.14} parent=0
    _
  %s6 = ssub.s32 1, %s4
  %s7 = scalar_select 0, %s6, %s4
  // Predicated region
  $region2: #{semantic_cnn_forward.14} parent=0 // pred_check
    _
  $region3: #{semantic_cnn_forward.14} parent=0 // pred_check_branch
    %9 = sbr.rel (0) target = $region5
  $region4: #{semantic_cnn_forward.14} parent=0 // pred_region
    _
  $region5: #{semantic_cnn_forward.14} parent=0 // pred_fallthru
    _
  // Predicated region
  $region6: #{semantic_cnn_forward.14} parent=0 // pred_check
    _
  $region7: #{semantic_cnn_forward.14} parent=0 // pred_check_branch
    %11 = sbr.rel (0) target = $region9
  $region8: #{semantic_cnn_forward.14} parent=0 // pred_region
    _
  $region9: #{semantic_cnn_forward.14} parent=0 // pred_fallthru
    _
  // Predicated region
  $region10: #{semantic_cnn_forward.14} parent=0 // pred_check
    _
  $region11: #{semantic_cnn_forward.14} parent=0 // pred_check_branch
    %13 = sbr.rel (0) target = $region13
  $region12: #{semantic_cnn_forward.14} parent=0 // pred_region
    _
  $region13: #{semantic_cnn_forward.14} parent=0 // pred_fallthru
    _
  %v15 = vld [vmem:[%s0] sm:$0xff]
  %v16 = vld [vmem:[%s0 + $0x8] sm:$0xff]
  %v17 = vld [vmem:[%s0 + $0x10] sm:$0xff]
  %v18 = vld [vmem:[%s0 + $0x18] sm:$0xff]
  %v19 = vpack.c.bf16 %v16, %v15
  %v20 = vpack.c.bf16 %v18, %v17
  %v21 = vld [vmem:[%s1] sm:$0x3]
  %v22 = vld [vmem:[%s2] sm:$0x1]
  %v24 = vperm.slane %v22, 0
  %vm26 = vcmask 23552
  %v28 = vsel %vm26, %v19, 0
  %v31 = vsel %vm26, %v20, 0
  %vm33 = vcmask 1040384
  %vm34 = vcmask 1041408
  %v35 = vsel %vm33, 4294967295, 65535
  %v36 = vsel %vm34, %v35, 0
  %v38 = vand.u32 %v21, %v36
  %40 = vmatpush.bf16.msra.mxu0 0
  %41 = vmatpush.bf16.msra.mxu0 0
  %42 = vmatpush.bf16.msra.mxu0 0
  %43 = vmatpush.bf16.msra.mxu0 0
  %44 = vmatpush.bf16.msra.mxu0 0
  %45 = vmatpush.bf16.msra.mxu0 0
  %46 = vmatpush.bf16.msra.mxu0 0
  %47 = vmatpush.bf16.msra.mxu0 %v38
  %48 = vmatmul.bf16.gmra.mxu0 %v28
  %v49 = vpop.f32.mrf.mxu0
  %v50 = vadd.f32 %v24, %v49
  %v51 = vpop.f32.mrf.mxu0
  %v52 = vadd.f32 %v24, %v51
  %53 = vmatmul.bf16.gmra.mxu0 %v31
  %v54 = vpop.f32.mrf.mxu0
  %v55 = vadd.f32 %v24, %v54
  %v56 = vpop.f32.mrf.mxu0
  %v57 = vadd.f32 %v24, %v56
  %58 = vdwg.mxu0
  %v59 = vmax.f32 %v50, 0.0
  %v60 = vmax.f32 %v52, 0.0
  %v61 = vmax.f32 %v55, 0.0
  %v62 = vmax.f32 %v57, 0.0
  %v63 = vpack.c.bf16 %v59, %v59
  %v64 = vpack.c.bf16 %v60, %v60
  %v65 = vpack.c.bf16 %v61, %v61
  %v66 = vpack.c.bf16 %v62, %v62
  %vm67 = vcmask 11264
  %68 = vst.msk [vmem:[%s3] sm:$0xf] %vm67, %v63
  %69 = vst.msk [vmem:[%s3 + $0x4] sm:$0xf] %vm67, %v64
  %70 = vst.msk [vmem:[%s3 + $0x8] sm:$0xf] %vm67, %v65
  %71 = vst.msk [vmem:[%s3 + $0xc] sm:$0xf] %vm67, %v66
  // Predicated region
  $region14: #{semantic_cnn_forward.14} parent=0 // pred_check
    _
  $region15: #{semantic_cnn_forward.14} parent=0 // pred_check_branch
    %73 = sbr.rel (0) target = $region17
  $region16: #{semantic_cnn_forward.14} parent=0 // pred_region
    _
  $region17: #{semantic_cnn_forward.14} parent=0 // pred_fallthru
    _
  // Predicated region
  $region18: #{semantic_cnn_forward.14} parent=0 // pred_check
    _
  $region19: #{semantic_cnn_forward.14} parent=0 // pred_check_branch
    %75 = sbr.rel (0) target = $region21
  $region20: #{semantic_cnn_forward.14} parent=0 // pred_region
    _
  $region21: #{semantic_cnn_forward.14} parent=0 // pred_fallthru
    _

// kernel: semantic_cnn_forward.15
$region0: #{semantic_cnn_forward.15}
  #allocation0 [shape = 'u32[]', space=smem, size = 0x4, offset = 0x4, fixed_abs, tag = 'smem constant byte address 0x4 - core index']
  #allocation1 [shape = 'u32[72,128]{1,0:T(1,128)}', space=vmem, size = 0x9000, scoped, tag = 'internal scratch']
  %s0 = inlined_call_operand.vmem [shape: bf16[2,16,2], index: 0, kind: input, shape index: {}, may-alias: {0,1}]
  %s1 = inlined_call_operand.vmem [shape: bf16[2,16,2], index: 1, kind: input, shape index: {}, may-alias: {0,1}]
  %s2 = inlined_call_operand.vmem [shape: bf16[2,16,16], index: 2, kind: output, shape index: {}]
  %s3 = sld [smem:[#allocation0]]
  $region41: #{semantic_cnn_forward.15} parent=0
    _
  %s5 = ssub.s32 1, %s3
  %s6 = scalar_select 0, %s5, %s3
  loop: start=0, step=1, limit=4
  $region2: #{semantic_cnn_forward.15} parent=0 // loop_pre_header
    _
  $region3: #{semantic_cnn_forward.15} parent=0 // loop_header
    %s8 = sphi 0, %s12
    %p9 = scmp.ge.s32.totalorder %s8, 4
    %s15 = sphi 0, %s27
    %s16 = sphi 0, %s23
    %s17 = sphi 0, %s15
    %s18 = sphi 0, %s16
    %s19 = sphi 0, %s17
    %s20 = sphi 0, %s18
    %s32 = sphi 0, %s34
    %s35 = sphi 0, %s32
    %s36 = sphi 0, %s35
    %s52 = sphi 0, %s36
    %s58 = sphi 0, %s60
    %s61 = sphi 0, %s58
    %s62 = sphi 0, %s61
    %s78 = sphi 0, %s62
    %s86 = sphi 0, %s88
    %s89 = sphi 0, %s86
    %s90 = sphi 0, %s89
    %s106 = sphi 0, %s90
  $region4: #{semantic_cnn_forward.15} parent=0 // loop_header_branch
    %11 = sbr.rel (%p9) target = $region8
  $region5: #{semantic_cnn_forward.15} parent=0 // loop_body
    %s13 = ssub.s32 %s8, 1
    %s14 = ssub.s32 %s8, 2
    %s21 = sadd.s32 1, %s16
    %p22 = scmp.ge.s32.totalorder %s21, 1
    %s23 = scalar_select %p22, 0, %s21
    %s24 = sadd.s32 1, %s15
    %s25 = scalar_select %p22, %s24, %s15
    %p26 = scmp.ge.s32.totalorder %s25, 2
    %s27 = scalar_select %p26, 0, %s25
    %s28 = ssub.s32 %s15, %s27
    %s29 = ssub.s32 %s16, %s23
    %s30 = sor.u32 %s28, %s29
    %p31 = scmp.eq.s32.totalorder %s30, 0
    %s33 = sadd.s32 %s32, 1
    %s34 = scalar_select %p31, %s32, %s33
    %p37 = pneg %p31
    %p38 = scmp.eq.s32.totalorder %s8, 1
    %p39 = por %p37, %p38
    %p40 = scmp.ne.s32.totalorder %s32, %s35
    %p41 = scmp.eq.s32.totalorder %s8, 0
    %p42 = por %p40, %p41
    %p43 = scmp.ne.s32.totalorder %s32, %s35
    %p44 = scmp.eq.s32.totalorder %s13, 1
    %p45 = por %p43, %p44
    %p46 = scmp.ne.s32.totalorder %s35, %s36
    %p47 = scmp.eq.s32.totalorder %s13, 0
    %p48 = por %p46, %p47
    %p49 = scmp.ne.s32.totalorder %s35, %s36
    %p50 = scmp.eq.s32.totalorder %s14, 1
    %p51 = por %p49, %p50
    %p53 = scmp.ne.s32.totalorder %s36, %s52
    %p54 = scmp.eq.s32.totalorder %s14, 0
    %p55 = por %p53, %p54
    %s56 = ssub.s32 %s15, %s27
    %p57 = scmp.eq.s32.totalorder %s56, 0
    %s59 = sadd.s32 %s58, 1
    %s60 = scalar_select %p57, %s58, %s59
    %p63 = pneg %p57
    %p64 = scmp.eq.s32.totalorder %s8, 1
    %p65 = por %p63, %p64
    %p66 = scmp.ne.s32.totalorder %s58, %s61
    %p67 = scmp.eq.s32.totalorder %s8, 0
    %p68 = por %p66, %p67
    %p69 = scmp.ne.s32.totalorder %s58, %s61
    %p70 = scmp.eq.s32.totalorder %s13, 1
    %p71 = por %p69, %p70
    %p72 = scmp.ne.s32.totalorder %s61, %s62
    %p73 = scmp.eq.s32.totalorder %s13, 0
    %p74 = por %p72, %p73
    %p75 = scmp.ne.s32.totalorder %s61, %s62
    %p76 = scmp.eq.s32.totalorder %s14, 1
    %p77 = por %p75, %p76
    %p79 = scmp.ne.s32.totalorder %s62, %s78
    %p80 = scmp.eq.s32.totalorder %s14, 0
    %p81 = por %p79, %p80
    %s82 = ssub.s32 %s15, %s27
    %s83 = ssub.s32 %s16, %s23
    %s84 = sor.u32 %s82, %s83
    %p85 = scmp.eq.s32.totalorder %s84, 0
    %s87 = sadd.s32 %s86, 1
    %s88 = scalar_select %p85, %s86, %s87
    %p91 = pneg %p85
    %p92 = scmp.eq.s32.totalorder %s8, 1
    %p93 = por %p91, %p92
    %p94 = scmp.ne.s32.totalorder %s86, %s89
    %p95 = scmp.eq.s32.totalorder %s8, 0
    %p96 = por %p94, %p95
    %p97 = scmp.ne.s32.totalorder %s86, %s89
    %p98 = scmp.eq.s32.totalorder %s13, 1
    %p99 = por %p97, %p98
    %p100 = scmp.ne.s32.totalorder %s89, %s90
    %p101 = scmp.eq.s32.totalorder %s13, 0
    %p102 = por %p100, %p101
    %p103 = scmp.ne.s32.totalorder %s89, %s90
    %p104 = scmp.eq.s32.totalorder %s14, 1
    %p105 = por %p103, %p104
    %p107 = scmp.ne.s32.totalorder %s90, %s106
    %p108 = scmp.eq.s32.totalorder %s14, 0
    %p109 = por %p107, %p108
    %p110 = scmp.le.s32.totalorder 1, %s8
    %p111 = scmp.lt.s32.totalorder %s8, 3
    %p112 = pnand %p110, %p111
    %p113 = pneg %p112
    // Predicated region
    $region9: #{semantic_cnn_forward.15} parent=5 // pred_check
      _
    $region10: #{semantic_cnn_forward.15} parent=5 // pred_check_branch
      %115 = sbr.rel (%p112) target = $region12
    $region11: #{semantic_cnn_forward.15} parent=5 // pred_region
      %s116 = ssub.s32 %s8, 1
    $region12: #{semantic_cnn_forward.15} parent=5 // pred_fallthru
      _
    %p117 = scmp.lt.s32.totalorder %s8, 2
    // Predicated region
    $region13: #{semantic_cnn_forward.15} parent=5 // pred_check
      %p118 = pneg %p117
    $region14: #{semantic_cnn_forward.15} parent=5 // pred_check_branch
      %120 = sbr.rel (%p118) target = $region16
    $region15: #{semantic_cnn_forward.15} parent=5 // pred_region
      // Predicated region
      $region17: #{semantic_cnn_forward.15} parent=15 // pred_check
        %p121 = pneg %p42
      $region18: #{semantic_cnn_forward.15} parent=15 // pred_check_branch
        %123 = sbr.rel (%p121) target = $region20
      $region19: #{semantic_cnn_forward.15} parent=15 // pred_region
        %s124 = smul.u32 2, %s16
        %p125 = scmp.lt.s32.totalorder %s15, 1
        %s126 = scalar_select %p125, %s15, 1
        %p127 = scmp.lt.s32.totalorder %s124, 1
        %s128 = scalar_select %p127, %s124, 1
        %s129 = smul.addr %s126, 2
        %s130 = sadd.s32 %s128, %s129
        %s131 = smul.addr %s130, 4
        %s132 = scalar_lea.vmem %s0, %s131
        %s133 = smul.u32 2, %s16
      $region20: #{semantic_cnn_forward.15} parent=15 // pred_fallthru
        _
      // Predicated region
      $region21: #{semantic_cnn_forward.15} parent=15 // pred_check
        %p134 = pneg %p68
      $region22: #{semantic_cnn_forward.15} parent=15 // pred_check_branch
        %136 = sbr.rel (%p134) target = $region24
      $region23: #{semantic_cnn_forward.15} parent=15 // pred_region
        %p137 = scmp.lt.s32.totalorder %s15, 1
        %s138 = scalar_select %p137, %s15, 1
        %s139 = smul.addr %s138, 2
        %s140 = smul.addr %s139, 4
        %s141 = scalar_lea.vmem %s1, %s140
      $region24: #{semantic_cnn_forward.15} parent=15 // pred_fallthru
        _
    $region16: #{semantic_cnn_forward.15} parent=5 // pred_fallthru
      _
    %p142 = scmp.le.s32.totalorder 1, %s8
    %p143 = scmp.lt.s32.totalorder %s8, 3
    %p144 = pnand %p142, %p143
    %p145 = pneg %p144
    // Predicated region
    $region25: #{semantic_cnn_forward.15} parent=5 // pred_check
      _
    $region26: #{semantic_cnn_forward.15} parent=5 // pred_check_branch
      %147 = sbr.rel (%p144) target = $region28
    $region27: #{semantic_cnn_forward.15} parent=5 // pred_region
      %s148 = ssub.s32 %s8, 1
      %s149 = smul.u32 2, %s18
      %p150 = scmp.lt.s32.totalorder %s17, 1
      %s151 = scalar_select %p150, %s17, 1
      %p152 = scmp.lt.s32.totalorder %s149, 1
      %s153 = scalar_select %p152, %s149, 1
      %s154 = smul.addr %s151, 2
      %s155 = sadd.s32 %s153, %s154
      %s156 = smul.addr %s155, 4
      %s157 = scalar_lea.vmem %s0, %s156
      %p158 = pneg %p48
      %p159 = pneg %p45
      %p160 = scmp.lt.s32.totalorder %s17, 1
      %s161 = scalar_select %p160, %s17, 1
      %s162 = smul.addr %s161, 2
      %s163 = smul.addr %s162, 4
      %s164 = scalar_lea.vmem %s1, %s163
      %p165 = pneg %p74
      %p166 = pneg %p71
      %p167 = pneg %p102
      %p168 = pneg %p99
      %s169 = smul.u32 2, %s18
      %p170 = scmp.lt.s32.totalorder %s17, 1
      %s171 = scalar_select %p170, %s17, 1
      %p172 = scmp.lt.s32.totalorder %s169, 1
      %s173 = scalar_select %p172, %s169, 1
      %s174 = smul.addr %s171, 2
      %s175 = sadd.s32 %s173, %s174
      %s176 = smul.addr %s175, 4
      %s177 = scalar_lea.vmem %s2, %s176
      %s178 = smul.u32 2, %s18
      %p179 = scmp.lt.s32.totalorder %s17, 1
      %s180 = scalar_select %p179, %s17, 1
      %p181 = scmp.lt.s32.totalorder %s178, 1
      %s182 = scalar_select %p181, %s178, 1
      %s183 = smul.addr %s180, 2
      %s184 = sadd.s32 %s182, %s183
      %s185 = smul.addr %s184, 4
      %s186 = scalar_lea.vmem %s0, %s185
      %s187 = smul.u32 2, %s18
      %p188 = scmp.lt.s32.totalorder %s17, 1
      %s189 = scalar_select %p188, %s17, 1
      %s190 = smul.addr %s189, 2
      %s191 = smul.addr %s190, 4
      %s192 = scalar_lea.vmem %s1, %s191
      %s193 = smul.u32 2, %s18
      %p194 = scmp.lt.s32.totalorder %s17, 1
      %s195 = scalar_select %p194, %s17, 1
      %p196 = scmp.lt.s32.totalorder %s193, 1
      %s197 = scalar_select %p196, %s193, 1
      %s198 = smul.addr %s195, 2
      %s199 = sadd.s32 %s197, %s198
      %s200 = smul.addr %s199, 4
      %s201 = scalar_lea.vmem %s2, %s200
      %s202 = smul.u32 2, %s18
      %v204 = vld [vmem:[%s186] sm:$0xf]
      %v205 = vld [vmem:[%s186 + $0x4] sm:$0xf]
      %v206 = vld [vmem:[%s192] sm:$0xf]
      %v207 = vld [vmem:[%s192 + $0x4] sm:$0xf]
      %v208 = vunpack.c.l.bf16 %v204
      %v209 = vunpack.c.l.bf16 %v205
      %v210 = vunpack.c.l.bf16 %v206
      %v211 = vunpack.c.l.bf16 %v207
      %v212 = vmul.f32 %v208, %v208
      %v213 = vmul.f32 %v209, %v209
      %vm214 = vcmask 15360
      %v215 = vsel %vm214, %v212, 0.0
      %216 = vadd.xlane.f32.xlu0 %v215
      %v217 = vpop.xlane.xlu0 %216
      %v218 = vsel %vm214, %v213, 0.0
      %219 = vadd.xlane.f32.xlu0 %v218
      %v220 = vpop.xlane.xlu0 %219
      %v221 = vmul.f32 %v210, %v210
      %v222 = vmul.f32 %v211, %v211
      %v223 = vsel %vm214, %v221, 0.0
      %224 = vadd.xlane.f32.xlu0 %v223
      %v225 = vpop.xlane.xlu0 %224
      %v226 = vsel %vm214, %v222, 0.0
      %227 = vadd.xlane.f32.xlu0 %v226
      %v228 = vpop.xlane.xlu0 %227
      %v231 = vunpack.c.l.b16 %v204
      %v232 = vunpack.c.l.b16 %v205
      %v233 = vpack.c.b16 %v232, %v231
      %v236 = vunpack.c.l.b16 %v206
      %v237 = vunpack.c.l.b16 %v207
      %v238 = vpack.c.b16 %v237, %v236
      %v240 = vsel %vm214, %v233, 0
      %v243 = vsel %vm214, %v238, 0
      %245 = vmatpush.bf16.xpose.msra.mxu0 0
      %246 = vmatpush.bf16.xpose.msra.mxu0 0
      %247 = vmatpush.bf16.xpose.msra.mxu0 0
      %248 = vmatpush.bf16.xpose.msra.mxu0 0
      %249 = vmatpush.bf16.xpose.msra.mxu0 0
      %250 = vmatpush.bf16.xpose.msra.mxu0 0
      %251 = vmatpush.bf16.xpose.msra.mxu0 0
      %252 = vmatpush.bf16.xpose.msra.mxu0 %v243
      %253 = vmatmul.bf16.gmra.mxu0 %v240
      %v254 = vpop.f32.mrf.mxu0
      %v255 = vadd.f32 0.0, %v254
      %v256 = vpop.f32.mrf.mxu0
      %v257 = vadd.f32 0.0, %v256
      %258 = vdwg.mxu0
      %v259 = vmul.f32 %v255, 2.0
      %v260 = vmul.f32 %v257, 2.0
      %v261 = vsub.f32 %v259, %v217
      %v262 = vsub.f32 %v260, %v220
      %263 = vxpose.xlu0.b32.start [1/16] %v225, 128
      %264 = vxpose.xlu0.b32.cont [2/16] %v228, 128
      %265 = vxpose.xlu0.b32.cont [3/16] 0.0, 128
      %266 = vxpose.xlu0.b32.cont [4/16] 0.0, 128
      %267 = vxpose.xlu0.b32.cont [5/16] 0.0, 128
      %268 = vxpose.xlu0.b32.cont [6/16] 0.0, 128
      %269 = vxpose.xlu0.b32.cont [7/16] 0.0, 128
      %270 = vxpose.xlu0.b32.cont [8/16] 0.0, 128
      %271 = vxpose.xlu0.b32.cont [9/16] 0.0, 128
      %272 = vxpose.xlu0.b32.cont [10/16] 0.0, 128
      %273 = vxpose.xlu0.b32.cont [11/16] 0.0, 128
      %274 = vxpose.xlu0.b32.cont [12/16] 0.0, 128
      %275 = vxpose.xlu0.b32.cont [13/16] 0.0, 128
      %276 = vxpose.xlu0.b32.cont [14/16] 0.0, 128
      %277 = vxpose.xlu0.b32.cont [15/16] 0.0, 128
      %278 = vxpose.xlu0.b32.end [16/16] 0.0, 128
      %v279 = vpop.trf.xlu0
      %v280 = vpop.trf.xlu0
      %v281 = vpop.trf.xlu0
      %v282 = vpop.trf.xlu0
      %v283 = vpop.trf.xlu0
      %v284 = vpop.trf.xlu0
      %v285 = vpop.trf.xlu0
      %v286 = vpop.trf.xlu0
      %v287 = vpop.trf.xlu0
      %v288 = vpop.trf.xlu0
      %v289 = vpop.trf.xlu0
      %v290 = vpop.trf.xlu0
      %v291 = vpop.trf.xlu0
      %v292 = vpop.trf.xlu0
      %v293 = vpop.trf.xlu0
      %v294 = vpop.trf.xlu0
      %v295 = vperm.slane %v279, 0
      %v296 = vsub.f32 %v261, %v295
      %v297 = vsub.f32 %v262, %v295
      %v298 = vpack.c.bf16 %v296, %v296
      %v299 = vpack.c.bf16 %v297, %v297
      %vm300 = vcmask 125952
      %301 = vst.msk [vmem:[%s201] sm:$0xf] %vm300, %v298
      %302 = vst.msk [vmem:[%s201 + $0x4] sm:$0xf] %vm300, %v299
      %s303 = smul.u32 2, %s18
      %p304 = scmp.lt.s32.totalorder %s17, 1
      %s305 = scalar_select %p304, %s17, 1
      %p306 = scmp.lt.s32.totalorder %s303, 1
      %s307 = scalar_select %p306, %s303, 1
      %s308 = smul.addr %s305, 2
      %s309 = sadd.s32 %s307, %s308
      %s310 = smul.addr %s309, 4
      %s311 = scalar_lea.vmem %s2, %s310
      // Predicated region
      $region29: #{semantic_cnn_forward.15} parent=27 // pred_check
        %p312 = pneg %p99
      $region30: #{semantic_cnn_forward.15} parent=27 // pred_check_branch
        %314 = sbr.rel (%p312) target = $region32
      $region31: #{semantic_cnn_forward.15} parent=27 // pred_region
        %s315 = smul.u32 2, %s18
      $region32: #{semantic_cnn_forward.15} parent=27 // pred_fallthru
        _
    $region28: #{semantic_cnn_forward.15} parent=5 // pred_fallthru
      _
    %p316 = scmp.le.s32.totalorder 2, %s8
    // Predicated region
    $region33: #{semantic_cnn_forward.15} parent=5 // pred_check
      %p317 = pneg %p316
    $region34: #{semantic_cnn_forward.15} parent=5 // pred_check_branch
      %319 = sbr.rel (%p317) target = $region36
    $region35: #{semantic_cnn_forward.15} parent=5 // pred_region
      %s320 = ssub.s32 %s8, 2
      // Predicated region
      $region37: #{semantic_cnn_forward.15} parent=35 // pred_check
        %p321 = pneg %p105
      $region38: #{semantic_cnn_forward.15} parent=35 // pred_check_branch
        %323 = sbr.rel (%p321) target = $region40
      $region39: #{semantic_cnn_forward.15} parent=35 // pred_region
        %s324 = smul.u32 2, %s20
        %p325 = scmp.lt.s32.totalorder %s19, 1
        %s326 = scalar_select %p325, %s19, 1
        %p327 = scmp.lt.s32.totalorder %s324, 1
        %s328 = scalar_select %p327, %s324, 1
        %s329 = smul.addr %s326, 2
        %s330 = sadd.s32 %s328, %s329
        %s331 = smul.addr %s330, 4
        %s332 = scalar_lea.vmem %s2, %s331
      $region40: #{semantic_cnn_forward.15} parent=35 // pred_fallthru
        _
    $region36: #{semantic_cnn_forward.15} parent=5 // pred_fallthru
      _
  $region6: #{semantic_cnn_forward.15} parent=0 // loop_footer
    %s12 = sadd.s32 1, %s8
  $region7: #{semantic_cnn_forward.15} parent=0 // loop_footer_branch
    %7 = sbr.rel target = $region3
  $region8: #{semantic_cnn_forward.15} parent=0 // loop_exit
    _

// kernel: semantic_cnn_forward.19
$region0: #{semantic_cnn_forward.19}
  #allocation0 [shape = 'u32[]', space=smem, size = 0x4, offset = 0x4, fixed_abs, tag = 'smem constant byte address 0x4 - core index']
  #allocation1 [shape = 'u32[72,128]{1,0:T(1,128)}', space=vmem, size = 0x9000, scoped, tag = 'internal scratch']
  %s0 = inlined_call_operand.vmem [shape: bf16[32,2], index: 0, kind: input, shape index: {}]
  %s1 = inlined_call_operand.vmem [shape: bf16[4,32,2], index: 1, kind: input, shape index: {}]
  %s2 = inlined_call_operand.vmem [shape: bf16[2,4], index: 2, kind: input, shape index: {}]
  %s3 = inlined_call_operand.vmem [shape: bf16[2,4], index: 3, kind: input, shape index: {}]
  %s4 = inlined_call_operand.vmem [shape: f32[1,4], index: 4, kind: input, shape index: {}]
  %s5 = inlined_call_operand.vmem [shape: f32[1,4], index: 5, kind: input, shape index: {}]
  %s6 = inlined_call_operand.vmem [shape: bf16[32,4], index: 6, kind: output, shape index: {}]
  %s7 = sld [smem:[#allocation0]]
  $region34: #{semantic_cnn_forward.19} parent=0
    _
  %s9 = ssub.s32 1, %s7
  %s10 = scalar_select 0, %s9, %s7
  // Predicated region
  $region2: #{semantic_cnn_forward.19} parent=0 // pred_check
    _
  $region3: #{semantic_cnn_forward.19} parent=0 // pred_check_branch
    %12 = sbr.rel (0) target = $region5
  $region4: #{semantic_cnn_forward.19} parent=0 // pred_region
    _
  $region5: #{semantic_cnn_forward.19} parent=0 // pred_fallthru
    _
  // Predicated region
  $region6: #{semantic_cnn_forward.19} parent=0 // pred_check
    _
  $region7: #{semantic_cnn_forward.19} parent=0 // pred_check_branch
    %14 = sbr.rel (0) target = $region9
  $region8: #{semantic_cnn_forward.19} parent=0 // pred_region
    _
  $region9: #{semantic_cnn_forward.19} parent=0 // pred_fallthru
    _
  // Predicated region
  $region10: #{semantic_cnn_forward.19} parent=0 // pred_check
    _
  $region11: #{semantic_cnn_forward.19} parent=0 // pred_check_branch
    %16 = sbr.rel (0) target = $region13
  $region12: #{semantic_cnn_forward.19} parent=0 // pred_region
    _
  $region13: #{semantic_cnn_forward.19} parent=0 // pred_fallthru
    _
  // Predicated region
  $region14: #{semantic_cnn_forward.19} parent=0 // pred_check
    _
  $region15: #{semantic_cnn_forward.19} parent=0 // pred_check_branch
    %18 = sbr.rel (0) target = $region17
  $region16: #{semantic_cnn_forward.19} parent=0 // pred_region
    _
  $region17: #{semantic_cnn_forward.19} parent=0 // pred_fallthru
    _
  // Predicated region
  $region18: #{semantic_cnn_forward.19} parent=0 // pred_check
    _
  $region19: #{semantic_cnn_forward.19} parent=0 // pred_check_branch
    %20 = sbr.rel (0) target = $region21
  $region20: #{semantic_cnn_forward.19} parent=0 // pred_region
    _
  $region21: #{semantic_cnn_forward.19} parent=0 // pred_fallthru
    _
  // Predicated region
  $region22: #{semantic_cnn_forward.19} parent=0 // pred_check
    _
  $region23: #{semantic_cnn_forward.19} parent=0 // pred_check_branch
    %22 = sbr.rel (0) target = $region25
  $region24: #{semantic_cnn_forward.19} parent=0 // pred_region
    _
  $region25: #{semantic_cnn_forward.19} parent=0 // pred_fallthru
    _
  %v24 = vld [vmem:[%s0] sm:$0xf]
  %v25 = vld [vmem:[%s0 + $0x4] sm:$0xf]
  %v26 = vld [vmem:[%s0 + $0x8] sm:$0xf]
  %v27 = vld [vmem:[%s0 + $0xc] sm:$0xf]
  %v28 = vld [vmem:[%s2] sm:$0x1]
  %v29 = vunpack.c.l.bf16 %v24
  %v30 = vunpack.c.l.bf16 %v25
  %v31 = vunpack.c.l.bf16 %v26
  %v32 = vunpack.c.l.bf16 %v27
  %v33 = vld [vmem:[%s4] sm:$0x1]
  %v34 = vld [vmem:[%s1] sm:$0xf]
  %v35 = vld [vmem:[%s1 + $0x4] sm:$0xf]
  %v36 = vld [vmem:[%s1 + $0x8] sm:$0xf]
  %v37 = vld [vmem:[%s1 + $0xc] sm:$0xf]
  %v38 = vld [vmem:[%s3] sm:$0x1]
  %v39 = vunpack.c.l.bf16 %v34
  %v40 = vunpack.c.l.bf16 %v35
  %v41 = vunpack.c.l.bf16 %v36
  %v42 = vunpack.c.l.bf16 %v37
  %v43 = vsub.f32 %v39, %v29
  %v44 = vsub.f32 %v40, %v30
  %v45 = vsub.f32 %v41, %v31
  %v46 = vsub.f32 %v42, %v32
  %v47 = vmul.f32 %v43, %v43
  %v48 = vmul.f32 %v44, %v44
  %v49 = vmul.f32 %v45, %v45
  %v50 = vmul.f32 %v46, %v46
  %vm51 = vcmask 15360
  %v52 = vsel %vm51, %v47, 0.0
  %53 = vadd.xlane.f32.xlu0 %v52
  %v54 = vpop.xlane.xlu0 %53
  %v55 = vsel %vm51, %v48, 0.0
  %56 = vadd.xlane.f32.xlu0 %v55
  %v57 = vpop.xlane.xlu0 %56
  %v58 = vsel %vm51, %v49, 0.0
  %59 = vadd.xlane.f32.xlu0 %v58
  %v60 = vpop.xlane.xlu0 %59
  %v61 = vsel %vm51, %v50, 0.0
  %62 = vadd.xlane.f32.xlu0 %v61
  %v63 = vpop.xlane.xlu0 %62
  %v64 = vrsqrt.pop %v54
  %v65 = vmul.f32 %v64, %v54
  %v66 = vmul.f32 %v65, %v64
  %v67 = vmul.f32 0.5, %v66
  %v68 = vsub.f32 1.5, %v67
  %v69 = vmul.f32 %v64, %v68
  %v70 = vmul.f32 %v54, %v69
  %vm71 = vcmp.eq.f32.partialorder %v54, inf
  %v72 = vsel %vm71, %v54, %v70
  %vm73 = vcmp.eq.f32.partialorder %v54, 0.0
  %v74 = vand.u32 %v54, 2147483648
  %v75 = vsel %vm73, %v74, %v72
  %v76 = vrsqrt.pop %v57
  %v77 = vmul.f32 %v76, %v57
  %v78 = vmul.f32 %v77, %v76
  %v79 = vmul.f32 0.5, %v78
  %v80 = vsub.f32 1.5, %v79
  %v81 = vmul.f32 %v76, %v80
  %v82 = vmul.f32 %v57, %v81
  %vm83 = vcmp.eq.f32.partialorder %v57, inf
  %v84 = vsel %vm83, %v57, %v82
  %vm85 = vcmp.eq.f32.partialorder %v57, 0.0
  %v86 = vand.u32 %v57, 2147483648
  %v87 = vsel %vm85, %v86, %v84
  %v88 = vrsqrt.pop %v60
  %v89 = vmul.f32 %v88, %v60
  %v90 = vmul.f32 %v89, %v88
  %v91 = vmul.f32 0.5, %v90
  %v92 = vsub.f32 1.5, %v91
  %v93 = vmul.f32 %v88, %v92
  %v94 = vmul.f32 %v60, %v93
  %vm95 = vcmp.eq.f32.partialorder %v60, inf
  %v96 = vsel %vm95, %v60, %v94
  %vm97 = vcmp.eq.f32.partialorder %v60, 0.0
  %v98 = vand.u32 %v60, 2147483648
  %v99 = vsel %vm97, %v98, %v96
  %v100 = vrsqrt.pop %v63
  %v101 = vmul.f32 %v100, %v63
  %v102 = vmul.f32 %v101, %v100
  %v103 = vmul.f32 0.5, %v102
  %v104 = vsub.f32 1.5, %v103
  %v105 = vmul.f32 %v100, %v104
  %v106 = vmul.f32 %v63, %v105
  %vm107 = vcmp.eq.f32.partialorder %v63, inf
  %v108 = vsel %vm107, %v63, %v106
  %vm109 = vcmp.eq.f32.partialorder %v63, 0.0
  %v110 = vand.u32 %v63, 2147483648
  %v111 = vsel %vm109, %v110, %v108
  %v113 = vperm.slane %v33, 0
  %v115 = vmul.f32 %v75, %v113
  %v116 = vmul.f32 %v87, %v113
  %v117 = vmul.f32 %v99, %v113
  %v118 = vmul.f32 %v111, %v113
  %v123 = vunpack.c.l.b16 %v34
  %v124 = vunpack.c.l.b16 %v35
  %v125 = vunpack.c.l.b16 %v36
  %v126 = vunpack.c.l.b16 %v37
  %v127 = vpack.c.b16 %v124, %v123
  %v128 = vpack.c.b16 %v126, %v125
  %v130 = vsel %vm51, %v127, 0
  %v133 = vsel %vm51, %v128, 0
  %vm135 = vcmask 1040384
  %v137 = vsel %vm135, %v38, 0
  %139 = vmatpush.bf16.msra.mxu0 0
  %140 = vmatpush.bf16.msra.mxu0 0
  %141 = vmatpush.bf16.msra.mxu0 0
  %142 = vmatpush.bf16.msra.mxu0 0
  %143 = vmatpush.bf16.msra.mxu0 0
  %144 = vmatpush.bf16.msra.mxu0 0
  %145 = vmatpush.bf16.msra.mxu0 0
  %146 = vmatpush.bf16.msra.mxu0 %v137
  %147 = vmatmul.bf16.gmra.mxu0 %v130
  %v148 = vpop.f32.mrf.mxu0
  %v149 = vadd.f32 %v115, %v148
  %v150 = vpop.f32.mrf.mxu0
  %v151 = vadd.f32 %v116, %v150
  %152 = vmatmul.bf16.gmra.mxu0 %v133
  %v153 = vpop.f32.mrf.mxu0
  %v154 = vadd.f32 %v117, %v153
  %v155 = vpop.f32.mrf.mxu0
  %v156 = vadd.f32 %v118, %v155
  %157 = vdwg.mxu0
  %s158 = scalar_lea.vmem %s1, 16
  %v159 = vld [vmem:[%s158] sm:$0xf]
  %v160 = vld [vmem:[%s158 + $0x4] sm:$0xf]
  %v161 = vld [vmem:[%s158 + $0x8] sm:$0xf]
  %v162 = vld [vmem:[%s158 + $0xc] sm:$0xf]
  %v163 = vunpack.c.l.bf16 %v159
  %v164 = vunpack.c.l.bf16 %v160
  %v165 = vunpack.c.l.bf16 %v161
  %v166 = vunpack.c.l.bf16 %v162
  %v167 = vsub.f32 %v163, %v29
  %v168 = vsub.f32 %v164, %v30
  %v169 = vsub.f32 %v165, %v31
  %v170 = vsub.f32 %v166, %v32
  %v171 = vmul.f32 %v167, %v167
  %v172 = vmul.f32 %v168, %v168
  %v173 = vmul.f32 %v169, %v169
  %v174 = vmul.f32 %v170, %v170
  %v175 = vsel %vm51, %v171, 0.0
  %176 = vadd.xlane.f32.xlu0 %v175
  %v177 = vpop.xlane.xlu0 %176
  %v178 = vsel %vm51, %v172, 0.0
  %179 = vadd.xlane.f32.xlu0 %v178
  %v180 = vpop.xlane.xlu0 %179
  %v181 = vsel %vm51, %v173, 0.0
  %182 = vadd.xlane.f32.xlu0 %v181
  %v183 = vpop.xlane.xlu0 %182
  %v184 = vsel %vm51, %v174, 0.0
  %185 = vadd.xlane.f32.xlu0 %v184
  %v186 = vpop.xlane.xlu0 %185
  %v187 = vrsqrt.pop %v177
  %v188 = vmul.f32 %v187, %v177
  %v189 = vmul.f32 %v188, %v187
  %v190 = vmul.f32 0.5, %v189
  %v191 = vsub.f32 1.5, %v190
  %v192 = vmul.f32 %v187, %v191
  %v193 = vmul.f32 %v177, %v192
  %vm194 = vcmp.eq.f32.partialorder %v177, inf
  %v195 = vsel %vm194, %v177, %v193
  %vm196 = vcmp.eq.f32.partialorder %v177, 0.0
  %v197 = vand.u32 %v177, 2147483648
  %v198 = vsel %vm196, %v197, %v195
  %v199 = vrsqrt.pop %v180
  %v200 = vmul.f32 %v199, %v180
  %v201 = vmul.f32 %v200, %v199
  %v202 = vmul.f32 0.5, %v201
  %v203 = vsub.f32 1.5, %v202
  %v204 = vmul.f32 %v199, %v203
  %v205 = vmul.f32 %v180, %v204
  %vm206 = vcmp.eq.f32.partialorder %v180, inf
  %v207 = vsel %vm206, %v180, %v205
  %vm208 = vcmp.eq.f32.partialorder %v180, 0.0
  %v209 = vand.u32 %v180, 2147483648
  %v210 = vsel %vm208, %v209, %v207
  %v211 = vrsqrt.pop %v183
  %v212 = vmul.f32 %v211, %v183
  %v213 = vmul.f32 %v212, %v211
  %v214 = vmul.f32 0.5, %v213
  %v215 = vsub.f32 1.5, %v214
  %v216 = vmul.f32 %v211, %v215
  %v217 = vmul.f32 %v183, %v216
  %vm218 = vcmp.eq.f32.partialorder %v183, inf
  %v219 = vsel %vm218, %v183, %v217
  %vm220 = vcmp.eq.f32.partialorder %v183, 0.0
  %v221 = vand.u32 %v183, 2147483648
  %v222 = vsel %vm220, %v221, %v219
  %v223 = vrsqrt.pop %v186
  %v224 = vmul.f32 %v223, %v186
  %v225 = vmul.f32 %v224, %v223
  %v226 = vmul.f32 0.5, %v225
  %v227 = vsub.f32 1.5, %v226
  %v228 = vmul.f32 %v223, %v227
  %v229 = vmul.f32 %v186, %v228
  %vm230 = vcmp.eq.f32.partialorder %v186, inf
  %v231 = vsel %vm230, %v186, %v229
  %vm232 = vcmp.eq.f32.partialorder %v186, 0.0
  %v233 = vand.u32 %v186, 2147483648
  %v234 = vsel %vm232, %v233, %v231
  %v235 = vmul.f32 %v198, %v113
  %v236 = vmul.f32 %v210, %v113
  %v237 = vmul.f32 %v222, %v113
  %v238 = vmul.f32 %v234, %v113
  %v243 = vunpack.c.l.b16 %v159
  %v244 = vunpack.c.l.b16 %v160
  %v245 = vunpack.c.l.b16 %v161
  %v246 = vunpack.c.l.b16 %v162
  %v247 = vpack.c.b16 %v244, %v243
  %v248 = vpack.c.b16 %v246, %v245
  %v250 = vsel %vm51, %v247, 0
  %v253 = vsel %vm51, %v248, 0
  %255 = vmatpush.bf16.msra.mxu0 0
  %256 = vmatpush.bf16.msra.mxu0 0
  %257 = vmatpush.bf16.msra.mxu0 0
  %258 = vmatpush.bf16.msra.mxu0 0
  %259 = vmatpush.bf16.msra.mxu0 0
  %260 = vmatpush.bf16.msra.mxu0 0
  %261 = vmatpush.bf16.msra.mxu0 0
  %262 = vmatpush.bf16.msra.mxu0 %v137
  %263 = vmatmul.bf16.gmra.mxu0 %v250
  %v264 = vpop.f32.mrf.mxu0
  %v265 = vadd.f32 %v235, %v264
  %v266 = vpop.f32.mrf.mxu0
  %v267 = vadd.f32 %v236, %v266
  %268 = vmatmul.bf16.gmra.mxu0 %v253
  %v269 = vpop.f32.mrf.mxu0
  %v270 = vadd.f32 %v237, %v269
  %v271 = vpop.f32.mrf.mxu0
  %v272 = vadd.f32 %v238, %v271
  %273 = vdwg.mxu0
  %v274 = vmax.f32 %v149, %v265
  %v275 = vmax.f32 %v151, %v267
  %v276 = vmax.f32 %v154, %v270
  %v277 = vmax.f32 %v156, %v272
  %s278 = scalar_lea.vmem %s1, 32
  %v279 = vld [vmem:[%s278] sm:$0xf]
  %v280 = vld [vmem:[%s278 + $0x4] sm:$0xf]
  %v281 = vld [vmem:[%s278 + $0x8] sm:$0xf]
  %v282 = vld [vmem:[%s278 + $0xc] sm:$0xf]
  %v283 = vunpack.c.l.bf16 %v279
  %v284 = vunpack.c.l.bf16 %v280
  %v285 = vunpack.c.l.bf16 %v281
  %v286 = vunpack.c.l.bf16 %v282
  %v287 = vsub.f32 %v283, %v29
  %v288 = vsub.f32 %v284, %v30
  %v289 = vsub.f32 %v285, %v31
  %v290 = vsub.f32 %v286, %v32
  %v291 = vmul.f32 %v287, %v287
  %v292 = vmul.f32 %v288, %v288
  %v293 = vmul.f32 %v289, %v289
  %v294 = vmul.f32 %v290, %v290
  %v295 = vsel %vm51, %v291, 0.0
  %296 = vadd.xlane.f32.xlu0 %v295
  %v297 = vpop.xlane.xlu0 %296
  %v298 = vsel %vm51, %v292, 0.0
  %299 = vadd.xlane.f32.xlu0 %v298
  %v300 = vpop.xlane.xlu0 %299
  %v301 = vsel %vm51, %v293, 0.0
  %302 = vadd.xlane.f32.xlu0 %v301
  %v303 = vpop.xlane.xlu0 %302
  %v304 = vsel %vm51, %v294, 0.0
  %305 = vadd.xlane.f32.xlu0 %v304
  %v306 = vpop.xlane.xlu0 %305
  %v307 = vrsqrt.pop %v297
  %v308 = vmul.f32 %v307, %v297
  %v309 = vmul.f32 %v308, %v307
  %v310 = vmul.f32 0.5, %v309
  %v311 = vsub.f32 1.5, %v310
  %v312 = vmul.f32 %v307, %v311
  %v313 = vmul.f32 %v297, %v312
  %vm314 = vcmp.eq.f32.partialorder %v297, inf
  %v315 = vsel %vm314, %v297, %v313
  %vm316 = vcmp.eq.f32.partialorder %v297, 0.0
  %v317 = vand.u32 %v297, 2147483648
  %v318 = vsel %vm316, %v317, %v315
  %v319 = vrsqrt.pop %v300
  %v320 = vmul.f32 %v319, %v300
  %v321 = vmul.f32 %v320, %v319
  %v322 = vmul.f32 0.5, %v321
  %v323 = vsub.f32 1.5, %v322
  %v324 = vmul.f32 %v319, %v323
  %v325 = vmul.f32 %v300, %v324
  %vm326 = vcmp.eq.f32.partialorder %v300, inf
  %v327 = vsel %vm326, %v300, %v325
  %vm328 = vcmp.eq.f32.partialorder %v300, 0.0
  %v329 = vand.u32 %v300, 2147483648
  %v330 = vsel %vm328, %v329, %v327
  %v331 = vrsqrt.pop %v303
  %v332 = vmul.f32 %v331, %v303
  %v333 = vmul.f32 %v332, %v331
  %v334 = vmul.f32 0.5, %v333
  %v335 = vsub.f32 1.5, %v334
  %v336 = vmul.f32 %v331, %v335
  %v337 = vmul.f32 %v303, %v336
  %vm338 = vcmp.eq.f32.partialorder %v303, inf
  %v339 = vsel %vm338, %v303, %v337
  %vm340 = vcmp.eq.f32.partialorder %v303, 0.0
  %v341 = vand.u32 %v303, 2147483648
  %v342 = vsel %vm340, %v341, %v339
  %v343 = vrsqrt.pop %v306
  %v344 = vmul.f32 %v343, %v306
  %v345 = vmul.f32 %v344, %v343
  %v346 = vmul.f32 0.5, %v345
  %v347 = vsub.f32 1.5, %v346
  %v348 = vmul.f32 %v343, %v347
  %v349 = vmul.f32 %v306, %v348
  %vm350 = vcmp.eq.f32.partialorder %v306, inf
  %v351 = vsel %vm350, %v306, %v349
  %vm352 = vcmp.eq.f32.partialorder %v306, 0.0
  %v353 = vand.u32 %v306, 2147483648
  %v354 = vsel %vm352, %v353, %v351
  %v355 = vmul.f32 %v318, %v113
  %v356 = vmul.f32 %v330, %v113
  %v357 = vmul.f32 %v342, %v113
  %v358 = vmul.f32 %v354, %v113
  %v363 = vunpack.c.l.b16 %v279
  %v364 = vunpack.c.l.b16 %v280
  %v365 = vunpack.c.l.b16 %v281
  %v366 = vunpack.c.l.b16 %v282
  %v367 = vpack.c.b16 %v364, %v363
  %v368 = vpack.c.b16 %v366, %v365
  %v370 = vsel %vm51, %v367, 0
  %v373 = vsel %vm51, %v368, 0
  %375 = vmatpush.bf16.msra.mxu0 0
  %376 = vmatpush.bf16.msra.mxu0 0
  %377 = vmatpush.bf16.msra.mxu0 0
  %378 = vmatpush.bf16.msra.mxu0 0
  %379 = vmatpush.bf16.msra.mxu0 0
  %380 = vmatpush.bf16.msra.mxu0 0
  %381 = vmatpush.bf16.msra.mxu0 0
  %382 = vmatpush.bf16.msra.mxu0 %v137
  %383 = vmatmul.bf16.gmra.mxu0 %v370
  %v384 = vpop.f32.mrf.mxu0
  %v385 = vadd.f32 %v355, %v384
  %v386 = vpop.f32.mrf.mxu0
  %v387 = vadd.f32 %v356, %v386
  %388 = vmatmul.bf16.gmra.mxu0 %v373
  %v389 = vpop.f32.mrf.mxu0
  %v390 = vadd.f32 %v357, %v389
  %v391 = vpop.f32.mrf.mxu0
  %v392 = vadd.f32 %v358, %v391
  %393 = vdwg.mxu0
  %v394 = vmax.f32 %v274, %v385
  %v395 = vmax.f32 %v275, %v387
  %v396 = vmax.f32 %v276, %v390
  %v397 = vmax.f32 %v277, %v392
  %s398 = scalar_lea.vmem %s1, 48
  %v399 = vld [vmem:[%s398] sm:$0xf]
  %v400 = vld [vmem:[%s398 + $0x4] sm:$0xf]
  %v401 = vld [vmem:[%s398 + $0x8] sm:$0xf]
  %v402 = vld [vmem:[%s398 + $0xc] sm:$0xf]
  %v403 = vunpack.c.l.bf16 %v399
  %v404 = vunpack.c.l.bf16 %v400
  %v405 = vunpack.c.l.bf16 %v401
  %v406 = vunpack.c.l.bf16 %v402
  %v407 = vsub.f32 %v403, %v29
  %v408 = vsub.f32 %v404, %v30
  %v409 = vsub.f32 %v405, %v31
  %v410 = vsub.f32 %v406, %v32
  %v411 = vmul.f32 %v407, %v407
  %v412 = vmul.f32 %v408, %v408
  %v413 = vmul.f32 %v409, %v409
  %v414 = vmul.f32 %v410, %v410
  %v415 = vsel %vm51, %v411, 0.0
  %416 = vadd.xlane.f32.xlu0 %v415
  %v417 = vpop.xlane.xlu0 %416
  %v418 = vsel %vm51, %v412, 0.0
  %419 = vadd.xlane.f32.xlu0 %v418
  %v420 = vpop.xlane.xlu0 %419
  %v421 = vsel %vm51, %v413, 0.0
  %422 = vadd.xlane.f32.xlu0 %v421
  %v423 = vpop.xlane.xlu0 %422
  %v424 = vsel %vm51, %v414, 0.0
  %425 = vadd.xlane.f32.xlu0 %v424
  %v426 = vpop.xlane.xlu0 %425
  %v427 = vrsqrt.pop %v417
  %v428 = vmul.f32 %v427, %v417
  %v429 = vmul.f32 %v428, %v427
  %v430 = vmul.f32 0.5, %v429
  %v431 = vsub.f32 1.5, %v430
  %v432 = vmul.f32 %v427, %v431
  %v433 = vmul.f32 %v417, %v432
  %vm434 = vcmp.eq.f32.partialorder %v417, inf
  %v435 = vsel %vm434, %v417, %v433
  %vm436 = vcmp.eq.f32.partialorder %v417, 0.0
  %v437 = vand.u32 %v417, 2147483648
  %v438 = vsel %vm436, %v437, %v435
  %v439 = vrsqrt.pop %v420
  %v440 = vmul.f32 %v439, %v420
  %v441 = vmul.f32 %v440, %v439
  %v442 = vmul.f32 0.5, %v441
  %v443 = vsub.f32 1.5, %v442
  %v444 = vmul.f32 %v439, %v443
  %v445 = vmul.f32 %v420, %v444
  %vm446 = vcmp.eq.f32.partialorder %v420, inf
  %v447 = vsel %vm446, %v420, %v445
  %vm448 = vcmp.eq.f32.partialorder %v420, 0.0
  %v449 = vand.u32 %v420, 2147483648
  %v450 = vsel %vm448, %v449, %v447
  %v451 = vrsqrt.pop %v423
  %v452 = vmul.f32 %v451, %v423
  %v453 = vmul.f32 %v452, %v451
  %v454 = vmul.f32 0.5, %v453
  %v455 = vsub.f32 1.5, %v454
  %v456 = vmul.f32 %v451, %v455
  %v457 = vmul.f32 %v423, %v456
  %vm458 = vcmp.eq.f32.partialorder %v423, inf
  %v459 = vsel %vm458, %v423, %v457
  %vm460 = vcmp.eq.f32.partialorder %v423, 0.0
  %v461 = vand.u32 %v423, 2147483648
  %v462 = vsel %vm460, %v461, %v459
  %v463 = vrsqrt.pop %v426
  %v464 = vmul.f32 %v463, %v426
  %v465 = vmul.f32 %v464, %v463
  %v466 = vmul.f32 0.5, %v465
  %v467 = vsub.f32 1.5, %v466
  %v468 = vmul.f32 %v463, %v467
  %v469 = vmul.f32 %v426, %v468
  %vm470 = vcmp.eq.f32.partialorder %v426, inf
  %v471 = vsel %vm470, %v426, %v469
  %vm472 = vcmp.eq.f32.partialorder %v426, 0.0
  %v473 = vand.u32 %v426, 2147483648
  %v474 = vsel %vm472, %v473, %v471
  %v475 = vmul.f32 %v438, %v113
  %v476 = vmul.f32 %v450, %v113
  %v477 = vmul.f32 %v462, %v113
  %v478 = vmul.f32 %v474, %v113
  %v483 = vunpack.c.l.b16 %v399
  %v484 = vunpack.c.l.b16 %v400
  %v485 = vunpack.c.l.b16 %v401
  %v486 = vunpack.c.l.b16 %v402
  %v487 = vpack.c.b16 %v484, %v483
  %v488 = vpack.c.b16 %v486, %v485
  %v490 = vsel %vm51, %v487, 0
  %v493 = vsel %vm51, %v488, 0
  %495 = vmatpush.bf16.msra.mxu0 0
  %496 = vmatpush.bf16.msra.mxu0 0
  %497 = vmatpush.bf16.msra.mxu0 0
  %498 = vmatpush.bf16.msra.mxu0 0
  %499 = vmatpush.bf16.msra.mxu0 0
  %500 = vmatpush.bf16.msra.mxu0 0
  %501 = vmatpush.bf16.msra.mxu0 0
  %502 = vmatpush.bf16.msra.mxu0 %v137
  %503 = vmatmul.bf16.gmra.mxu0 %v490
  %v504 = vpop.f32.mrf.mxu0
  %v505 = vadd.f32 %v475, %v504
  %v506 = vpop.f32.mrf.mxu0
  %v507 = vadd.f32 %v476, %v506
  %508 = vmatmul.bf16.gmra.mxu0 %v493
  %v509 = vpop.f32.mrf.mxu0
  %v510 = vadd.f32 %v477, %v509
  %v511 = vpop.f32.mrf.mxu0
  %v512 = vadd.f32 %v478, %v511
  %513 = vdwg.mxu0
  %v514 = vmax.f32 %v394, %v505
  %v515 = vmax.f32 %v395, %v507
  %v516 = vmax.f32 %v396, %v510
  %v517 = vmax.f32 %v397, %v512
  %v522 = vunpack.c.l.b16 %v24
  %v523 = vunpack.c.l.b16 %v25
  %v524 = vunpack.c.l.b16 %v26
  %v525 = vunpack.c.l.b16 %v27
  %v526 = vpack.c.b16 %v523, %v522
  %v527 = vpack.c.b16 %v525, %v524
  %v529 = vsel %vm51, %v526, 0
  %v532 = vsel %vm51, %v527, 0
  %v535 = vsel %vm135, %v28, 0
  %537 = vmatpush.bf16.msra.mxu0 0
  %538 = vmatpush.bf16.msra.mxu0 0
  %539 = vmatpush.bf16.msra.mxu0 0
  %540 = vmatpush.bf16.msra.mxu0 0
  %541 = vmatpush.bf16.msra.mxu0 0
  %542 = vmatpush.bf16.msra.mxu0 0
  %543 = vmatpush.bf16.msra.mxu0 0
  %544 = vmatpush.bf16.msra.mxu0 %v535
  %545 = vmatmul.bf16.gmra.mxu0 %v529
  %v546 = vpop.f32.mrf.mxu0
  %v547 = vadd.f32 %v514, %v546
  %v548 = vpop.f32.mrf.mxu0
  %v549 = vadd.f32 %v515, %v548
  %550 = vmatmul.bf16.gmra.mxu0 %v532
  %v551 = vpop.f32.mrf.mxu0
  %v552 = vadd.f32 %v516, %v551
  %v553 = vpop.f32.mrf.mxu0
  %v554 = vadd.f32 %v517, %v553
  %555 = vdwg.mxu0
  %v556 = vld [vmem:[%s5] sm:$0x1]
  %v558 = vperm.slane %v556, 0
  %v560 = vadd.f32 %v547, %v558
  %v561 = vadd.f32 %v549, %v558
  %v562 = vadd.f32 %v552, %v558
  %v563 = vadd.f32 %v554, %v558
  %vm564 = vcmp.gt.f32.partialorder %v560, 0.0
  %vm565 = vcmp.gt.f32.partialorder %v561, 0.0
  %vm566 = vcmp.gt.f32.partialorder %v562, 0.0
  %vm567 = vcmp.gt.f32.partialorder %v563, 0.0
  %v568 = vmul.f32 %v560, 0.01
  %v569 = vmul.f32 %v561, 0.01
  %v570 = vmul.f32 %v562, 0.01
  %v571 = vmul.f32 %v563, 0.01
  %v572 = vsel %vm564, %v560, %v568
  %v573 = vsel %vm565, %v561, %v569
  %v574 = vsel %vm566, %v562, %v570
  %v575 = vsel %vm567, %v563, %v571
  %v576 = vpack.c.bf16 %v572, %v572
  %v577 = vpack.c.bf16 %v573, %v573
  %v578 = vpack.c.bf16 %v574, %v574
  %v579 = vpack.c.bf16 %v575, %v575
  %vm580 = vcmask 27648
  %581 = vst.msk [vmem:[%s6] sm:$0xf] %vm580, %v576
  %582 = vst.msk [vmem:[%s6 + $0x4] sm:$0xf] %vm580, %v577
  %583 = vst.msk [vmem:[%s6 + $0x8] sm:$0xf] %vm580, %v578
  %584 = vst.msk [vmem:[%s6 + $0xc] sm:$0xf] %vm580, %v579
  // Predicated region
  $region26: #{semantic_cnn_forward.19} parent=0 // pred_check
    _
  $region27: #{semantic_cnn_forward.19} parent=0 // pred_check_branch
    %586 = sbr.rel (0) target = $region29
  $region28: #{semantic_cnn_forward.19} parent=0 // pred_region
    _
  $region29: #{semantic_cnn_forward.19} parent=0 // pred_fallthru
    _
  // Predicated region
  $region30: #{semantic_cnn_forward.19} parent=0 // pred_check
    _
  $region31: #{semantic_cnn_forward.19} parent=0 // pred_check_branch
    %588 = sbr.rel (0) target = $region33
  $region32: #{semantic_cnn_forward.19} parent=0 // pred_region
    _
  $region33: #{semantic_cnn_forward.19} parent=0 // pred_fallthru
    _

// kernel: semantic_cnn_forward.17
$region0: #{semantic_cnn_forward.17}
  #allocation0 [shape = 'u32[]', space=smem, size = 0x4, offset = 0x4, fixed_abs, tag = 'smem constant byte address 0x4 - core index']
  #allocation1 [shape = 'u32[72,128]{1,0:T(1,128)}', space=vmem, size = 0x9000, scoped, tag = 'internal scratch']
  #allocation2 [shape = 'bf16[16,2]{1,0:T(8,128)(2,1)}', space=vmem, size = 0x1000, scoped, tag = 'scratch operand']
  #allocation3 [shape = 'bf16[16,2]{1,0:T(8,128)(2,1)}', space=vmem, size = 0x1000, scoped, tag = 'scratch operand']
  %s0 = inlined_call_operand.vmem [shape: bf16[2,16,2], index: 0, kind: input, shape index: {}, may-alias: {0,1}]
  %s1 = inlined_call_operand.vmem [shape: bf16[2,16,2], index: 1, kind: input, shape index: {}, may-alias: {0,1}]
  %s2 = inlined_call_operand.vmem [shape: bf16[2,16,2], index: 2, kind: input, shape index: {}]
  %s3 = inlined_call_operand.vmem [shape: bf16[2,2], index: 3, kind: input, shape index: {}]
  %s4 = inlined_call_operand.vmem [shape: f32[1,2], index: 4, kind: input, shape index: {}]
  %s5 = inlined_call_operand.vmem [shape: bf16[2,2], index: 5, kind: input, shape index: {}]
  %s6 = inlined_call_operand.vmem [shape: f32[1,2], index: 6, kind: input, shape index: {}]
  %s7 = inlined_call_operand.vmem [shape: bf16[2,2], index: 7, kind: input, shape index: {}]
  %s8 = inlined_call_operand.vmem [shape: f32[1,2], index: 8, kind: input, shape index: {}]
  %s9 = inlined_call_operand.vmem [shape: bf16[2,2], index: 9, kind: input, shape index: {}]
  %s10 = inlined_call_operand.vmem [shape: f32[1,2], index: 10, kind: input, shape index: {}]
  %s11 = inlined_call_operand.vmem [shape: bf16[2,2], index: 11, kind: input, shape index: {}]
  %s12 = inlined_call_operand.vmem [shape: bf16[2,2], index: 12, kind: input, shape index: {}]
  %s13 = inlined_call_operand.vmem [shape: f32[1,2], index: 13, kind: input, shape index: {}]
  %s14 = inlined_call_operand.vmem [shape: bf16[2,16,2], index: 14, kind: output, shape index: {}]
  %s15 = sld [smem:[#allocation0]]
  $region93: #{semantic_cnn_forward.17} parent=0
    _
  %s17 = ssub.s32 1, %s15
  %s18 = scalar_select 0, %s17, %s15
  loop: start=0, step=1, limit=4
  $region2: #{semantic_cnn_forward.17} parent=0 // loop_pre_header
    _
  $region3: #{semantic_cnn_forward.17} parent=0 // loop_header
    %s20 = sphi 0, %s24
    %p21 = scmp.ge.s32.totalorder %s20, 4
    %s27 = sphi 0, %s39
    %s28 = sphi 0, %s35
    %s29 = sphi 0, %s27
    %s30 = sphi 0, %s28
    %s31 = sphi 0, %s29
    %s32 = sphi 0, %s30
    %s44 = sphi 0, %s46
    %s47 = sphi 0, %s44
    %s48 = sphi 0, %s47
    %s64 = sphi 0, %s48
    %s70 = sphi 0, %s72
    %s73 = sphi 0, %s70
    %s74 = sphi 0, %s73
    %s90 = sphi 0, %s74
    %s98 = sphi 0, %s100
    %s101 = sphi 0, %s98
    %s102 = sphi 0, %s101
    %s118 = sphi 0, %s102
    %s122 = sphi 0, %s122
    %s124 = sphi 0, %s122
    %s125 = sphi 0, %s124
    %s139 = sphi 0, %s125
    %s143 = sphi 0, %s143
    %s145 = sphi 0, %s143
    %s146 = sphi 0, %s145
    %s160 = sphi 0, %s146
    %s164 = sphi 0, %s164
    %s166 = sphi 0, %s164
    %s167 = sphi 0, %s166
    %s181 = sphi 0, %s167
    %s185 = sphi 0, %s185
    %s187 = sphi 0, %s185
    %s188 = sphi 0, %s187
    %s202 = sphi 0, %s188
    %s206 = sphi 0, %s206
    %s208 = sphi 0, %s206
    %s209 = sphi 0, %s208
    %s223 = sphi 0, %s209
    %s227 = sphi 0, %s227
    %s229 = sphi 0, %s227
    %s230 = sphi 0, %s229
    %s244 = sphi 0, %s230
    %s248 = sphi 0, %s248
    %s250 = sphi 0, %s248
    %s251 = sphi 0, %s250
    %s265 = sphi 0, %s251
    %s269 = sphi 0, %s269
    %s271 = sphi 0, %s269
    %s272 = sphi 0, %s271
    %s286 = sphi 0, %s272
    %s290 = sphi 0, %s290
    %s292 = sphi 0, %s290
    %s293 = sphi 0, %s292
    %s307 = sphi 0, %s293
    %s311 = sphi 0, %s311
    %s313 = sphi 0, %s311
    %s314 = sphi 0, %s313
    %s328 = sphi 0, %s314
    %s332 = sphi 0, %s332
    %s334 = sphi 0, %s332
    %s335 = sphi 0, %s334
    %s349 = sphi 0, %s335
    %s357 = sphi 0, %s359
    %s360 = sphi 0, %s357
    %s361 = sphi 0, %s360
    %s377 = sphi 0, %s361
  $region4: #{semantic_cnn_forward.17} parent=0 // loop_header_branch
    %23 = sbr.rel (%p21) target = $region8
  $region5: #{semantic_cnn_forward.17} parent=0 // loop_body
    %s25 = ssub.s32 %s20, 1
    %s26 = ssub.s32 %s20, 2
    %s33 = sadd.s32 1, %s28
    %p34 = scmp.ge.s32.totalorder %s33, 1
    %s35 = scalar_select %p34, 0, %s33
    %s36 = sadd.s32 1, %s27
    %s37 = scalar_select %p34, %s36, %s27
    %p38 = scmp.ge.s32.totalorder %s37, 2
    %s39 = scalar_select %p38, 0, %s37
    %s40 = ssub.s32 %s27, %s39
    %s41 = ssub.s32 %s28, %s35
    %s42 = sor.u32 %s40, %s41
    %p43 = scmp.eq.s32.totalorder %s42, 0
    %s45 = sadd.s32 %s44, 1
    %s46 = scalar_select %p43, %s44, %s45
    %p49 = pneg %p43
    %p50 = scmp.eq.s32.totalorder %s20, 1
    %p51 = por %p49, %p50
    %p52 = scmp.ne.s32.totalorder %s44, %s47
    %p53 = scmp.eq.s32.totalorder %s20, 0
    %p54 = por %p52, %p53
    %p55 = scmp.ne.s32.totalorder %s44, %s47
    %p56 = scmp.eq.s32.totalorder %s25, 1
    %p57 = por %p55, %p56
    %p58 = scmp.ne.s32.totalorder %s47, %s48
    %p59 = scmp.eq.s32.totalorder %s25, 0
    %p60 = por %p58, %p59
    %p61 = scmp.ne.s32.totalorder %s47, %s48
    %p62 = scmp.eq.s32.totalorder %s26, 1
    %p63 = por %p61, %p62
    %p65 = scmp.ne.s32.totalorder %s48, %s64
    %p66 = scmp.eq.s32.totalorder %s26, 0
    %p67 = por %p65, %p66
    %s68 = ssub.s32 %s27, %s39
    %p69 = scmp.eq.s32.totalorder %s68, 0
    %s71 = sadd.s32 %s70, 1
    %s72 = scalar_select %p69, %s70, %s71
    %p75 = pneg %p69
    %p76 = scmp.eq.s32.totalorder %s20, 1
    %p77 = por %p75, %p76
    %p78 = scmp.ne.s32.totalorder %s70, %s73
    %p79 = scmp.eq.s32.totalorder %s20, 0
    %p80 = por %p78, %p79
    %p81 = scmp.ne.s32.totalorder %s70, %s73
    %p82 = scmp.eq.s32.totalorder %s25, 1
    %p83 = por %p81, %p82
    %p84 = scmp.ne.s32.totalorder %s73, %s74
    %p85 = scmp.eq.s32.totalorder %s25, 0
    %p86 = por %p84, %p85
    %p87 = scmp.ne.s32.totalorder %s73, %s74
    %p88 = scmp.eq.s32.totalorder %s26, 1
    %p89 = por %p87, %p88
    %p91 = scmp.ne.s32.totalorder %s74, %s90
    %p92 = scmp.eq.s32.totalorder %s26, 0
    %p93 = por %p91, %p92
    %s94 = ssub.s32 %s27, %s39
    %s95 = ssub.s32 %s28, %s35
    %s96 = sor.u32 %s94, %s95
    %p97 = scmp.eq.s32.totalorder %s96, 0
    %s99 = sadd.s32 %s98, 1
    %s100 = scalar_select %p97, %s98, %s99
    %p103 = pneg %p97
    %p104 = scmp.eq.s32.totalorder %s20, 1
    %p105 = por %p103, %p104
    %p106 = scmp.ne.s32.totalorder %s98, %s101
    %p107 = scmp.eq.s32.totalorder %s20, 0
    %p108 = por %p106, %p107
    %p109 = scmp.ne.s32.totalorder %s98, %s101
    %p110 = scmp.eq.s32.totalorder %s25, 1
    %p111 = por %p109, %p110
    %p112 = scmp.ne.s32.totalorder %s101, %s102
    %p113 = scmp.eq.s32.totalorder %s25, 0
    %p114 = por %p112, %p113
    %p115 = scmp.ne.s32.totalorder %s101, %s102
    %p116 = scmp.eq.s32.totalorder %s26, 1
    %p117 = por %p115, %p116
    %p119 = scmp.ne.s32.totalorder %s102, %s118
    %p120 = scmp.eq.s32.totalorder %s26, 0
    %p121 = por %p119, %p120
    %s123 = sadd.s32 %s122, 1
    %p126 = scmp.eq.s32.totalorder %s20, 1
    %p127 = scmp.ne.s32.totalorder %s122, %s124
    %p128 = scmp.eq.s32.totalorder %s20, 0
    %p129 = por %p127, %p128
    %p130 = scmp.ne.s32.totalorder %s122, %s124
    %p131 = scmp.eq.s32.totalorder %s25, 1
    %p132 = por %p130, %p131
    %p133 = scmp.ne.s32.totalorder %s124, %s125
    %p134 = scmp.eq.s32.totalorder %s25, 0
    %p135 = por %p133, %p134
    %p136 = scmp.ne.s32.totalorder %s124, %s125
    %p137 = scmp.eq.s32.totalorder %s26, 1
    %p138 = por %p136, %p137
    %p140 = scmp.ne.s32.totalorder %s125, %s139
    %p141 = scmp.eq.s32.totalorder %s26, 0
    %p142 = por %p140, %p141
    %s144 = sadd.s32 %s143, 1
    %p147 = scmp.eq.s32.totalorder %s20, 1
    %p148 = scmp.ne.s32.totalorder %s143, %s145
    %p149 = scmp.eq.s32.totalorder %s20, 0
    %p150 = por %p148, %p149
    %p151 = scmp.ne.s32.totalorder %s143, %s145
    %p152 = scmp.eq.s32.totalorder %s25, 1
    %p153 = por %p151, %p152
    %p154 = scmp.ne.s32.totalorder %s145, %s146
    %p155 = scmp.eq.s32.totalorder %s25, 0
    %p156 = por %p154, %p155
    %p157 = scmp.ne.s32.totalorder %s145, %s146
    %p158 = scmp.eq.s32.totalorder %s26, 1
    %p159 = por %p157, %p158
    %p161 = scmp.ne.s32.totalorder %s146, %s160
    %p162 = scmp.eq.s32.totalorder %s26, 0
    %p163 = por %p161, %p162
    %s165 = sadd.s32 %s164, 1
    %p168 = scmp.eq.s32.totalorder %s20, 1
    %p169 = scmp.ne.s32.totalorder %s164, %s166
    %p170 = scmp.eq.s32.totalorder %s20, 0
    %p171 = por %p169, %p170
    %p172 = scmp.ne.s32.totalorder %s164, %s166
    %p173 = scmp.eq.s32.totalorder %s25, 1
    %p174 = por %p172, %p173
    %p175 = scmp.ne.s32.totalorder %s166, %s167
    %p176 = scmp.eq.s32.totalorder %s25, 0
    %p177 = por %p175, %p176
    %p178 = scmp.ne.s32.totalorder %s166, %s167
    %p179 = scmp.eq.s32.totalorder %s26, 1
    %p180 = por %p178, %p179
    %p182 = scmp.ne.s32.totalorder %s167, %s181
    %p183 = scmp.eq.s32.totalorder %s26, 0
    %p184 = por %p182, %p183
    %s186 = sadd.s32 %s185, 1
    %p189 = scmp.eq.s32.totalorder %s20, 1
    %p190 = scmp.ne.s32.totalorder %s185, %s187
    %p191 = scmp.eq.s32.totalorder %s20, 0
    %p192 = por %p190, %p191
    %p193 = scmp.ne.s32.totalorder %s185, %s187
    %p194 = scmp.eq.s32.totalorder %s25, 1
    %p195 = por %p193, %p194
    %p196 = scmp.ne.s32.totalorder %s187, %s188
    %p197 = scmp.eq.s32.totalorder %s25, 0
    %p198 = por %p196, %p197
    %p199 = scmp.ne.s32.totalorder %s187, %s188
    %p200 = scmp.eq.s32.totalorder %s26, 1
    %p201 = por %p199, %p200
    %p203 = scmp.ne.s32.totalorder %s188, %s202
    %p204 = scmp.eq.s32.totalorder %s26, 0
    %p205 = por %p203, %p204
    %s207 = sadd.s32 %s206, 1
    %p210 = scmp.eq.s32.totalorder %s20, 1
    %p211 = scmp.ne.s32.totalorder %s206, %s208
    %p212 = scmp.eq.s32.totalorder %s20, 0
    %p213 = por %p211, %p212
    %p214 = scmp.ne.s32.totalorder %s206, %s208
    %p215 = scmp.eq.s32.totalorder %s25, 1
    %p216 = por %p214, %p215
    %p217 = scmp.ne.s32.totalorder %s208, %s209
    %p218 = scmp.eq.s32.totalorder %s25, 0
    %p219 = por %p217, %p218
    %p220 = scmp.ne.s32.totalorder %s208, %s209
    %p221 = scmp.eq.s32.totalorder %s26, 1
    %p222 = por %p220, %p221
    %p224 = scmp.ne.s32.totalorder %s209, %s223
    %p225 = scmp.eq.s32.totalorder %s26, 0
    %p226 = por %p224, %p225
    %s228 = sadd.s32 %s227, 1
    %p231 = scmp.eq.s32.totalorder %s20, 1
    %p232 = scmp.ne.s32.totalorder %s227, %s229
    %p233 = scmp.eq.s32.totalorder %s20, 0
    %p234 = por %p232, %p233
    %p235 = scmp.ne.s32.totalorder %s227, %s229
    %p236 = scmp.eq.s32.totalorder %s25, 1
    %p237 = por %p235, %p236
    %p238 = scmp.ne.s32.totalorder %s229, %s230
    %p239 = scmp.eq.s32.totalorder %s25, 0
    %p240 = por %p238, %p239
    %p241 = scmp.ne.s32.totalorder %s229, %s230
    %p242 = scmp.eq.s32.totalorder %s26, 1
    %p243 = por %p241, %p242
    %p245 = scmp.ne.s32.totalorder %s230, %s244
    %p246 = scmp.eq.s32.totalorder %s26, 0
    %p247 = por %p245, %p246
    %s249 = sadd.s32 %s248, 1
    %p252 = scmp.eq.s32.totalorder %s20, 1
    %p253 = scmp.ne.s32.totalorder %s248, %s250
    %p254 = scmp.eq.s32.totalorder %s20, 0
    %p255 = por %p253, %p254
    %p256 = scmp.ne.s32.totalorder %s248, %s250
    %p257 = scmp.eq.s32.totalorder %s25, 1
    %p258 = por %p256, %p257
    %p259 = scmp.ne.s32.totalorder %s250, %s251
    %p260 = scmp.eq.s32.totalorder %s25, 0
    %p261 = por %p259, %p260
    %p262 = scmp.ne.s32.totalorder %s250, %s251
    %p263 = scmp.eq.s32.totalorder %s26, 1
    %p264 = por %p262, %p263
    %p266 = scmp.ne.s32.totalorder %s251, %s265
    %p267 = scmp.eq.s32.totalorder %s26, 0
    %p268 = por %p266, %p267
    %s270 = sadd.s32 %s269, 1
    %p273 = scmp.eq.s32.totalorder %s20, 1
    %p274 = scmp.ne.s32.totalorder %s269, %s271
    %p275 = scmp.eq.s32.totalorder %s20, 0
    %p276 = por %p274, %p275
    %p277 = scmp.ne.s32.totalorder %s269, %s271
    %p278 = scmp.eq.s32.totalorder %s25, 1
    %p279 = por %p277, %p278
    %p280 = scmp.ne.s32.totalorder %s271, %s272
    %p281 = scmp.eq.s32.totalorder %s25, 0
    %p282 = por %p280, %p281
    %p283 = scmp.ne.s32.totalorder %s271, %s272
    %p284 = scmp.eq.s32.totalorder %s26, 1
    %p285 = por %p283, %p284
    %p287 = scmp.ne.s32.totalorder %s272, %s286
    %p288 = scmp.eq.s32.totalorder %s26, 0
    %p289 = por %p287, %p288
    %s291 = sadd.s32 %s290, 1
    %p294 = scmp.eq.s32.totalorder %s20, 1
    %p295 = scmp.ne.s32.totalorder %s290, %s292
    %p296 = scmp.eq.s32.totalorder %s20, 0
    %p297 = por %p295, %p296
    %p298 = scmp.ne.s32.totalorder %s290, %s292
    %p299 = scmp.eq.s32.totalorder %s25, 1
    %p300 = por %p298, %p299
    %p301 = scmp.ne.s32.totalorder %s292, %s293
    %p302 = scmp.eq.s32.totalorder %s25, 0
    %p303 = por %p301, %p302
    %p304 = scmp.ne.s32.totalorder %s292, %s293
    %p305 = scmp.eq.s32.totalorder %s26, 1
    %p306 = por %p304, %p305
    %p308 = scmp.ne.s32.totalorder %s293, %s307
    %p309 = scmp.eq.s32.totalorder %s26, 0
    %p310 = por %p308, %p309
    %s312 = sadd.s32 %s311, 1
    %p315 = scmp.eq.s32.totalorder %s20, 1
    %p316 = scmp.ne.s32.totalorder %s311, %s313
    %p317 = scmp.eq.s32.totalorder %s20, 0
    %p318 = por %p316, %p317
    %p319 = scmp.ne.s32.totalorder %s311, %s313
    %p320 = scmp.eq.s32.totalorder %s25, 1
    %p321 = por %p319, %p320
    %p322 = scmp.ne.s32.totalorder %s313, %s314
    %p323 = scmp.eq.s32.totalorder %s25, 0
    %p324 = por %p322, %p323
    %p325 = scmp.ne.s32.totalorder %s313, %s314
    %p326 = scmp.eq.s32.totalorder %s26, 1
    %p327 = por %p325, %p326
    %p329 = scmp.ne.s32.totalorder %s314, %s328
    %p330 = scmp.eq.s32.totalorder %s26, 0
    %p331 = por %p329, %p330
    %s333 = sadd.s32 %s332, 1
    %p336 = scmp.eq.s32.totalorder %s20, 1
    %p337 = scmp.ne.s32.totalorder %s332, %s334
    %p338 = scmp.eq.s32.totalorder %s20, 0
    %p339 = por %p337, %p338
    %p340 = scmp.ne.s32.totalorder %s332, %s334
    %p341 = scmp.eq.s32.totalorder %s25, 1
    %p342 = por %p340, %p341
    %p343 = scmp.ne.s32.totalorder %s334, %s335
    %p344 = scmp.eq.s32.totalorder %s25, 0
    %p345 = por %p343, %p344
    %p346 = scmp.ne.s32.totalorder %s334, %s335
    %p347 = scmp.eq.s32.totalorder %s26, 1
    %p348 = por %p346, %p347
    %p350 = scmp.ne.s32.totalorder %s335, %s349
    %p351 = scmp.eq.s32.totalorder %s26, 0
    %p352 = por %p350, %p351
    %s353 = ssub.s32 %s27, %s39
    %s354 = ssub.s32 %s28, %s35
    %s355 = sor.u32 %s353, %s354
    %p356 = scmp.eq.s32.totalorder %s355, 0
    %s358 = sadd.s32 %s357, 1
    %s359 = scalar_select %p356, %s357, %s358
    %p362 = pneg %p356
    %p363 = scmp.eq.s32.totalorder %s20, 1
    %p364 = por %p362, %p363
    %p365 = scmp.ne.s32.totalorder %s357, %s360
    %p366 = scmp.eq.s32.totalorder %s20, 0
    %p367 = por %p365, %p366
    %p368 = scmp.ne.s32.totalorder %s357, %s360
    %p369 = scmp.eq.s32.totalorder %s25, 1
    %p370 = por %p368, %p369
    %p371 = scmp.ne.s32.totalorder %s360, %s361
    %p372 = scmp.eq.s32.totalorder %s25, 0
    %p373 = por %p371, %p372
    %p374 = scmp.ne.s32.totalorder %s360, %s361
    %p375 = scmp.eq.s32.totalorder %s26, 1
    %p376 = por %p374, %p375
    %p378 = scmp.ne.s32.totalorder %s361, %s377
    %p379 = scmp.eq.s32.totalorder %s26, 0
    %p380 = por %p378, %p379
    %p381 = scmp.le.s32.totalorder 1, %s20
    %p382 = scmp.lt.s32.totalorder %s20, 3
    %p383 = pnand %p381, %p382
    %p384 = pneg %p383
    // Predicated region
    $region9: #{semantic_cnn_forward.17} parent=5 // pred_check
      _
    $region10: #{semantic_cnn_forward.17} parent=5 // pred_check_branch
      %386 = sbr.rel (%p383) target = $region12
    $region11: #{semantic_cnn_forward.17} parent=5 // pred_region
      %s387 = ssub.s32 %s20, 1
      // Predicated region
      $region13: #{semantic_cnn_forward.17} parent=11 // pred_check
        %p388 = pneg %p135
      $region14: #{semantic_cnn_forward.17} parent=11 // pred_check_branch
        %390 = sbr.rel (%p388) target = $region16
      $region15: #{semantic_cnn_forward.17} parent=11 // pred_region
        _
      $region16: #{semantic_cnn_forward.17} parent=11 // pred_fallthru
        _
      // Predicated region
      $region17: #{semantic_cnn_forward.17} parent=11 // pred_check
        %p391 = pneg %p156
      $region18: #{semantic_cnn_forward.17} parent=11 // pred_check_branch
        %393 = sbr.rel (%p391) target = $region20
      $region19: #{semantic_cnn_forward.17} parent=11 // pred_region
        _
      $region20: #{semantic_cnn_forward.17} parent=11 // pred_fallthru
        _
      // Predicated region
      $region21: #{semantic_cnn_forward.17} parent=11 // pred_check
        %p394 = pneg %p177
      $region22: #{semantic_cnn_forward.17} parent=11 // pred_check_branch
        %396 = sbr.rel (%p394) target = $region24
      $region23: #{semantic_cnn_forward.17} parent=11 // pred_region
        _
      $region24: #{semantic_cnn_forward.17} parent=11 // pred_fallthru
        _
      // Predicated region
      $region25: #{semantic_cnn_forward.17} parent=11 // pred_check
        %p397 = pneg %p198
      $region26: #{semantic_cnn_forward.17} parent=11 // pred_check_branch
        %399 = sbr.rel (%p397) target = $region28
      $region27: #{semantic_cnn_forward.17} parent=11 // pred_region
        _
      $region28: #{semantic_cnn_forward.17} parent=11 // pred_fallthru
        _
      // Predicated region
      $region29: #{semantic_cnn_forward.17} parent=11 // pred_check
        %p400 = pneg %p219
      $region30: #{semantic_cnn_forward.17} parent=11 // pred_check_branch
        %402 = sbr.rel (%p400) target = $region32
      $region31: #{semantic_cnn_forward.17} parent=11 // pred_region
        _
      $region32: #{semantic_cnn_forward.17} parent=11 // pred_fallthru
        _
      // Predicated region
      $region33: #{semantic_cnn_forward.17} parent=11 // pred_check
        %p403 = pneg %p240
      $region34: #{semantic_cnn_forward.17} parent=11 // pred_check_branch
        %405 = sbr.rel (%p403) target = $region36
      $region35: #{semantic_cnn_forward.17} parent=11 // pred_region
        _
      $region36: #{semantic_cnn_forward.17} parent=11 // pred_fallthru
        _
      // Predicated region
      $region37: #{semantic_cnn_forward.17} parent=11 // pred_check
        %p406 = pneg %p261
      $region38: #{semantic_cnn_forward.17} parent=11 // pred_check_branch
        %408 = sbr.rel (%p406) target = $region40
      $region39: #{semantic_cnn_forward.17} parent=11 // pred_region
        _
      $region40: #{semantic_cnn_forward.17} parent=11 // pred_fallthru
        _
      // Predicated region
      $region41: #{semantic_cnn_forward.17} parent=11 // pred_check
        %p409 = pneg %p282
      $region42: #{semantic_cnn_forward.17} parent=11 // pred_check_branch
        %411 = sbr.rel (%p409) target = $region44
      $region43: #{semantic_cnn_forward.17} parent=11 // pred_region
        _
      $region44: #{semantic_cnn_forward.17} parent=11 // pred_fallthru
        _
      // Predicated region
      $region45: #{semantic_cnn_forward.17} parent=11 // pred_check
        %p412 = pneg %p303
      $region46: #{semantic_cnn_forward.17} parent=11 // pred_check_branch
        %414 = sbr.rel (%p412) target = $region48
      $region47: #{semantic_cnn_forward.17} parent=11 // pred_region
        _
      $region48: #{semantic_cnn_forward.17} parent=11 // pred_fallthru
        _
      // Predicated region
      $region49: #{semantic_cnn_forward.17} parent=11 // pred_check
        %p415 = pneg %p324
      $region50: #{semantic_cnn_forward.17} parent=11 // pred_check_branch
        %417 = sbr.rel (%p415) target = $region52
      $region51: #{semantic_cnn_forward.17} parent=11 // pred_region
        _
      $region52: #{semantic_cnn_forward.17} parent=11 // pred_fallthru
        _
      // Predicated region
      $region53: #{semantic_cnn_forward.17} parent=11 // pred_check
        %p418 = pneg %p345
      $region54: #{semantic_cnn_forward.17} parent=11 // pred_check_branch
        %420 = sbr.rel (%p418) target = $region56
      $region55: #{semantic_cnn_forward.17} parent=11 // pred_region
        _
      $region56: #{semantic_cnn_forward.17} parent=11 // pred_fallthru
        _
    $region12: #{semantic_cnn_forward.17} parent=5 // pred_fallthru
      _
    %p421 = scmp.lt.s32.totalorder %s20, 2
    // Predicated region
    $region57: #{semantic_cnn_forward.17} parent=5 // pred_check
      %p422 = pneg %p421
    $region58: #{semantic_cnn_forward.17} parent=5 // pred_check_branch
      %424 = sbr.rel (%p422) target = $region60
    $region59: #{semantic_cnn_forward.17} parent=5 // pred_region
      // Predicated region
      $region61: #{semantic_cnn_forward.17} parent=59 // pred_check
        %p425 = pneg %p54
      $region62: #{semantic_cnn_forward.17} parent=59 // pred_check_branch
        %427 = sbr.rel (%p425) target = $region64
      $region63: #{semantic_cnn_forward.17} parent=59 // pred_region
        %s428 = smul.u32 2, %s28
        %p429 = scmp.lt.s32.totalorder %s27, 1
        %s430 = scalar_select %p429, %s27, 1
        %p431 = scmp.lt.s32.totalorder %s428, 1
        %s432 = scalar_select %p431, %s428, 1
        %s433 = smul.addr %s430, 2
        %s434 = sadd.s32 %s432, %s433
        %s435 = smul.addr %s434, 4
        %s436 = scalar_lea.vmem %s0, %s435
        %s437 = smul.u32 2, %s28
      $region64: #{semantic_cnn_forward.17} parent=59 // pred_fallthru
        _
      // Predicated region
      $region65: #{semantic_cnn_forward.17} parent=59 // pred_check
        %p438 = pneg %p80
      $region66: #{semantic_cnn_forward.17} parent=59 // pred_check_branch
        %440 = sbr.rel (%p438) target = $region68
      $region67: #{semantic_cnn_forward.17} parent=59 // pred_region
        %p441 = scmp.lt.s32.totalorder %s27, 1
        %s442 = scalar_select %p441, %s27, 1
        %s443 = smul.addr %s442, 2
        %s444 = smul.addr %s443, 4
        %s445 = scalar_lea.vmem %s1, %s444
      $region68: #{semantic_cnn_forward.17} parent=59 // pred_fallthru
        _
      // Predicated region
      $region69: #{semantic_cnn_forward.17} parent=59 // pred_check
        %p446 = pneg %p108
      $region70: #{semantic_cnn_forward.17} parent=59 // pred_check_branch
        %448 = sbr.rel (%p446) target = $region72
      $region71: #{semantic_cnn_forward.17} parent=59 // pred_region
        %s449 = smul.u32 2, %s28
        %p450 = scmp.lt.s32.totalorder %s27, 1
        %s451 = scalar_select %p450, %s27, 1
        %p452 = scmp.lt.s32.totalorder %s449, 1
        %s453 = scalar_select %p452, %s449, 1
        %s454 = smul.addr %s451, 2
        %s455 = sadd.s32 %s453, %s454
        %s456 = smul.addr %s455, 4
        %s457 = scalar_lea.vmem %s2, %s456
        %s458 = smul.u32 2, %s28
      $region72: #{semantic_cnn_forward.17} parent=59 // pred_fallthru
        _
    $region60: #{semantic_cnn_forward.17} parent=5 // pred_fallthru
      _
    %p459 = scmp.le.s32.totalorder 1, %s20
    %p460 = scmp.lt.s32.totalorder %s20, 3
    %p461 = pnand %p459, %p460
    %p462 = pneg %p461
    // Predicated region
    $region73: #{semantic_cnn_forward.17} parent=5 // pred_check
      _
    $region74: #{semantic_cnn_forward.17} parent=5 // pred_check_branch
      %464 = sbr.rel (%p461) target = $region76
    $region75: #{semantic_cnn_forward.17} parent=5 // pred_region
      %s465 = ssub.s32 %s20, 1
      %s466 = smul.u32 2, %s30
      %p467 = scmp.lt.s32.totalorder %s29, 1
      %s468 = scalar_select %p467, %s29, 1
      %p469 = scmp.lt.s32.totalorder %s466, 1
      %s470 = scalar_select %p469, %s466, 1
      %s471 = smul.addr %s468, 2
      %s472 = sadd.s32 %s470, %s471
      %s473 = smul.addr %s472, 4
      %s474 = scalar_lea.vmem %s0, %s473
      %p475 = pneg %p60
      %p476 = pneg %p57
      %p477 = scmp.lt.s32.totalorder %s29, 1
      %s478 = scalar_select %p477, %s29, 1
      %s479 = smul.addr %s478, 2
      %s480 = smul.addr %s479, 4
      %s481 = scalar_lea.vmem %s1, %s480
      %p482 = pneg %p86
      %p483 = pneg %p83
      %s484 = smul.u32 2, %s30
      %p485 = scmp.lt.s32.totalorder %s29, 1
      %s486 = scalar_select %p485, %s29, 1
      %p487 = scmp.lt.s32.totalorder %s484, 1
      %s488 = scalar_select %p487, %s484, 1
      %s489 = smul.addr %s486, 2
      %s490 = sadd.s32 %s488, %s489
      %s491 = smul.addr %s490, 4
      %s492 = scalar_lea.vmem %s2, %s491
      %p493 = pneg %p114
      %p494 = pneg %p111
      %p495 = pneg %p135
      %p496 = pneg %p132
      %p497 = pneg %p156
      %p498 = pneg %p153
      %p499 = pneg %p177
      %p500 = pneg %p174
      %p501 = pneg %p198
      %p502 = pneg %p195
      %p503 = pneg %p219
      %p504 = pneg %p216
      %p505 = pneg %p240
      %p506 = pneg %p237
      %p507 = pneg %p261
      %p508 = pneg %p258
      %p509 = pneg %p282
      %p510 = pneg %p279
      %p511 = pneg %p303
      %p512 = pneg %p300
      %p513 = pneg %p324
      %p514 = pneg %p321
      %p515 = pneg %p345
      %p516 = pneg %p342
      %p517 = pneg %p373
      %p518 = pneg %p370
      %s519 = smul.u32 2, %s30
      %p520 = scmp.lt.s32.totalorder %s29, 1
      %s521 = scalar_select %p520, %s29, 1
      %p522 = scmp.lt.s32.totalorder %s519, 1
      %s523 = scalar_select %p522, %s519, 1
      %s524 = smul.addr %s521, 2
      %s525 = sadd.s32 %s523, %s524
      %s526 = smul.addr %s525, 4
      %s527 = scalar_lea.vmem %s14, %s526
      %s528 = smul.u32 2, %s30
      %p529 = scmp.lt.s32.totalorder %s29, 1
      %s530 = scalar_select %p529, %s29, 1
      %p531 = scmp.lt.s32.totalorder %s528, 1
      %s532 = scalar_select %p531, %s528, 1
      %s533 = smul.addr %s530, 2
      %s534 = sadd.s32 %s532, %s533
      %s535 = smul.addr %s534, 4
      %s536 = scalar_lea.vmem %s0, %s535
      %s537 = smul.u32 2, %s30
      %p538 = scmp.lt.s32.totalorder %s29, 1
      %s539 = scalar_select %p538, %s29, 1
      %s540 = smul.addr %s539, 2
      %s541 = smul.addr %s540, 4
      %s542 = scalar_lea.vmem %s1, %s541
      %s543 = smul.u32 2, %s30
      %p544 = scmp.lt.s32.totalorder %s29, 1
      %s545 = scalar_select %p544, %s29, 1
      %p546 = scmp.lt.s32.totalorder %s543, 1
      %s547 = scalar_select %p546, %s543, 1
      %s548 = smul.addr %s545, 2
      %s549 = sadd.s32 %s547, %s548
      %s550 = smul.addr %s549, 4
      %s551 = scalar_lea.vmem %s2, %s550
      %s552 = smul.u32 2, %s30
      %s553 = smul.u32 2, %s30
      %p554 = scmp.lt.s32.totalorder %s29, 1
      %s555 = scalar_select %p554, %s29, 1
      %p556 = scmp.lt.s32.totalorder %s553, 1
      %s557 = scalar_select %p556, %s553, 1
      %s558 = smul.addr %s555, 2
      %s559 = sadd.s32 %s557, %s558
      %s560 = smul.addr %s559, 4
      %s561 = scalar_lea.vmem %s14, %s560
      %s562 = smul.u32 2, %s30
      %p564 = scmp.eq.s32.totalorder %s30, 0
      // Predicated region
      $region77: #{semantic_cnn_forward.17} parent=75 // pred_check
        %p565 = pneg %p564
      $region78: #{semantic_cnn_forward.17} parent=75 // pred_check_branch
        %567 = sbr.rel (%p565) target = $region80
      $region79: #{semantic_cnn_forward.17} parent=75 // pred_region
        %v568 = vld [vmem:[%s542] sm:$0xf]
        %v569 = vld [vmem:[%s542 + $0x4] sm:$0xf]
        %v570 = vld [vmem:[%s5] sm:$0x1]
        %v571 = vld [vmem:[%s6] sm:$0x1]
        %v573 = vperm.slane %v571, 0
        %v577 = vunpack.c.l.b16 %v568
        %v578 = vunpack.c.l.b16 %v569
        %v579 = vpack.c.b16 %v578, %v577
        %vm580 = vcmask 15360
        %v582 = vsel %vm580, %v579, 0
        %vm584 = vcmask 1040384
        %v586 = vsel %vm584, %v570, 0
        %588 = vmatpush.bf16.msra.mxu0 0
        %589 = vmatpush.bf16.msra.mxu0 0
        %590 = vmatpush.bf16.msra.mxu0 0
        %591 = vmatpush.bf16.msra.mxu0 0
        %592 = vmatpush.bf16.msra.mxu0 0
        %593 = vmatpush.bf16.msra.mxu0 0
        %594 = vmatpush.bf16.msra.mxu0 0
        %595 = vmatpush.bf16.msra.mxu0 %v586
        %596 = vmatmul.bf16.gmra.mxu0 %v582
        %v597 = vpop.f32.mrf.mxu0
        %v598 = vadd.f32 %v573, %v597
        %v599 = vpop.f32.mrf.mxu0
        %v600 = vadd.f32 %v573, %v599
        %601 = vdwg.mxu0
        %v602 = vld [vmem:[%s7] sm:$0x1]
        %v603 = vld [vmem:[%s8] sm:$0x1]
        %v605 = vperm.slane %v603, 0
        %v608 = vsel %vm584, %v602, 0
        %610 = vmatpush.bf16.msra.mxu0 0
        %611 = vmatpush.bf16.msra.mxu0 0
        %612 = vmatpush.bf16.msra.mxu0 0
        %613 = vmatpush.bf16.msra.mxu0 0
        %614 = vmatpush.bf16.msra.mxu0 0
        %615 = vmatpush.bf16.msra.mxu0 0
        %616 = vmatpush.bf16.msra.mxu0 0
        %617 = vmatpush.bf16.msra.mxu0 %v608
        %618 = vmatmul.bf16.gmra.mxu0 %v582
        %v619 = vpop.f32.mrf.mxu0
        %v620 = vadd.f32 %v605, %v619
        %v621 = vpop.f32.mrf.mxu0
        %v622 = vadd.f32 %v605, %v621
        %623 = vdwg.mxu0
        %v624 = vpack.c.bf16 %v598, %v598
        %v625 = vpack.c.bf16 %v600, %v600
        %vm626 = vcmask 11264
        %627 = vst.msk [vmem:[#allocation2] sm:$0xf] %vm626, %v624
        %628 = vst.msk [vmem:[#allocation2 + $0x4] sm:$0xf] %vm626, %v625
        %v629 = vpack.c.bf16 %v620, %v620
        %v630 = vpack.c.bf16 %v622, %v622
        %631 = vst.msk [vmem:[#allocation3] sm:$0xf] %vm626, %v629
        %632 = vst.msk [vmem:[#allocation3 + $0x4] sm:$0xf] %vm626, %v630
      $region80: #{semantic_cnn_forward.17} parent=75 // pred_fallthru
        _
      %v633 = vld [vmem:[%s536] sm:$0xf]
      %v634 = vld [vmem:[%s536 + $0x4] sm:$0xf]
      %v635 = vld [vmem:[%s3] sm:$0x1]
      %v636 = vld [vmem:[%s4] sm:$0x1]
      %v638 = vperm.slane %v636, 0
      %v642 = vunpack.c.l.b16 %v633
      %v643 = vunpack.c.l.b16 %v634
      %v644 = vpack.c.b16 %v643, %v642
      %vm645 = vcmask 15360
      %v647 = vsel %vm645, %v644, 0
      %vm649 = vcmask 1040384
      %v651 = vsel %vm649, %v635, 0
      %653 = vmatpush.bf16.msra.mxu0 0
      %654 = vmatpush.bf16.msra.mxu0 0
      %655 = vmatpush.bf16.msra.mxu0 0
      %656 = vmatpush.bf16.msra.mxu0 0
      %657 = vmatpush.bf16.msra.mxu0 0
      %658 = vmatpush.bf16.msra.mxu0 0
      %659 = vmatpush.bf16.msra.mxu0 0
      %660 = vmatpush.bf16.msra.mxu0 %v651
      %661 = vmatmul.bf16.gmra.mxu0 %v647
      %v662 = vpop.f32.mrf.mxu0
      %v663 = vadd.f32 %v638, %v662
      %v664 = vpop.f32.mrf.mxu0
      %v665 = vadd.f32 %v638, %v664
      %666 = vdwg.mxu0
      %v667 = vpack.c.bf16 %v665, %v663
      %v668 = vld [vmem:[#allocation2] sm:$0xf]
      %v669 = vld [vmem:[#allocation2 + $0x4] sm:$0xf]
      %v672 = vunpack.c.l.b16 %v668
      %v673 = vunpack.c.l.b16 %v669
      %v674 = vpack.c.b16 %v673, %v672
      %v676 = vsel %vm645, %v667, 0
      %v679 = vsel %vm645, %v674, 0
      %681 = vmatpush.bf16.xpose.msra.mxu0 0
      %682 = vmatpush.bf16.xpose.msra.mxu0 0
      %683 = vmatpush.bf16.xpose.msra.mxu0 0
      %684 = vmatpush.bf16.xpose.msra.mxu0 0
      %685 = vmatpush.bf16.xpose.msra.mxu0 0
      %686 = vmatpush.bf16.xpose.msra.mxu0 0
      %687 = vmatpush.bf16.xpose.msra.mxu0 0
      %688 = vmatpush.bf16.xpose.msra.mxu0 %v679
      %689 = vmatmul.bf16.gmra.mxu0 %v676
      %v690 = vpop.f32.mrf.mxu0
      %v691 = vadd.f32 0.0, %v690
      %v692 = vpop.f32.mrf.mxu0
      %v693 = vadd.f32 0.0, %v692
      %694 = vdwg.mxu0
      %v695 = vmul.f32 %v691, 0.70710677
      %v696 = vmul.f32 %v693, 0.70710677
      %vm697 = vcmask 130048
      %v698 = vsel %vm697, %v695, -inf
      %699 = vmax.xlane.f32.xlu0 %v698
      %v700 = vpop.xlane.xlu0 %699
      %v701 = vsel %vm697, %v696, -inf
      %702 = vmax.xlane.f32.xlu0 %v701
      %v703 = vpop.xlane.xlu0 %702
      %v704 = vsub.f32 %v695, %v700
      %v705 = vsub.f32 %v696, %v703
      %v706 = vmul.f32 %v704, 1.442695
      %v707 = vpow.pop %v706
      %v708 = vmul.f32 %v705, 1.442695
      %v709 = vpow.pop %v708
      %v710 = vsel %vm697, %v707, 0.0
      %711 = vadd.xlane.f32.xlu0 %v710
      %v712 = vpop.xlane.xlu0 %711
      %v713 = vsel %vm697, %v709, 0.0
      %714 = vadd.xlane.f32.xlu0 %v713
      %v715 = vpop.xlane.xlu0 %714
      %v716 = vrcp.pop %v712
      %v717 = vrcp.pop %v715
      %v718 = vmul.f32 %v707, %v716
      %v719 = vmul.f32 %v709, %v717
      %v720 = vpack.c.bf16 %v719, %v718
      %v721 = vld [vmem:[#allocation3] sm:$0xf]
      %v722 = vld [vmem:[#allocation3 + $0x4] sm:$0xf]
      %v725 = vunpack.c.l.b16 %v721
      %v726 = vunpack.c.l.b16 %v722
      %v727 = vpack.c.b16 %v726, %v725
      %v730 = vsel %vm697, %v720, 0
      %732 = vmatpush.bf16.msra.mxu0 0
      %733 = vmatpush.bf16.msra.mxu0 0
      %734 = vmatpush.bf16.msra.mxu0 0
      %735 = vmatpush.bf16.msra.mxu0 0
      %736 = vmatpush.bf16.msra.mxu0 0
      %737 = vmatpush.bf16.msra.mxu0 0
      %738 = vmatpush.bf16.msra.mxu0 0
      %739 = vmatpush.bf16.msra.mxu0 %v727
      %740 = vmatmul.bf16.gmra.mxu0 %v730
      %v741 = vpop.f32.mrf.mxu0
      %v742 = vadd.f32 0.0, %v741
      %v743 = vpop.f32.mrf.mxu0
      %v744 = vadd.f32 0.0, %v743
      %745 = vdwg.mxu0
      %v746 = vpack.c.bf16 %v744, %v742
      %v747 = vld [vmem:[%s9] sm:$0x1]
      %v748 = vld [vmem:[%s10] sm:$0x1]
      %v750 = vperm.slane %v748, 0
      %v753 = vsel %vm645, %v746, 0
      %v756 = vsel %vm649, %v747, 0
      %758 = vmatpush.bf16.msra.mxu0 0
      %759 = vmatpush.bf16.msra.mxu0 0
      %760 = vmatpush.bf16.msra.mxu0 0
      %761 = vmatpush.bf16.msra.mxu0 0
      %762 = vmatpush.bf16.msra.mxu0 0
      %763 = vmatpush.bf16.msra.mxu0 0
      %764 = vmatpush.bf16.msra.mxu0 0
      %765 = vmatpush.bf16.msra.mxu0 %v756
      %766 = vmatmul.bf16.gmra.mxu0 %v753
      %v767 = vpop.f32.mrf.mxu0
      %v768 = vadd.f32 %v750, %v767
      %v769 = vpop.f32.mrf.mxu0
      %v770 = vadd.f32 %v750, %v769
      %771 = vdwg.mxu0
      %vm772 = vcmp.gt.f32.partialorder %v768, 0.0
      %vm773 = vcmp.gt.f32.partialorder %v770, 0.0
      %v774 = vmul.f32 %v768, 0.01
      %v775 = vmul.f32 %v770, 0.01
      %v776 = vsel %vm772, %v768, %v774
      %v777 = vsel %vm773, %v770, %v775
      %v778 = vld [vmem:[%s551] sm:$0xf]
      %v779 = vld [vmem:[%s551 + $0x4] sm:$0xf]
      %v780 = vld [vmem:[%s11] sm:$0x1]
      %v781 = vpack.c.bf16 %v777, %v776
      %v782 = vld [vmem:[%s12] sm:$0x1]
      %v784 = vsel %vm645, %v781, 0
      %v787 = vsel %vm649, %v782, 0
      %789 = vmatpush.bf16.msra.mxu0 0
      %790 = vmatpush.bf16.msra.mxu0 0
      %791 = vmatpush.bf16.msra.mxu0 0
      %792 = vmatpush.bf16.msra.mxu0 0
      %793 = vmatpush.bf16.msra.mxu0 0
      %794 = vmatpush.bf16.msra.mxu0 0
      %795 = vmatpush.bf16.msra.mxu0 0
      %796 = vmatpush.bf16.msra.mxu0 %v787
      %797 = vmatmul.bf16.gmra.mxu0 %v784
      %v798 = vpop.f32.mrf.mxu0
      %v799 = vadd.f32 0.0, %v798
      %v800 = vpop.f32.mrf.mxu0
      %v801 = vadd.f32 0.0, %v800
      %802 = vdwg.mxu0
      %v805 = vunpack.c.l.b16 %v778
      %v806 = vunpack.c.l.b16 %v779
      %v807 = vpack.c.b16 %v806, %v805
      %v809 = vsel %vm645, %v807, 0
      %v812 = vsel %vm649, %v780, 0
      %814 = vmatpush.bf16.msra.mxu0 0
      %815 = vmatpush.bf16.msra.mxu0 0
      %816 = vmatpush.bf16.msra.mxu0 0
      %817 = vmatpush.bf16.msra.mxu0 0
      %818 = vmatpush.bf16.msra.mxu0 0
      %819 = vmatpush.bf16.msra.mxu0 0
      %820 = vmatpush.bf16.msra.mxu0 0
      %821 = vmatpush.bf16.msra.mxu0 %v812
      %822 = vmatmul.bf16.gmra.mxu0 %v809
      %v823 = vpop.f32.mrf.mxu0
      %v824 = vadd.f32 %v799, %v823
      %v825 = vpop.f32.mrf.mxu0
      %v826 = vadd.f32 %v801, %v825
      %827 = vdwg.mxu0
      %v828 = vld [vmem:[%s13] sm:$0x1]
      %v830 = vperm.slane %v828, 0
      %v832 = vadd.f32 %v824, %v830
      %v833 = vadd.f32 %v826, %v830
      %vm834 = vcmp.gt.f32.partialorder %v832, 0.0
      %vm835 = vcmp.gt.f32.partialorder %v833, 0.0
      %v836 = vmul.f32 %v832, 0.01
      %v837 = vmul.f32 %v833, 0.01
      %v838 = vsel %vm834, %v832, %v836
      %v839 = vsel %vm835, %v833, %v837
      %v840 = vpack.c.bf16 %v838, %v838
      %v841 = vpack.c.bf16 %v839, %v839
      %vm842 = vcmask 11264
      %843 = vst.msk [vmem:[%s561] sm:$0xf] %vm842, %v840
      %844 = vst.msk [vmem:[%s561 + $0x4] sm:$0xf] %vm842, %v841
      %s845 = smul.u32 2, %s30
      %p846 = scmp.lt.s32.totalorder %s29, 1
      %s847 = scalar_select %p846, %s29, 1
      %p848 = scmp.lt.s32.totalorder %s845, 1
      %s849 = scalar_select %p848, %s845, 1
      %s850 = smul.addr %s847, 2
      %s851 = sadd.s32 %s849, %s850
      %s852 = smul.addr %s851, 4
      %s853 = scalar_lea.vmem %s14, %s852
      // Predicated region
      $region81: #{semantic_cnn_forward.17} parent=75 // pred_check
        %p854 = pneg %p370
      $region82: #{semantic_cnn_forward.17} parent=75 // pred_check_branch
        %856 = sbr.rel (%p854) target = $region84
      $region83: #{semantic_cnn_forward.17} parent=75 // pred_region
        %s857 = smul.u32 2, %s30
      $region84: #{semantic_cnn_forward.17} parent=75 // pred_fallthru
        _
    $region76: #{semantic_cnn_forward.17} parent=5 // pred_fallthru
      _
    %p858 = scmp.le.s32.totalorder 2, %s20
    // Predicated region
    $region85: #{semantic_cnn_forward.17} parent=5 // pred_check
      %p859 = pneg %p858
    $region86: #{semantic_cnn_forward.17} parent=5 // pred_check_branch
      %861 = sbr.rel (%p859) target = $region88
    $region87: #{semantic_cnn_forward.17} parent=5 // pred_region
      %s862 = ssub.s32 %s20, 2
      // Predicated region
      $region89: #{semantic_cnn_forward.17} parent=87 // pred_check
        %p863 = pneg %p376
      $region90: #{semantic_cnn_forward.17} parent=87 // pred_check_branch
        %865 = sbr.rel (%p863) target = $region92
      $region91: #{semantic_cnn_forward.17} parent=87 // pred_region
        %s866 = smul.u32 2, %s32
        %p867 = scmp.lt.s32.totalorder %s31, 1
        %s868 = scalar_select %p867, %s31, 1
        %p869 = scmp.lt.s32.totalorder %s866, 1
        %s870 = scalar_select %p869, %s866, 1
        %s871 = smul.addr %s868, 2
        %s872 = sadd.s32 %s870, %s871
        %s873 = smul.addr %s872, 4
        %s874 = scalar_lea.vmem %s14, %s873
      $region92: #{semantic_cnn_forward.17} parent=87 // pred_fallthru
        _
    $region88: #{semantic_cnn_forward.17} parent=5 // pred_fallthru
      _
  $region6: #{semantic_cnn_forward.17} parent=0 // loop_footer
    %s24 = sadd.s32 1, %s20
  $region7: #{semantic_cnn_forward.17} parent=0 // loop_footer_branch
    %19 = sbr.rel target = $region3
  $region8: #{semantic_cnn_forward.17} parent=0 // loop_exit
    _

// kernel: semantic_cnn_forward.16
$region0: #{semantic_cnn_forward.16}
  #allocation0 [shape = 'u32[]', space=smem, size = 0x4, offset = 0x4, fixed_abs, tag = 'smem constant byte address 0x4 - core index']
  #allocation1 [shape = 'u32[72,128]{1,0:T(1,128)}', space=vmem, size = 0x9000, scoped, tag = 'internal scratch']
  %s0 = inlined_call_operand.vmem [shape: bf16[32,2], index: 0, kind: input, shape index: {}]
  %s1 = inlined_call_operand.vmem [shape: bf16[4,32,2], index: 1, kind: input, shape index: {}]
  %s2 = inlined_call_operand.vmem [shape: bf16[2,2], index: 2, kind: input, shape index: {}]
  %s3 = inlined_call_operand.vmem [shape: bf16[2,2], index: 3, kind: input, shape index: {}]
  %s4 = inlined_call_operand.vmem [shape: f32[1,2], index: 4, kind: input, shape index: {}]
  %s5 = inlined_call_operand.vmem [shape: f32[1,2], index: 5, kind: input, shape index: {}]
  %s6 = inlined_call_operand.vmem [shape: bf16[32,2], index: 6, kind: output, shape index: {}]
  %s7 = sld [smem:[#allocation0]]
  $region34: #{semantic_cnn_forward.16} parent=0
    _
  %s9 = ssub.s32 1, %s7
  %s10 = scalar_select 0, %s9, %s7
  // Predicated region
  $region2: #{semantic_cnn_forward.16} parent=0 // pred_check
    _
  $region3: #{semantic_cnn_forward.16} parent=0 // pred_check_branch
    %12 = sbr.rel (0) target = $region5
  $region4: #{semantic_cnn_forward.16} parent=0 // pred_region
    _
  $region5: #{semantic_cnn_forward.16} parent=0 // pred_fallthru
    _
  // Predicated region
  $region6: #{semantic_cnn_forward.16} parent=0 // pred_check
    _
  $region7: #{semantic_cnn_forward.16} parent=0 // pred_check_branch
    %14 = sbr.rel (0) target = $region9
  $region8: #{semantic_cnn_forward.16} parent=0 // pred_region
    _
  $region9: #{semantic_cnn_forward.16} parent=0 // pred_fallthru
    _
  // Predicated region
  $region10: #{semantic_cnn_forward.16} parent=0 // pred_check
    _
  $region11: #{semantic_cnn_forward.16} parent=0 // pred_check_branch
    %16 = sbr.rel (0) target = $region13
  $region12: #{semantic_cnn_forward.16} parent=0 // pred_region
    _
  $region13: #{semantic_cnn_forward.16} parent=0 // pred_fallthru
    _
  // Predicated region
  $region14: #{semantic_cnn_forward.16} parent=0 // pred_check
    _
  $region15: #{semantic_cnn_forward.16} parent=0 // pred_check_branch
    %18 = sbr.rel (0) target = $region17
  $region16: #{semantic_cnn_forward.16} parent=0 // pred_region
    _
  $region17: #{semantic_cnn_forward.16} parent=0 // pred_fallthru
    _
  // Predicated region
  $region18: #{semantic_cnn_forward.16} parent=0 // pred_check
    _
  $region19: #{semantic_cnn_forward.16} parent=0 // pred_check_branch
    %20 = sbr.rel (0) target = $region21
  $region20: #{semantic_cnn_forward.16} parent=0 // pred_region
    _
  $region21: #{semantic_cnn_forward.16} parent=0 // pred_fallthru
    _
  // Predicated region
  $region22: #{semantic_cnn_forward.16} parent=0 // pred_check
    _
  $region23: #{semantic_cnn_forward.16} parent=0 // pred_check_branch
    %22 = sbr.rel (0) target = $region25
  $region24: #{semantic_cnn_forward.16} parent=0 // pred_region
    _
  $region25: #{semantic_cnn_forward.16} parent=0 // pred_fallthru
    _
  %v24 = vld [vmem:[%s0] sm:$0xf]
  %v25 = vld [vmem:[%s0 + $0x4] sm:$0xf]
  %v26 = vld [vmem:[%s0 + $0x8] sm:$0xf]
  %v27 = vld [vmem:[%s0 + $0xc] sm:$0xf]
  %v28 = vld [vmem:[%s2] sm:$0x1]
  %v29 = vunpack.c.l.bf16 %v24
  %v30 = vunpack.c.l.bf16 %v25
  %v31 = vunpack.c.l.bf16 %v26
  %v32 = vunpack.c.l.bf16 %v27
  %v33 = vld [vmem:[%s4] sm:$0x1]
  %v34 = vld [vmem:[%s1] sm:$0xf]
  %v35 = vld [vmem:[%s1 + $0x4] sm:$0xf]
  %v36 = vld [vmem:[%s1 + $0x8] sm:$0xf]
  %v37 = vld [vmem:[%s1 + $0xc] sm:$0xf]
  %v38 = vld [vmem:[%s3] sm:$0x1]
  %v39 = vunpack.c.l.bf16 %v34
  %v40 = vunpack.c.l.bf16 %v35
  %v41 = vunpack.c.l.bf16 %v36
  %v42 = vunpack.c.l.bf16 %v37
  %v43 = vsub.f32 %v39, %v29
  %v44 = vsub.f32 %v40, %v30
  %v45 = vsub.f32 %v41, %v31
  %v46 = vsub.f32 %v42, %v32
  %v47 = vmul.f32 %v43, %v43
  %v48 = vmul.f32 %v44, %v44
  %v49 = vmul.f32 %v45, %v45
  %v50 = vmul.f32 %v46, %v46
  %vm51 = vcmask 15360
  %v52 = vsel %vm51, %v47, 0.0
  %53 = vadd.xlane.f32.xlu0 %v52
  %v54 = vpop.xlane.xlu0 %53
  %v55 = vsel %vm51, %v48, 0.0
  %56 = vadd.xlane.f32.xlu0 %v55
  %v57 = vpop.xlane.xlu0 %56
  %v58 = vsel %vm51, %v49, 0.0
  %59 = vadd.xlane.f32.xlu0 %v58
  %v60 = vpop.xlane.xlu0 %59
  %v61 = vsel %vm51, %v50, 0.0
  %62 = vadd.xlane.f32.xlu0 %v61
  %v63 = vpop.xlane.xlu0 %62
  %v64 = vrsqrt.pop %v54
  %v65 = vmul.f32 %v64, %v54
  %v66 = vmul.f32 %v65, %v64
  %v67 = vmul.f32 0.5, %v66
  %v68 = vsub.f32 1.5, %v67
  %v69 = vmul.f32 %v64, %v68
  %v70 = vmul.f32 %v54, %v69
  %vm71 = vcmp.eq.f32.partialorder %v54, inf
  %v72 = vsel %vm71, %v54, %v70
  %vm73 = vcmp.eq.f32.partialorder %v54, 0.0
  %v74 = vand.u32 %v54, 2147483648
  %v75 = vsel %vm73, %v74, %v72
  %v76 = vrsqrt.pop %v57
  %v77 = vmul.f32 %v76, %v57
  %v78 = vmul.f32 %v77, %v76
  %v79 = vmul.f32 0.5, %v78
  %v80 = vsub.f32 1.5, %v79
  %v81 = vmul.f32 %v76, %v80
  %v82 = vmul.f32 %v57, %v81
  %vm83 = vcmp.eq.f32.partialorder %v57, inf
  %v84 = vsel %vm83, %v57, %v82
  %vm85 = vcmp.eq.f32.partialorder %v57, 0.0
  %v86 = vand.u32 %v57, 2147483648
  %v87 = vsel %vm85, %v86, %v84
  %v88 = vrsqrt.pop %v60
  %v89 = vmul.f32 %v88, %v60
  %v90 = vmul.f32 %v89, %v88
  %v91 = vmul.f32 0.5, %v90
  %v92 = vsub.f32 1.5, %v91
  %v93 = vmul.f32 %v88, %v92
  %v94 = vmul.f32 %v60, %v93
  %vm95 = vcmp.eq.f32.partialorder %v60, inf
  %v96 = vsel %vm95, %v60, %v94
  %vm97 = vcmp.eq.f32.partialorder %v60, 0.0
  %v98 = vand.u32 %v60, 2147483648
  %v99 = vsel %vm97, %v98, %v96
  %v100 = vrsqrt.pop %v63
  %v101 = vmul.f32 %v100, %v63
  %v102 = vmul.f32 %v101, %v100
  %v103 = vmul.f32 0.5, %v102
  %v104 = vsub.f32 1.5, %v103
  %v105 = vmul.f32 %v100, %v104
  %v106 = vmul.f32 %v63, %v105
  %vm107 = vcmp.eq.f32.partialorder %v63, inf
  %v108 = vsel %vm107, %v63, %v106
  %vm109 = vcmp.eq.f32.partialorder %v63, 0.0
  %v110 = vand.u32 %v63, 2147483648
  %v111 = vsel %vm109, %v110, %v108
  %v113 = vperm.slane %v33, 0
  %v115 = vmul.f32 %v75, %v113
  %v116 = vmul.f32 %v87, %v113
  %v117 = vmul.f32 %v99, %v113
  %v118 = vmul.f32 %v111, %v113
  %v123 = vunpack.c.l.b16 %v34
  %v124 = vunpack.c.l.b16 %v35
  %v125 = vunpack.c.l.b16 %v36
  %v126 = vunpack.c.l.b16 %v37
  %v127 = vpack.c.b16 %v124, %v123
  %v128 = vpack.c.b16 %v126, %v125
  %v130 = vsel %vm51, %v127, 0
  %v133 = vsel %vm51, %v128, 0
  %vm135 = vcmask 1040384
  %v137 = vsel %vm135, %v38, 0
  %139 = vmatpush.bf16.msra.mxu0 0
  %140 = vmatpush.bf16.msra.mxu0 0
  %141 = vmatpush.bf16.msra.mxu0 0
  %142 = vmatpush.bf16.msra.mxu0 0
  %143 = vmatpush.bf16.msra.mxu0 0
  %144 = vmatpush.bf16.msra.mxu0 0
  %145 = vmatpush.bf16.msra.mxu0 0
  %146 = vmatpush.bf16.msra.mxu0 %v137
  %147 = vmatmul.bf16.gmra.mxu0 %v130
  %v148 = vpop.f32.mrf.mxu0
  %v149 = vadd.f32 %v115, %v148
  %v150 = vpop.f32.mrf.mxu0
  %v151 = vadd.f32 %v116, %v150
  %152 = vmatmul.bf16.gmra.mxu0 %v133
  %v153 = vpop.f32.mrf.mxu0
  %v154 = vadd.f32 %v117, %v153
  %v155 = vpop.f32.mrf.mxu0
  %v156 = vadd.f32 %v118, %v155
  %157 = vdwg.mxu0
  %s158 = scalar_lea.vmem %s1, 16
  %v159 = vld [vmem:[%s158] sm:$0xf]
  %v160 = vld [vmem:[%s158 + $0x4] sm:$0xf]
  %v161 = vld [vmem:[%s158 + $0x8] sm:$0xf]
  %v162 = vld [vmem:[%s158 + $0xc] sm:$0xf]
  %v163 = vunpack.c.l.bf16 %v159
  %v164 = vunpack.c.l.bf16 %v160
  %v165 = vunpack.c.l.bf16 %v161
  %v166 = vunpack.c.l.bf16 %v162
  %v167 = vsub.f32 %v163, %v29
  %v168 = vsub.f32 %v164, %v30
  %v169 = vsub.f32 %v165, %v31
  %v170 = vsub.f32 %v166, %v32
  %v171 = vmul.f32 %v167, %v167
  %v172 = vmul.f32 %v168, %v168
  %v173 = vmul.f32 %v169, %v169
  %v174 = vmul.f32 %v170, %v170
  %v175 = vsel %vm51, %v171, 0.0
  %176 = vadd.xlane.f32.xlu0 %v175
  %v177 = vpop.xlane.xlu0 %176
  %v178 = vsel %vm51, %v172, 0.0
  %179 = vadd.xlane.f32.xlu0 %v178
  %v180 = vpop.xlane.xlu0 %179
  %v181 = vsel %vm51, %v173, 0.0
  %182 = vadd.xlane.f32.xlu0 %v181
  %v183 = vpop.xlane.xlu0 %182
  %v184 = vsel %vm51, %v174, 0.0
  %185 = vadd.xlane.f32.xlu0 %v184
  %v186 = vpop.xlane.xlu0 %185
  %v187 = vrsqrt.pop %v177
  %v188 = vmul.f32 %v187, %v177
  %v189 = vmul.f32 %v188, %v187
  %v190 = vmul.f32 0.5, %v189
  %v191 = vsub.f32 1.5, %v190
  %v192 = vmul.f32 %v187, %v191
  %v193 = vmul.f32 %v177, %v192
  %vm194 = vcmp.eq.f32.partialorder %v177, inf
  %v195 = vsel %vm194, %v177, %v193
  %vm196 = vcmp.eq.f32.partialorder %v177, 0.0
  %v197 = vand.u32 %v177, 2147483648
  %v198 = vsel %vm196, %v197, %v195
  %v199 = vrsqrt.pop %v180
  %v200 = vmul.f32 %v199, %v180
  %v201 = vmul.f32 %v200, %v199
  %v202 = vmul.f32 0.5, %v201
  %v203 = vsub.f32 1.5, %v202
  %v204 = vmul.f32 %v199, %v203
  %v205 = vmul.f32 %v180, %v204
  %vm206 = vcmp.eq.f32.partialorder %v180, inf
  %v207 = vsel %vm206, %v180, %v205
  %vm208 = vcmp.eq.f32.partialorder %v180, 0.0
  %v209 = vand.u32 %v180, 2147483648
  %v210 = vsel %vm208, %v209, %v207
  %v211 = vrsqrt.pop %v183
  %v212 = vmul.f32 %v211, %v183
  %v213 = vmul.f32 %v212, %v211
  %v214 = vmul.f32 0.5, %v213
  %v215 = vsub.f32 1.5, %v214
  %v216 = vmul.f32 %v211, %v215
  %v217 = vmul.f32 %v183, %v216
  %vm218 = vcmp.eq.f32.partialorder %v183, inf
  %v219 = vsel %vm218, %v183, %v217
  %vm220 = vcmp.eq.f32.partialorder %v183, 0.0
  %v221 = vand.u32 %v183, 2147483648
  %v222 = vsel %vm220, %v221, %v219
  %v223 = vrsqrt.pop %v186
  %v224 = vmul.f32 %v223, %v186
  %v225 = vmul.f32 %v224, %v223
  %v226 = vmul.f32 0.5, %v225
  %v227 = vsub.f32 1.5, %v226
  %v228 = vmul.f32 %v223, %v227
  %v229 = vmul.f32 %v186, %v228
  %vm230 = vcmp.eq.f32.partialorder %v186, inf
  %v231 = vsel %vm230, %v186, %v229
  %vm232 = vcmp.eq.f32.partialorder %v186, 0.0
  %v233 = vand.u32 %v186, 2147483648
  %v234 = vsel %vm232, %v233, %v231
  %v235 = vmul.f32 %v198, %v113
  %v236 = vmul.f32 %v210, %v113
  %v237 = vmul.f32 %v222, %v113
  %v238 = vmul.f32 %v234, %v113
  %v243 = vunpack.c.l.b16 %v159
  %v244 = vunpack.c.l.b16 %v160
  %v245 = vunpack.c.l.b16 %v161
  %v246 = vunpack.c.l.b16 %v162
  %v247 = vpack.c.b16 %v244, %v243
  %v248 = vpack.c.b16 %v246, %v245
  %v250 = vsel %vm51, %v247, 0
  %v253 = vsel %vm51, %v248, 0
  %255 = vmatpush.bf16.msra.mxu0 0
  %256 = vmatpush.bf16.msra.mxu0 0
  %257 = vmatpush.bf16.msra.mxu0 0
  %258 = vmatpush.bf16.msra.mxu0 0
  %259 = vmatpush.bf16.msra.mxu0 0
  %260 = vmatpush.bf16.msra.mxu0 0
  %261 = vmatpush.bf16.msra.mxu0 0
  %262 = vmatpush.bf16.msra.mxu0 %v137
  %263 = vmatmul.bf16.gmra.mxu0 %v250
  %v264 = vpop.f32.mrf.mxu0
  %v265 = vadd.f32 %v235, %v264
  %v266 = vpop.f32.mrf.mxu0
  %v267 = vadd.f32 %v236, %v266
  %268 = vmatmul.bf16.gmra.mxu0 %v253
  %v269 = vpop.f32.mrf.mxu0
  %v270 = vadd.f32 %v237, %v269
  %v271 = vpop.f32.mrf.mxu0
  %v272 = vadd.f32 %v238, %v271
  %273 = vdwg.mxu0
  %v274 = vmax.f32 %v149, %v265
  %v275 = vmax.f32 %v151, %v267
  %v276 = vmax.f32 %v154, %v270
  %v277 = vmax.f32 %v156, %v272
  %s278 = scalar_lea.vmem %s1, 32
  %v279 = vld [vmem:[%s278] sm:$0xf]
  %v280 = vld [vmem:[%s278 + $0x4] sm:$0xf]
  %v281 = vld [vmem:[%s278 + $0x8] sm:$0xf]
  %v282 = vld [vmem:[%s278 + $0xc] sm:$0xf]
  %v283 = vunpack.c.l.bf16 %v279
  %v284 = vunpack.c.l.bf16 %v280
  %v285 = vunpack.c.l.bf16 %v281
  %v286 = vunpack.c.l.bf16 %v282
  %v287 = vsub.f32 %v283, %v29
  %v288 = vsub.f32 %v284, %v30
  %v289 = vsub.f32 %v285, %v31
  %v290 = vsub.f32 %v286, %v32
  %v291 = vmul.f32 %v287, %v287
  %v292 = vmul.f32 %v288, %v288
  %v293 = vmul.f32 %v289, %v289
  %v294 = vmul.f32 %v290, %v290
  %v295 = vsel %vm51, %v291, 0.0
  %296 = vadd.xlane.f32.xlu0 %v295
  %v297 = vpop.xlane.xlu0 %296
  %v298 = vsel %vm51, %v292, 0.0
  %299 = vadd.xlane.f32.xlu0 %v298
  %v300 = vpop.xlane.xlu0 %299
  %v301 = vsel %vm51, %v293, 0.0
  %302 = vadd.xlane.f32.xlu0 %v301
  %v303 = vpop.xlane.xlu0 %302
  %v304 = vsel %vm51, %v294, 0.0
  %305 = vadd.xlane.f32.xlu0 %v304
  %v306 = vpop.xlane.xlu0 %305
  %v307 = vrsqrt.pop %v297
  %v308 = vmul.f32 %v307, %v297
  %v309 = vmul.f32 %v308, %v307
  %v310 = vmul.f32 0.5, %v309
  %v311 = vsub.f32 1.5, %v310
  %v312 = vmul.f32 %v307, %v311
  %v313 = vmul.f32 %v297, %v312
  %vm314 = vcmp.eq.f32.partialorder %v297, inf
  %v315 = vsel %vm314, %v297, %v313
  %vm316 = vcmp.eq.f32.partialorder %v297, 0.0
  %v317 = vand.u32 %v297, 2147483648
  %v318 = vsel %vm316, %v317, %v315
  %v319 = vrsqrt.pop %v300
  %v320 = vmul.f32 %v319, %v300
  %v321 = vmul.f32 %v320, %v319
  %v322 = vmul.f32 0.5, %v321
  %v323 = vsub.f32 1.5, %v322
  %v324 = vmul.f32 %v319, %v323
  %v325 = vmul.f32 %v300, %v324
  %vm326 = vcmp.eq.f32.partialorder %v300, inf
  %v327 = vsel %vm326, %v300, %v325
  %vm328 = vcmp.eq.f32.partialorder %v300, 0.0
  %v329 = vand.u32 %v300, 2147483648
  %v330 = vsel %vm328, %v329, %v327
  %v331 = vrsqrt.pop %v303
  %v332 = vmul.f32 %v331, %v303
  %v333 = vmul.f32 %v332, %v331
  %v334 = vmul.f32 0.5, %v333
  %v335 = vsub.f32 1.5, %v334
  %v336 = vmul.f32 %v331, %v335
  %v337 = vmul.f32 %v303, %v336
  %vm338 = vcmp.eq.f32.partialorder %v303, inf
  %v339 = vsel %vm338, %v303, %v337
  %vm340 = vcmp.eq.f32.partialorder %v303, 0.0
  %v341 = vand.u32 %v303, 2147483648
  %v342 = vsel %vm340, %v341, %v339
  %v343 = vrsqrt.pop %v306
  %v344 = vmul.f32 %v343, %v306
  %v345 = vmul.f32 %v344, %v343
  %v346 = vmul.f32 0.5, %v345
  %v347 = vsub.f32 1.5, %v346
  %v348 = vmul.f32 %v343, %v347
  %v349 = vmul.f32 %v306, %v348
  %vm350 = vcmp.eq.f32.partialorder %v306, inf
  %v351 = vsel %vm350, %v306, %v349
  %vm352 = vcmp.eq.f32.partialorder %v306, 0.0
  %v353 = vand.u32 %v306, 2147483648
  %v354 = vsel %vm352, %v353, %v351
  %v355 = vmul.f32 %v318, %v113
  %v356 = vmul.f32 %v330, %v113
  %v357 = vmul.f32 %v342, %v113
  %v358 = vmul.f32 %v354, %v113
  %v363 = vunpack.c.l.b16 %v279
  %v364 = vunpack.c.l.b16 %v280
  %v365 = vunpack.c.l.b16 %v281
  %v366 = vunpack.c.l.b16 %v282
  %v367 = vpack.c.b16 %v364, %v363
  %v368 = vpack.c.b16 %v366, %v365
  %v370 = vsel %vm51, %v367, 0
  %v373 = vsel %vm51, %v368, 0
  %375 = vmatpush.bf16.msra.mxu0 0
  %376 = vmatpush.bf16.msra.mxu0 0
  %377 = vmatpush.bf16.msra.mxu0 0
  %378 = vmatpush.bf16.msra.mxu0 0
  %379 = vmatpush.bf16.msra.mxu0 0
  %380 = vmatpush.bf16.msra.mxu0 0
  %381 = vmatpush.bf16.msra.mxu0 0
  %382 = vmatpush.bf16.msra.mxu0 %v137
  %383 = vmatmul.bf16.gmra.mxu0 %v370
  %v384 = vpop.f32.mrf.mxu0
  %v385 = vadd.f32 %v355, %v384
  %v386 = vpop.f32.mrf.mxu0
  %v387 = vadd.f32 %v356, %v386
  %388 = vmatmul.bf16.gmra.mxu0 %v373
  %v389 = vpop.f32.mrf.mxu0
  %v390 = vadd.f32 %v357, %v389
  %v391 = vpop.f32.mrf.mxu0
  %v392 = vadd.f32 %v358, %v391
  %393 = vdwg.mxu0
  %v394 = vmax.f32 %v274, %v385
  %v395 = vmax.f32 %v275, %v387
  %v396 = vmax.f32 %v276, %v390
  %v397 = vmax.f32 %v277, %v392
  %s398 = scalar_lea.vmem %s1, 48
  %v399 = vld [vmem:[%s398] sm:$0xf]
  %v400 = vld [vmem:[%s398 + $0x4] sm:$0xf]
  %v401 = vld [vmem:[%s398 + $0x8] sm:$0xf]
  %v402 = vld [vmem:[%s398 + $0xc] sm:$0xf]
  %v403 = vunpack.c.l.bf16 %v399
  %v404 = vunpack.c.l.bf16 %v400
  %v405 = vunpack.c.l.bf16 %v401
  %v406 = vunpack.c.l.bf16 %v402
  %v407 = vsub.f32 %v403, %v29
  %v408 = vsub.f32 %v404, %v30
  %v409 = vsub.f32 %v405, %v31
  %v410 = vsub.f32 %v406, %v32
  %v411 = vmul.f32 %v407, %v407
  %v412 = vmul.f32 %v408, %v408
  %v413 = vmul.f32 %v409, %v409
  %v414 = vmul.f32 %v410, %v410
  %v415 = vsel %vm51, %v411, 0.0
  %416 = vadd.xlane.f32.xlu0 %v415
  %v417 = vpop.xlane.xlu0 %416
  %v418 = vsel %vm51, %v412, 0.0
  %419 = vadd.xlane.f32.xlu0 %v418
  %v420 = vpop.xlane.xlu0 %419
  %v421 = vsel %vm51, %v413, 0.0
  %422 = vadd.xlane.f32.xlu0 %v421
  %v423 = vpop.xlane.xlu0 %422
  %v424 = vsel %vm51, %v414, 0.0
  %425 = vadd.xlane.f32.xlu0 %v424
  %v426 = vpop.xlane.xlu0 %425
  %v427 = vrsqrt.pop %v417
  %v428 = vmul.f32 %v427, %v417
  %v429 = vmul.f32 %v428, %v427
  %v430 = vmul.f32 0.5, %v429
  %v431 = vsub.f32 1.5, %v430
  %v432 = vmul.f32 %v427, %v431
  %v433 = vmul.f32 %v417, %v432
  %vm434 = vcmp.eq.f32.partialorder %v417, inf
  %v435 = vsel %vm434, %v417, %v433
  %vm436 = vcmp.eq.f32.partialorder %v417, 0.0
  %v437 = vand.u32 %v417, 2147483648
  %v438 = vsel %vm436, %v437, %v435
  %v439 = vrsqrt.pop %v420
  %v440 = vmul.f32 %v439, %v420
  %v441 = vmul.f32 %v440, %v439
  %v442 = vmul.f32 0.5, %v441
  %v443 = vsub.f32 1.5, %v442
  %v444 = vmul.f32 %v439, %v443
  %v445 = vmul.f32 %v420, %v444
  %vm446 = vcmp.eq.f32.partialorder %v420, inf
  %v447 = vsel %vm446, %v420, %v445
  %vm448 = vcmp.eq.f32.partialorder %v420, 0.0
  %v449 = vand.u32 %v420, 2147483648
  %v450 = vsel %vm448, %v449, %v447
  %v451 = vrsqrt.pop %v423
  %v452 = vmul.f32 %v451, %v423
  %v453 = vmul.f32 %v452, %v451
  %v454 = vmul.f32 0.5, %v453
  %v455 = vsub.f32 1.5, %v454
  %v456 = vmul.f32 %v451, %v455
  %v457 = vmul.f32 %v423, %v456
  %vm458 = vcmp.eq.f32.partialorder %v423, inf
  %v459 = vsel %vm458, %v423, %v457
  %vm460 = vcmp.eq.f32.partialorder %v423, 0.0
  %v461 = vand.u32 %v423, 2147483648
  %v462 = vsel %vm460, %v461, %v459
  %v463 = vrsqrt.pop %v426
  %v464 = vmul.f32 %v463, %v426
  %v465 = vmul.f32 %v464, %v463
  %v466 = vmul.f32 0.5, %v465
  %v467 = vsub.f32 1.5, %v466
  %v468 = vmul.f32 %v463, %v467
  %v469 = vmul.f32 %v426, %v468
  %vm470 = vcmp.eq.f32.partialorder %v426, inf
  %v471 = vsel %vm470, %v426, %v469
  %vm472 = vcmp.eq.f32.partialorder %v426, 0.0
  %v473 = vand.u32 %v426, 2147483648
  %v474 = vsel %vm472, %v473, %v471
  %v475 = vmul.f32 %v438, %v113
  %v476 = vmul.f32 %v450, %v113
  %v477 = vmul.f32 %v462, %v113
  %v478 = vmul.f32 %v474, %v113
  %v483 = vunpack.c.l.b16 %v399
  %v484 = vunpack.c.l.b16 %v400
  %v485 = vunpack.c.l.b16 %v401
  %v486 = vunpack.c.l.b16 %v402
  %v487 = vpack.c.b16 %v484, %v483
  %v488 = vpack.c.b16 %v486, %v485
  %v490 = vsel %vm51, %v487, 0
  %v493 = vsel %vm51, %v488, 0
  %495 = vmatpush.bf16.msra.mxu0 0
  %496 = vmatpush.bf16.msra.mxu0 0
  %497 = vmatpush.bf16.msra.mxu0 0
  %498 = vmatpush.bf16.msra.mxu0 0
  %499 = vmatpush.bf16.msra.mxu0 0
  %500 = vmatpush.bf16.msra.mxu0 0
  %501 = vmatpush.bf16.msra.mxu0 0
  %502 = vmatpush.bf16.msra.mxu0 %v137
  %503 = vmatmul.bf16.gmra.mxu0 %v490
  %v504 = vpop.f32.mrf.mxu0
  %v505 = vadd.f32 %v475, %v504
  %v506 = vpop.f32.mrf.mxu0
  %v507 = vadd.f32 %v476, %v506
  %508 = vmatmul.bf16.gmra.mxu0 %v493
  %v509 = vpop.f32.mrf.mxu0
  %v510 = vadd.f32 %v477, %v509
  %v511 = vpop.f32.mrf.mxu0
  %v512 = vadd.f32 %v478, %v511
  %513 = vdwg.mxu0
  %v514 = vmax.f32 %v394, %v505
  %v515 = vmax.f32 %v395, %v507
  %v516 = vmax.f32 %v396, %v510
  %v517 = vmax.f32 %v397, %v512
  %v522 = vunpack.c.l.b16 %v24
  %v523 = vunpack.c.l.b16 %v25
  %v524 = vunpack.c.l.b16 %v26
  %v525 = vunpack.c.l.b16 %v27
  %v526 = vpack.c.b16 %v523, %v522
  %v527 = vpack.c.b16 %v525, %v524
  %v529 = vsel %vm51, %v526, 0
  %v532 = vsel %vm51, %v527, 0
  %v535 = vsel %vm135, %v28, 0
  %537 = vmatpush.bf16.msra.mxu0 0
  %538 = vmatpush.bf16.msra.mxu0 0
  %539 = vmatpush.bf16.msra.mxu0 0
  %540 = vmatpush.bf16.msra.mxu0 0
  %541 = vmatpush.bf16.msra.mxu0 0
  %542 = vmatpush.bf16.msra.mxu0 0
  %543 = vmatpush.bf16.msra.mxu0 0
  %544 = vmatpush.bf16.msra.mxu0 %v535
  %545 = vmatmul.bf16.gmra.mxu0 %v529
  %v546 = vpop.f32.mrf.mxu0
  %v547 = vadd.f32 %v514, %v546
  %v548 = vpop.f32.mrf.mxu0
  %v549 = vadd.f32 %v515, %v548
  %550 = vmatmul.bf16.gmra.mxu0 %v532
  %v551 = vpop.f32.mrf.mxu0
  %v552 = vadd.f32 %v516, %v551
  %v553 = vpop.f32.mrf.mxu0
  %v554 = vadd.f32 %v517, %v553
  %555 = vdwg.mxu0
  %v556 = vld [vmem:[%s5] sm:$0x1]
  %v558 = vperm.slane %v556, 0
  %v560 = vadd.f32 %v547, %v558
  %v561 = vadd.f32 %v549, %v558
  %v562 = vadd.f32 %v552, %v558
  %v563 = vadd.f32 %v554, %v558
  %vm564 = vcmp.gt.f32.partialorder %v560, 0.0
  %vm565 = vcmp.gt.f32.partialorder %v561, 0.0
  %vm566 = vcmp.gt.f32.partialorder %v562, 0.0
  %vm567 = vcmp.gt.f32.partialorder %v563, 0.0
  %v568 = vmul.f32 %v560, 0.01
  %v569 = vmul.f32 %v561, 0.01
  %v570 = vmul.f32 %v562, 0.01
  %v571 = vmul.f32 %v563, 0.01
  %v572 = vsel %vm564, %v560, %v568
  %v573 = vsel %vm565, %v561, %v569
  %v574 = vsel %vm566, %v562, %v570
  %v575 = vsel %vm567, %v563, %v571
  %v576 = vpack.c.bf16 %v572, %v572
  %v577 = vpack.c.bf16 %v573, %v573
  %v578 = vpack.c.bf16 %v574, %v574
  %v579 = vpack.c.bf16 %v575, %v575
  %vm580 = vcmask 11264
  %581 = vst.msk [vmem:[%s6] sm:$0xf] %vm580, %v576
  %582 = vst.msk [vmem:[%s6 + $0x4] sm:$0xf] %vm580, %v577
  %583 = vst.msk [vmem:[%s6 + $0x8] sm:$0xf] %vm580, %v578
  %584 = vst.msk [vmem:[%s6 + $0xc] sm:$0xf] %vm580, %v579
  // Predicated region
  $region26: #{semantic_cnn_forward.16} parent=0 // pred_check
    _
  $region27: #{semantic_cnn_forward.16} parent=0 // pred_check_branch
    %586 = sbr.rel (0) target = $region29
  $region28: #{semantic_cnn_forward.16} parent=0 // pred_region
    _
  $region29: #{semantic_cnn_forward.16} parent=0 // pred_fallthru
    _
  // Predicated region
  $region30: #{semantic_cnn_forward.16} parent=0 // pred_check
    _
  $region31: #{semantic_cnn_forward.16} parent=0 // pred_check_branch
    %588 = sbr.rel (0) target = $region33
  $region32: #{semantic_cnn_forward.16} parent=0 // pred_region
    _
  $region33: #{semantic_cnn_forward.16} parent=0 // pred_fallthru
    _

// kernel: semantic_cnn_forward.20
$region0: #{semantic_cnn_forward.20}
  #allocation0 [shape = 'u32[]', space=smem, size = 0x4, offset = 0x4, fixed_abs, tag = 'smem constant byte address 0x4 - core index']
  #allocation1 [shape = 'u32[72,128]{1,0:T(1,128)}', space=vmem, size = 0x9000, scoped, tag = 'internal scratch']
  #allocation2 [shape = 'bf16[16,2]{1,0:T(8,128)(2,1)}', space=vmem, size = 0x1000, scoped, tag = 'scratch operand']
  #allocation3 [shape = 'bf16[16,2]{1,0:T(8,128)(2,1)}', space=vmem, size = 0x1000, scoped, tag = 'scratch operand']
  %s0 = inlined_call_operand.vmem [shape: bf16[2,16,2], index: 0, kind: input, shape index: {}, may-alias: {0,1}]
  %s1 = inlined_call_operand.vmem [shape: bf16[2,16,2], index: 1, kind: input, shape index: {}, may-alias: {0,1}]
  %s2 = inlined_call_operand.vmem [shape: bf16[2,16,4], index: 2, kind: input, shape index: {}]
  %s3 = inlined_call_operand.vmem [shape: bf16[2,2], index: 3, kind: input, shape index: {}]
  %s4 = inlined_call_operand.vmem [shape: f32[1,2], index: 4, kind: input, shape index: {}]
  %s5 = inlined_call_operand.vmem [shape: bf16[2,2], index: 5, kind: input, shape index: {}]
  %s6 = inlined_call_operand.vmem [shape: f32[1,2], index: 6, kind: input, shape index: {}]
  %s7 = inlined_call_operand.vmem [shape: bf16[2,2], index: 7, kind: input, shape index: {}]
  %s8 = inlined_call_operand.vmem [shape: f32[1,2], index: 8, kind: input, shape index: {}]
  %s9 = inlined_call_operand.vmem [shape: bf16[2,4], index: 9, kind: input, shape index: {}]
  %s10 = inlined_call_operand.vmem [shape: f32[1,4], index: 10, kind: input, shape index: {}]
  %s11 = inlined_call_operand.vmem [shape: bf16[4,4], index: 11, kind: input, shape index: {}]
  %s12 = inlined_call_operand.vmem [shape: bf16[4,4], index: 12, kind: input, shape index: {}]
  %s13 = inlined_call_operand.vmem [shape: f32[1,4], index: 13, kind: input, shape index: {}]
  %s14 = inlined_call_operand.vmem [shape: bf16[2,16,4], index: 14, kind: output, shape index: {}]
  %s15 = sld [smem:[#allocation0]]
  $region93: #{semantic_cnn_forward.20} parent=0
    _
  %s17 = ssub.s32 1, %s15
  %s18 = scalar_select 0, %s17, %s15
  loop: start=0, step=1, limit=4
  $region2: #{semantic_cnn_forward.20} parent=0 // loop_pre_header
    _
  $region3: #{semantic_cnn_forward.20} parent=0 // loop_header
    %s20 = sphi 0, %s24
    %p21 = scmp.ge.s32.totalorder %s20, 4
    %s27 = sphi 0, %s39
    %s28 = sphi 0, %s35
    %s29 = sphi 0, %s27
    %s30 = sphi 0, %s28
    %s31 = sphi 0, %s29
    %s32 = sphi 0, %s30
    %s44 = sphi 0, %s46
    %s47 = sphi 0, %s44
    %s48 = sphi 0, %s47
    %s64 = sphi 0, %s48
    %s70 = sphi 0, %s72
    %s73 = sphi 0, %s70
    %s74 = sphi 0, %s73
    %s90 = sphi 0, %s74
    %s98 = sphi 0, %s100
    %s101 = sphi 0, %s98
    %s102 = sphi 0, %s101
    %s118 = sphi 0, %s102
    %s122 = sphi 0, %s122
    %s124 = sphi 0, %s122
    %s125 = sphi 0, %s124
    %s139 = sphi 0, %s125
    %s143 = sphi 0, %s143
    %s145 = sphi 0, %s143
    %s146 = sphi 0, %s145
    %s160 = sphi 0, %s146
    %s164 = sphi 0, %s164
    %s166 = sphi 0, %s164
    %s167 = sphi 0, %s166
    %s181 = sphi 0, %s167
    %s185 = sphi 0, %s185
    %s187 = sphi 0, %s185
    %s188 = sphi 0, %s187
    %s202 = sphi 0, %s188
    %s206 = sphi 0, %s206
    %s208 = sphi 0, %s206
    %s209 = sphi 0, %s208
    %s223 = sphi 0, %s209
    %s227 = sphi 0, %s227
    %s229 = sphi 0, %s227
    %s230 = sphi 0, %s229
    %s244 = sphi 0, %s230
    %s248 = sphi 0, %s248
    %s250 = sphi 0, %s248
    %s251 = sphi 0, %s250
    %s265 = sphi 0, %s251
    %s269 = sphi 0, %s269
    %s271 = sphi 0, %s269
    %s272 = sphi 0, %s271
    %s286 = sphi 0, %s272
    %s290 = sphi 0, %s290
    %s292 = sphi 0, %s290
    %s293 = sphi 0, %s292
    %s307 = sphi 0, %s293
    %s311 = sphi 0, %s311
    %s313 = sphi 0, %s311
    %s314 = sphi 0, %s313
    %s328 = sphi 0, %s314
    %s332 = sphi 0, %s332
    %s334 = sphi 0, %s332
    %s335 = sphi 0, %s334
    %s349 = sphi 0, %s335
    %s357 = sphi 0, %s359
    %s360 = sphi 0, %s357
    %s361 = sphi 0, %s360
    %s377 = sphi 0, %s361
  $region4: #{semantic_cnn_forward.20} parent=0 // loop_header_branch
    %23 = sbr.rel (%p21) target = $region8
  $region5: #{semantic_cnn_forward.20} parent=0 // loop_body
    %s25 = ssub.s32 %s20, 1
    %s26 = ssub.s32 %s20, 2
    %s33 = sadd.s32 1, %s28
    %p34 = scmp.ge.s32.totalorder %s33, 1
    %s35 = scalar_select %p34, 0, %s33
    %s36 = sadd.s32 1, %s27
    %s37 = scalar_select %p34, %s36, %s27
    %p38 = scmp.ge.s32.totalorder %s37, 2
    %s39 = scalar_select %p38, 0, %s37
    %s40 = ssub.s32 %s27, %s39
    %s41 = ssub.s32 %s28, %s35
    %s42 = sor.u32 %s40, %s41
    %p43 = scmp.eq.s32.totalorder %s42, 0
    %s45 = sadd.s32 %s44, 1
    %s46 = scalar_select %p43, %s44, %s45
    %p49 = pneg %p43
    %p50 = scmp.eq.s32.totalorder %s20, 1
    %p51 = por %p49, %p50
    %p52 = scmp.ne.s32.totalorder %s44, %s47
    %p53 = scmp.eq.s32.totalorder %s20, 0
    %p54 = por %p52, %p53
    %p55 = scmp.ne.s32.totalorder %s44, %s47
    %p56 = scmp.eq.s32.totalorder %s25, 1
    %p57 = por %p55, %p56
    %p58 = scmp.ne.s32.totalorder %s47, %s48
    %p59 = scmp.eq.s32.totalorder %s25, 0
    %p60 = por %p58, %p59
    %p61 = scmp.ne.s32.totalorder %s47, %s48
    %p62 = scmp.eq.s32.totalorder %s26, 1
    %p63 = por %p61, %p62
    %p65 = scmp.ne.s32.totalorder %s48, %s64
    %p66 = scmp.eq.s32.totalorder %s26, 0
    %p67 = por %p65, %p66
    %s68 = ssub.s32 %s27, %s39
    %p69 = scmp.eq.s32.totalorder %s68, 0
    %s71 = sadd.s32 %s70, 1
    %s72 = scalar_select %p69, %s70, %s71
    %p75 = pneg %p69
    %p76 = scmp.eq.s32.totalorder %s20, 1
    %p77 = por %p75, %p76
    %p78 = scmp.ne.s32.totalorder %s70, %s73
    %p79 = scmp.eq.s32.totalorder %s20, 0
    %p80 = por %p78, %p79
    %p81 = scmp.ne.s32.totalorder %s70, %s73
    %p82 = scmp.eq.s32.totalorder %s25, 1
    %p83 = por %p81, %p82
    %p84 = scmp.ne.s32.totalorder %s73, %s74
    %p85 = scmp.eq.s32.totalorder %s25, 0
    %p86 = por %p84, %p85
    %p87 = scmp.ne.s32.totalorder %s73, %s74
    %p88 = scmp.eq.s32.totalorder %s26, 1
    %p89 = por %p87, %p88
    %p91 = scmp.ne.s32.totalorder %s74, %s90
    %p92 = scmp.eq.s32.totalorder %s26, 0
    %p93 = por %p91, %p92
    %s94 = ssub.s32 %s27, %s39
    %s95 = ssub.s32 %s28, %s35
    %s96 = sor.u32 %s94, %s95
    %p97 = scmp.eq.s32.totalorder %s96, 0
    %s99 = sadd.s32 %s98, 1
    %s100 = scalar_select %p97, %s98, %s99
    %p103 = pneg %p97
    %p104 = scmp.eq.s32.totalorder %s20, 1
    %p105 = por %p103, %p104
    %p106 = scmp.ne.s32.totalorder %s98, %s101
    %p107 = scmp.eq.s32.totalorder %s20, 0
    %p108 = por %p106, %p107
    %p109 = scmp.ne.s32.totalorder %s98, %s101
    %p110 = scmp.eq.s32.totalorder %s25, 1
    %p111 = por %p109, %p110
    %p112 = scmp.ne.s32.totalorder %s101, %s102
    %p113 = scmp.eq.s32.totalorder %s25, 0
    %p114 = por %p112, %p113
    %p115 = scmp.ne.s32.totalorder %s101, %s102
    %p116 = scmp.eq.s32.totalorder %s26, 1
    %p117 = por %p115, %p116
    %p119 = scmp.ne.s32.totalorder %s102, %s118
    %p120 = scmp.eq.s32.totalorder %s26, 0
    %p121 = por %p119, %p120
    %s123 = sadd.s32 %s122, 1
    %p126 = scmp.eq.s32.totalorder %s20, 1
    %p127 = scmp.ne.s32.totalorder %s122, %s124
    %p128 = scmp.eq.s32.totalorder %s20, 0
    %p129 = por %p127, %p128
    %p130 = scmp.ne.s32.totalorder %s122, %s124
    %p131 = scmp.eq.s32.totalorder %s25, 1
    %p132 = por %p130, %p131
    %p133 = scmp.ne.s32.totalorder %s124, %s125
    %p134 = scmp.eq.s32.totalorder %s25, 0
    %p135 = por %p133, %p134
    %p136 = scmp.ne.s32.totalorder %s124, %s125
    %p137 = scmp.eq.s32.totalorder %s26, 1
    %p138 = por %p136, %p137
    %p140 = scmp.ne.s32.totalorder %s125, %s139
    %p141 = scmp.eq.s32.totalorder %s26, 0
    %p142 = por %p140, %p141
    %s144 = sadd.s32 %s143, 1
    %p147 = scmp.eq.s32.totalorder %s20, 1
    %p148 = scmp.ne.s32.totalorder %s143, %s145
    %p149 = scmp.eq.s32.totalorder %s20, 0
    %p150 = por %p148, %p149
    %p151 = scmp.ne.s32.totalorder %s143, %s145
    %p152 = scmp.eq.s32.totalorder %s25, 1
    %p153 = por %p151, %p152
    %p154 = scmp.ne.s32.totalorder %s145, %s146
    %p155 = scmp.eq.s32.totalorder %s25, 0
    %p156 = por %p154, %p155
    %p157 = scmp.ne.s32.totalorder %s145, %s146
    %p158 = scmp.eq.s32.totalorder %s26, 1
    %p159 = por %p157, %p158
    %p161 = scmp.ne.s32.totalorder %s146, %s160
    %p162 = scmp.eq.s32.totalorder %s26, 0
    %p163 = por %p161, %p162
    %s165 = sadd.s32 %s164, 1
    %p168 = scmp.eq.s32.totalorder %s20, 1
    %p169 = scmp.ne.s32.totalorder %s164, %s166
    %p170 = scmp.eq.s32.totalorder %s20, 0
    %p171 = por %p169, %p170
    %p172 = scmp.ne.s32.totalorder %s164, %s166
    %p173 = scmp.eq.s32.totalorder %s25, 1
    %p174 = por %p172, %p173
    %p175 = scmp.ne.s32.totalorder %s166, %s167
    %p176 = scmp.eq.s32.totalorder %s25, 0
    %p177 = por %p175, %p176
    %p178 = scmp.ne.s32.totalorder %s166, %s167
    %p179 = scmp.eq.s32.totalorder %s26, 1
    %p180 = por %p178, %p179
    %p182 = scmp.ne.s32.totalorder %s167, %s181
    %p183 = scmp.eq.s32.totalorder %s26, 0
    %p184 = por %p182, %p183
    %s186 = sadd.s32 %s185, 1
    %p189 = scmp.eq.s32.totalorder %s20, 1
    %p190 = scmp.ne.s32.totalorder %s185, %s187
    %p191 = scmp.eq.s32.totalorder %s20, 0
    %p192 = por %p190, %p191
    %p193 = scmp.ne.s32.totalorder %s185, %s187
    %p194 = scmp.eq.s32.totalorder %s25, 1
    %p195 = por %p193, %p194
    %p196 = scmp.ne.s32.totalorder %s187, %s188
    %p197 = scmp.eq.s32.totalorder %s25, 0
    %p198 = por %p196, %p197
    %p199 = scmp.ne.s32.totalorder %s187, %s188
    %p200 = scmp.eq.s32.totalorder %s26, 1
    %p201 = por %p199, %p200
    %p203 = scmp.ne.s32.totalorder %s188, %s202
    %p204 = scmp.eq.s32.totalorder %s26, 0
    %p205 = por %p203, %p204
    %s207 = sadd.s32 %s206, 1
    %p210 = scmp.eq.s32.totalorder %s20, 1
    %p211 = scmp.ne.s32.totalorder %s206, %s208
    %p212 = scmp.eq.s32.totalorder %s20, 0
    %p213 = por %p211, %p212
    %p214 = scmp.ne.s32.totalorder %s206, %s208
    %p215 = scmp.eq.s32.totalorder %s25, 1
    %p216 = por %p214, %p215
    %p217 = scmp.ne.s32.totalorder %s208, %s209
    %p218 = scmp.eq.s32.totalorder %s25, 0
    %p219 = por %p217, %p218
    %p220 = scmp.ne.s32.totalorder %s208, %s209
    %p221 = scmp.eq.s32.totalorder %s26, 1
    %p222 = por %p220, %p221
    %p224 = scmp.ne.s32.totalorder %s209, %s223
    %p225 = scmp.eq.s32.totalorder %s26, 0
    %p226 = por %p224, %p225
    %s228 = sadd.s32 %s227, 1
    %p231 = scmp.eq.s32.totalorder %s20, 1
    %p232 = scmp.ne.s32.totalorder %s227, %s229
    %p233 = scmp.eq.s32.totalorder %s20, 0
    %p234 = por %p232, %p233
    %p235 = scmp.ne.s32.totalorder %s227, %s229
    %p236 = scmp.eq.s32.totalorder %s25, 1
    %p237 = por %p235, %p236
    %p238 = scmp.ne.s32.totalorder %s229, %s230
    %p239 = scmp.eq.s32.totalorder %s25, 0
    %p240 = por %p238, %p239
    %p241 = scmp.ne.s32.totalorder %s229, %s230
    %p242 = scmp.eq.s32.totalorder %s26, 1
    %p243 = por %p241, %p242
    %p245 = scmp.ne.s32.totalorder %s230, %s244
    %p246 = scmp.eq.s32.totalorder %s26, 0
    %p247 = por %p245, %p246
    %s249 = sadd.s32 %s248, 1
    %p252 = scmp.eq.s32.totalorder %s20, 1
    %p253 = scmp.ne.s32.totalorder %s248, %s250
    %p254 = scmp.eq.s32.totalorder %s20, 0
    %p255 = por %p253, %p254
    %p256 = scmp.ne.s32.totalorder %s248, %s250
    %p257 = scmp.eq.s32.totalorder %s25, 1
    %p258 = por %p256, %p257
    %p259 = scmp.ne.s32.totalorder %s250, %s251
    %p260 = scmp.eq.s32.totalorder %s25, 0
    %p261 = por %p259, %p260
    %p262 = scmp.ne.s32.totalorder %s250, %s251
    %p263 = scmp.eq.s32.totalorder %s26, 1
    %p264 = por %p262, %p263
    %p266 = scmp.ne.s32.totalorder %s251, %s265
    %p267 = scmp.eq.s32.totalorder %s26, 0
    %p268 = por %p266, %p267
    %s270 = sadd.s32 %s269, 1
    %p273 = scmp.eq.s32.totalorder %s20, 1
    %p274 = scmp.ne.s32.totalorder %s269, %s271
    %p275 = scmp.eq.s32.totalorder %s20, 0
    %p276 = por %p274, %p275
    %p277 = scmp.ne.s32.totalorder %s269, %s271
    %p278 = scmp.eq.s32.totalorder %s25, 1
    %p279 = por %p277, %p278
    %p280 = scmp.ne.s32.totalorder %s271, %s272
    %p281 = scmp.eq.s32.totalorder %s25, 0
    %p282 = por %p280, %p281
    %p283 = scmp.ne.s32.totalorder %s271, %s272
    %p284 = scmp.eq.s32.totalorder %s26, 1
    %p285 = por %p283, %p284
    %p287 = scmp.ne.s32.totalorder %s272, %s286
    %p288 = scmp.eq.s32.totalorder %s26, 0
    %p289 = por %p287, %p288
    %s291 = sadd.s32 %s290, 1
    %p294 = scmp.eq.s32.totalorder %s20, 1
    %p295 = scmp.ne.s32.totalorder %s290, %s292
    %p296 = scmp.eq.s32.totalorder %s20, 0
    %p297 = por %p295, %p296
    %p298 = scmp.ne.s32.totalorder %s290, %s292
    %p299 = scmp.eq.s32.totalorder %s25, 1
    %p300 = por %p298, %p299
    %p301 = scmp.ne.s32.totalorder %s292, %s293
    %p302 = scmp.eq.s32.totalorder %s25, 0
    %p303 = por %p301, %p302
    %p304 = scmp.ne.s32.totalorder %s292, %s293
    %p305 = scmp.eq.s32.totalorder %s26, 1
    %p306 = por %p304, %p305
    %p308 = scmp.ne.s32.totalorder %s293, %s307
    %p309 = scmp.eq.s32.totalorder %s26, 0
    %p310 = por %p308, %p309
    %s312 = sadd.s32 %s311, 1
    %p315 = scmp.eq.s32.totalorder %s20, 1
    %p316 = scmp.ne.s32.totalorder %s311, %s313
    %p317 = scmp.eq.s32.totalorder %s20, 0
    %p318 = por %p316, %p317
    %p319 = scmp.ne.s32.totalorder %s311, %s313
    %p320 = scmp.eq.s32.totalorder %s25, 1
    %p321 = por %p319, %p320
    %p322 = scmp.ne.s32.totalorder %s313, %s314
    %p323 = scmp.eq.s32.totalorder %s25, 0
    %p324 = por %p322, %p323
    %p325 = scmp.ne.s32.totalorder %s313, %s314
    %p326 = scmp.eq.s32.totalorder %s26, 1
    %p327 = por %p325, %p326
    %p329 = scmp.ne.s32.totalorder %s314, %s328
    %p330 = scmp.eq.s32.totalorder %s26, 0
    %p331 = por %p329, %p330
    %s333 = sadd.s32 %s332, 1
    %p336 = scmp.eq.s32.totalorder %s20, 1
    %p337 = scmp.ne.s32.totalorder %s332, %s334
    %p338 = scmp.eq.s32.totalorder %s20, 0
    %p339 = por %p337, %p338
    %p340 = scmp.ne.s32.totalorder %s332, %s334
    %p341 = scmp.eq.s32.totalorder %s25, 1
    %p342 = por %p340, %p341
    %p343 = scmp.ne.s32.totalorder %s334, %s335
    %p344 = scmp.eq.s32.totalorder %s25, 0
    %p345 = por %p343, %p344
    %p346 = scmp.ne.s32.totalorder %s334, %s335
    %p347 = scmp.eq.s32.totalorder %s26, 1
    %p348 = por %p346, %p347
    %p350 = scmp.ne.s32.totalorder %s335, %s349
    %p351 = scmp.eq.s32.totalorder %s26, 0
    %p352 = por %p350, %p351
    %s353 = ssub.s32 %s27, %s39
    %s354 = ssub.s32 %s28, %s35
    %s355 = sor.u32 %s353, %s354
    %p356 = scmp.eq.s32.totalorder %s355, 0
    %s358 = sadd.s32 %s357, 1
    %s359 = scalar_select %p356, %s357, %s358
    %p362 = pneg %p356
    %p363 = scmp.eq.s32.totalorder %s20, 1
    %p364 = por %p362, %p363
    %p365 = scmp.ne.s32.totalorder %s357, %s360
    %p366 = scmp.eq.s32.totalorder %s20, 0
    %p367 = por %p365, %p366
    %p368 = scmp.ne.s32.totalorder %s357, %s360
    %p369 = scmp.eq.s32.totalorder %s25, 1
    %p370 = por %p368, %p369
    %p371 = scmp.ne.s32.totalorder %s360, %s361
    %p372 = scmp.eq.s32.totalorder %s25, 0
    %p373 = por %p371, %p372
    %p374 = scmp.ne.s32.totalorder %s360, %s361
    %p375 = scmp.eq.s32.totalorder %s26, 1
    %p376 = por %p374, %p375
    %p378 = scmp.ne.s32.totalorder %s361, %s377
    %p379 = scmp.eq.s32.totalorder %s26, 0
    %p380 = por %p378, %p379
    %p381 = scmp.le.s32.totalorder 1, %s20
    %p382 = scmp.lt.s32.totalorder %s20, 3
    %p383 = pnand %p381, %p382
    %p384 = pneg %p383
    // Predicated region
    $region9: #{semantic_cnn_forward.20} parent=5 // pred_check
      _
    $region10: #{semantic_cnn_forward.20} parent=5 // pred_check_branch
      %386 = sbr.rel (%p383) target = $region12
    $region11: #{semantic_cnn_forward.20} parent=5 // pred_region
      %s387 = ssub.s32 %s20, 1
      // Predicated region
      $region13: #{semantic_cnn_forward.20} parent=11 // pred_check
        %p388 = pneg %p135
      $region14: #{semantic_cnn_forward.20} parent=11 // pred_check_branch
        %390 = sbr.rel (%p388) target = $region16
      $region15: #{semantic_cnn_forward.20} parent=11 // pred_region
        _
      $region16: #{semantic_cnn_forward.20} parent=11 // pred_fallthru
        _
      // Predicated region
      $region17: #{semantic_cnn_forward.20} parent=11 // pred_check
        %p391 = pneg %p156
      $region18: #{semantic_cnn_forward.20} parent=11 // pred_check_branch
        %393 = sbr.rel (%p391) target = $region20
      $region19: #{semantic_cnn_forward.20} parent=11 // pred_region
        _
      $region20: #{semantic_cnn_forward.20} parent=11 // pred_fallthru
        _
      // Predicated region
      $region21: #{semantic_cnn_forward.20} parent=11 // pred_check
        %p394 = pneg %p177
      $region22: #{semantic_cnn_forward.20} parent=11 // pred_check_branch
        %396 = sbr.rel (%p394) target = $region24
      $region23: #{semantic_cnn_forward.20} parent=11 // pred_region
        _
      $region24: #{semantic_cnn_forward.20} parent=11 // pred_fallthru
        _
      // Predicated region
      $region25: #{semantic_cnn_forward.20} parent=11 // pred_check
        %p397 = pneg %p198
      $region26: #{semantic_cnn_forward.20} parent=11 // pred_check_branch
        %399 = sbr.rel (%p397) target = $region28
      $region27: #{semantic_cnn_forward.20} parent=11 // pred_region
        _
      $region28: #{semantic_cnn_forward.20} parent=11 // pred_fallthru
        _
      // Predicated region
      $region29: #{semantic_cnn_forward.20} parent=11 // pred_check
        %p400 = pneg %p219
      $region30: #{semantic_cnn_forward.20} parent=11 // pred_check_branch
        %402 = sbr.rel (%p400) target = $region32
      $region31: #{semantic_cnn_forward.20} parent=11 // pred_region
        _
      $region32: #{semantic_cnn_forward.20} parent=11 // pred_fallthru
        _
      // Predicated region
      $region33: #{semantic_cnn_forward.20} parent=11 // pred_check
        %p403 = pneg %p240
      $region34: #{semantic_cnn_forward.20} parent=11 // pred_check_branch
        %405 = sbr.rel (%p403) target = $region36
      $region35: #{semantic_cnn_forward.20} parent=11 // pred_region
        _
      $region36: #{semantic_cnn_forward.20} parent=11 // pred_fallthru
        _
      // Predicated region
      $region37: #{semantic_cnn_forward.20} parent=11 // pred_check
        %p406 = pneg %p261
      $region38: #{semantic_cnn_forward.20} parent=11 // pred_check_branch
        %408 = sbr.rel (%p406) target = $region40
      $region39: #{semantic_cnn_forward.20} parent=11 // pred_region
        _
      $region40: #{semantic_cnn_forward.20} parent=11 // pred_fallthru
        _
      // Predicated region
      $region41: #{semantic_cnn_forward.20} parent=11 // pred_check
        %p409 = pneg %p282
      $region42: #{semantic_cnn_forward.20} parent=11 // pred_check_branch
        %411 = sbr.rel (%p409) target = $region44
      $region43: #{semantic_cnn_forward.20} parent=11 // pred_region
        _
      $region44: #{semantic_cnn_forward.20} parent=11 // pred_fallthru
        _
      // Predicated region
      $region45: #{semantic_cnn_forward.20} parent=11 // pred_check
        %p412 = pneg %p303
      $region46: #{semantic_cnn_forward.20} parent=11 // pred_check_branch
        %414 = sbr.rel (%p412) target = $region48
      $region47: #{semantic_cnn_forward.20} parent=11 // pred_region
        _
      $region48: #{semantic_cnn_forward.20} parent=11 // pred_fallthru
        _
      // Predicated region
      $region49: #{semantic_cnn_forward.20} parent=11 // pred_check
        %p415 = pneg %p324
      $region50: #{semantic_cnn_forward.20} parent=11 // pred_check_branch
        %417 = sbr.rel (%p415) target = $region52
      $region51: #{semantic_cnn_forward.20} parent=11 // pred_region
        _
      $region52: #{semantic_cnn_forward.20} parent=11 // pred_fallthru
        _
      // Predicated region
      $region53: #{semantic_cnn_forward.20} parent=11 // pred_check
        %p418 = pneg %p345
      $region54: #{semantic_cnn_forward.20} parent=11 // pred_check_branch
        %420 = sbr.rel (%p418) target = $region56
      $region55: #{semantic_cnn_forward.20} parent=11 // pred_region
        _
      $region56: #{semantic_cnn_forward.20} parent=11 // pred_fallthru
        _
    $region12: #{semantic_cnn_forward.20} parent=5 // pred_fallthru
      _
    %p421 = scmp.lt.s32.totalorder %s20, 2
    // Predicated region
    $region57: #{semantic_cnn_forward.20} parent=5 // pred_check
      %p422 = pneg %p421
    $region58: #{semantic_cnn_forward.20} parent=5 // pred_check_branch
      %424 = sbr.rel (%p422) target = $region60
    $region59: #{semantic_cnn_forward.20} parent=5 // pred_region
      // Predicated region
      $region61: #{semantic_cnn_forward.20} parent=59 // pred_check
        %p425 = pneg %p54
      $region62: #{semantic_cnn_forward.20} parent=59 // pred_check_branch
        %427 = sbr.rel (%p425) target = $region64
      $region63: #{semantic_cnn_forward.20} parent=59 // pred_region
        %s428 = smul.u32 2, %s28
        %p429 = scmp.lt.s32.totalorder %s27, 1
        %s430 = scalar_select %p429, %s27, 1
        %p431 = scmp.lt.s32.totalorder %s428, 1
        %s432 = scalar_select %p431, %s428, 1
        %s433 = smul.addr %s430, 2
        %s434 = sadd.s32 %s432, %s433
        %s435 = smul.addr %s434, 4
        %s436 = scalar_lea.vmem %s0, %s435
        %s437 = smul.u32 2, %s28
      $region64: #{semantic_cnn_forward.20} parent=59 // pred_fallthru
        _
      // Predicated region
      $region65: #{semantic_cnn_forward.20} parent=59 // pred_check
        %p438 = pneg %p80
      $region66: #{semantic_cnn_forward.20} parent=59 // pred_check_branch
        %440 = sbr.rel (%p438) target = $region68
      $region67: #{semantic_cnn_forward.20} parent=59 // pred_region
        %p441 = scmp.lt.s32.totalorder %s27, 1
        %s442 = scalar_select %p441, %s27, 1
        %s443 = smul.addr %s442, 2
        %s444 = smul.addr %s443, 4
        %s445 = scalar_lea.vmem %s1, %s444
      $region68: #{semantic_cnn_forward.20} parent=59 // pred_fallthru
        _
      // Predicated region
      $region69: #{semantic_cnn_forward.20} parent=59 // pred_check
        %p446 = pneg %p108
      $region70: #{semantic_cnn_forward.20} parent=59 // pred_check_branch
        %448 = sbr.rel (%p446) target = $region72
      $region71: #{semantic_cnn_forward.20} parent=59 // pred_region
        %s449 = smul.u32 2, %s28
        %p450 = scmp.lt.s32.totalorder %s27, 1
        %s451 = scalar_select %p450, %s27, 1
        %p452 = scmp.lt.s32.totalorder %s449, 1
        %s453 = scalar_select %p452, %s449, 1
        %s454 = smul.addr %s451, 2
        %s455 = sadd.s32 %s453, %s454
        %s456 = smul.addr %s455, 4
        %s457 = scalar_lea.vmem %s2, %s456
        %s458 = smul.u32 2, %s28
      $region72: #{semantic_cnn_forward.20} parent=59 // pred_fallthru
        _
    $region60: #{semantic_cnn_forward.20} parent=5 // pred_fallthru
      _
    %p459 = scmp.le.s32.totalorder 1, %s20
    %p460 = scmp.lt.s32.totalorder %s20, 3
    %p461 = pnand %p459, %p460
    %p462 = pneg %p461
    // Predicated region
    $region73: #{semantic_cnn_forward.20} parent=5 // pred_check
      _
    $region74: #{semantic_cnn_forward.20} parent=5 // pred_check_branch
      %464 = sbr.rel (%p461) target = $region76
    $region75: #{semantic_cnn_forward.20} parent=5 // pred_region
      %s465 = ssub.s32 %s20, 1
      %s466 = smul.u32 2, %s30
      %p467 = scmp.lt.s32.totalorder %s29, 1
      %s468 = scalar_select %p467, %s29, 1
      %p469 = scmp.lt.s32.totalorder %s466, 1
      %s470 = scalar_select %p469, %s466, 1
      %s471 = smul.addr %s468, 2
      %s472 = sadd.s32 %s470, %s471
      %s473 = smul.addr %s472, 4
      %s474 = scalar_lea.vmem %s0, %s473
      %p475 = pneg %p60
      %p476 = pneg %p57
      %p477 = scmp.lt.s32.totalorder %s29, 1
      %s478 = scalar_select %p477, %s29, 1
      %s479 = smul.addr %s478, 2
      %s480 = smul.addr %s479, 4
      %s481 = scalar_lea.vmem %s1, %s480
      %p482 = pneg %p86
      %p483 = pneg %p83
      %s484 = smul.u32 2, %s30
      %p485 = scmp.lt.s32.totalorder %s29, 1
      %s486 = scalar_select %p485, %s29, 1
      %p487 = scmp.lt.s32.totalorder %s484, 1
      %s488 = scalar_select %p487, %s484, 1
      %s489 = smul.addr %s486, 2
      %s490 = sadd.s32 %s488, %s489
      %s491 = smul.addr %s490, 4
      %s492 = scalar_lea.vmem %s2, %s491
      %p493 = pneg %p114
      %p494 = pneg %p111
      %p495 = pneg %p135
      %p496 = pneg %p132
      %p497 = pneg %p156
      %p498 = pneg %p153
      %p499 = pneg %p177
      %p500 = pneg %p174
      %p501 = pneg %p198
      %p502 = pneg %p195
      %p503 = pneg %p219
      %p504 = pneg %p216
      %p505 = pneg %p240
      %p506 = pneg %p237
      %p507 = pneg %p261
      %p508 = pneg %p258
      %p509 = pneg %p282
      %p510 = pneg %p279
      %p511 = pneg %p303
      %p512 = pneg %p300
      %p513 = pneg %p324
      %p514 = pneg %p321
      %p515 = pneg %p345
      %p516 = pneg %p342
      %p517 = pneg %p373
      %p518 = pneg %p370
      %s519 = smul.u32 2, %s30
      %p520 = scmp.lt.s32.totalorder %s29, 1
      %s521 = scalar_select %p520, %s29, 1
      %p522 = scmp.lt.s32.totalorder %s519, 1
      %s523 = scalar_select %p522, %s519, 1
      %s524 = smul.addr %s521, 2
      %s525 = sadd.s32 %s523, %s524
      %s526 = smul.addr %s525, 4
      %s527 = scalar_lea.vmem %s14, %s526
      %s528 = smul.u32 2, %s30
      %p529 = scmp.lt.s32.totalorder %s29, 1
      %s530 = scalar_select %p529, %s29, 1
      %p531 = scmp.lt.s32.totalorder %s528, 1
      %s532 = scalar_select %p531, %s528, 1
      %s533 = smul.addr %s530, 2
      %s534 = sadd.s32 %s532, %s533
      %s535 = smul.addr %s534, 4
      %s536 = scalar_lea.vmem %s0, %s535
      %s537 = smul.u32 2, %s30
      %p538 = scmp.lt.s32.totalorder %s29, 1
      %s539 = scalar_select %p538, %s29, 1
      %s540 = smul.addr %s539, 2
      %s541 = smul.addr %s540, 4
      %s542 = scalar_lea.vmem %s1, %s541
      %s543 = smul.u32 2, %s30
      %p544 = scmp.lt.s32.totalorder %s29, 1
      %s545 = scalar_select %p544, %s29, 1
      %p546 = scmp.lt.s32.totalorder %s543, 1
      %s547 = scalar_select %p546, %s543, 1
      %s548 = smul.addr %s545, 2
      %s549 = sadd.s32 %s547, %s548
      %s550 = smul.addr %s549, 4
      %s551 = scalar_lea.vmem %s2, %s550
      %s552 = smul.u32 2, %s30
      %s553 = smul.u32 2, %s30
      %p554 = scmp.lt.s32.totalorder %s29, 1
      %s555 = scalar_select %p554, %s29, 1
      %p556 = scmp.lt.s32.totalorder %s553, 1
      %s557 = scalar_select %p556, %s553, 1
      %s558 = smul.addr %s555, 2
      %s559 = sadd.s32 %s557, %s558
      %s560 = smul.addr %s559, 4
      %s561 = scalar_lea.vmem %s14, %s560
      %s562 = smul.u32 2, %s30
      %p564 = scmp.eq.s32.totalorder %s30, 0
      // Predicated region
      $region77: #{semantic_cnn_forward.20} parent=75 // pred_check
        %p565 = pneg %p564
      $region78: #{semantic_cnn_forward.20} parent=75 // pred_check_branch
        %567 = sbr.rel (%p565) target = $region80
      $region79: #{semantic_cnn_forward.20} parent=75 // pred_region
        %v568 = vld [vmem:[%s542] sm:$0xf]
        %v569 = vld [vmem:[%s542 + $0x4] sm:$0xf]
        %v570 = vld [vmem:[%s5] sm:$0x1]
        %v571 = vld [vmem:[%s6] sm:$0x1]
        %v573 = vperm.slane %v571, 0
        %v577 = vunpack.c.l.b16 %v568
        %v578 = vunpack.c.l.b16 %v569
        %v579 = vpack.c.b16 %v578, %v577
        %vm580 = vcmask 15360
        %v582 = vsel %vm580, %v579, 0
        %vm584 = vcmask 1040384
        %v586 = vsel %vm584, %v570, 0
        %588 = vmatpush.bf16.msra.mxu0 0
        %589 = vmatpush.bf16.msra.mxu0 0
        %590 = vmatpush.bf16.msra.mxu0 0
        %591 = vmatpush.bf16.msra.mxu0 0
        %592 = vmatpush.bf16.msra.mxu0 0
        %593 = vmatpush.bf16.msra.mxu0 0
        %594 = vmatpush.bf16.msra.mxu0 0
        %595 = vmatpush.bf16.msra.mxu0 %v586
        %596 = vmatmul.bf16.gmra.mxu0 %v582
        %v597 = vpop.f32.mrf.mxu0
        %v598 = vadd.f32 %v573, %v597
        %v599 = vpop.f32.mrf.mxu0
        %v600 = vadd.f32 %v573, %v599
        %601 = vdwg.mxu0
        %v602 = vld [vmem:[%s7] sm:$0x1]
        %v603 = vld [vmem:[%s8] sm:$0x1]
        %v605 = vperm.slane %v603, 0
        %v608 = vsel %vm584, %v602, 0
        %610 = vmatpush.bf16.msra.mxu0 0
        %611 = vmatpush.bf16.msra.mxu0 0
        %612 = vmatpush.bf16.msra.mxu0 0
        %613 = vmatpush.bf16.msra.mxu0 0
        %614 = vmatpush.bf16.msra.mxu0 0
        %615 = vmatpush.bf16.msra.mxu0 0
        %616 = vmatpush.bf16.msra.mxu0 0
        %617 = vmatpush.bf16.msra.mxu0 %v608
        %618 = vmatmul.bf16.gmra.mxu0 %v582
        %v619 = vpop.f32.mrf.mxu0
        %v620 = vadd.f32 %v605, %v619
        %v621 = vpop.f32.mrf.mxu0
        %v622 = vadd.f32 %v605, %v621
        %623 = vdwg.mxu0
        %v624 = vpack.c.bf16 %v598, %v598
        %v625 = vpack.c.bf16 %v600, %v600
        %vm626 = vcmask 11264
        %627 = vst.msk [vmem:[#allocation2] sm:$0xf] %vm626, %v624
        %628 = vst.msk [vmem:[#allocation2 + $0x4] sm:$0xf] %vm626, %v625
        %v629 = vpack.c.bf16 %v620, %v620
        %v630 = vpack.c.bf16 %v622, %v622
        %631 = vst.msk [vmem:[#allocation3] sm:$0xf] %vm626, %v629
        %632 = vst.msk [vmem:[#allocation3 + $0x4] sm:$0xf] %vm626, %v630
      $region80: #{semantic_cnn_forward.20} parent=75 // pred_fallthru
        _
      %v633 = vld [vmem:[%s536] sm:$0xf]
      %v634 = vld [vmem:[%s536 + $0x4] sm:$0xf]
      %v635 = vld [vmem:[%s3] sm:$0x1]
      %v636 = vld [vmem:[%s4] sm:$0x1]
      %v638 = vperm.slane %v636, 0
      %v642 = vunpack.c.l.b16 %v633
      %v643 = vunpack.c.l.b16 %v634
      %v644 = vpack.c.b16 %v643, %v642
      %vm645 = vcmask 15360
      %v647 = vsel %vm645, %v644, 0
      %vm649 = vcmask 1040384
      %v651 = vsel %vm649, %v635, 0
      %653 = vmatpush.bf16.msra.mxu0 0
      %654 = vmatpush.bf16.msra.mxu0 0
      %655 = vmatpush.bf16.msra.mxu0 0
      %656 = vmatpush.bf16.msra.mxu0 0
      %657 = vmatpush.bf16.msra.mxu0 0
      %658 = vmatpush.bf16.msra.mxu0 0
      %659 = vmatpush.bf16.msra.mxu0 0
      %660 = vmatpush.bf16.msra.mxu0 %v651
      %661 = vmatmul.bf16.gmra.mxu0 %v647
      %v662 = vpop.f32.mrf.mxu0
      %v663 = vadd.f32 %v638, %v662
      %v664 = vpop.f32.mrf.mxu0
      %v665 = vadd.f32 %v638, %v664
      %666 = vdwg.mxu0
      %v667 = vpack.c.bf16 %v665, %v663
      %v668 = vld [vmem:[#allocation2] sm:$0xf]
      %v669 = vld [vmem:[#allocation2 + $0x4] sm:$0xf]
      %v672 = vunpack.c.l.b16 %v668
      %v673 = vunpack.c.l.b16 %v669
      %v674 = vpack.c.b16 %v673, %v672
      %v676 = vsel %vm645, %v667, 0
      %v679 = vsel %vm645, %v674, 0
      %681 = vmatpush.bf16.xpose.msra.mxu0 0
      %682 = vmatpush.bf16.xpose.msra.mxu0 0
      %683 = vmatpush.bf16.xpose.msra.mxu0 0
      %684 = vmatpush.bf16.xpose.msra.mxu0 0
      %685 = vmatpush.bf16.xpose.msra.mxu0 0
      %686 = vmatpush.bf16.xpose.msra.mxu0 0
      %687 = vmatpush.bf16.xpose.msra.mxu0 0
      %688 = vmatpush.bf16.xpose.msra.mxu0 %v679
      %689 = vmatmul.bf16.gmra.mxu0 %v676
      %v690 = vpop.f32.mrf.mxu0
      %v691 = vadd.f32 0.0, %v690
      %v692 = vpop.f32.mrf.mxu0
      %v693 = vadd.f32 0.0, %v692
      %694 = vdwg.mxu0
      %v695 = vmul.f32 %v691, 0.70710677
      %v696 = vmul.f32 %v693, 0.70710677
      %vm697 = vcmask 130048
      %v698 = vsel %vm697, %v695, -inf
      %699 = vmax.xlane.f32.xlu0 %v698
      %v700 = vpop.xlane.xlu0 %699
      %v701 = vsel %vm697, %v696, -inf
      %702 = vmax.xlane.f32.xlu0 %v701
      %v703 = vpop.xlane.xlu0 %702
      %v704 = vsub.f32 %v695, %v700
      %v705 = vsub.f32 %v696, %v703
      %v706 = vmul.f32 %v704, 1.442695
      %v707 = vpow.pop %v706
      %v708 = vmul.f32 %v705, 1.442695
      %v709 = vpow.pop %v708
      %v710 = vsel %vm697, %v707, 0.0
      %711 = vadd.xlane.f32.xlu0 %v710
      %v712 = vpop.xlane.xlu0 %711
      %v713 = vsel %vm697, %v709, 0.0
      %714 = vadd.xlane.f32.xlu0 %v713
      %v715 = vpop.xlane.xlu0 %714
      %v716 = vrcp.pop %v712
      %v717 = vrcp.pop %v715
      %v718 = vmul.f32 %v707, %v716
      %v719 = vmul.f32 %v709, %v717
      %v720 = vpack.c.bf16 %v719, %v718
      %v721 = vld [vmem:[#allocation3] sm:$0xf]
      %v722 = vld [vmem:[#allocation3 + $0x4] sm:$0xf]
      %v725 = vunpack.c.l.b16 %v721
      %v726 = vunpack.c.l.b16 %v722
      %v727 = vpack.c.b16 %v726, %v725
      %v730 = vsel %vm697, %v720, 0
      %732 = vmatpush.bf16.msra.mxu0 0
      %733 = vmatpush.bf16.msra.mxu0 0
      %734 = vmatpush.bf16.msra.mxu0 0
      %735 = vmatpush.bf16.msra.mxu0 0
      %736 = vmatpush.bf16.msra.mxu0 0
      %737 = vmatpush.bf16.msra.mxu0 0
      %738 = vmatpush.bf16.msra.mxu0 0
      %739 = vmatpush.bf16.msra.mxu0 %v727
      %740 = vmatmul.bf16.gmra.mxu0 %v730
      %v741 = vpop.f32.mrf.mxu0
      %v742 = vadd.f32 0.0, %v741
      %v743 = vpop.f32.mrf.mxu0
      %v744 = vadd.f32 0.0, %v743
      %745 = vdwg.mxu0
      %v746 = vpack.c.bf16 %v744, %v742
      %v747 = vld [vmem:[%s9] sm:$0x1]
      %v748 = vld [vmem:[%s10] sm:$0x1]
      %v750 = vperm.slane %v748, 0
      %v753 = vsel %vm645, %v746, 0
      %v756 = vsel %vm649, %v747, 0
      %758 = vmatpush.bf16.msra.mxu0 0
      %759 = vmatpush.bf16.msra.mxu0 0
      %760 = vmatpush.bf16.msra.mxu0 0
      %761 = vmatpush.bf16.msra.mxu0 0
      %762 = vmatpush.bf16.msra.mxu0 0
      %763 = vmatpush.bf16.msra.mxu0 0
      %764 = vmatpush.bf16.msra.mxu0 0
      %765 = vmatpush.bf16.msra.mxu0 %v756
      %766 = vmatmul.bf16.gmra.mxu0 %v753
      %v767 = vpop.f32.mrf.mxu0
      %v768 = vadd.f32 %v750, %v767
      %v769 = vpop.f32.mrf.mxu0
      %v770 = vadd.f32 %v750, %v769
      %771 = vdwg.mxu0
      %vm772 = vcmp.gt.f32.partialorder %v768, 0.0
      %vm773 = vcmp.gt.f32.partialorder %v770, 0.0
      %v774 = vmul.f32 %v768, 0.01
      %v775 = vmul.f32 %v770, 0.01
      %v776 = vsel %vm772, %v768, %v774
      %v777 = vsel %vm773, %v770, %v775
      %v778 = vld [vmem:[%s551] sm:$0xf]
      %v779 = vld [vmem:[%s551 + $0x4] sm:$0xf]
      %v780 = vld [vmem:[%s11] sm:$0x3]
      %v781 = vpack.c.bf16 %v777, %v776
      %v782 = vld [vmem:[%s12] sm:$0x3]
      %vm783 = vcmask 31744
      %v785 = vsel %vm783, %v781, 0
      %vm787 = vcmask 1041408
      %v789 = vsel %vm787, %v782, 0
      %791 = vmatpush.bf16.msra.mxu0 0
      %792 = vmatpush.bf16.msra.mxu0 0
      %793 = vmatpush.bf16.msra.mxu0 0
      %794 = vmatpush.bf16.msra.mxu0 0
      %795 = vmatpush.bf16.msra.mxu0 0
      %796 = vmatpush.bf16.msra.mxu0 0
      %797 = vmatpush.bf16.msra.mxu0 0
      %798 = vmatpush.bf16.msra.mxu0 %v789
      %799 = vmatmul.bf16.gmra.mxu0 %v785
      %v800 = vpop.f32.mrf.mxu0
      %v801 = vadd.f32 0.0, %v800
      %v802 = vpop.f32.mrf.mxu0
      %v803 = vadd.f32 0.0, %v802
      %804 = vdwg.mxu0
      %v807 = vunpack.c.l.b16 %v778
      %v808 = vunpack.c.l.b16 %v779
      %v809 = vpack.c.b16 %v808, %v807
      %v811 = vsel %vm783, %v809, 0
      %v814 = vsel %vm787, %v780, 0
      %816 = vmatpush.bf16.msra.mxu0 0
      %817 = vmatpush.bf16.msra.mxu0 0
      %818 = vmatpush.bf16.msra.mxu0 0
      %819 = vmatpush.bf16.msra.mxu0 0
      %820 = vmatpush.bf16.msra.mxu0 0
      %821 = vmatpush.bf16.msra.mxu0 0
      %822 = vmatpush.bf16.msra.mxu0 0
      %823 = vmatpush.bf16.msra.mxu0 %v814
      %824 = vmatmul.bf16.gmra.mxu0 %v811
      %v825 = vpop.f32.mrf.mxu0
      %v826 = vadd.f32 %v801, %v825
      %v827 = vpop.f32.mrf.mxu0
      %v828 = vadd.f32 %v803, %v827
      %829 = vdwg.mxu0
      %v830 = vld [vmem:[%s13] sm:$0x1]
      %v832 = vperm.slane %v830, 0
      %v834 = vadd.f32 %v826, %v832
      %v835 = vadd.f32 %v828, %v832
      %vm836 = vcmp.gt.f32.partialorder %v834, 0.0
      %vm837 = vcmp.gt.f32.partialorder %v835, 0.0
      %v838 = vmul.f32 %v834, 0.01
      %v839 = vmul.f32 %v835, 0.01
      %v840 = vsel %vm836, %v834, %v838
      %v841 = vsel %vm837, %v835, %v839
      %v842 = vpack.c.bf16 %v840, %v840
      %v843 = vpack.c.bf16 %v841, %v841
      %vm844 = vcmask 27648
      %845 = vst.msk [vmem:[%s561] sm:$0xf] %vm844, %v842
      %846 = vst.msk [vmem:[%s561 + $0x4] sm:$0xf] %vm844, %v843
      %s847 = smul.u32 2, %s30
      %p848 = scmp.lt.s32.totalorder %s29, 1
      %s849 = scalar_select %p848, %s29, 1
      %p850 = scmp.lt.s32.totalorder %s847, 1
      %s851 = scalar_select %p850, %s847, 1
      %s852 = smul.addr %s849, 2
      %s853 = sadd.s32 %s851, %s852
      %s854 = smul.addr %s853, 4
      %s855 = scalar_lea.vmem %s14, %s854
      // Predicated region
      $region81: #{semantic_cnn_forward.20} parent=75 // pred_check
        %p856 = pneg %p370
      $region82: #{semantic_cnn_forward.20} parent=75 // pred_check_branch
        %858 = sbr.rel (%p856) target = $region84
      $region83: #{semantic_cnn_forward.20} parent=75 // pred_region
        %s859 = smul.u32 2, %s30
      $region84: #{semantic_cnn_forward.20} parent=75 // pred_fallthru
        _
    $region76: #{semantic_cnn_forward.20} parent=5 // pred_fallthru
      _
    %p860 = scmp.le.s32.totalorder 2, %s20
    // Predicated region
    $region85: #{semantic_cnn_forward.20} parent=5 // pred_check
      %p861 = pneg %p860
    $region86: #{semantic_cnn_forward.20} parent=5 // pred_check_branch
      %863 = sbr.rel (%p861) target = $region88
    $region87: #{semantic_cnn_forward.20} parent=5 // pred_region
      %s864 = ssub.s32 %s20, 2
      // Predicated region
      $region89: #{semantic_cnn_forward.20} parent=87 // pred_check
        %p865 = pneg %p376
      $region90: #{semantic_cnn_forward.20} parent=87 // pred_check_branch
        %867 = sbr.rel (%p865) target = $region92
      $region91: #{semantic_cnn_forward.20} parent=87 // pred_region
        %s868 = smul.u32 2, %s32
        %p869 = scmp.lt.s32.totalorder %s31, 1
        %s870 = scalar_select %p869, %s31, 1
        %p871 = scmp.lt.s32.totalorder %s868, 1
        %s872 = scalar_select %p871, %s868, 1
        %s873 = smul.addr %s870, 2
        %s874 = sadd.s32 %s872, %s873
        %s875 = smul.addr %s874, 4
        %s876 = scalar_lea.vmem %s14, %s875
      $region92: #{semantic_cnn_forward.20} parent=87 // pred_fallthru
        _
    $region88: #{semantic_cnn_forward.20} parent=5 // pred_fallthru
      _
  $region6: #{semantic_cnn_forward.20} parent=0 // loop_footer
    %s24 = sadd.s32 1, %s20
  $region7: #{semantic_cnn_forward.20} parent=0 // loop_footer_branch
    %19 = sbr.rel target = $region3
  $region8: #{semantic_cnn_forward.20} parent=0 // loop_exit
    _

// kernel: semantic_cnn_forward.21
$region0: #{semantic_cnn_forward.21}
  #allocation0 [shape = 'u32[]', space=smem, size = 0x4, offset = 0x4, fixed_abs, tag = 'smem constant byte address 0x4 - core index']
  #allocation1 [shape = 'u32[72,128]{1,0:T(1,128)}', space=vmem, size = 0x9000, scoped, tag = 'internal scratch']
  %s0 = inlined_call_operand.vmem [shape: bf16[2,16,4], index: 0, kind: input, shape index: {}, may-alias: {0,1}]
  %s1 = inlined_call_operand.vmem [shape: bf16[2,16,4], index: 1, kind: input, shape index: {}, may-alias: {0,1}]
  %s2 = inlined_call_operand.vmem [shape: bf16[2,16,16], index: 2, kind: output, shape index: {}]
  %s3 = sld [smem:[#allocation0]]
  $region41: #{semantic_cnn_forward.21} parent=0
    _
  %s5 = ssub.s32 1, %s3
  %s6 = scalar_select 0, %s5, %s3
  loop: start=0, step=1, limit=4
  $region2: #{semantic_cnn_forward.21} parent=0 // loop_pre_header
    _
  $region3: #{semantic_cnn_forward.21} parent=0 // loop_header
    %s8 = sphi 0, %s12
    %p9 = scmp.ge.s32.totalorder %s8, 4
    %s15 = sphi 0, %s27
    %s16 = sphi 0, %s23
    %s17 = sphi 0, %s15
    %s18 = sphi 0, %s16
    %s19 = sphi 0, %s17
    %s20 = sphi 0, %s18
    %s32 = sphi 0, %s34
    %s35 = sphi 0, %s32
    %s36 = sphi 0, %s35
    %s52 = sphi 0, %s36
    %s58 = sphi 0, %s60
    %s61 = sphi 0, %s58
    %s62 = sphi 0, %s61
    %s78 = sphi 0, %s62
    %s86 = sphi 0, %s88
    %s89 = sphi 0, %s86
    %s90 = sphi 0, %s89
    %s106 = sphi 0, %s90
  $region4: #{semantic_cnn_forward.21} parent=0 // loop_header_branch
    %11 = sbr.rel (%p9) target = $region8
  $region5: #{semantic_cnn_forward.21} parent=0 // loop_body
    %s13 = ssub.s32 %s8, 1
    %s14 = ssub.s32 %s8, 2
    %s21 = sadd.s32 1, %s16
    %p22 = scmp.ge.s32.totalorder %s21, 1
    %s23 = scalar_select %p22, 0, %s21
    %s24 = sadd.s32 1, %s15
    %s25 = scalar_select %p22, %s24, %s15
    %p26 = scmp.ge.s32.totalorder %s25, 2
    %s27 = scalar_select %p26, 0, %s25
    %s28 = ssub.s32 %s15, %s27
    %s29 = ssub.s32 %s16, %s23
    %s30 = sor.u32 %s28, %s29
    %p31 = scmp.eq.s32.totalorder %s30, 0
    %s33 = sadd.s32 %s32, 1
    %s34 = scalar_select %p31, %s32, %s33
    %p37 = pneg %p31
    %p38 = scmp.eq.s32.totalorder %s8, 1
    %p39 = por %p37, %p38
    %p40 = scmp.ne.s32.totalorder %s32, %s35
    %p41 = scmp.eq.s32.totalorder %s8, 0
    %p42 = por %p40, %p41
    %p43 = scmp.ne.s32.totalorder %s32, %s35
    %p44 = scmp.eq.s32.totalorder %s13, 1
    %p45 = por %p43, %p44
    %p46 = scmp.ne.s32.totalorder %s35, %s36
    %p47 = scmp.eq.s32.totalorder %s13, 0
    %p48 = por %p46, %p47
    %p49 = scmp.ne.s32.totalorder %s35, %s36
    %p50 = scmp.eq.s32.totalorder %s14, 1
    %p51 = por %p49, %p50
    %p53 = scmp.ne.s32.totalorder %s36, %s52
    %p54 = scmp.eq.s32.totalorder %s14, 0
    %p55 = por %p53, %p54
    %s56 = ssub.s32 %s15, %s27
    %p57 = scmp.eq.s32.totalorder %s56, 0
    %s59 = sadd.s32 %s58, 1
    %s60 = scalar_select %p57, %s58, %s59
    %p63 = pneg %p57
    %p64 = scmp.eq.s32.totalorder %s8, 1
    %p65 = por %p63, %p64
    %p66 = scmp.ne.s32.totalorder %s58, %s61
    %p67 = scmp.eq.s32.totalorder %s8, 0
    %p68 = por %p66, %p67
    %p69 = scmp.ne.s32.totalorder %s58, %s61
    %p70 = scmp.eq.s32.totalorder %s13, 1
    %p71 = por %p69, %p70
    %p72 = scmp.ne.s32.totalorder %s61, %s62
    %p73 = scmp.eq.s32.totalorder %s13, 0
    %p74 = por %p72, %p73
    %p75 = scmp.ne.s32.totalorder %s61, %s62
    %p76 = scmp.eq.s32.totalorder %s14, 1
    %p77 = por %p75, %p76
    %p79 = scmp.ne.s32.totalorder %s62, %s78
    %p80 = scmp.eq.s32.totalorder %s14, 0
    %p81 = por %p79, %p80
    %s82 = ssub.s32 %s15, %s27
    %s83 = ssub.s32 %s16, %s23
    %s84 = sor.u32 %s82, %s83
    %p85 = scmp.eq.s32.totalorder %s84, 0
    %s87 = sadd.s32 %s86, 1
    %s88 = scalar_select %p85, %s86, %s87
    %p91 = pneg %p85
    %p92 = scmp.eq.s32.totalorder %s8, 1
    %p93 = por %p91, %p92
    %p94 = scmp.ne.s32.totalorder %s86, %s89
    %p95 = scmp.eq.s32.totalorder %s8, 0
    %p96 = por %p94, %p95
    %p97 = scmp.ne.s32.totalorder %s86, %s89
    %p98 = scmp.eq.s32.totalorder %s13, 1
    %p99 = por %p97, %p98
    %p100 = scmp.ne.s32.totalorder %s89, %s90
    %p101 = scmp.eq.s32.totalorder %s13, 0
    %p102 = por %p100, %p101
    %p103 = scmp.ne.s32.totalorder %s89, %s90
    %p104 = scmp.eq.s32.totalorder %s14, 1
    %p105 = por %p103, %p104
    %p107 = scmp.ne.s32.totalorder %s90, %s106
    %p108 = scmp.eq.s32.totalorder %s14, 0
    %p109 = por %p107, %p108
    %p110 = scmp.le.s32.totalorder 1, %s8
    %p111 = scmp.lt.s32.totalorder %s8, 3
    %p112 = pnand %p110, %p111
    %p113 = pneg %p112
    // Predicated region
    $region9: #{semantic_cnn_forward.21} parent=5 // pred_check
      _
    $region10: #{semantic_cnn_forward.21} parent=5 // pred_check_branch
      %115 = sbr.rel (%p112) target = $region12
    $region11: #{semantic_cnn_forward.21} parent=5 // pred_region
      %s116 = ssub.s32 %s8, 1
    $region12: #{semantic_cnn_forward.21} parent=5 // pred_fallthru
      _
    %p117 = scmp.lt.s32.totalorder %s8, 2
    // Predicated region
    $region13: #{semantic_cnn_forward.21} parent=5 // pred_check
      %p118 = pneg %p117
    $region14: #{semantic_cnn_forward.21} parent=5 // pred_check_branch
      %120 = sbr.rel (%p118) target = $region16
    $region15: #{semantic_cnn_forward.21} parent=5 // pred_region
      // Predicated region
      $region17: #{semantic_cnn_forward.21} parent=15 // pred_check
        %p121 = pneg %p42
      $region18: #{semantic_cnn_forward.21} parent=15 // pred_check_branch
        %123 = sbr.rel (%p121) target = $region20
      $region19: #{semantic_cnn_forward.21} parent=15 // pred_region
        %s124 = smul.u32 2, %s16
        %p125 = scmp.lt.s32.totalorder %s15, 1
        %s126 = scalar_select %p125, %s15, 1
        %p127 = scmp.lt.s32.totalorder %s124, 1
        %s128 = scalar_select %p127, %s124, 1
        %s129 = smul.addr %s126, 2
        %s130 = sadd.s32 %s128, %s129
        %s131 = smul.addr %s130, 4
        %s132 = scalar_lea.vmem %s0, %s131
        %s133 = smul.u32 2, %s16
      $region20: #{semantic_cnn_forward.21} parent=15 // pred_fallthru
        _
      // Predicated region
      $region21: #{semantic_cnn_forward.21} parent=15 // pred_check
        %p134 = pneg %p68
      $region22: #{semantic_cnn_forward.21} parent=15 // pred_check_branch
        %136 = sbr.rel (%p134) target = $region24
      $region23: #{semantic_cnn_forward.21} parent=15 // pred_region
        %p137 = scmp.lt.s32.totalorder %s15, 1
        %s138 = scalar_select %p137, %s15, 1
        %s139 = smul.addr %s138, 2
        %s140 = smul.addr %s139, 4
        %s141 = scalar_lea.vmem %s1, %s140
      $region24: #{semantic_cnn_forward.21} parent=15 // pred_fallthru
        _
    $region16: #{semantic_cnn_forward.21} parent=5 // pred_fallthru
      _
    %p142 = scmp.le.s32.totalorder 1, %s8
    %p143 = scmp.lt.s32.totalorder %s8, 3
    %p144 = pnand %p142, %p143
    %p145 = pneg %p144
    // Predicated region
    $region25: #{semantic_cnn_forward.21} parent=5 // pred_check
      _
    $region26: #{semantic_cnn_forward.21} parent=5 // pred_check_branch
      %147 = sbr.rel (%p144) target = $region28
    $region27: #{semantic_cnn_forward.21} parent=5 // pred_region
      %s148 = ssub.s32 %s8, 1
      %s149 = smul.u32 2, %s18
      %p150 = scmp.lt.s32.totalorder %s17, 1
      %s151 = scalar_select %p150, %s17, 1
      %p152 = scmp.lt.s32.totalorder %s149, 1
      %s153 = scalar_select %p152, %s149, 1
      %s154 = smul.addr %s151, 2
      %s155 = sadd.s32 %s153, %s154
      %s156 = smul.addr %s155, 4
      %s157 = scalar_lea.vmem %s0, %s156
      %p158 = pneg %p48
      %p159 = pneg %p45
      %p160 = scmp.lt.s32.totalorder %s17, 1
      %s161 = scalar_select %p160, %s17, 1
      %s162 = smul.addr %s161, 2
      %s163 = smul.addr %s162, 4
      %s164 = scalar_lea.vmem %s1, %s163
      %p165 = pneg %p74
      %p166 = pneg %p71
      %p167 = pneg %p102
      %p168 = pneg %p99
      %s169 = smul.u32 2, %s18
      %p170 = scmp.lt.s32.totalorder %s17, 1
      %s171 = scalar_select %p170, %s17, 1
      %p172 = scmp.lt.s32.totalorder %s169, 1
      %s173 = scalar_select %p172, %s169, 1
      %s174 = smul.addr %s171, 2
      %s175 = sadd.s32 %s173, %s174
      %s176 = smul.addr %s175, 4
      %s177 = scalar_lea.vmem %s2, %s176
      %s178 = smul.u32 2, %s18
      %p179 = scmp.lt.s32.totalorder %s17, 1
      %s180 = scalar_select %p179, %s17, 1
      %p181 = scmp.lt.s32.totalorder %s178, 1
      %s182 = scalar_select %p181, %s178, 1
      %s183 = smul.addr %s180, 2
      %s184 = sadd.s32 %s182, %s183
      %s185 = smul.addr %s184, 4
      %s186 = scalar_lea.vmem %s0, %s185
      %s187 = smul.u32 2, %s18
      %p188 = scmp.lt.s32.totalorder %s17, 1
      %s189 = scalar_select %p188, %s17, 1
      %s190 = smul.addr %s189, 2
      %s191 = smul.addr %s190, 4
      %s192 = scalar_lea.vmem %s1, %s191
      %s193 = smul.u32 2, %s18
      %p194 = scmp.lt.s32.totalorder %s17, 1
      %s195 = scalar_select %p194, %s17, 1
      %p196 = scmp.lt.s32.totalorder %s193, 1
      %s197 = scalar_select %p196, %s193, 1
      %s198 = smul.addr %s195, 2
      %s199 = sadd.s32 %s197, %s198
      %s200 = smul.addr %s199, 4
      %s201 = scalar_lea.vmem %s2, %s200
      %s202 = smul.u32 2, %s18
      %v204 = vld [vmem:[%s186] sm:$0xf]
      %v205 = vld [vmem:[%s186 + $0x4] sm:$0xf]
      %v206 = vld [vmem:[%s192] sm:$0xf]
      %v207 = vld [vmem:[%s192 + $0x4] sm:$0xf]
      %v208 = vunpack.c.l.bf16 %v204
      %v209 = vunpack.c.l.bf16 %v205
      %v210 = vunpack.c.l.bf16 %v206
      %v211 = vunpack.c.l.bf16 %v207
      %v212 = vmul.f32 %v208, %v208
      %v213 = vmul.f32 %v209, %v209
      %vm214 = vcmask 31744
      %v215 = vsel %vm214, %v212, 0.0
      %216 = vadd.xlane.f32.xlu0 %v215
      %v217 = vpop.xlane.xlu0 %216
      %v218 = vsel %vm214, %v213, 0.0
      %219 = vadd.xlane.f32.xlu0 %v218
      %v220 = vpop.xlane.xlu0 %219
      %v221 = vmul.f32 %v210, %v210
      %v222 = vmul.f32 %v211, %v211
      %v223 = vsel %vm214, %v221, 0.0
      %224 = vadd.xlane.f32.xlu0 %v223
      %v225 = vpop.xlane.xlu0 %224
      %v226 = vsel %vm214, %v222, 0.0
      %227 = vadd.xlane.f32.xlu0 %v226
      %v228 = vpop.xlane.xlu0 %227
      %v231 = vunpack.c.l.b16 %v204
      %v232 = vunpack.c.l.b16 %v205
      %v233 = vpack.c.b16 %v232, %v231
      %v236 = vunpack.c.l.b16 %v206
      %v237 = vunpack.c.l.b16 %v207
      %v238 = vpack.c.b16 %v237, %v236
      %v240 = vsel %vm214, %v233, 0
      %v243 = vsel %vm214, %v238, 0
      %245 = vmatpush.bf16.xpose.msra.mxu0 0
      %246 = vmatpush.bf16.xpose.msra.mxu0 0
      %247 = vmatpush.bf16.xpose.msra.mxu0 0
      %248 = vmatpush.bf16.xpose.msra.mxu0 0
      %249 = vmatpush.bf16.xpose.msra.mxu0 0
      %250 = vmatpush.bf16.xpose.msra.mxu0 0
      %251 = vmatpush.bf16.xpose.msra.mxu0 0
      %252 = vmatpush.bf16.xpose.msra.mxu0 %v243
      %253 = vmatmul.bf16.gmra.mxu0 %v240
      %v254 = vpop.f32.mrf.mxu0
      %v255 = vadd.f32 0.0, %v254
      %v256 = vpop.f32.mrf.mxu0
      %v257 = vadd.f32 0.0, %v256
      %258 = vdwg.mxu0
      %v259 = vmul.f32 %v255, 2.0
      %v260 = vmul.f32 %v257, 2.0
      %v261 = vsub.f32 %v259, %v217
      %v262 = vsub.f32 %v260, %v220
      %263 = vxpose.xlu0.b32.start [1/16] %v225, 128
      %264 = vxpose.xlu0.b32.cont [2/16] %v228, 128
      %265 = vxpose.xlu0.b32.cont [3/16] 0.0, 128
      %266 = vxpose.xlu0.b32.cont [4/16] 0.0, 128
      %267 = vxpose.xlu0.b32.cont [5/16] 0.0, 128
      %268 = vxpose.xlu0.b32.cont [6/16] 0.0, 128
      %269 = vxpose.xlu0.b32.cont [7/16] 0.0, 128
      %270 = vxpose.xlu0.b32.cont [8/16] 0.0, 128
      %271 = vxpose.xlu0.b32.cont [9/16] 0.0, 128
      %272 = vxpose.xlu0.b32.cont [10/16] 0.0, 128
      %273 = vxpose.xlu0.b32.cont [11/16] 0.0, 128
      %274 = vxpose.xlu0.b32.cont [12/16] 0.0, 128
      %275 = vxpose.xlu0.b32.cont [13/16] 0.0, 128
      %276 = vxpose.xlu0.b32.cont [14/16] 0.0, 128
      %277 = vxpose.xlu0.b32.cont [15/16] 0.0, 128
      %278 = vxpose.xlu0.b32.end [16/16] 0.0, 128
      %v279 = vpop.trf.xlu0
      %v280 = vpop.trf.xlu0
      %v281 = vpop.trf.xlu0
      %v282 = vpop.trf.xlu0
      %v283 = vpop.trf.xlu0
      %v284 = vpop.trf.xlu0
      %v285 = vpop.trf.xlu0
      %v286 = vpop.trf.xlu0
      %v287 = vpop.trf.xlu0
      %v288 = vpop.trf.xlu0
      %v289 = vpop.trf.xlu0
      %v290 = vpop.trf.xlu0
      %v291 = vpop.trf.xlu0
      %v292 = vpop.trf.xlu0
      %v293 = vpop.trf.xlu0
      %v294 = vpop.trf.xlu0
      %v295 = vperm.slane %v279, 0
      %v296 = vsub.f32 %v261, %v295
      %v297 = vsub.f32 %v262, %v295
      %v298 = vpack.c.bf16 %v296, %v296
      %v299 = vpack.c.bf16 %v297, %v297
      %vm300 = vcmask 125952
      %301 = vst.msk [vmem:[%s201] sm:$0xf] %vm300, %v298
      %302 = vst.msk [vmem:[%s201 + $0x4] sm:$0xf] %vm300, %v299
      %s303 = smul.u32 2, %s18
      %p304 = scmp.lt.s32.totalorder %s17, 1
      %s305 = scalar_select %p304, %s17, 1
      %p306 = scmp.lt.s32.totalorder %s303, 1
      %s307 = scalar_select %p306, %s303, 1
      %s308 = smul.addr %s305, 2
      %s309 = sadd.s32 %s307, %s308
      %s310 = smul.addr %s309, 4
      %s311 = scalar_lea.vmem %s2, %s310
      // Predicated region
      $region29: #{semantic_cnn_forward.21} parent=27 // pred_check
        %p312 = pneg %p99
      $region30: #{semantic_cnn_forward.21} parent=27 // pred_check_branch
        %314 = sbr.rel (%p312) target = $region32
      $region31: #{semantic_cnn_forward.21} parent=27 // pred_region
        %s315 = smul.u32 2, %s18
      $region32: #{semantic_cnn_forward.21} parent=27 // pred_fallthru
        _
    $region28: #{semantic_cnn_forward.21} parent=5 // pred_fallthru
      _
    %p316 = scmp.le.s32.totalorder 2, %s8
    // Predicated region
    $region33: #{semantic_cnn_forward.21} parent=5 // pred_check
      %p317 = pneg %p316
    $region34: #{semantic_cnn_forward.21} parent=5 // pred_check_branch
      %319 = sbr.rel (%p317) target = $region36
    $region35: #{semantic_cnn_forward.21} parent=5 // pred_region
      %s320 = ssub.s32 %s8, 2
      // Predicated region
      $region37: #{semantic_cnn_forward.21} parent=35 // pred_check
        %p321 = pneg %p105
      $region38: #{semantic_cnn_forward.21} parent=35 // pred_check_branch
        %323 = sbr.rel (%p321) target = $region40
      $region39: #{semantic_cnn_forward.21} parent=35 // pred_region
        %s324 = smul.u32 2, %s20
        %p325 = scmp.lt.s32.totalorder %s19, 1
        %s326 = scalar_select %p325, %s19, 1
        %p327 = scmp.lt.s32.totalorder %s324, 1
        %s328 = scalar_select %p327, %s324, 1
        %s329 = smul.addr %s326, 2
        %s330 = sadd.s32 %s328, %s329
        %s331 = smul.addr %s330, 4
        %s332 = scalar_lea.vmem %s2, %s331
      $region40: #{semantic_cnn_forward.21} parent=35 // pred_fallthru
        _
    $region36: #{semantic_cnn_forward.21} parent=5 // pred_fallthru
      _
  $region6: #{semantic_cnn_forward.21} parent=0 // loop_footer
    %s12 = sadd.s32 1, %s8
  $region7: #{semantic_cnn_forward.21} parent=0 // loop_footer_branch
    %7 = sbr.rel target = $region3
  $region8: #{semantic_cnn_forward.21} parent=0 // loop_exit
    _

// kernel: semantic_cnn_forward.22
$region0: #{semantic_cnn_forward.22}
  #allocation0 [shape = 'u32[]', space=smem, size = 0x4, offset = 0x4, fixed_abs, tag = 'smem constant byte address 0x4 - core index']
  #allocation1 [shape = 'u32[72,128]{1,0:T(1,128)}', space=vmem, size = 0x9000, scoped, tag = 'internal scratch']
  %s0 = inlined_call_operand.vmem [shape: bf16[32,4], index: 0, kind: input, shape index: {}]
  %s1 = inlined_call_operand.vmem [shape: bf16[4,32,4], index: 1, kind: input, shape index: {}]
  %s2 = inlined_call_operand.vmem [shape: bf16[4,8], index: 2, kind: input, shape index: {}]
  %s3 = inlined_call_operand.vmem [shape: bf16[4,8], index: 3, kind: input, shape index: {}]
  %s4 = inlined_call_operand.vmem [shape: f32[1,8], index: 4, kind: input, shape index: {}]
  %s5 = inlined_call_operand.vmem [shape: f32[1,8], index: 5, kind: input, shape index: {}]
  %s6 = inlined_call_operand.vmem [shape: bf16[32,8], index: 6, kind: output, shape index: {}]
  %s7 = sld [smem:[#allocation0]]
  $region34: #{semantic_cnn_forward.22} parent=0
    _
  %s9 = ssub.s32 1, %s7
  %s10 = scalar_select 0, %s9, %s7
  // Predicated region
  $region2: #{semantic_cnn_forward.22} parent=0 // pred_check
    _
  $region3: #{semantic_cnn_forward.22} parent=0 // pred_check_branch
    %12 = sbr.rel (0) target = $region5
  $region4: #{semantic_cnn_forward.22} parent=0 // pred_region
    _
  $region5: #{semantic_cnn_forward.22} parent=0 // pred_fallthru
    _
  // Predicated region
  $region6: #{semantic_cnn_forward.22} parent=0 // pred_check
    _
  $region7: #{semantic_cnn_forward.22} parent=0 // pred_check_branch
    %14 = sbr.rel (0) target = $region9
  $region8: #{semantic_cnn_forward.22} parent=0 // pred_region
    _
  $region9: #{semantic_cnn_forward.22} parent=0 // pred_fallthru
    _
  // Predicated region
  $region10: #{semantic_cnn_forward.22} parent=0 // pred_check
    _
  $region11: #{semantic_cnn_forward.22} parent=0 // pred_check_branch
    %16 = sbr.rel (0) target = $region13
  $region12: #{semantic_cnn_forward.22} parent=0 // pred_region
    _
  $region13: #{semantic_cnn_forward.22} parent=0 // pred_fallthru
    _
  // Predicated region
  $region14: #{semantic_cnn_forward.22} parent=0 // pred_check
    _
  $region15: #{semantic_cnn_forward.22} parent=0 // pred_check_branch
    %18 = sbr.rel (0) target = $region17
  $region16: #{semantic_cnn_forward.22} parent=0 // pred_region
    _
  $region17: #{semantic_cnn_forward.22} parent=0 // pred_fallthru
    _
  // Predicated region
  $region18: #{semantic_cnn_forward.22} parent=0 // pred_check
    _
  $region19: #{semantic_cnn_forward.22} parent=0 // pred_check_branch
    %20 = sbr.rel (0) target = $region21
  $region20: #{semantic_cnn_forward.22} parent=0 // pred_region
    _
  $region21: #{semantic_cnn_forward.22} parent=0 // pred_fallthru
    _
  // Predicated region
  $region22: #{semantic_cnn_forward.22} parent=0 // pred_check
    _
  $region23: #{semantic_cnn_forward.22} parent=0 // pred_check_branch
    %22 = sbr.rel (0) target = $region25
  $region24: #{semantic_cnn_forward.22} parent=0 // pred_region
    _
  $region25: #{semantic_cnn_forward.22} parent=0 // pred_fallthru
    _
  %v24 = vld [vmem:[%s0] sm:$0xf]
  %v25 = vld [vmem:[%s0 + $0x4] sm:$0xf]
  %v26 = vld [vmem:[%s0 + $0x8] sm:$0xf]
  %v27 = vld [vmem:[%s0 + $0xc] sm:$0xf]
  %v28 = vld [vmem:[%s2] sm:$0x3]
  %v29 = vunpack.c.l.bf16 %v24
  %v30 = vunpack.c.l.bf16 %v25
  %v31 = vunpack.c.l.bf16 %v26
  %v32 = vunpack.c.l.bf16 %v27
  %v33 = vld [vmem:[%s4] sm:$0x1]
  %v34 = vld [vmem:[%s1] sm:$0xf]
  %v35 = vld [vmem:[%s1 + $0x4] sm:$0xf]
  %v36 = vld [vmem:[%s1 + $0x8] sm:$0xf]
  %v37 = vld [vmem:[%s1 + $0xc] sm:$0xf]
  %v38 = vld [vmem:[%s3] sm:$0x3]
  %v39 = vunpack.c.l.bf16 %v34
  %v40 = vunpack.c.l.bf16 %v35
  %v41 = vunpack.c.l.bf16 %v36
  %v42 = vunpack.c.l.bf16 %v37
  %v43 = vsub.f32 %v39, %v29
  %v44 = vsub.f32 %v40, %v30
  %v45 = vsub.f32 %v41, %v31
  %v46 = vsub.f32 %v42, %v32
  %v47 = vmul.f32 %v43, %v43
  %v48 = vmul.f32 %v44, %v44
  %v49 = vmul.f32 %v45, %v45
  %v50 = vmul.f32 %v46, %v46
  %vm51 = vcmask 31744
  %v52 = vsel %vm51, %v47, 0.0
  %53 = vadd.xlane.f32.xlu0 %v52
  %v54 = vpop.xlane.xlu0 %53
  %v55 = vsel %vm51, %v48, 0.0
  %56 = vadd.xlane.f32.xlu0 %v55
  %v57 = vpop.xlane.xlu0 %56
  %v58 = vsel %vm51, %v49, 0.0
  %59 = vadd.xlane.f32.xlu0 %v58
  %v60 = vpop.xlane.xlu0 %59
  %v61 = vsel %vm51, %v50, 0.0
  %62 = vadd.xlane.f32.xlu0 %v61
  %v63 = vpop.xlane.xlu0 %62
  %v64 = vrsqrt.pop %v54
  %v65 = vmul.f32 %v64, %v54
  %v66 = vmul.f32 %v65, %v64
  %v67 = vmul.f32 0.5, %v66
  %v68 = vsub.f32 1.5, %v67
  %v69 = vmul.f32 %v64, %v68
  %v70 = vmul.f32 %v54, %v69
  %vm71 = vcmp.eq.f32.partialorder %v54, inf
  %v72 = vsel %vm71, %v54, %v70
  %vm73 = vcmp.eq.f32.partialorder %v54, 0.0
  %v74 = vand.u32 %v54, 2147483648
  %v75 = vsel %vm73, %v74, %v72
  %v76 = vrsqrt.pop %v57
  %v77 = vmul.f32 %v76, %v57
  %v78 = vmul.f32 %v77, %v76
  %v79 = vmul.f32 0.5, %v78
  %v80 = vsub.f32 1.5, %v79
  %v81 = vmul.f32 %v76, %v80
  %v82 = vmul.f32 %v57, %v81
  %vm83 = vcmp.eq.f32.partialorder %v57, inf
  %v84 = vsel %vm83, %v57, %v82
  %vm85 = vcmp.eq.f32.partialorder %v57, 0.0
  %v86 = vand.u32 %v57, 2147483648
  %v87 = vsel %vm85, %v86, %v84
  %v88 = vrsqrt.pop %v60
  %v89 = vmul.f32 %v88, %v60
  %v90 = vmul.f32 %v89, %v88
  %v91 = vmul.f32 0.5, %v90
  %v92 = vsub.f32 1.5, %v91
  %v93 = vmul.f32 %v88, %v92
  %v94 = vmul.f32 %v60, %v93
  %vm95 = vcmp.eq.f32.partialorder %v60, inf
  %v96 = vsel %vm95, %v60, %v94
  %vm97 = vcmp.eq.f32.partialorder %v60, 0.0
  %v98 = vand.u32 %v60, 2147483648
  %v99 = vsel %vm97, %v98, %v96
  %v100 = vrsqrt.pop %v63
  %v101 = vmul.f32 %v100, %v63
  %v102 = vmul.f32 %v101, %v100
  %v103 = vmul.f32 0.5, %v102
  %v104 = vsub.f32 1.5, %v103
  %v105 = vmul.f32 %v100, %v104
  %v106 = vmul.f32 %v63, %v105
  %vm107 = vcmp.eq.f32.partialorder %v63, inf
  %v108 = vsel %vm107, %v63, %v106
  %vm109 = vcmp.eq.f32.partialorder %v63, 0.0
  %v110 = vand.u32 %v63, 2147483648
  %v111 = vsel %vm109, %v110, %v108
  %v113 = vperm.slane %v33, 0
  %v115 = vmul.f32 %v75, %v113
  %v116 = vmul.f32 %v87, %v113
  %v117 = vmul.f32 %v99, %v113
  %v118 = vmul.f32 %v111, %v113
  %v123 = vunpack.c.l.b16 %v34
  %v124 = vunpack.c.l.b16 %v35
  %v125 = vunpack.c.l.b16 %v36
  %v126 = vunpack.c.l.b16 %v37
  %v127 = vpack.c.b16 %v124, %v123
  %v128 = vpack.c.b16 %v126, %v125
  %v130 = vsel %vm51, %v127, 0
  %v133 = vsel %vm51, %v128, 0
  %vm135 = vcmask 1041408
  %v137 = vsel %vm135, %v38, 0
  %139 = vmatpush.bf16.msra.mxu0 0
  %140 = vmatpush.bf16.msra.mxu0 0
  %141 = vmatpush.bf16.msra.mxu0 0
  %142 = vmatpush.bf16.msra.mxu0 0
  %143 = vmatpush.bf16.msra.mxu0 0
  %144 = vmatpush.bf16.msra.mxu0 0
  %145 = vmatpush.bf16.msra.mxu0 0
  %146 = vmatpush.bf16.msra.mxu0 %v137
  %147 = vmatmul.bf16.gmra.mxu0 %v130
  %v148 = vpop.f32.mrf.mxu0
  %v149 = vadd.f32 %v115, %v148
  %v150 = vpop.f32.mrf.mxu0
  %v151 = vadd.f32 %v116, %v150
  %152 = vmatmul.bf16.gmra.mxu0 %v133
  %v153 = vpop.f32.mrf.mxu0
  %v154 = vadd.f32 %v117, %v153
  %v155 = vpop.f32.mrf.mxu0
  %v156 = vadd.f32 %v118, %v155
  %157 = vdwg.mxu0
  %s158 = scalar_lea.vmem %s1, 16
  %v159 = vld [vmem:[%s158] sm:$0xf]
  %v160 = vld [vmem:[%s158 + $0x4] sm:$0xf]
  %v161 = vld [vmem:[%s158 + $0x8] sm:$0xf]
  %v162 = vld [vmem:[%s158 + $0xc] sm:$0xf]
  %v163 = vunpack.c.l.bf16 %v159
  %v164 = vunpack.c.l.bf16 %v160
  %v165 = vunpack.c.l.bf16 %v161
  %v166 = vunpack.c.l.bf16 %v162
  %v167 = vsub.f32 %v163, %v29
  %v168 = vsub.f32 %v164, %v30
  %v169 = vsub.f32 %v165, %v31
  %v170 = vsub.f32 %v166, %v32
  %v171 = vmul.f32 %v167, %v167
  %v172 = vmul.f32 %v168, %v168
  %v173 = vmul.f32 %v169, %v169
  %v174 = vmul.f32 %v170, %v170
  %v175 = vsel %vm51, %v171, 0.0
  %176 = vadd.xlane.f32.xlu0 %v175
  %v177 = vpop.xlane.xlu0 %176
  %v178 = vsel %vm51, %v172, 0.0
  %179 = vadd.xlane.f32.xlu0 %v178
  %v180 = vpop.xlane.xlu0 %179
  %v181 = vsel %vm51, %v173, 0.0
  %182 = vadd.xlane.f32.xlu0 %v181
  %v183 = vpop.xlane.xlu0 %182
  %v184 = vsel %vm51, %v174, 0.0
  %185 = vadd.xlane.f32.xlu0 %v184
  %v186 = vpop.xlane.xlu0 %185
  %v187 = vrsqrt.pop %v177
  %v188 = vmul.f32 %v187, %v177
  %v189 = vmul.f32 %v188, %v187
  %v190 = vmul.f32 0.5, %v189
  %v191 = vsub.f32 1.5, %v190
  %v192 = vmul.f32 %v187, %v191
  %v193 = vmul.f32 %v177, %v192
  %vm194 = vcmp.eq.f32.partialorder %v177, inf
  %v195 = vsel %vm194, %v177, %v193
  %vm196 = vcmp.eq.f32.partialorder %v177, 0.0
  %v197 = vand.u32 %v177, 2147483648
  %v198 = vsel %vm196, %v197, %v195
  %v199 = vrsqrt.pop %v180
  %v200 = vmul.f32 %v199, %v180
  %v201 = vmul.f32 %v200, %v199
  %v202 = vmul.f32 0.5, %v201
  %v203 = vsub.f32 1.5, %v202
  %v204 = vmul.f32 %v199, %v203
  %v205 = vmul.f32 %v180, %v204
  %vm206 = vcmp.eq.f32.partialorder %v180, inf
  %v207 = vsel %vm206, %v180, %v205
  %vm208 = vcmp.eq.f32.partialorder %v180, 0.0
  %v209 = vand.u32 %v180, 2147483648
  %v210 = vsel %vm208, %v209, %v207
  %v211 = vrsqrt.pop %v183
  %v212 = vmul.f32 %v211, %v183
  %v213 = vmul.f32 %v212, %v211
  %v214 = vmul.f32 0.5, %v213
  %v215 = vsub.f32 1.5, %v214
  %v216 = vmul.f32 %v211, %v215
  %v217 = vmul.f32 %v183, %v216
  %vm218 = vcmp.eq.f32.partialorder %v183, inf
  %v219 = vsel %vm218, %v183, %v217
  %vm220 = vcmp.eq.f32.partialorder %v183, 0.0
  %v221 = vand.u32 %v183, 2147483648
  %v222 = vsel %vm220, %v221, %v219
  %v223 = vrsqrt.pop %v186
  %v224 = vmul.f32 %v223, %v186
  %v225 = vmul.f32 %v224, %v223
  %v226 = vmul.f32 0.5, %v225
  %v227 = vsub.f32 1.5, %v226
  %v228 = vmul.f32 %v223, %v227
  %v229 = vmul.f32 %v186, %v228
  %vm230 = vcmp.eq.f32.partialorder %v186, inf
  %v231 = vsel %vm230, %v186, %v229
  %vm232 = vcmp.eq.f32.partialorder %v186, 0.0
  %v233 = vand.u32 %v186, 2147483648
  %v234 = vsel %vm232, %v233, %v231
  %v235 = vmul.f32 %v198, %v113
  %v236 = vmul.f32 %v210, %v113
  %v237 = vmul.f32 %v222, %v113
  %v238 = vmul.f32 %v234, %v113
  %v243 = vunpack.c.l.b16 %v159
  %v244 = vunpack.c.l.b16 %v160
  %v245 = vunpack.c.l.b16 %v161
  %v246 = vunpack.c.l.b16 %v162
  %v247 = vpack.c.b16 %v244, %v243
  %v248 = vpack.c.b16 %v246, %v245
  %v250 = vsel %vm51, %v247, 0
  %v253 = vsel %vm51, %v248, 0
  %255 = vmatpush.bf16.msra.mxu0 0
  %256 = vmatpush.bf16.msra.mxu0 0
  %257 = vmatpush.bf16.msra.mxu0 0
  %258 = vmatpush.bf16.msra.mxu0 0
  %259 = vmatpush.bf16.msra.mxu0 0
  %260 = vmatpush.bf16.msra.mxu0 0
  %261 = vmatpush.bf16.msra.mxu0 0
  %262 = vmatpush.bf16.msra.mxu0 %v137
  %263 = vmatmul.bf16.gmra.mxu0 %v250
  %v264 = vpop.f32.mrf.mxu0
  %v265 = vadd.f32 %v235, %v264
  %v266 = vpop.f32.mrf.mxu0
  %v267 = vadd.f32 %v236, %v266
  %268 = vmatmul.bf16.gmra.mxu0 %v253
  %v269 = vpop.f32.mrf.mxu0
  %v270 = vadd.f32 %v237, %v269
  %v271 = vpop.f32.mrf.mxu0
  %v272 = vadd.f32 %v238, %v271
  %273 = vdwg.mxu0
  %v274 = vmax.f32 %v149, %v265
  %v275 = vmax.f32 %v151, %v267
  %v276 = vmax.f32 %v154, %v270
  %v277 = vmax.f32 %v156, %v272
  %s278 = scalar_lea.vmem %s1, 32
  %v279 = vld [vmem:[%s278] sm:$0xf]
  %v280 = vld [vmem:[%s278 + $0x4] sm:$0xf]
  %v281 = vld [vmem:[%s278 + $0x8] sm:$0xf]
  %v282 = vld [vmem:[%s278 + $0xc] sm:$0xf]
  %v283 = vunpack.c.l.bf16 %v279
  %v284 = vunpack.c.l.bf16 %v280
  %v285 = vunpack.c.l.bf16 %v281
  %v286 = vunpack.c.l.bf16 %v282
  %v287 = vsub.f32 %v283, %v29
  %v288 = vsub.f32 %v284, %v30
  %v289 = vsub.f32 %v285, %v31
  %v290 = vsub.f32 %v286, %v32
  %v291 = vmul.f32 %v287, %v287
  %v292 = vmul.f32 %v288, %v288
  %v293 = vmul.f32 %v289, %v289
  %v294 = vmul.f32 %v290, %v290
  %v295 = vsel %vm51, %v291, 0.0
  %296 = vadd.xlane.f32.xlu0 %v295
  %v297 = vpop.xlane.xlu0 %296
  %v298 = vsel %vm51, %v292, 0.0
  %299 = vadd.xlane.f32.xlu0 %v298
  %v300 = vpop.xlane.xlu0 %299
  %v301 = vsel %vm51, %v293, 0.0
  %302 = vadd.xlane.f32.xlu0 %v301
  %v303 = vpop.xlane.xlu0 %302
  %v304 = vsel %vm51, %v294, 0.0
  %305 = vadd.xlane.f32.xlu0 %v304
  %v306 = vpop.xlane.xlu0 %305
  %v307 = vrsqrt.pop %v297
  %v308 = vmul.f32 %v307, %v297
  %v309 = vmul.f32 %v308, %v307
  %v310 = vmul.f32 0.5, %v309
  %v311 = vsub.f32 1.5, %v310
  %v312 = vmul.f32 %v307, %v311
  %v313 = vmul.f32 %v297, %v312
  %vm314 = vcmp.eq.f32.partialorder %v297, inf
  %v315 = vsel %vm314, %v297, %v313
  %vm316 = vcmp.eq.f32.partialorder %v297, 0.0
  %v317 = vand.u32 %v297, 2147483648
  %v318 = vsel %vm316, %v317, %v315
  %v319 = vrsqrt.pop %v300
  %v320 = vmul.f32 %v319, %v300
  %v321 = vmul.f32 %v320, %v319
  %v322 = vmul.f32 0.5, %v321
  %v323 = vsub.f32 1.5, %v322
  %v324 = vmul.f32 %v319, %v323
  %v325 = vmul.f32 %v300, %v324
  %vm326 = vcmp.eq.f32.partialorder %v300, inf
  %v327 = vsel %vm326, %v300, %v325
  %vm328 = vcmp.eq.f32.partialorder %v300, 0.0
  %v329 = vand.u32 %v300, 2147483648
  %v330 = vsel %vm328, %v329, %v327
  %v331 = vrsqrt.pop %v303
  %v332 = vmul.f32 %v331, %v303
  %v333 = vmul.f32 %v332, %v331
  %v334 = vmul.f32 0.5, %v333
  %v335 = vsub.f32 1.5, %v334
  %v336 = vmul.f32 %v331, %v335
  %v337 = vmul.f32 %v303, %v336
  %vm338 = vcmp.eq.f32.partialorder %v303, inf
  %v339 = vsel %vm338, %v303, %v337
  %vm340 = vcmp.eq.f32.partialorder %v303, 0.0
  %v341 = vand.u32 %v303, 2147483648
  %v342 = vsel %vm340, %v341, %v339
  %v343 = vrsqrt.pop %v306
  %v344 = vmul.f32 %v343, %v306
  %v345 = vmul.f32 %v344, %v343
  %v346 = vmul.f32 0.5, %v345
  %v347 = vsub.f32 1.5, %v346
  %v348 = vmul.f32 %v343, %v347
  %v349 = vmul.f32 %v306, %v348
  %vm350 = vcmp.eq.f32.partialorder %v306, inf
  %v351 = vsel %vm350, %v306, %v349
  %vm352 = vcmp.eq.f32.partialorder %v306, 0.0
  %v353 = vand.u32 %v306, 2147483648
  %v354 = vsel %vm352, %v353, %v351
  %v355 = vmul.f32 %v318, %v113
  %v356 = vmul.f32 %v330, %v113
  %v357 = vmul.f32 %v342, %v113
  %v358 = vmul.f32 %v354, %v113
  %v363 = vunpack.c.l.b16 %v279
  %v364 = vunpack.c.l.b16 %v280
  %v365 = vunpack.c.l.b16 %v281
  %v366 = vunpack.c.l.b16 %v282
  %v367 = vpack.c.b16 %v364, %v363
  %v368 = vpack.c.b16 %v366, %v365
  %v370 = vsel %vm51, %v367, 0
  %v373 = vsel %vm51, %v368, 0
  %375 = vmatpush.bf16.msra.mxu0 0
  %376 = vmatpush.bf16.msra.mxu0 0
  %377 = vmatpush.bf16.msra.mxu0 0
  %378 = vmatpush.bf16.msra.mxu0 0
  %379 = vmatpush.bf16.msra.mxu0 0
  %380 = vmatpush.bf16.msra.mxu0 0
  %381 = vmatpush.bf16.msra.mxu0 0
  %382 = vmatpush.bf16.msra.mxu0 %v137
  %383 = vmatmul.bf16.gmra.mxu0 %v370
  %v384 = vpop.f32.mrf.mxu0
  %v385 = vadd.f32 %v355, %v384
  %v386 = vpop.f32.mrf.mxu0
  %v387 = vadd.f32 %v356, %v386
  %388 = vmatmul.bf16.gmra.mxu0 %v373
  %v389 = vpop.f32.mrf.mxu0
  %v390 = vadd.f32 %v357, %v389
  %v391 = vpop.f32.mrf.mxu0
  %v392 = vadd.f32 %v358, %v391
  %393 = vdwg.mxu0
  %v394 = vmax.f32 %v274, %v385
  %v395 = vmax.f32 %v275, %v387
  %v396 = vmax.f32 %v276, %v390
  %v397 = vmax.f32 %v277, %v392
  %s398 = scalar_lea.vmem %s1, 48
  %v399 = vld [vmem:[%s398] sm:$0xf]
  %v400 = vld [vmem:[%s398 + $0x4] sm:$0xf]
  %v401 = vld [vmem:[%s398 + $0x8] sm:$0xf]
  %v402 = vld [vmem:[%s398 + $0xc] sm:$0xf]
  %v403 = vunpack.c.l.bf16 %v399
  %v404 = vunpack.c.l.bf16 %v400
  %v405 = vunpack.c.l.bf16 %v401
  %v406 = vunpack.c.l.bf16 %v402
  %v407 = vsub.f32 %v403, %v29
  %v408 = vsub.f32 %v404, %v30
  %v409 = vsub.f32 %v405, %v31
  %v410 = vsub.f32 %v406, %v32
  %v411 = vmul.f32 %v407, %v407
  %v412 = vmul.f32 %v408, %v408
  %v413 = vmul.f32 %v409, %v409
  %v414 = vmul.f32 %v410, %v410
  %v415 = vsel %vm51, %v411, 0.0
  %416 = vadd.xlane.f32.xlu0 %v415
  %v417 = vpop.xlane.xlu0 %416
  %v418 = vsel %vm51, %v412, 0.0
  %419 = vadd.xlane.f32.xlu0 %v418
  %v420 = vpop.xlane.xlu0 %419
  %v421 = vsel %vm51, %v413, 0.0
  %422 = vadd.xlane.f32.xlu0 %v421
  %v423 = vpop.xlane.xlu0 %422
  %v424 = vsel %vm51, %v414, 0.0
  %425 = vadd.xlane.f32.xlu0 %v424
  %v426 = vpop.xlane.xlu0 %425
  %v427 = vrsqrt.pop %v417
  %v428 = vmul.f32 %v427, %v417
  %v429 = vmul.f32 %v428, %v427
  %v430 = vmul.f32 0.5, %v429
  %v431 = vsub.f32 1.5, %v430
  %v432 = vmul.f32 %v427, %v431
  %v433 = vmul.f32 %v417, %v432
  %vm434 = vcmp.eq.f32.partialorder %v417, inf
  %v435 = vsel %vm434, %v417, %v433
  %vm436 = vcmp.eq.f32.partialorder %v417, 0.0
  %v437 = vand.u32 %v417, 2147483648
  %v438 = vsel %vm436, %v437, %v435
  %v439 = vrsqrt.pop %v420
  %v440 = vmul.f32 %v439, %v420
  %v441 = vmul.f32 %v440, %v439
  %v442 = vmul.f32 0.5, %v441
  %v443 = vsub.f32 1.5, %v442
  %v444 = vmul.f32 %v439, %v443
  %v445 = vmul.f32 %v420, %v444
  %vm446 = vcmp.eq.f32.partialorder %v420, inf
  %v447 = vsel %vm446, %v420, %v445
  %vm448 = vcmp.eq.f32.partialorder %v420, 0.0
  %v449 = vand.u32 %v420, 2147483648
  %v450 = vsel %vm448, %v449, %v447
  %v451 = vrsqrt.pop %v423
  %v452 = vmul.f32 %v451, %v423
  %v453 = vmul.f32 %v452, %v451
  %v454 = vmul.f32 0.5, %v453
  %v455 = vsub.f32 1.5, %v454
  %v456 = vmul.f32 %v451, %v455
  %v457 = vmul.f32 %v423, %v456
  %vm458 = vcmp.eq.f32.partialorder %v423, inf
  %v459 = vsel %vm458, %v423, %v457
  %vm460 = vcmp.eq.f32.partialorder %v423, 0.0
  %v461 = vand.u32 %v423, 2147483648
  %v462 = vsel %vm460, %v461, %v459
  %v463 = vrsqrt.pop %v426
  %v464 = vmul.f32 %v463, %v426
  %v465 = vmul.f32 %v464, %v463
  %v466 = vmul.f32 0.5, %v465
  %v467 = vsub.f32 1.5, %v466
  %v468 = vmul.f32 %v463, %v467
  %v469 = vmul.f32 %v426, %v468
  %vm470 = vcmp.eq.f32.partialorder %v426, inf
  %v471 = vsel %vm470, %v426, %v469
  %vm472 = vcmp.eq.f32.partialorder %v426, 0.0
  %v473 = vand.u32 %v426, 2147483648
  %v474 = vsel %vm472, %v473, %v471
  %v475 = vmul.f32 %v438, %v113
  %v476 = vmul.f32 %v450, %v113
  %v477 = vmul.f32 %v462, %v113
  %v478 = vmul.f32 %v474, %v113
  %v483 = vunpack.c.l.b16 %v399
  %v484 = vunpack.c.l.b16 %v400
  %v485 = vunpack.c.l.b16 %v401
  %v486 = vunpack.c.l.b16 %v402
  %v487 = vpack.c.b16 %v484, %v483
  %v488 = vpack.c.b16 %v486, %v485
  %v490 = vsel %vm51, %v487, 0
  %v493 = vsel %vm51, %v488, 0
  %495 = vmatpush.bf16.msra.mxu0 0
  %496 = vmatpush.bf16.msra.mxu0 0
  %497 = vmatpush.bf16.msra.mxu0 0
  %498 = vmatpush.bf16.msra.mxu0 0
  %499 = vmatpush.bf16.msra.mxu0 0
  %500 = vmatpush.bf16.msra.mxu0 0
  %501 = vmatpush.bf16.msra.mxu0 0
  %502 = vmatpush.bf16.msra.mxu0 %v137
  %503 = vmatmul.bf16.gmra.mxu0 %v490
  %v504 = vpop.f32.mrf.mxu0
  %v505 = vadd.f32 %v475, %v504
  %v506 = vpop.f32.mrf.mxu0
  %v507 = vadd.f32 %v476, %v506
  %508 = vmatmul.bf16.gmra.mxu0 %v493
  %v509 = vpop.f32.mrf.mxu0
  %v510 = vadd.f32 %v477, %v509
  %v511 = vpop.f32.mrf.mxu0
  %v512 = vadd.f32 %v478, %v511
  %513 = vdwg.mxu0
  %v514 = vmax.f32 %v394, %v505
  %v515 = vmax.f32 %v395, %v507
  %v516 = vmax.f32 %v396, %v510
  %v517 = vmax.f32 %v397, %v512
  %v522 = vunpack.c.l.b16 %v24
  %v523 = vunpack.c.l.b16 %v25
  %v524 = vunpack.c.l.b16 %v26
  %v525 = vunpack.c.l.b16 %v27
  %v526 = vpack.c.b16 %v523, %v522
  %v527 = vpack.c.b16 %v525, %v524
  %v529 = vsel %vm51, %v526, 0
  %v532 = vsel %vm51, %v527, 0
  %v535 = vsel %vm135, %v28, 0
  %537 = vmatpush.bf16.msra.mxu0 0
  %538 = vmatpush.bf16.msra.mxu0 0
  %539 = vmatpush.bf16.msra.mxu0 0
  %540 = vmatpush.bf16.msra.mxu0 0
  %541 = vmatpush.bf16.msra.mxu0 0
  %542 = vmatpush.bf16.msra.mxu0 0
  %543 = vmatpush.bf16.msra.mxu0 0
  %544 = vmatpush.bf16.msra.mxu0 %v535
  %545 = vmatmul.bf16.gmra.mxu0 %v529
  %v546 = vpop.f32.mrf.mxu0
  %v547 = vadd.f32 %v514, %v546
  %v548 = vpop.f32.mrf.mxu0
  %v549 = vadd.f32 %v515, %v548
  %550 = vmatmul.bf16.gmra.mxu0 %v532
  %v551 = vpop.f32.mrf.mxu0
  %v552 = vadd.f32 %v516, %v551
  %v553 = vpop.f32.mrf.mxu0
  %v554 = vadd.f32 %v517, %v553
  %555 = vdwg.mxu0
  %v556 = vld [vmem:[%s5] sm:$0x1]
  %v558 = vperm.slane %v556, 0
  %v560 = vadd.f32 %v547, %v558
  %v561 = vadd.f32 %v549, %v558
  %v562 = vadd.f32 %v552, %v558
  %v563 = vadd.f32 %v554, %v558
  %vm564 = vcmp.gt.f32.partialorder %v560, 0.0
  %vm565 = vcmp.gt.f32.partialorder %v561, 0.0
  %vm566 = vcmp.gt.f32.partialorder %v562, 0.0
  %vm567 = vcmp.gt.f32.partialorder %v563, 0.0
  %v568 = vmul.f32 %v560, 0.01
  %v569 = vmul.f32 %v561, 0.01
  %v570 = vmul.f32 %v562, 0.01
  %v571 = vmul.f32 %v563, 0.01
  %v572 = vsel %vm564, %v560, %v568
  %v573 = vsel %vm565, %v561, %v569
  %v574 = vsel %vm566, %v562, %v570
  %v575 = vsel %vm567, %v563, %v571
  %v576 = vpack.c.bf16 %v572, %v572
  %v577 = vpack.c.bf16 %v573, %v573
  %v578 = vpack.c.bf16 %v574, %v574
  %v579 = vpack.c.bf16 %v575, %v575
  %vm580 = vcmask 60416
  %581 = vst.msk [vmem:[%s6] sm:$0xf] %vm580, %v576
  %582 = vst.msk [vmem:[%s6 + $0x4] sm:$0xf] %vm580, %v577
  %583 = vst.msk [vmem:[%s6 + $0x8] sm:$0xf] %vm580, %v578
  %584 = vst.msk [vmem:[%s6 + $0xc] sm:$0xf] %vm580, %v579
  // Predicated region
  $region26: #{semantic_cnn_forward.22} parent=0 // pred_check
    _
  $region27: #{semantic_cnn_forward.22} parent=0 // pred_check_branch
    %586 = sbr.rel (0) target = $region29
  $region28: #{semantic_cnn_forward.22} parent=0 // pred_region
    _
  $region29: #{semantic_cnn_forward.22} parent=0 // pred_fallthru
    _
  // Predicated region
  $region30: #{semantic_cnn_forward.22} parent=0 // pred_check
    _
  $region31: #{semantic_cnn_forward.22} parent=0 // pred_check_branch
    %588 = sbr.rel (0) target = $region33
  $region32: #{semantic_cnn_forward.22} parent=0 // pred_region
    _
  $region33: #{semantic_cnn_forward.22} parent=0 // pred_fallthru
    _

// kernel: semantic_cnn_forward.24
$region0: #{semantic_cnn_forward.24}
  #allocation0 [shape = 'u32[]', space=smem, size = 0x4, offset = 0x4, fixed_abs, tag = 'smem constant byte address 0x4 - core index']
  #allocation1 [shape = 'u32[72,128]{1,0:T(1,128)}', space=vmem, size = 0x9000, scoped, tag = 'internal scratch']
  %s0 = inlined_call_operand.vmem [shape: bf16[2,16,8], index: 0, kind: input, shape index: {}, may-alias: {0,1}]
  %s1 = inlined_call_operand.vmem [shape: bf16[2,16,8], index: 1, kind: input, shape index: {}, may-alias: {0,1}]
  %s2 = inlined_call_operand.vmem [shape: bf16[2,16,16], index: 2, kind: output, shape index: {}]
  %s3 = sld [smem:[#allocation0]]
  $region41: #{semantic_cnn_forward.24} parent=0
    _
  %s5 = ssub.s32 1, %s3
  %s6 = scalar_select 0, %s5, %s3
  loop: start=0, step=1, limit=4
  $region2: #{semantic_cnn_forward.24} parent=0 // loop_pre_header
    _
  $region3: #{semantic_cnn_forward.24} parent=0 // loop_header
    %s8 = sphi 0, %s12
    %p9 = scmp.ge.s32.totalorder %s8, 4
    %s15 = sphi 0, %s27
    %s16 = sphi 0, %s23
    %s17 = sphi 0, %s15
    %s18 = sphi 0, %s16
    %s19 = sphi 0, %s17
    %s20 = sphi 0, %s18
    %s32 = sphi 0, %s34
    %s35 = sphi 0, %s32
    %s36 = sphi 0, %s35
    %s52 = sphi 0, %s36
    %s58 = sphi 0, %s60
    %s61 = sphi 0, %s58
    %s62 = sphi 0, %s61
    %s78 = sphi 0, %s62
    %s86 = sphi 0, %s88
    %s89 = sphi 0, %s86
    %s90 = sphi 0, %s89
    %s106 = sphi 0, %s90
  $region4: #{semantic_cnn_forward.24} parent=0 // loop_header_branch
    %11 = sbr.rel (%p9) target = $region8
  $region5: #{semantic_cnn_forward.24} parent=0 // loop_body
    %s13 = ssub.s32 %s8, 1
    %s14 = ssub.s32 %s8, 2
    %s21 = sadd.s32 1, %s16
    %p22 = scmp.ge.s32.totalorder %s21, 1
    %s23 = scalar_select %p22, 0, %s21
    %s24 = sadd.s32 1, %s15
    %s25 = scalar_select %p22, %s24, %s15
    %p26 = scmp.ge.s32.totalorder %s25, 2
    %s27 = scalar_select %p26, 0, %s25
    %s28 = ssub.s32 %s15, %s27
    %s29 = ssub.s32 %s16, %s23
    %s30 = sor.u32 %s28, %s29
    %p31 = scmp.eq.s32.totalorder %s30, 0
    %s33 = sadd.s32 %s32, 1
    %s34 = scalar_select %p31, %s32, %s33
    %p37 = pneg %p31
    %p38 = scmp.eq.s32.totalorder %s8, 1
    %p39 = por %p37, %p38
    %p40 = scmp.ne.s32.totalorder %s32, %s35
    %p41 = scmp.eq.s32.totalorder %s8, 0
    %p42 = por %p40, %p41
    %p43 = scmp.ne.s32.totalorder %s32, %s35
    %p44 = scmp.eq.s32.totalorder %s13, 1
    %p45 = por %p43, %p44
    %p46 = scmp.ne.s32.totalorder %s35, %s36
    %p47 = scmp.eq.s32.totalorder %s13, 0
    %p48 = por %p46, %p47
    %p49 = scmp.ne.s32.totalorder %s35, %s36
    %p50 = scmp.eq.s32.totalorder %s14, 1
    %p51 = por %p49, %p50
    %p53 = scmp.ne.s32.totalorder %s36, %s52
    %p54 = scmp.eq.s32.totalorder %s14, 0
    %p55 = por %p53, %p54
    %s56 = ssub.s32 %s15, %s27
    %p57 = scmp.eq.s32.totalorder %s56, 0
    %s59 = sadd.s32 %s58, 1
    %s60 = scalar_select %p57, %s58, %s59
    %p63 = pneg %p57
    %p64 = scmp.eq.s32.totalorder %s8, 1
    %p65 = por %p63, %p64
    %p66 = scmp.ne.s32.totalorder %s58, %s61
    %p67 = scmp.eq.s32.totalorder %s8, 0
    %p68 = por %p66, %p67
    %p69 = scmp.ne.s32.totalorder %s58, %s61
    %p70 = scmp.eq.s32.totalorder %s13, 1
    %p71 = por %p69, %p70
    %p72 = scmp.ne.s32.totalorder %s61, %s62
    %p73 = scmp.eq.s32.totalorder %s13, 0
    %p74 = por %p72, %p73
    %p75 = scmp.ne.s32.totalorder %s61, %s62
    %p76 = scmp.eq.s32.totalorder %s14, 1
    %p77 = por %p75, %p76
    %p79 = scmp.ne.s32.totalorder %s62, %s78
    %p80 = scmp.eq.s32.totalorder %s14, 0
    %p81 = por %p79, %p80
    %s82 = ssub.s32 %s15, %s27
    %s83 = ssub.s32 %s16, %s23
    %s84 = sor.u32 %s82, %s83
    %p85 = scmp.eq.s32.totalorder %s84, 0
    %s87 = sadd.s32 %s86, 1
    %s88 = scalar_select %p85, %s86, %s87
    %p91 = pneg %p85
    %p92 = scmp.eq.s32.totalorder %s8, 1
    %p93 = por %p91, %p92
    %p94 = scmp.ne.s32.totalorder %s86, %s89
    %p95 = scmp.eq.s32.totalorder %s8, 0
    %p96 = por %p94, %p95
    %p97 = scmp.ne.s32.totalorder %s86, %s89
    %p98 = scmp.eq.s32.totalorder %s13, 1
    %p99 = por %p97, %p98
    %p100 = scmp.ne.s32.totalorder %s89, %s90
    %p101 = scmp.eq.s32.totalorder %s13, 0
    %p102 = por %p100, %p101
    %p103 = scmp.ne.s32.totalorder %s89, %s90
    %p104 = scmp.eq.s32.totalorder %s14, 1
    %p105 = por %p103, %p104
    %p107 = scmp.ne.s32.totalorder %s90, %s106
    %p108 = scmp.eq.s32.totalorder %s14, 0
    %p109 = por %p107, %p108
    %p110 = scmp.le.s32.totalorder 1, %s8
    %p111 = scmp.lt.s32.totalorder %s8, 3
    %p112 = pnand %p110, %p111
    %p113 = pneg %p112
    // Predicated region
    $region9: #{semantic_cnn_forward.24} parent=5 // pred_check
      _
    $region10: #{semantic_cnn_forward.24} parent=5 // pred_check_branch
      %115 = sbr.rel (%p112) target = $region12
    $region11: #{semantic_cnn_forward.24} parent=5 // pred_region
      %s116 = ssub.s32 %s8, 1
    $region12: #{semantic_cnn_forward.24} parent=5 // pred_fallthru
      _
    %p117 = scmp.lt.s32.totalorder %s8, 2
    // Predicated region
    $region13: #{semantic_cnn_forward.24} parent=5 // pred_check
      %p118 = pneg %p117
    $region14: #{semantic_cnn_forward.24} parent=5 // pred_check_branch
      %120 = sbr.rel (%p118) target = $region16
    $region15: #{semantic_cnn_forward.24} parent=5 // pred_region
      // Predicated region
      $region17: #{semantic_cnn_forward.24} parent=15 // pred_check
        %p121 = pneg %p42
      $region18: #{semantic_cnn_forward.24} parent=15 // pred_check_branch
        %123 = sbr.rel (%p121) target = $region20
      $region19: #{semantic_cnn_forward.24} parent=15 // pred_region
        %s124 = smul.u32 2, %s16
        %p125 = scmp.lt.s32.totalorder %s15, 1
        %s126 = scalar_select %p125, %s15, 1
        %p127 = scmp.lt.s32.totalorder %s124, 1
        %s128 = scalar_select %p127, %s124, 1
        %s129 = smul.addr %s126, 2
        %s130 = sadd.s32 %s128, %s129
        %s131 = smul.addr %s130, 4
        %s132 = scalar_lea.vmem %s0, %s131
        %s133 = smul.u32 2, %s16
      $region20: #{semantic_cnn_forward.24} parent=15 // pred_fallthru
        _
      // Predicated region
      $region21: #{semantic_cnn_forward.24} parent=15 // pred_check
        %p134 = pneg %p68
      $region22: #{semantic_cnn_forward.24} parent=15 // pred_check_branch
        %136 = sbr.rel (%p134) target = $region24
      $region23: #{semantic_cnn_forward.24} parent=15 // pred_region
        %p137 = scmp.lt.s32.totalorder %s15, 1
        %s138 = scalar_select %p137, %s15, 1
        %s139 = smul.addr %s138, 2
        %s140 = smul.addr %s139, 4
        %s141 = scalar_lea.vmem %s1, %s140
      $region24: #{semantic_cnn_forward.24} parent=15 // pred_fallthru
        _
    $region16: #{semantic_cnn_forward.24} parent=5 // pred_fallthru
      _
    %p142 = scmp.le.s32.totalorder 1, %s8
    %p143 = scmp.lt.s32.totalorder %s8, 3
    %p144 = pnand %p142, %p143
    %p145 = pneg %p144
    // Predicated region
    $region25: #{semantic_cnn_forward.24} parent=5 // pred_check
      _
    $region26: #{semantic_cnn_forward.24} parent=5 // pred_check_branch
      %147 = sbr.rel (%p144) target = $region28
    $region27: #{semantic_cnn_forward.24} parent=5 // pred_region
      %s148 = ssub.s32 %s8, 1
      %s149 = smul.u32 2, %s18
      %p150 = scmp.lt.s32.totalorder %s17, 1
      %s151 = scalar_select %p150, %s17, 1
      %p152 = scmp.lt.s32.totalorder %s149, 1
      %s153 = scalar_select %p152, %s149, 1
      %s154 = smul.addr %s151, 2
      %s155 = sadd.s32 %s153, %s154
      %s156 = smul.addr %s155, 4
      %s157 = scalar_lea.vmem %s0, %s156
      %p158 = pneg %p48
      %p159 = pneg %p45
      %p160 = scmp.lt.s32.totalorder %s17, 1
      %s161 = scalar_select %p160, %s17, 1
      %s162 = smul.addr %s161, 2
      %s163 = smul.addr %s162, 4
      %s164 = scalar_lea.vmem %s1, %s163
      %p165 = pneg %p74
      %p166 = pneg %p71
      %p167 = pneg %p102
      %p168 = pneg %p99
      %s169 = smul.u32 2, %s18
      %p170 = scmp.lt.s32.totalorder %s17, 1
      %s171 = scalar_select %p170, %s17, 1
      %p172 = scmp.lt.s32.totalorder %s169, 1
      %s173 = scalar_select %p172, %s169, 1
      %s174 = smul.addr %s171, 2
      %s175 = sadd.s32 %s173, %s174
      %s176 = smul.addr %s175, 4
      %s177 = scalar_lea.vmem %s2, %s176
      %s178 = smul.u32 2, %s18
      %p179 = scmp.lt.s32.totalorder %s17, 1
      %s180 = scalar_select %p179, %s17, 1
      %p181 = scmp.lt.s32.totalorder %s178, 1
      %s182 = scalar_select %p181, %s178, 1
      %s183 = smul.addr %s180, 2
      %s184 = sadd.s32 %s182, %s183
      %s185 = smul.addr %s184, 4
      %s186 = scalar_lea.vmem %s0, %s185
      %s187 = smul.u32 2, %s18
      %p188 = scmp.lt.s32.totalorder %s17, 1
      %s189 = scalar_select %p188, %s17, 1
      %s190 = smul.addr %s189, 2
      %s191 = smul.addr %s190, 4
      %s192 = scalar_lea.vmem %s1, %s191
      %s193 = smul.u32 2, %s18
      %p194 = scmp.lt.s32.totalorder %s17, 1
      %s195 = scalar_select %p194, %s17, 1
      %p196 = scmp.lt.s32.totalorder %s193, 1
      %s197 = scalar_select %p196, %s193, 1
      %s198 = smul.addr %s195, 2
      %s199 = sadd.s32 %s197, %s198
      %s200 = smul.addr %s199, 4
      %s201 = scalar_lea.vmem %s2, %s200
      %s202 = smul.u32 2, %s18
      %v204 = vld [vmem:[%s186] sm:$0xf]
      %v205 = vld [vmem:[%s186 + $0x4] sm:$0xf]
      %v206 = vld [vmem:[%s192] sm:$0xf]
      %v207 = vld [vmem:[%s192 + $0x4] sm:$0xf]
      %v208 = vunpack.c.l.bf16 %v204
      %v209 = vunpack.c.l.bf16 %v205
      %v210 = vunpack.c.l.bf16 %v206
      %v211 = vunpack.c.l.bf16 %v207
      %v212 = vmul.f32 %v208, %v208
      %v213 = vmul.f32 %v209, %v209
      %vm214 = vcmask 64512
      %v215 = vsel %vm214, %v212, 0.0
      %216 = vadd.xlane.f32.xlu0 %v215
      %v217 = vpop.xlane.xlu0 %216
      %v218 = vsel %vm214, %v213, 0.0
      %219 = vadd.xlane.f32.xlu0 %v218
      %v220 = vpop.xlane.xlu0 %219
      %v221 = vmul.f32 %v210, %v210
      %v222 = vmul.f32 %v211, %v211
      %v223 = vsel %vm214, %v221, 0.0
      %224 = vadd.xlane.f32.xlu0 %v223
      %v225 = vpop.xlane.xlu0 %224
      %v226 = vsel %vm214, %v222, 0.0
      %227 = vadd.xlane.f32.xlu0 %v226
      %v228 = vpop.xlane.xlu0 %227
      %v231 = vunpack.c.l.b16 %v204
      %v232 = vunpack.c.l.b16 %v205
      %v233 = vpack.c.b16 %v232, %v231
      %v236 = vunpack.c.l.b16 %v206
      %v237 = vunpack.c.l.b16 %v207
      %v238 = vpack.c.b16 %v237, %v236
      %v240 = vsel %vm214, %v233, 0
      %v243 = vsel %vm214, %v238, 0
      %245 = vmatpush.bf16.xpose.msra.mxu0 0
      %246 = vmatpush.bf16.xpose.msra.mxu0 0
      %247 = vmatpush.bf16.xpose.msra.mxu0 0
      %248 = vmatpush.bf16.xpose.msra.mxu0 0
      %249 = vmatpush.bf16.xpose.msra.mxu0 0
      %250 = vmatpush.bf16.xpose.msra.mxu0 0
      %251 = vmatpush.bf16.xpose.msra.mxu0 0
      %252 = vmatpush.bf16.xpose.msra.mxu0 %v243
      %253 = vmatmul.bf16.gmra.mxu0 %v240
      %v254 = vpop.f32.mrf.mxu0
      %v255 = vadd.f32 0.0, %v254
      %v256 = vpop.f32.mrf.mxu0
      %v257 = vadd.f32 0.0, %v256
      %258 = vdwg.mxu0
      %v259 = vmul.f32 %v255, 2.0
      %v260 = vmul.f32 %v257, 2.0
      %v261 = vsub.f32 %v259, %v217
      %v262 = vsub.f32 %v260, %v220
      %263 = vxpose.xlu0.b32.start [1/16] %v225, 128
      %264 = vxpose.xlu0.b32.cont [2/16] %v228, 128
      %265 = vxpose.xlu0.b32.cont [3/16] 0.0, 128
      %266 = vxpose.xlu0.b32.cont [4/16] 0.0, 128
      %267 = vxpose.xlu0.b32.cont [5/16] 0.0, 128
      %268 = vxpose.xlu0.b32.cont [6/16] 0.0, 128
      %269 = vxpose.xlu0.b32.cont [7/16] 0.0, 128
      %270 = vxpose.xlu0.b32.cont [8/16] 0.0, 128
      %271 = vxpose.xlu0.b32.cont [9/16] 0.0, 128
      %272 = vxpose.xlu0.b32.cont [10/16] 0.0, 128
      %273 = vxpose.xlu0.b32.cont [11/16] 0.0, 128
      %274 = vxpose.xlu0.b32.cont [12/16] 0.0, 128
      %275 = vxpose.xlu0.b32.cont [13/16] 0.0, 128
      %276 = vxpose.xlu0.b32.cont [14/16] 0.0, 128
      %277 = vxpose.xlu0.b32.cont [15/16] 0.0, 128
      %278 = vxpose.xlu0.b32.end [16/16] 0.0, 128
      %v279 = vpop.trf.xlu0
      %v280 = vpop.trf.xlu0
      %v281 = vpop.trf.xlu0
      %v282 = vpop.trf.xlu0
      %v283 = vpop.trf.xlu0
      %v284 = vpop.trf.xlu0
      %v285 = vpop.trf.xlu0
      %v286 = vpop.trf.xlu0
      %v287 = vpop.trf.xlu0
      %v288 = vpop.trf.xlu0
      %v289 = vpop.trf.xlu0
      %v290 = vpop.trf.xlu0
      %v291 = vpop.trf.xlu0
      %v292 = vpop.trf.xlu0
      %v293 = vpop.trf.xlu0
      %v294 = vpop.trf.xlu0
      %v295 = vperm.slane %v279, 0
      %v296 = vsub.f32 %v261, %v295
      %v297 = vsub.f32 %v262, %v295
      %v298 = vpack.c.bf16 %v296, %v296
      %v299 = vpack.c.bf16 %v297, %v297
      %vm300 = vcmask 125952
      %301 = vst.msk [vmem:[%s201] sm:$0xf] %vm300, %v298
      %302 = vst.msk [vmem:[%s201 + $0x4] sm:$0xf] %vm300, %v299
      %s303 = smul.u32 2, %s18
      %p304 = scmp.lt.s32.totalorder %s17, 1
      %s305 = scalar_select %p304, %s17, 1
      %p306 = scmp.lt.s32.totalorder %s303, 1
      %s307 = scalar_select %p306, %s303, 1
      %s308 = smul.addr %s305, 2
      %s309 = sadd.s32 %s307, %s308
      %s310 = smul.addr %s309, 4
      %s311 = scalar_lea.vmem %s2, %s310
      // Predicated region
      $region29: #{semantic_cnn_forward.24} parent=27 // pred_check
        %p312 = pneg %p99
      $region30: #{semantic_cnn_forward.24} parent=27 // pred_check_branch
        %314 = sbr.rel (%p312) target = $region32
      $region31: #{semantic_cnn_forward.24} parent=27 // pred_region
        %s315 = smul.u32 2, %s18
      $region32: #{semantic_cnn_forward.24} parent=27 // pred_fallthru
        _
    $region28: #{semantic_cnn_forward.24} parent=5 // pred_fallthru
      _
    %p316 = scmp.le.s32.totalorder 2, %s8
    // Predicated region
    $region33: #{semantic_cnn_forward.24} parent=5 // pred_check
      %p317 = pneg %p316
    $region34: #{semantic_cnn_forward.24} parent=5 // pred_check_branch
      %319 = sbr.rel (%p317) target = $region36
    $region35: #{semantic_cnn_forward.24} parent=5 // pred_region
      %s320 = ssub.s32 %s8, 2
      // Predicated region
      $region37: #{semantic_cnn_forward.24} parent=35 // pred_check
        %p321 = pneg %p105
      $region38: #{semantic_cnn_forward.24} parent=35 // pred_check_branch
        %323 = sbr.rel (%p321) target = $region40
      $region39: #{semantic_cnn_forward.24} parent=35 // pred_region
        %s324 = smul.u32 2, %s20
        %p325 = scmp.lt.s32.totalorder %s19, 1
        %s326 = scalar_select %p325, %s19, 1
        %p327 = scmp.lt.s32.totalorder %s324, 1
        %s328 = scalar_select %p327, %s324, 1
        %s329 = smul.addr %s326, 2
        %s330 = sadd.s32 %s328, %s329
        %s331 = smul.addr %s330, 4
        %s332 = scalar_lea.vmem %s2, %s331
      $region40: #{semantic_cnn_forward.24} parent=35 // pred_fallthru
        _
    $region36: #{semantic_cnn_forward.24} parent=5 // pred_fallthru
      _
  $region6: #{semantic_cnn_forward.24} parent=0 // loop_footer
    %s12 = sadd.s32 1, %s8
  $region7: #{semantic_cnn_forward.24} parent=0 // loop_footer_branch
    %7 = sbr.rel target = $region3
  $region8: #{semantic_cnn_forward.24} parent=0 // loop_exit
    _

// kernel: semantic_cnn_forward.23
$region0: #{semantic_cnn_forward.23}
  #allocation0 [shape = 'u32[]', space=smem, size = 0x4, offset = 0x4, fixed_abs, tag = 'smem constant byte address 0x4 - core index']
  #allocation1 [shape = 'u32[72,128]{1,0:T(1,128)}', space=vmem, size = 0x9000, scoped, tag = 'internal scratch']
  #allocation2 [shape = 'bf16[16,4]{1,0:T(8,128)(2,1)}', space=vmem, size = 0x1000, scoped, tag = 'scratch operand']
  #allocation3 [shape = 'bf16[16,4]{1,0:T(8,128)(2,1)}', space=vmem, size = 0x1000, scoped, tag = 'scratch operand']
  %s0 = inlined_call_operand.vmem [shape: bf16[2,16,4], index: 0, kind: input, shape index: {}, may-alias: {0,1}]
  %s1 = inlined_call_operand.vmem [shape: bf16[2,16,4], index: 1, kind: input, shape index: {}, may-alias: {0,1}]
  %s2 = inlined_call_operand.vmem [shape: bf16[2,16,8], index: 2, kind: input, shape index: {}]
  %s3 = inlined_call_operand.vmem [shape: bf16[4,4], index: 3, kind: input, shape index: {}]
  %s4 = inlined_call_operand.vmem [shape: f32[1,4], index: 4, kind: input, shape index: {}]
  %s5 = inlined_call_operand.vmem [shape: bf16[4,4], index: 5, kind: input, shape index: {}]
  %s6 = inlined_call_operand.vmem [shape: f32[1,4], index: 6, kind: input, shape index: {}]
  %s7 = inlined_call_operand.vmem [shape: bf16[4,4], index: 7, kind: input, shape index: {}]
  %s8 = inlined_call_operand.vmem [shape: f32[1,4], index: 8, kind: input, shape index: {}]
  %s9 = inlined_call_operand.vmem [shape: bf16[4,8], index: 9, kind: input, shape index: {}]
  %s10 = inlined_call_operand.vmem [shape: f32[1,8], index: 10, kind: input, shape index: {}]
  %s11 = inlined_call_operand.vmem [shape: bf16[8,8], index: 11, kind: input, shape index: {}]
  %s12 = inlined_call_operand.vmem [shape: bf16[8,8], index: 12, kind: input, shape index: {}]
  %s13 = inlined_call_operand.vmem [shape: f32[1,8], index: 13, kind: input, shape index: {}]
  %s14 = inlined_call_operand.vmem [shape: bf16[2,16,8], index: 14, kind: output, shape index: {}]
  %s15 = sld [smem:[#allocation0]]
  $region93: #{semantic_cnn_forward.23} parent=0
    _
  %s17 = ssub.s32 1, %s15
  %s18 = scalar_select 0, %s17, %s15
  loop: start=0, step=1, limit=4
  $region2: #{semantic_cnn_forward.23} parent=0 // loop_pre_header
    _
  $region3: #{semantic_cnn_forward.23} parent=0 // loop_header
    %s20 = sphi 0, %s24
    %p21 = scmp.ge.s32.totalorder %s20, 4
    %s27 = sphi 0, %s39
    %s28 = sphi 0, %s35
    %s29 = sphi 0, %s27
    %s30 = sphi 0, %s28
    %s31 = sphi 0, %s29
    %s32 = sphi 0, %s30
    %s44 = sphi 0, %s46
    %s47 = sphi 0, %s44
    %s48 = sphi 0, %s47
    %s64 = sphi 0, %s48
    %s70 = sphi 0, %s72
    %s73 = sphi 0, %s70
    %s74 = sphi 0, %s73
    %s90 = sphi 0, %s74
    %s98 = sphi 0, %s100
    %s101 = sphi 0, %s98
    %s102 = sphi 0, %s101
    %s118 = sphi 0, %s102
    %s122 = sphi 0, %s122
    %s124 = sphi 0, %s122
    %s125 = sphi 0, %s124
    %s139 = sphi 0, %s125
    %s143 = sphi 0, %s143
    %s145 = sphi 0, %s143
    %s146 = sphi 0, %s145
    %s160 = sphi 0, %s146
    %s164 = sphi 0, %s164
    %s166 = sphi 0, %s164
    %s167 = sphi 0, %s166
    %s181 = sphi 0, %s167
    %s185 = sphi 0, %s185
    %s187 = sphi 0, %s185
    %s188 = sphi 0, %s187
    %s202 = sphi 0, %s188
    %s206 = sphi 0, %s206
    %s208 = sphi 0, %s206
    %s209 = sphi 0, %s208
    %s223 = sphi 0, %s209
    %s227 = sphi 0, %s227
    %s229 = sphi 0, %s227
    %s230 = sphi 0, %s229
    %s244 = sphi 0, %s230
    %s248 = sphi 0, %s248
    %s250 = sphi 0, %s248
    %s251 = sphi 0, %s250
    %s265 = sphi 0, %s251
    %s269 = sphi 0, %s269
    %s271 = sphi 0, %s269
    %s272 = sphi 0, %s271
    %s286 = sphi 0, %s272
    %s290 = sphi 0, %s290
    %s292 = sphi 0, %s290
    %s293 = sphi 0, %s292
    %s307 = sphi 0, %s293
    %s311 = sphi 0, %s311
    %s313 = sphi 0, %s311
    %s314 = sphi 0, %s313
    %s328 = sphi 0, %s314
    %s332 = sphi 0, %s332
    %s334 = sphi 0, %s332
    %s335 = sphi 0, %s334
    %s349 = sphi 0, %s335
    %s357 = sphi 0, %s359
    %s360 = sphi 0, %s357
    %s361 = sphi 0, %s360
    %s377 = sphi 0, %s361
  $region4: #{semantic_cnn_forward.23} parent=0 // loop_header_branch
    %23 = sbr.rel (%p21) target = $region8
  $region5: #{semantic_cnn_forward.23} parent=0 // loop_body
    %s25 = ssub.s32 %s20, 1
    %s26 = ssub.s32 %s20, 2
    %s33 = sadd.s32 1, %s28
    %p34 = scmp.ge.s32.totalorder %s33, 1
    %s35 = scalar_select %p34, 0, %s33
    %s36 = sadd.s32 1, %s27
    %s37 = scalar_select %p34, %s36, %s27
    %p38 = scmp.ge.s32.totalorder %s37, 2
    %s39 = scalar_select %p38, 0, %s37
    %s40 = ssub.s32 %s27, %s39
    %s41 = ssub.s32 %s28, %s35
    %s42 = sor.u32 %s40, %s41
    %p43 = scmp.eq.s32.totalorder %s42, 0
    %s45 = sadd.s32 %s44, 1
    %s46 = scalar_select %p43, %s44, %s45
    %p49 = pneg %p43
    %p50 = scmp.eq.s32.totalorder %s20, 1
    %p51 = por %p49, %p50
    %p52 = scmp.ne.s32.totalorder %s44, %s47
    %p53 = scmp.eq.s32.totalorder %s20, 0
    %p54 = por %p52, %p53
    %p55 = scmp.ne.s32.totalorder %s44, %s47
    %p56 = scmp.eq.s32.totalorder %s25, 1
    %p57 = por %p55, %p56
    %p58 = scmp.ne.s32.totalorder %s47, %s48
    %p59 = scmp.eq.s32.totalorder %s25, 0
    %p60 = por %p58, %p59
    %p61 = scmp.ne.s32.totalorder %s47, %s48
    %p62 = scmp.eq.s32.totalorder %s26, 1
    %p63 = por %p61, %p62
    %p65 = scmp.ne.s32.totalorder %s48, %s64
    %p66 = scmp.eq.s32.totalorder %s26, 0
    %p67 = por %p65, %p66
    %s68 = ssub.s32 %s27, %s39
    %p69 = scmp.eq.s32.totalorder %s68, 0
    %s71 = sadd.s32 %s70, 1
    %s72 = scalar_select %p69, %s70, %s71
    %p75 = pneg %p69
    %p76 = scmp.eq.s32.totalorder %s20, 1
    %p77 = por %p75, %p76
    %p78 = scmp.ne.s32.totalorder %s70, %s73
    %p79 = scmp.eq.s32.totalorder %s20, 0
    %p80 = por %p78, %p79
    %p81 = scmp.ne.s32.totalorder %s70, %s73
    %p82 = scmp.eq.s32.totalorder %s25, 1
    %p83 = por %p81, %p82
    %p84 = scmp.ne.s32.totalorder %s73, %s74
    %p85 = scmp.eq.s32.totalorder %s25, 0
    %p86 = por %p84, %p85
    %p87 = scmp.ne.s32.totalorder %s73, %s74
    %p88 = scmp.eq.s32.totalorder %s26, 1
    %p89 = por %p87, %p88
    %p91 = scmp.ne.s32.totalorder %s74, %s90
    %p92 = scmp.eq.s32.totalorder %s26, 0
    %p93 = por %p91, %p92
    %s94 = ssub.s32 %s27, %s39
    %s95 = ssub.s32 %s28, %s35
    %s96 = sor.u32 %s94, %s95
    %p97 = scmp.eq.s32.totalorder %s96, 0
    %s99 = sadd.s32 %s98, 1
    %s100 = scalar_select %p97, %s98, %s99
    %p103 = pneg %p97
    %p104 = scmp.eq.s32.totalorder %s20, 1
    %p105 = por %p103, %p104
    %p106 = scmp.ne.s32.totalorder %s98, %s101
    %p107 = scmp.eq.s32.totalorder %s20, 0
    %p108 = por %p106, %p107
    %p109 = scmp.ne.s32.totalorder %s98, %s101
    %p110 = scmp.eq.s32.totalorder %s25, 1
    %p111 = por %p109, %p110
    %p112 = scmp.ne.s32.totalorder %s101, %s102
    %p113 = scmp.eq.s32.totalorder %s25, 0
    %p114 = por %p112, %p113
    %p115 = scmp.ne.s32.totalorder %s101, %s102
    %p116 = scmp.eq.s32.totalorder %s26, 1
    %p117 = por %p115, %p116
    %p119 = scmp.ne.s32.totalorder %s102, %s118
    %p120 = scmp.eq.s32.totalorder %s26, 0
    %p121 = por %p119, %p120
    %s123 = sadd.s32 %s122, 1
    %p126 = scmp.eq.s32.totalorder %s20, 1
    %p127 = scmp.ne.s32.totalorder %s122, %s124
    %p128 = scmp.eq.s32.totalorder %s20, 0
    %p129 = por %p127, %p128
    %p130 = scmp.ne.s32.totalorder %s122, %s124
    %p131 = scmp.eq.s32.totalorder %s25, 1
    %p132 = por %p130, %p131
    %p133 = scmp.ne.s32.totalorder %s124, %s125
    %p134 = scmp.eq.s32.totalorder %s25, 0
    %p135 = por %p133, %p134
    %p136 = scmp.ne.s32.totalorder %s124, %s125
    %p137 = scmp.eq.s32.totalorder %s26, 1
    %p138 = por %p136, %p137
    %p140 = scmp.ne.s32.totalorder %s125, %s139
    %p141 = scmp.eq.s32.totalorder %s26, 0
    %p142 = por %p140, %p141
    %s144 = sadd.s32 %s143, 1
    %p147 = scmp.eq.s32.totalorder %s20, 1
    %p148 = scmp.ne.s32.totalorder %s143, %s145
    %p149 = scmp.eq.s32.totalorder %s20, 0
    %p150 = por %p148, %p149
    %p151 = scmp.ne.s32.totalorder %s143, %s145
    %p152 = scmp.eq.s32.totalorder %s25, 1
    %p153 = por %p151, %p152
    %p154 = scmp.ne.s32.totalorder %s145, %s146
    %p155 = scmp.eq.s32.totalorder %s25, 0
    %p156 = por %p154, %p155
    %p157 = scmp.ne.s32.totalorder %s145, %s146
    %p158 = scmp.eq.s32.totalorder %s26, 1
    %p159 = por %p157, %p158
    %p161 = scmp.ne.s32.totalorder %s146, %s160
    %p162 = scmp.eq.s32.totalorder %s26, 0
    %p163 = por %p161, %p162
    %s165 = sadd.s32 %s164, 1
    %p168 = scmp.eq.s32.totalorder %s20, 1
    %p169 = scmp.ne.s32.totalorder %s164, %s166
    %p170 = scmp.eq.s32.totalorder %s20, 0
    %p171 = por %p169, %p170
    %p172 = scmp.ne.s32.totalorder %s164, %s166
    %p173 = scmp.eq.s32.totalorder %s25, 1
    %p174 = por %p172, %p173
    %p175 = scmp.ne.s32.totalorder %s166, %s167
    %p176 = scmp.eq.s32.totalorder %s25, 0
    %p177 = por %p175, %p176
    %p178 = scmp.ne.s32.totalorder %s166, %s167
    %p179 = scmp.eq.s32.totalorder %s26, 1
    %p180 = por %p178, %p179
    %p182 = scmp.ne.s32.totalorder %s167, %s181
    %p183 = scmp.eq.s32.totalorder %s26, 0
    %p184 = por %p182, %p183
    %s186 = sadd.s32 %s185, 1
    %p189 = scmp.eq.s32.totalorder %s20, 1
    %p190 = scmp.ne.s32.totalorder %s185, %s187
    %p191 = scmp.eq.s32.totalorder %s20, 0
    %p192 = por %p190, %p191
    %p193 = scmp.ne.s32.totalorder %s185, %s187
    %p194 = scmp.eq.s32.totalorder %s25, 1
    %p195 = por %p193, %p194
    %p196 = scmp.ne.s32.totalorder %s187, %s188
    %p197 = scmp.eq.s32.totalorder %s25, 0
    %p198 = por %p196, %p197
    %p199 = scmp.ne.s32.totalorder %s187, %s188
    %p200 = scmp.eq.s32.totalorder %s26, 1
    %p201 = por %p199, %p200
    %p203 = scmp.ne.s32.totalorder %s188, %s202
    %p204 = scmp.eq.s32.totalorder %s26, 0
    %p205 = por %p203, %p204
    %s207 = sadd.s32 %s206, 1
    %p210 = scmp.eq.s32.totalorder %s20, 1
    %p211 = scmp.ne.s32.totalorder %s206, %s208
    %p212 = scmp.eq.s32.totalorder %s20, 0
    %p213 = por %p211, %p212
    %p214 = scmp.ne.s32.totalorder %s206, %s208
    %p215 = scmp.eq.s32.totalorder %s25, 1
    %p216 = por %p214, %p215
    %p217 = scmp.ne.s32.totalorder %s208, %s209
    %p218 = scmp.eq.s32.totalorder %s25, 0
    %p219 = por %p217, %p218
    %p220 = scmp.ne.s32.totalorder %s208, %s209
    %p221 = scmp.eq.s32.totalorder %s26, 1
    %p222 = por %p220, %p221
    %p224 = scmp.ne.s32.totalorder %s209, %s223
    %p225 = scmp.eq.s32.totalorder %s26, 0
    %p226 = por %p224, %p225
    %s228 = sadd.s32 %s227, 1
    %p231 = scmp.eq.s32.totalorder %s20, 1
    %p232 = scmp.ne.s32.totalorder %s227, %s229
    %p233 = scmp.eq.s32.totalorder %s20, 0
    %p234 = por %p232, %p233
    %p235 = scmp.ne.s32.totalorder %s227, %s229
    %p236 = scmp.eq.s32.totalorder %s25, 1
    %p237 = por %p235, %p236
    %p238 = scmp.ne.s32.totalorder %s229, %s230
    %p239 = scmp.eq.s32.totalorder %s25, 0
    %p240 = por %p238, %p239
    %p241 = scmp.ne.s32.totalorder %s229, %s230
    %p242 = scmp.eq.s32.totalorder %s26, 1
    %p243 = por %p241, %p242
    %p245 = scmp.ne.s32.totalorder %s230, %s244
    %p246 = scmp.eq.s32.totalorder %s26, 0
    %p247 = por %p245, %p246
    %s249 = sadd.s32 %s248, 1
    %p252 = scmp.eq.s32.totalorder %s20, 1
    %p253 = scmp.ne.s32.totalorder %s248, %s250
    %p254 = scmp.eq.s32.totalorder %s20, 0
    %p255 = por %p253, %p254
    %p256 = scmp.ne.s32.totalorder %s248, %s250
    %p257 = scmp.eq.s32.totalorder %s25, 1
    %p258 = por %p256, %p257
    %p259 = scmp.ne.s32.totalorder %s250, %s251
    %p260 = scmp.eq.s32.totalorder %s25, 0
    %p261 = por %p259, %p260
    %p262 = scmp.ne.s32.totalorder %s250, %s251
    %p263 = scmp.eq.s32.totalorder %s26, 1
    %p264 = por %p262, %p263
    %p266 = scmp.ne.s32.totalorder %s251, %s265
    %p267 = scmp.eq.s32.totalorder %s26, 0
    %p268 = por %p266, %p267
    %s270 = sadd.s32 %s269, 1
    %p273 = scmp.eq.s32.totalorder %s20, 1
    %p274 = scmp.ne.s32.totalorder %s269, %s271
    %p275 = scmp.eq.s32.totalorder %s20, 0
    %p276 = por %p274, %p275
    %p277 = scmp.ne.s32.totalorder %s269, %s271
    %p278 = scmp.eq.s32.totalorder %s25, 1
    %p279 = por %p277, %p278
    %p280 = scmp.ne.s32.totalorder %s271, %s272
    %p281 = scmp.eq.s32.totalorder %s25, 0
    %p282 = por %p280, %p281
    %p283 = scmp.ne.s32.totalorder %s271, %s272
    %p284 = scmp.eq.s32.totalorder %s26, 1
    %p285 = por %p283, %p284
    %p287 = scmp.ne.s32.totalorder %s272, %s286
    %p288 = scmp.eq.s32.totalorder %s26, 0
    %p289 = por %p287, %p288
    %s291 = sadd.s32 %s290, 1
    %p294 = scmp.eq.s32.totalorder %s20, 1
    %p295 = scmp.ne.s32.totalorder %s290, %s292
    %p296 = scmp.eq.s32.totalorder %s20, 0
    %p297 = por %p295, %p296
    %p298 = scmp.ne.s32.totalorder %s290, %s292
    %p299 = scmp.eq.s32.totalorder %s25, 1
    %p300 = por %p298, %p299
    %p301 = scmp.ne.s32.totalorder %s292, %s293
    %p302 = scmp.eq.s32.totalorder %s25, 0
    %p303 = por %p301, %p302
    %p304 = scmp.ne.s32.totalorder %s292, %s293
    %p305 = scmp.eq.s32.totalorder %s26, 1
    %p306 = por %p304, %p305
    %p308 = scmp.ne.s32.totalorder %s293, %s307
    %p309 = scmp.eq.s32.totalorder %s26, 0
    %p310 = por %p308, %p309
    %s312 = sadd.s32 %s311, 1
    %p315 = scmp.eq.s32.totalorder %s20, 1
    %p316 = scmp.ne.s32.totalorder %s311, %s313
    %p317 = scmp.eq.s32.totalorder %s20, 0
    %p318 = por %p316, %p317
    %p319 = scmp.ne.s32.totalorder %s311, %s313
    %p320 = scmp.eq.s32.totalorder %s25, 1
    %p321 = por %p319, %p320
    %p322 = scmp.ne.s32.totalorder %s313, %s314
    %p323 = scmp.eq.s32.totalorder %s25, 0
    %p324 = por %p322, %p323
    %p325 = scmp.ne.s32.totalorder %s313, %s314
    %p326 = scmp.eq.s32.totalorder %s26, 1
    %p327 = por %p325, %p326
    %p329 = scmp.ne.s32.totalorder %s314, %s328
    %p330 = scmp.eq.s32.totalorder %s26, 0
    %p331 = por %p329, %p330
    %s333 = sadd.s32 %s332, 1
    %p336 = scmp.eq.s32.totalorder %s20, 1
    %p337 = scmp.ne.s32.totalorder %s332, %s334
    %p338 = scmp.eq.s32.totalorder %s20, 0
    %p339 = por %p337, %p338
    %p340 = scmp.ne.s32.totalorder %s332, %s334
    %p341 = scmp.eq.s32.totalorder %s25, 1
    %p342 = por %p340, %p341
    %p343 = scmp.ne.s32.totalorder %s334, %s335
    %p344 = scmp.eq.s32.totalorder %s25, 0
    %p345 = por %p343, %p344
    %p346 = scmp.ne.s32.totalorder %s334, %s335
    %p347 = scmp.eq.s32.totalorder %s26, 1
    %p348 = por %p346, %p347
    %p350 = scmp.ne.s32.totalorder %s335, %s349
    %p351 = scmp.eq.s32.totalorder %s26, 0
    %p352 = por %p350, %p351
    %s353 = ssub.s32 %s27, %s39
    %s354 = ssub.s32 %s28, %s35
    %s355 = sor.u32 %s353, %s354
    %p356 = scmp.eq.s32.totalorder %s355, 0
    %s358 = sadd.s32 %s357, 1
    %s359 = scalar_select %p356, %s357, %s358
    %p362 = pneg %p356
    %p363 = scmp.eq.s32.totalorder %s20, 1
    %p364 = por %p362, %p363
    %p365 = scmp.ne.s32.totalorder %s357, %s360
    %p366 = scmp.eq.s32.totalorder %s20, 0
    %p367 = por %p365, %p366
    %p368 = scmp.ne.s32.totalorder %s357, %s360
    %p369 = scmp.eq.s32.totalorder %s25, 1
    %p370 = por %p368, %p369
    %p371 = scmp.ne.s32.totalorder %s360, %s361
    %p372 = scmp.eq.s32.totalorder %s25, 0
    %p373 = por %p371, %p372
    %p374 = scmp.ne.s32.totalorder %s360, %s361
    %p375 = scmp.eq.s32.totalorder %s26, 1
    %p376 = por %p374, %p375
    %p378 = scmp.ne.s32.totalorder %s361, %s377
    %p379 = scmp.eq.s32.totalorder %s26, 0
    %p380 = por %p378, %p379
    %p381 = scmp.le.s32.totalorder 1, %s20
    %p382 = scmp.lt.s32.totalorder %s20, 3
    %p383 = pnand %p381, %p382
    %p384 = pneg %p383
    // Predicated region
    $region9: #{semantic_cnn_forward.23} parent=5 // pred_check
      _
    $region10: #{semantic_cnn_forward.23} parent=5 // pred_check_branch
      %386 = sbr.rel (%p383) target = $region12
    $region11: #{semantic_cnn_forward.23} parent=5 // pred_region
      %s387 = ssub.s32 %s20, 1
      // Predicated region
      $region13: #{semantic_cnn_forward.23} parent=11 // pred_check
        %p388 = pneg %p135
      $region14: #{semantic_cnn_forward.23} parent=11 // pred_check_branch
        %390 = sbr.rel (%p388) target = $region16
      $region15: #{semantic_cnn_forward.23} parent=11 // pred_region
        _
      $region16: #{semantic_cnn_forward.23} parent=11 // pred_fallthru
        _
      // Predicated region
      $region17: #{semantic_cnn_forward.23} parent=11 // pred_check
        %p391 = pneg %p156
      $region18: #{semantic_cnn_forward.23} parent=11 // pred_check_branch
        %393 = sbr.rel (%p391) target = $region20
      $region19: #{semantic_cnn_forward.23} parent=11 // pred_region
        _
      $region20: #{semantic_cnn_forward.23} parent=11 // pred_fallthru
        _
      // Predicated region
      $region21: #{semantic_cnn_forward.23} parent=11 // pred_check
        %p394 = pneg %p177
      $region22: #{semantic_cnn_forward.23} parent=11 // pred_check_branch
        %396 = sbr.rel (%p394) target = $region24
      $region23: #{semantic_cnn_forward.23} parent=11 // pred_region
        _
      $region24: #{semantic_cnn_forward.23} parent=11 // pred_fallthru
        _
      // Predicated region
      $region25: #{semantic_cnn_forward.23} parent=11 // pred_check
        %p397 = pneg %p198
      $region26: #{semantic_cnn_forward.23} parent=11 // pred_check_branch
        %399 = sbr.rel (%p397) target = $region28
      $region27: #{semantic_cnn_forward.23} parent=11 // pred_region
        _
      $region28: #{semantic_cnn_forward.23} parent=11 // pred_fallthru
        _
      // Predicated region
      $region29: #{semantic_cnn_forward.23} parent=11 // pred_check
        %p400 = pneg %p219
      $region30: #{semantic_cnn_forward.23} parent=11 // pred_check_branch
        %402 = sbr.rel (%p400) target = $region32
      $region31: #{semantic_cnn_forward.23} parent=11 // pred_region
        _
      $region32: #{semantic_cnn_forward.23} parent=11 // pred_fallthru
        _
      // Predicated region
      $region33: #{semantic_cnn_forward.23} parent=11 // pred_check
        %p403 = pneg %p240
      $region34: #{semantic_cnn_forward.23} parent=11 // pred_check_branch
        %405 = sbr.rel (%p403) target = $region36
      $region35: #{semantic_cnn_forward.23} parent=11 // pred_region
        _
      $region36: #{semantic_cnn_forward.23} parent=11 // pred_fallthru
        _
      // Predicated region
      $region37: #{semantic_cnn_forward.23} parent=11 // pred_check
        %p406 = pneg %p261
      $region38: #{semantic_cnn_forward.23} parent=11 // pred_check_branch
        %408 = sbr.rel (%p406) target = $region40
      $region39: #{semantic_cnn_forward.23} parent=11 // pred_region
        _
      $region40: #{semantic_cnn_forward.23} parent=11 // pred_fallthru
        _
      // Predicated region
      $region41: #{semantic_cnn_forward.23} parent=11 // pred_check
        %p409 = pneg %p282
      $region42: #{semantic_cnn_forward.23} parent=11 // pred_check_branch
        %411 = sbr.rel (%p409) target = $region44
      $region43: #{semantic_cnn_forward.23} parent=11 // pred_region
        _
      $region44: #{semantic_cnn_forward.23} parent=11 // pred_fallthru
        _
      // Predicated region
      $region45: #{semantic_cnn_forward.23} parent=11 // pred_check
        %p412 = pneg %p303
      $region46: #{semantic_cnn_forward.23} parent=11 // pred_check_branch
        %414 = sbr.rel (%p412) target = $region48
      $region47: #{semantic_cnn_forward.23} parent=11 // pred_region
        _
      $region48: #{semantic_cnn_forward.23} parent=11 // pred_fallthru
        _
      // Predicated region
      $region49: #{semantic_cnn_forward.23} parent=11 // pred_check
        %p415 = pneg %p324
      $region50: #{semantic_cnn_forward.23} parent=11 // pred_check_branch
        %417 = sbr.rel (%p415) target = $region52
      $region51: #{semantic_cnn_forward.23} parent=11 // pred_region
        _
      $region52: #{semantic_cnn_forward.23} parent=11 // pred_fallthru
        _
      // Predicated region
      $region53: #{semantic_cnn_forward.23} parent=11 // pred_check
        %p418 = pneg %p345
      $region54: #{semantic_cnn_forward.23} parent=11 // pred_check_branch
        %420 = sbr.rel (%p418) target = $region56
      $region55: #{semantic_cnn_forward.23} parent=11 // pred_region
        _
      $region56: #{semantic_cnn_forward.23} parent=11 // pred_fallthru
        _
    $region12: #{semantic_cnn_forward.23} parent=5 // pred_fallthru
      _
    %p421 = scmp.lt.s32.totalorder %s20, 2
    // Predicated region
    $region57: #{semantic_cnn_forward.23} parent=5 // pred_check
      %p422 = pneg %p421
    $region58: #{semantic_cnn_forward.23} parent=5 // pred_check_branch
      %424 = sbr.rel (%p422) target = $region60
    $region59: #{semantic_cnn_forward.23} parent=5 // pred_region
      // Predicated region
      $region61: #{semantic_cnn_forward.23} parent=59 // pred_check
        %p425 = pneg %p54
      $region62: #{semantic_cnn_forward.23} parent=59 // pred_check_branch
        %427 = sbr.rel (%p425) target = $region64
      $region63: #{semantic_cnn_forward.23} parent=59 // pred_region
        %s428 = smul.u32 2, %s28
        %p429 = scmp.lt.s32.totalorder %s27, 1
        %s430 = scalar_select %p429, %s27, 1
        %p431 = scmp.lt.s32.totalorder %s428, 1
        %s432 = scalar_select %p431, %s428, 1
        %s433 = smul.addr %s430, 2
        %s434 = sadd.s32 %s432, %s433
        %s435 = smul.addr %s434, 4
        %s436 = scalar_lea.vmem %s0, %s435
        %s437 = smul.u32 2, %s28
      $region64: #{semantic_cnn_forward.23} parent=59 // pred_fallthru
        _
      // Predicated region
      $region65: #{semantic_cnn_forward.23} parent=59 // pred_check
        %p438 = pneg %p80
      $region66: #{semantic_cnn_forward.23} parent=59 // pred_check_branch
        %440 = sbr.rel (%p438) target = $region68
      $region67: #{semantic_cnn_forward.23} parent=59 // pred_region
        %p441 = scmp.lt.s32.totalorder %s27, 1
        %s442 = scalar_select %p441, %s27, 1
        %s443 = smul.addr %s442, 2
        %s444 = smul.addr %s443, 4
        %s445 = scalar_lea.vmem %s1, %s444
      $region68: #{semantic_cnn_forward.23} parent=59 // pred_fallthru
        _
      // Predicated region
      $region69: #{semantic_cnn_forward.23} parent=59 // pred_check
        %p446 = pneg %p108
      $region70: #{semantic_cnn_forward.23} parent=59 // pred_check_branch
        %448 = sbr.rel (%p446) target = $region72
      $region71: #{semantic_cnn_forward.23} parent=59 // pred_region
        %s449 = smul.u32 2, %s28
        %p450 = scmp.lt.s32.totalorder %s27, 1
        %s451 = scalar_select %p450, %s27, 1
        %p452 = scmp.lt.s32.totalorder %s449, 1
        %s453 = scalar_select %p452, %s449, 1
        %s454 = smul.addr %s451, 2
        %s455 = sadd.s32 %s453, %s454
        %s456 = smul.addr %s455, 4
        %s457 = scalar_lea.vmem %s2, %s456
        %s458 = smul.u32 2, %s28
      $region72: #{semantic_cnn_forward.23} parent=59 // pred_fallthru
        _
    $region60: #{semantic_cnn_forward.23} parent=5 // pred_fallthru
      _
    %p459 = scmp.le.s32.totalorder 1, %s20
    %p460 = scmp.lt.s32.totalorder %s20, 3
    %p461 = pnand %p459, %p460
    %p462 = pneg %p461
    // Predicated region
    $region73: #{semantic_cnn_forward.23} parent=5 // pred_check
      _
    $region74: #{semantic_cnn_forward.23} parent=5 // pred_check_branch
      %464 = sbr.rel (%p461) target = $region76
    $region75: #{semantic_cnn_forward.23} parent=5 // pred_region
      %s465 = ssub.s32 %s20, 1
      %s466 = smul.u32 2, %s30
      %p467 = scmp.lt.s32.totalorder %s29, 1
      %s468 = scalar_select %p467, %s29, 1
      %p469 = scmp.lt.s32.totalorder %s466, 1
      %s470 = scalar_select %p469, %s466, 1
      %s471 = smul.addr %s468, 2
      %s472 = sadd.s32 %s470, %s471
      %s473 = smul.addr %s472, 4
      %s474 = scalar_lea.vmem %s0, %s473
      %p475 = pneg %p60
      %p476 = pneg %p57
      %p477 = scmp.lt.s32.totalorder %s29, 1
      %s478 = scalar_select %p477, %s29, 1
      %s479 = smul.addr %s478, 2
      %s480 = smul.addr %s479, 4
      %s481 = scalar_lea.vmem %s1, %s480
      %p482 = pneg %p86
      %p483 = pneg %p83
      %s484 = smul.u32 2, %s30
      %p485 = scmp.lt.s32.totalorder %s29, 1
      %s486 = scalar_select %p485, %s29, 1
      %p487 = scmp.lt.s32.totalorder %s484, 1
      %s488 = scalar_select %p487, %s484, 1
      %s489 = smul.addr %s486, 2
      %s490 = sadd.s32 %s488, %s489
      %s491 = smul.addr %s490, 4
      %s492 = scalar_lea.vmem %s2, %s491
      %p493 = pneg %p114
      %p494 = pneg %p111
      %p495 = pneg %p135
      %p496 = pneg %p132
      %p497 = pneg %p156
      %p498 = pneg %p153
      %p499 = pneg %p177
      %p500 = pneg %p174
      %p501 = pneg %p198
      %p502 = pneg %p195
      %p503 = pneg %p219
      %p504 = pneg %p216
      %p505 = pneg %p240
      %p506 = pneg %p237
      %p507 = pneg %p261
      %p508 = pneg %p258
      %p509 = pneg %p282
      %p510 = pneg %p279
      %p511 = pneg %p303
      %p512 = pneg %p300
      %p513 = pneg %p324
      %p514 = pneg %p321
      %p515 = pneg %p345
      %p516 = pneg %p342
      %p517 = pneg %p373
      %p518 = pneg %p370
      %s519 = smul.u32 2, %s30
      %p520 = scmp.lt.s32.totalorder %s29, 1
      %s521 = scalar_select %p520, %s29, 1
      %p522 = scmp.lt.s32.totalorder %s519, 1
      %s523 = scalar_select %p522, %s519, 1
      %s524 = smul.addr %s521, 2
      %s525 = sadd.s32 %s523, %s524
      %s526 = smul.addr %s525, 4
      %s527 = scalar_lea.vmem %s14, %s526
      %s528 = smul.u32 2, %s30
      %p529 = scmp.lt.s32.totalorder %s29, 1
      %s530 = scalar_select %p529, %s29, 1
      %p531 = scmp.lt.s32.totalorder %s528, 1
      %s532 = scalar_select %p531, %s528, 1
      %s533 = smul.addr %s530, 2
      %s534 = sadd.s32 %s532, %s533
      %s535 = smul.addr %s534, 4
      %s536 = scalar_lea.vmem %s0, %s535
      %s537 = smul.u32 2, %s30
      %p538 = scmp.lt.s32.totalorder %s29, 1
      %s539 = scalar_select %p538, %s29, 1
      %s540 = smul.addr %s539, 2
      %s541 = smul.addr %s540, 4
      %s542 = scalar_lea.vmem %s1, %s541
      %s543 = smul.u32 2, %s30
      %p544 = scmp.lt.s32.totalorder %s29, 1
      %s545 = scalar_select %p544, %s29, 1
      %p546 = scmp.lt.s32.totalorder %s543, 1
      %s547 = scalar_select %p546, %s543, 1
      %s548 = smul.addr %s545, 2
      %s549 = sadd.s32 %s547, %s548
      %s550 = smul.addr %s549, 4
      %s551 = scalar_lea.vmem %s2, %s550
      %s552 = smul.u32 2, %s30
      %s553 = smul.u32 2, %s30
      %p554 = scmp.lt.s32.totalorder %s29, 1
      %s555 = scalar_select %p554, %s29, 1
      %p556 = scmp.lt.s32.totalorder %s553, 1
      %s557 = scalar_select %p556, %s553, 1
      %s558 = smul.addr %s555, 2
      %s559 = sadd.s32 %s557, %s558
      %s560 = smul.addr %s559, 4
      %s561 = scalar_lea.vmem %s14, %s560
      %s562 = smul.u32 2, %s30
      %p564 = scmp.eq.s32.totalorder %s30, 0
      // Predicated region
      $region77: #{semantic_cnn_forward.23} parent=75 // pred_check
        %p565 = pneg %p564
      $region78: #{semantic_cnn_forward.23} parent=75 // pred_check_branch
        %567 = sbr.rel (%p565) target = $region80
      $region79: #{semantic_cnn_forward.23} parent=75 // pred_region
        %v568 = vld [vmem:[%s542] sm:$0xf]
        %v569 = vld [vmem:[%s542 + $0x4] sm:$0xf]
        %v570 = vld [vmem:[%s5] sm:$0x3]
        %v571 = vld [vmem:[%s6] sm:$0x1]
        %v573 = vperm.slane %v571, 0
        %v577 = vunpack.c.l.b16 %v568
        %v578 = vunpack.c.l.b16 %v569
        %v579 = vpack.c.b16 %v578, %v577
        %vm580 = vcmask 31744
        %v582 = vsel %vm580, %v579, 0
        %vm584 = vcmask 1041408
        %v586 = vsel %vm584, %v570, 0
        %588 = vmatpush.bf16.msra.mxu0 0
        %589 = vmatpush.bf16.msra.mxu0 0
        %590 = vmatpush.bf16.msra.mxu0 0
        %591 = vmatpush.bf16.msra.mxu0 0
        %592 = vmatpush.bf16.msra.mxu0 0
        %593 = vmatpush.bf16.msra.mxu0 0
        %594 = vmatpush.bf16.msra.mxu0 0
        %595 = vmatpush.bf16.msra.mxu0 %v586
        %596 = vmatmul.bf16.gmra.mxu0 %v582
        %v597 = vpop.f32.mrf.mxu0
        %v598 = vadd.f32 %v573, %v597
        %v599 = vpop.f32.mrf.mxu0
        %v600 = vadd.f32 %v573, %v599
        %601 = vdwg.mxu0
        %v602 = vld [vmem:[%s7] sm:$0x3]
        %v603 = vld [vmem:[%s8] sm:$0x1]
        %v605 = vperm.slane %v603, 0
        %v608 = vsel %vm584, %v602, 0
        %610 = vmatpush.bf16.msra.mxu0 0
        %611 = vmatpush.bf16.msra.mxu0 0
        %612 = vmatpush.bf16.msra.mxu0 0
        %613 = vmatpush.bf16.msra.mxu0 0
        %614 = vmatpush.bf16.msra.mxu0 0
        %615 = vmatpush.bf16.msra.mxu0 0
        %616 = vmatpush.bf16.msra.mxu0 0
        %617 = vmatpush.bf16.msra.mxu0 %v608
        %618 = vmatmul.bf16.gmra.mxu0 %v582
        %v619 = vpop.f32.mrf.mxu0
        %v620 = vadd.f32 %v605, %v619
        %v621 = vpop.f32.mrf.mxu0
        %v622 = vadd.f32 %v605, %v621
        %623 = vdwg.mxu0
        %v624 = vpack.c.bf16 %v598, %v598
        %v625 = vpack.c.bf16 %v600, %v600
        %vm626 = vcmask 27648
        %627 = vst.msk [vmem:[#allocation2] sm:$0xf] %vm626, %v624
        %628 = vst.msk [vmem:[#allocation2 + $0x4] sm:$0xf] %vm626, %v625
        %v629 = vpack.c.bf16 %v620, %v620
        %v630 = vpack.c.bf16 %v622, %v622
        %631 = vst.msk [vmem:[#allocation3] sm:$0xf] %vm626, %v629
        %632 = vst.msk [vmem:[#allocation3 + $0x4] sm:$0xf] %vm626, %v630
      $region80: #{semantic_cnn_forward.23} parent=75 // pred_fallthru
        _
      %v633 = vld [vmem:[%s536] sm:$0xf]
      %v634 = vld [vmem:[%s536 + $0x4] sm:$0xf]
      %v635 = vld [vmem:[%s3] sm:$0x3]
      %v636 = vld [vmem:[%s4] sm:$0x1]
      %v638 = vperm.slane %v636, 0
      %v642 = vunpack.c.l.b16 %v633
      %v643 = vunpack.c.l.b16 %v634
      %v644 = vpack.c.b16 %v643, %v642
      %vm645 = vcmask 31744
      %v647 = vsel %vm645, %v644, 0
      %vm649 = vcmask 1041408
      %v651 = vsel %vm649, %v635, 0
      %653 = vmatpush.bf16.msra.mxu0 0
      %654 = vmatpush.bf16.msra.mxu0 0
      %655 = vmatpush.bf16.msra.mxu0 0
      %656 = vmatpush.bf16.msra.mxu0 0
      %657 = vmatpush.bf16.msra.mxu0 0
      %658 = vmatpush.bf16.msra.mxu0 0
      %659 = vmatpush.bf16.msra.mxu0 0
      %660 = vmatpush.bf16.msra.mxu0 %v651
      %661 = vmatmul.bf16.gmra.mxu0 %v647
      %v662 = vpop.f32.mrf.mxu0
      %v663 = vadd.f32 %v638, %v662
      %v664 = vpop.f32.mrf.mxu0
      %v665 = vadd.f32 %v638, %v664
      %666 = vdwg.mxu0
      %v667 = vpack.c.bf16 %v665, %v663
      %v668 = vld [vmem:[#allocation2] sm:$0xf]
      %v669 = vld [vmem:[#allocation2 + $0x4] sm:$0xf]
      %v672 = vunpack.c.l.b16 %v668
      %v673 = vunpack.c.l.b16 %v669
      %v674 = vpack.c.b16 %v673, %v672
      %v676 = vsel %vm645, %v667, 0
      %v679 = vsel %vm645, %v674, 0
      %681 = vmatpush.bf16.xpose.msra.mxu0 0
      %682 = vmatpush.bf16.xpose.msra.mxu0 0
      %683 = vmatpush.bf16.xpose.msra.mxu0 0
      %684 = vmatpush.bf16.xpose.msra.mxu0 0
      %685 = vmatpush.bf16.xpose.msra.mxu0 0
      %686 = vmatpush.bf16.xpose.msra.mxu0 0
      %687 = vmatpush.bf16.xpose.msra.mxu0 0
      %688 = vmatpush.bf16.xpose.msra.mxu0 %v679
      %689 = vmatmul.bf16.gmra.mxu0 %v676
      %v690 = vpop.f32.mrf.mxu0
      %v691 = vadd.f32 0.0, %v690
      %v692 = vpop.f32.mrf.mxu0
      %v693 = vadd.f32 0.0, %v692
      %694 = vdwg.mxu0
      %v695 = vmul.f32 %v691, 0.5
      %v696 = vmul.f32 %v693, 0.5
      %vm697 = vcmask 130048
      %v698 = vsel %vm697, %v695, -inf
      %699 = vmax.xlane.f32.xlu0 %v698
      %v700 = vpop.xlane.xlu0 %699
      %v701 = vsel %vm697, %v696, -inf
      %702 = vmax.xlane.f32.xlu0 %v701
      %v703 = vpop.xlane.xlu0 %702
      %v704 = vsub.f32 %v695, %v700
      %v705 = vsub.f32 %v696, %v703
      %v706 = vmul.f32 %v704, 1.442695
      %v707 = vpow.pop %v706
      %v708 = vmul.f32 %v705, 1.442695
      %v709 = vpow.pop %v708
      %v710 = vsel %vm697, %v707, 0.0
      %711 = vadd.xlane.f32.xlu0 %v710
      %v712 = vpop.xlane.xlu0 %711
      %v713 = vsel %vm697, %v709, 0.0
      %714 = vadd.xlane.f32.xlu0 %v713
      %v715 = vpop.xlane.xlu0 %714
      %v716 = vrcp.pop %v712
      %v717 = vrcp.pop %v715
      %v718 = vmul.f32 %v707, %v716
      %v719 = vmul.f32 %v709, %v717
      %v720 = vpack.c.bf16 %v719, %v718
      %v721 = vld [vmem:[#allocation3] sm:$0xf]
      %v722 = vld [vmem:[#allocation3 + $0x4] sm:$0xf]
      %v725 = vunpack.c.l.b16 %v721
      %v726 = vunpack.c.l.b16 %v722
      %v727 = vpack.c.b16 %v726, %v725
      %v730 = vsel %vm697, %v720, 0
      %732 = vmatpush.bf16.msra.mxu0 0
      %733 = vmatpush.bf16.msra.mxu0 0
      %734 = vmatpush.bf16.msra.mxu0 0
      %735 = vmatpush.bf16.msra.mxu0 0
      %736 = vmatpush.bf16.msra.mxu0 0
      %737 = vmatpush.bf16.msra.mxu0 0
      %738 = vmatpush.bf16.msra.mxu0 0
      %739 = vmatpush.bf16.msra.mxu0 %v727
      %740 = vmatmul.bf16.gmra.mxu0 %v730
      %v741 = vpop.f32.mrf.mxu0
      %v742 = vadd.f32 0.0, %v741
      %v743 = vpop.f32.mrf.mxu0
      %v744 = vadd.f32 0.0, %v743
      %745 = vdwg.mxu0
      %v746 = vpack.c.bf16 %v744, %v742
      %v747 = vld [vmem:[%s9] sm:$0x3]
      %v748 = vld [vmem:[%s10] sm:$0x1]
      %v750 = vperm.slane %v748, 0
      %v753 = vsel %vm645, %v746, 0
      %v756 = vsel %vm649, %v747, 0
      %758 = vmatpush.bf16.msra.mxu0 0
      %759 = vmatpush.bf16.msra.mxu0 0
      %760 = vmatpush.bf16.msra.mxu0 0
      %761 = vmatpush.bf16.msra.mxu0 0
      %762 = vmatpush.bf16.msra.mxu0 0
      %763 = vmatpush.bf16.msra.mxu0 0
      %764 = vmatpush.bf16.msra.mxu0 0
      %765 = vmatpush.bf16.msra.mxu0 %v756
      %766 = vmatmul.bf16.gmra.mxu0 %v753
      %v767 = vpop.f32.mrf.mxu0
      %v768 = vadd.f32 %v750, %v767
      %v769 = vpop.f32.mrf.mxu0
      %v770 = vadd.f32 %v750, %v769
      %771 = vdwg.mxu0
      %vm772 = vcmp.gt.f32.partialorder %v768, 0.0
      %vm773 = vcmp.gt.f32.partialorder %v770, 0.0
      %v774 = vmul.f32 %v768, 0.01
      %v775 = vmul.f32 %v770, 0.01
      %v776 = vsel %vm772, %v768, %v774
      %v777 = vsel %vm773, %v770, %v775
      %v778 = vld [vmem:[%s551] sm:$0xf]
      %v779 = vld [vmem:[%s551 + $0x4] sm:$0xf]
      %v780 = vld [vmem:[%s11] sm:$0xf]
      %v781 = vpack.c.bf16 %v777, %v776
      %v782 = vld [vmem:[%s12] sm:$0xf]
      %vm783 = vcmask 64512
      %v785 = vsel %vm783, %v781, 0
      %vm787 = vcmask 1043456
      %v789 = vsel %vm787, %v782, 0
      %791 = vmatpush.bf16.msra.mxu0 0
      %792 = vmatpush.bf16.msra.mxu0 0
      %793 = vmatpush.bf16.msra.mxu0 0
      %794 = vmatpush.bf16.msra.mxu0 0
      %795 = vmatpush.bf16.msra.mxu0 0
      %796 = vmatpush.bf16.msra.mxu0 0
      %797 = vmatpush.bf16.msra.mxu0 0
      %798 = vmatpush.bf16.msra.mxu0 %v789
      %799 = vmatmul.bf16.gmra.mxu0 %v785
      %v800 = vpop.f32.mrf.mxu0
      %v801 = vadd.f32 0.0, %v800
      %v802 = vpop.f32.mrf.mxu0
      %v803 = vadd.f32 0.0, %v802
      %804 = vdwg.mxu0
      %v807 = vunpack.c.l.b16 %v778
      %v808 = vunpack.c.l.b16 %v779
      %v809 = vpack.c.b16 %v808, %v807
      %v811 = vsel %vm783, %v809, 0
      %v814 = vsel %vm787, %v780, 0
      %816 = vmatpush.bf16.msra.mxu0 0
      %817 = vmatpush.bf16.msra.mxu0 0
      %818 = vmatpush.bf16.msra.mxu0 0
      %819 = vmatpush.bf16.msra.mxu0 0
      %820 = vmatpush.bf16.msra.mxu0 0
      %821 = vmatpush.bf16.msra.mxu0 0
      %822 = vmatpush.bf16.msra.mxu0 0
      %823 = vmatpush.bf16.msra.mxu0 %v814
      %824 = vmatmul.bf16.gmra.mxu0 %v811
      %v825 = vpop.f32.mrf.mxu0
      %v826 = vadd.f32 %v801, %v825
      %v827 = vpop.f32.mrf.mxu0
      %v828 = vadd.f32 %v803, %v827
      %829 = vdwg.mxu0
      %v830 = vld [vmem:[%s13] sm:$0x1]
      %v832 = vperm.slane %v830, 0
      %v834 = vadd.f32 %v826, %v832
      %v835 = vadd.f32 %v828, %v832
      %vm836 = vcmp.gt.f32.partialorder %v834, 0.0
      %vm837 = vcmp.gt.f32.partialorder %v835, 0.0
      %v838 = vmul.f32 %v834, 0.01
      %v839 = vmul.f32 %v835, 0.01
      %v840 = vsel %vm836, %v834, %v838
      %v841 = vsel %vm837, %v835, %v839
      %v842 = vpack.c.bf16 %v840, %v840
      %v843 = vpack.c.bf16 %v841, %v841
      %vm844 = vcmask 60416
      %845 = vst.msk [vmem:[%s561] sm:$0xf] %vm844, %v842
      %846 = vst.msk [vmem:[%s561 + $0x4] sm:$0xf] %vm844, %v843
      %s847 = smul.u32 2, %s30
      %p848 = scmp.lt.s32.totalorder %s29, 1
      %s849 = scalar_select %p848, %s29, 1
      %p850 = scmp.lt.s32.totalorder %s847, 1
      %s851 = scalar_select %p850, %s847, 1
      %s852 = smul.addr %s849, 2
      %s853 = sadd.s32 %s851, %s852
      %s854 = smul.addr %s853, 4
      %s855 = scalar_lea.vmem %s14, %s854
      // Predicated region
      $region81: #{semantic_cnn_forward.23} parent=75 // pred_check
        %p856 = pneg %p370
      $region82: #{semantic_cnn_forward.23} parent=75 // pred_check_branch
        %858 = sbr.rel (%p856) target = $region84
      $region83: #{semantic_cnn_forward.23} parent=75 // pred_region
        %s859 = smul.u32 2, %s30
      $region84: #{semantic_cnn_forward.23} parent=75 // pred_fallthru
        _
    $region76: #{semantic_cnn_forward.23} parent=5 // pred_fallthru
      _
    %p860 = scmp.le.s32.totalorder 2, %s20
    // Predicated region
    $region85: #{semantic_cnn_forward.23} parent=5 // pred_check
      %p861 = pneg %p860
    $region86: #{semantic_cnn_forward.23} parent=5 // pred_check_branch
      %863 = sbr.rel (%p861) target = $region88
    $region87: #{semantic_cnn_forward.23} parent=5 // pred_region
      %s864 = ssub.s32 %s20, 2
      // Predicated region
      $region89: #{semantic_cnn_forward.23} parent=87 // pred_check
        %p865 = pneg %p376
      $region90: #{semantic_cnn_forward.23} parent=87 // pred_check_branch
        %867 = sbr.rel (%p865) target = $region92
      $region91: #{semantic_cnn_forward.23} parent=87 // pred_region
        %s868 = smul.u32 2, %s32
        %p869 = scmp.lt.s32.totalorder %s31, 1
        %s870 = scalar_select %p869, %s31, 1
        %p871 = scmp.lt.s32.totalorder %s868, 1
        %s872 = scalar_select %p871, %s868, 1
        %s873 = smul.addr %s870, 2
        %s874 = sadd.s32 %s872, %s873
        %s875 = smul.addr %s874, 4
        %s876 = scalar_lea.vmem %s14, %s875
      $region92: #{semantic_cnn_forward.23} parent=87 // pred_fallthru
        _
    $region88: #{semantic_cnn_forward.23} parent=5 // pred_fallthru
      _
  $region6: #{semantic_cnn_forward.23} parent=0 // loop_footer
    %s24 = sadd.s32 1, %s20
  $region7: #{semantic_cnn_forward.23} parent=0 // loop_footer_branch
    %19 = sbr.rel target = $region3
  $region8: #{semantic_cnn_forward.23} parent=0 // loop_exit
    _

// kernel: semantic_cnn_forward.25
$region0: #{semantic_cnn_forward.25}
  #allocation0 [shape = 'u32[]', space=smem, size = 0x4, offset = 0x4, fixed_abs, tag = 'smem constant byte address 0x4 - core index']
  #allocation1 [shape = 'u32[72,128]{1,0:T(1,128)}', space=vmem, size = 0x9000, scoped, tag = 'internal scratch']
  %s0 = inlined_call_operand.vmem [shape: bf16[32,8], index: 0, kind: input, shape index: {}]
  %s1 = inlined_call_operand.vmem [shape: bf16[4,32,8], index: 1, kind: input, shape index: {}]
  %s2 = inlined_call_operand.vmem [shape: bf16[8,16], index: 2, kind: input, shape index: {}]
  %s3 = inlined_call_operand.vmem [shape: bf16[8,16], index: 3, kind: input, shape index: {}]
  %s4 = inlined_call_operand.vmem [shape: f32[1,16], index: 4, kind: input, shape index: {}]
  %s5 = inlined_call_operand.vmem [shape: f32[1,16], index: 5, kind: input, shape index: {}]
  %s6 = inlined_call_operand.vmem [shape: bf16[32,16], index: 6, kind: output, shape index: {}]
  %s7 = sld [smem:[#allocation0]]
  $region34: #{semantic_cnn_forward.25} parent=0
    _
  %s9 = ssub.s32 1, %s7
  %s10 = scalar_select 0, %s9, %s7
  // Predicated region
  $region2: #{semantic_cnn_forward.25} parent=0 // pred_check
    _
  $region3: #{semantic_cnn_forward.25} parent=0 // pred_check_branch
    %12 = sbr.rel (0) target = $region5
  $region4: #{semantic_cnn_forward.25} parent=0 // pred_region
    _
  $region5: #{semantic_cnn_forward.25} parent=0 // pred_fallthru
    _
  // Predicated region
  $region6: #{semantic_cnn_forward.25} parent=0 // pred_check
    _
  $region7: #{semantic_cnn_forward.25} parent=0 // pred_check_branch
    %14 = sbr.rel (0) target = $region9
  $region8: #{semantic_cnn_forward.25} parent=0 // pred_region
    _
  $region9: #{semantic_cnn_forward.25} parent=0 // pred_fallthru
    _
  // Predicated region
  $region10: #{semantic_cnn_forward.25} parent=0 // pred_check
    _
  $region11: #{semantic_cnn_forward.25} parent=0 // pred_check_branch
    %16 = sbr.rel (0) target = $region13
  $region12: #{semantic_cnn_forward.25} parent=0 // pred_region
    _
  $region13: #{semantic_cnn_forward.25} parent=0 // pred_fallthru
    _
  // Predicated region
  $region14: #{semantic_cnn_forward.25} parent=0 // pred_check
    _
  $region15: #{semantic_cnn_forward.25} parent=0 // pred_check_branch
    %18 = sbr.rel (0) target = $region17
  $region16: #{semantic_cnn_forward.25} parent=0 // pred_region
    _
  $region17: #{semantic_cnn_forward.25} parent=0 // pred_fallthru
    _
  // Predicated region
  $region18: #{semantic_cnn_forward.25} parent=0 // pred_check
    _
  $region19: #{semantic_cnn_forward.25} parent=0 // pred_check_branch
    %20 = sbr.rel (0) target = $region21
  $region20: #{semantic_cnn_forward.25} parent=0 // pred_region
    _
  $region21: #{semantic_cnn_forward.25} parent=0 // pred_fallthru
    _
  // Predicated region
  $region22: #{semantic_cnn_forward.25} parent=0 // pred_check
    _
  $region23: #{semantic_cnn_forward.25} parent=0 // pred_check_branch
    %22 = sbr.rel (0) target = $region25
  $region24: #{semantic_cnn_forward.25} parent=0 // pred_region
    _
  $region25: #{semantic_cnn_forward.25} parent=0 // pred_fallthru
    _
  %v24 = vld [vmem:[%s0] sm:$0xf]
  %v25 = vld [vmem:[%s0 + $0x4] sm:$0xf]
  %v26 = vld [vmem:[%s0 + $0x8] sm:$0xf]
  %v27 = vld [vmem:[%s0 + $0xc] sm:$0xf]
  %v28 = vld [vmem:[%s2] sm:$0xf]
  %v29 = vunpack.c.l.bf16 %v24
  %v30 = vunpack.c.l.bf16 %v25
  %v31 = vunpack.c.l.bf16 %v26
  %v32 = vunpack.c.l.bf16 %v27
  %v33 = vld [vmem:[%s4] sm:$0x1]
  %v34 = vld [vmem:[%s1] sm:$0xf]
  %v35 = vld [vmem:[%s1 + $0x4] sm:$0xf]
  %v36 = vld [vmem:[%s1 + $0x8] sm:$0xf]
  %v37 = vld [vmem:[%s1 + $0xc] sm:$0xf]
  %v38 = vld [vmem:[%s3] sm:$0xf]
  %v39 = vunpack.c.l.bf16 %v34
  %v40 = vunpack.c.l.bf16 %v35
  %v41 = vunpack.c.l.bf16 %v36
  %v42 = vunpack.c.l.bf16 %v37
  %v43 = vsub.f32 %v39, %v29
  %v44 = vsub.f32 %v40, %v30
  %v45 = vsub.f32 %v41, %v31
  %v46 = vsub.f32 %v42, %v32
  %v47 = vmul.f32 %v43, %v43
  %v48 = vmul.f32 %v44, %v44
  %v49 = vmul.f32 %v45, %v45
  %v50 = vmul.f32 %v46, %v46
  %vm51 = vcmask 64512
  %v52 = vsel %vm51, %v47, 0.0
  %53 = vadd.xlane.f32.xlu0 %v52
  %v54 = vpop.xlane.xlu0 %53
  %v55 = vsel %vm51, %v48, 0.0
  %56 = vadd.xlane.f32.xlu0 %v55
  %v57 = vpop.xlane.xlu0 %56
  %v58 = vsel %vm51, %v49, 0.0
  %59 = vadd.xlane.f32.xlu0 %v58
  %v60 = vpop.xlane.xlu0 %59
  %v61 = vsel %vm51, %v50, 0.0
  %62 = vadd.xlane.f32.xlu0 %v61
  %v63 = vpop.xlane.xlu0 %62
  %v64 = vrsqrt.pop %v54
  %v65 = vmul.f32 %v64, %v54
  %v66 = vmul.f32 %v65, %v64
  %v67 = vmul.f32 0.5, %v66
  %v68 = vsub.f32 1.5, %v67
  %v69 = vmul.f32 %v64, %v68
  %v70 = vmul.f32 %v54, %v69
  %vm71 = vcmp.eq.f32.partialorder %v54, inf
  %v72 = vsel %vm71, %v54, %v70
  %vm73 = vcmp.eq.f32.partialorder %v54, 0.0
  %v74 = vand.u32 %v54, 2147483648
  %v75 = vsel %vm73, %v74, %v72
  %v76 = vrsqrt.pop %v57
  %v77 = vmul.f32 %v76, %v57
  %v78 = vmul.f32 %v77, %v76
  %v79 = vmul.f32 0.5, %v78
  %v80 = vsub.f32 1.5, %v79
  %v81 = vmul.f32 %v76, %v80
  %v82 = vmul.f32 %v57, %v81
  %vm83 = vcmp.eq.f32.partialorder %v57, inf
  %v84 = vsel %vm83, %v57, %v82
  %vm85 = vcmp.eq.f32.partialorder %v57, 0.0
  %v86 = vand.u32 %v57, 2147483648
  %v87 = vsel %vm85, %v86, %v84
  %v88 = vrsqrt.pop %v60
  %v89 = vmul.f32 %v88, %v60
  %v90 = vmul.f32 %v89, %v88
  %v91 = vmul.f32 0.5, %v90
  %v92 = vsub.f32 1.5, %v91
  %v93 = vmul.f32 %v88, %v92
  %v94 = vmul.f32 %v60, %v93
  %vm95 = vcmp.eq.f32.partialorder %v60, inf
  %v96 = vsel %vm95, %v60, %v94
  %vm97 = vcmp.eq.f32.partialorder %v60, 0.0
  %v98 = vand.u32 %v60, 2147483648
  %v99 = vsel %vm97, %v98, %v96
  %v100 = vrsqrt.pop %v63
  %v101 = vmul.f32 %v100, %v63
  %v102 = vmul.f32 %v101, %v100
  %v103 = vmul.f32 0.5, %v102
  %v104 = vsub.f32 1.5, %v103
  %v105 = vmul.f32 %v100, %v104
  %v106 = vmul.f32 %v63, %v105
  %vm107 = vcmp.eq.f32.partialorder %v63, inf
  %v108 = vsel %vm107, %v63, %v106
  %vm109 = vcmp.eq.f32.partialorder %v63, 0.0
  %v110 = vand.u32 %v63, 2147483648
  %v111 = vsel %vm109, %v110, %v108
  %v113 = vperm.slane %v33, 0
  %v115 = vmul.f32 %v75, %v113
  %v116 = vmul.f32 %v87, %v113
  %v117 = vmul.f32 %v99, %v113
  %v118 = vmul.f32 %v111, %v113
  %v123 = vunpack.c.l.b16 %v34
  %v124 = vunpack.c.l.b16 %v35
  %v125 = vunpack.c.l.b16 %v36
  %v126 = vunpack.c.l.b16 %v37
  %v127 = vpack.c.b16 %v124, %v123
  %v128 = vpack.c.b16 %v126, %v125
  %v130 = vsel %vm51, %v127, 0
  %v133 = vsel %vm51, %v128, 0
  %vm135 = vcmask 1043456
  %v137 = vsel %vm135, %v38, 0
  %139 = vmatpush.bf16.msra.mxu0 0
  %140 = vmatpush.bf16.msra.mxu0 0
  %141 = vmatpush.bf16.msra.mxu0 0
  %142 = vmatpush.bf16.msra.mxu0 0
  %143 = vmatpush.bf16.msra.mxu0 0
  %144 = vmatpush.bf16.msra.mxu0 0
  %145 = vmatpush.bf16.msra.mxu0 0
  %146 = vmatpush.bf16.msra.mxu0 %v137
  %147 = vmatmul.bf16.gmra.mxu0 %v130
  %v148 = vpop.f32.mrf.mxu0
  %v149 = vadd.f32 %v115, %v148
  %v150 = vpop.f32.mrf.mxu0
  %v151 = vadd.f32 %v116, %v150
  %152 = vmatmul.bf16.gmra.mxu0 %v133
  %v153 = vpop.f32.mrf.mxu0
  %v154 = vadd.f32 %v117, %v153
  %v155 = vpop.f32.mrf.mxu0
  %v156 = vadd.f32 %v118, %v155
  %157 = vdwg.mxu0
  %s158 = scalar_lea.vmem %s1, 16
  %v159 = vld [vmem:[%s158] sm:$0xf]
  %v160 = vld [vmem:[%s158 + $0x4] sm:$0xf]
  %v161 = vld [vmem:[%s158 + $0x8] sm:$0xf]
  %v162 = vld [vmem:[%s158 + $0xc] sm:$0xf]
  %v163 = vunpack.c.l.bf16 %v159
  %v164 = vunpack.c.l.bf16 %v160
  %v165 = vunpack.c.l.bf16 %v161
  %v166 = vunpack.c.l.bf16 %v162
  %v167 = vsub.f32 %v163, %v29
  %v168 = vsub.f32 %v164, %v30
  %v169 = vsub.f32 %v165, %v31
  %v170 = vsub.f32 %v166, %v32
  %v171 = vmul.f32 %v167, %v167
  %v172 = vmul.f32 %v168, %v168
  %v173 = vmul.f32 %v169, %v169
  %v174 = vmul.f32 %v170, %v170
  %v175 = vsel %vm51, %v171, 0.0
  %176 = vadd.xlane.f32.xlu0 %v175
  %v177 = vpop.xlane.xlu0 %176
  %v178 = vsel %vm51, %v172, 0.0
  %179 = vadd.xlane.f32.xlu0 %v178
  %v180 = vpop.xlane.xlu0 %179
  %v181 = vsel %vm51, %v173, 0.0
  %182 = vadd.xlane.f32.xlu0 %v181
  %v183 = vpop.xlane.xlu0 %182
  %v184 = vsel %vm51, %v174, 0.0
  %185 = vadd.xlane.f32.xlu0 %v184
  %v186 = vpop.xlane.xlu0 %185
  %v187 = vrsqrt.pop %v177
  %v188 = vmul.f32 %v187, %v177
  %v189 = vmul.f32 %v188, %v187
  %v190 = vmul.f32 0.5, %v189
  %v191 = vsub.f32 1.5, %v190
  %v192 = vmul.f32 %v187, %v191
  %v193 = vmul.f32 %v177, %v192
  %vm194 = vcmp.eq.f32.partialorder %v177, inf
  %v195 = vsel %vm194, %v177, %v193
  %vm196 = vcmp.eq.f32.partialorder %v177, 0.0
  %v197 = vand.u32 %v177, 2147483648
  %v198 = vsel %vm196, %v197, %v195
  %v199 = vrsqrt.pop %v180
  %v200 = vmul.f32 %v199, %v180
  %v201 = vmul.f32 %v200, %v199
  %v202 = vmul.f32 0.5, %v201
  %v203 = vsub.f32 1.5, %v202
  %v204 = vmul.f32 %v199, %v203
  %v205 = vmul.f32 %v180, %v204
  %vm206 = vcmp.eq.f32.partialorder %v180, inf
  %v207 = vsel %vm206, %v180, %v205
  %vm208 = vcmp.eq.f32.partialorder %v180, 0.0
  %v209 = vand.u32 %v180, 2147483648
  %v210 = vsel %vm208, %v209, %v207
  %v211 = vrsqrt.pop %v183
  %v212 = vmul.f32 %v211, %v183
  %v213 = vmul.f32 %v212, %v211
  %v214 = vmul.f32 0.5, %v213
  %v215 = vsub.f32 1.5, %v214
  %v216 = vmul.f32 %v211, %v215
  %v217 = vmul.f32 %v183, %v216
  %vm218 = vcmp.eq.f32.partialorder %v183, inf
  %v219 = vsel %vm218, %v183, %v217
  %vm220 = vcmp.eq.f32.partialorder %v183, 0.0
  %v221 = vand.u32 %v183, 2147483648
  %v222 = vsel %vm220, %v221, %v219
  %v223 = vrsqrt.pop %v186
  %v224 = vmul.f32 %v223, %v186
  %v225 = vmul.f32 %v224, %v223
  %v226 = vmul.f32 0.5, %v225
  %v227 = vsub.f32 1.5, %v226
  %v228 = vmul.f32 %v223, %v227
  %v229 = vmul.f32 %v186, %v228
  %vm230 = vcmp.eq.f32.partialorder %v186, inf
  %v231 = vsel %vm230, %v186, %v229
  %vm232 = vcmp.eq.f32.partialorder %v186, 0.0
  %v233 = vand.u32 %v186, 2147483648
  %v234 = vsel %vm232, %v233, %v231
  %v235 = vmul.f32 %v198, %v113
  %v236 = vmul.f32 %v210, %v113
  %v237 = vmul.f32 %v222, %v113
  %v238 = vmul.f32 %v234, %v113
  %v243 = vunpack.c.l.b16 %v159
  %v244 = vunpack.c.l.b16 %v160
  %v245 = vunpack.c.l.b16 %v161
  %v246 = vunpack.c.l.b16 %v162
  %v247 = vpack.c.b16 %v244, %v243
  %v248 = vpack.c.b16 %v246, %v245
  %v250 = vsel %vm51, %v247, 0
  %v253 = vsel %vm51, %v248, 0
  %255 = vmatpush.bf16.msra.mxu0 0
  %256 = vmatpush.bf16.msra.mxu0 0
  %257 = vmatpush.bf16.msra.mxu0 0
  %258 = vmatpush.bf16.msra.mxu0 0
  %259 = vmatpush.bf16.msra.mxu0 0
  %260 = vmatpush.bf16.msra.mxu0 0
  %261 = vmatpush.bf16.msra.mxu0 0
  %262 = vmatpush.bf16.msra.mxu0 %v137
  %263 = vmatmul.bf16.gmra.mxu0 %v250
  %v264 = vpop.f32.mrf.mxu0
  %v265 = vadd.f32 %v235, %v264
  %v266 = vpop.f32.mrf.mxu0
  %v267 = vadd.f32 %v236, %v266
  %268 = vmatmul.bf16.gmra.mxu0 %v253
  %v269 = vpop.f32.mrf.mxu0
  %v270 = vadd.f32 %v237, %v269
  %v271 = vpop.f32.mrf.mxu0
  %v272 = vadd.f32 %v238, %v271
  %273 = vdwg.mxu0
  %v274 = vmax.f32 %v149, %v265
  %v275 = vmax.f32 %v151, %v267
  %v276 = vmax.f32 %v154, %v270
  %v277 = vmax.f32 %v156, %v272
  %s278 = scalar_lea.vmem %s1, 32
  %v279 = vld [vmem:[%s278] sm:$0xf]
  %v280 = vld [vmem:[%s278 + $0x4] sm:$0xf]
  %v281 = vld [vmem:[%s278 + $0x8] sm:$0xf]
  %v282 = vld [vmem:[%s278 + $0xc] sm:$0xf]
  %v283 = vunpack.c.l.bf16 %v279
  %v284 = vunpack.c.l.bf16 %v280
  %v285 = vunpack.c.l.bf16 %v281
  %v286 = vunpack.c.l.bf16 %v282
  %v287 = vsub.f32 %v283, %v29
  %v288 = vsub.f32 %v284, %v30
  %v289 = vsub.f32 %v285, %v31
  %v290 = vsub.f32 %v286, %v32
  %v291 = vmul.f32 %v287, %v287
  %v292 = vmul.f32 %v288, %v288
  %v293 = vmul.f32 %v289, %v289
  %v294 = vmul.f32 %v290, %v290
  %v295 = vsel %vm51, %v291, 0.0
  %296 = vadd.xlane.f32.xlu0 %v295
  %v297 = vpop.xlane.xlu0 %296
  %v298 = vsel %vm51, %v292, 0.0
  %299 = vadd.xlane.f32.xlu0 %v298
  %v300 = vpop.xlane.xlu0 %299
  %v301 = vsel %vm51, %v293, 0.0
  %302 = vadd.xlane.f32.xlu0 %v301
  %v303 = vpop.xlane.xlu0 %302
  %v304 = vsel %vm51, %v294, 0.0
  %305 = vadd.xlane.f32.xlu0 %v304
  %v306 = vpop.xlane.xlu0 %305
  %v307 = vrsqrt.pop %v297
  %v308 = vmul.f32 %v307, %v297
  %v309 = vmul.f32 %v308, %v307
  %v310 = vmul.f32 0.5, %v309
  %v311 = vsub.f32 1.5, %v310
  %v312 = vmul.f32 %v307, %v311
  %v313 = vmul.f32 %v297, %v312
  %vm314 = vcmp.eq.f32.partialorder %v297, inf
  %v315 = vsel %vm314, %v297, %v313
  %vm316 = vcmp.eq.f32.partialorder %v297, 0.0
  %v317 = vand.u32 %v297, 2147483648
  %v318 = vsel %vm316, %v317, %v315
  %v319 = vrsqrt.pop %v300
  %v320 = vmul.f32 %v319, %v300
  %v321 = vmul.f32 %v320, %v319
  %v322 = vmul.f32 0.5, %v321
  %v323 = vsub.f32 1.5, %v322
  %v324 = vmul.f32 %v319, %v323
  %v325 = vmul.f32 %v300, %v324
  %vm326 = vcmp.eq.f32.partialorder %v300, inf
  %v327 = vsel %vm326, %v300, %v325
  %vm328 = vcmp.eq.f32.partialorder %v300, 0.0
  %v329 = vand.u32 %v300, 2147483648
  %v330 = vsel %vm328, %v329, %v327
  %v331 = vrsqrt.pop %v303
  %v332 = vmul.f32 %v331, %v303
  %v333 = vmul.f32 %v332, %v331
  %v334 = vmul.f32 0.5, %v333
  %v335 = vsub.f32 1.5, %v334
  %v336 = vmul.f32 %v331, %v335
  %v337 = vmul.f32 %v303, %v336
  %vm338 = vcmp.eq.f32.partialorder %v303, inf
  %v339 = vsel %vm338, %v303, %v337
  %vm340 = vcmp.eq.f32.partialorder %v303, 0.0
  %v341 = vand.u32 %v303, 2147483648
  %v342 = vsel %vm340, %v341, %v339
  %v343 = vrsqrt.pop %v306
  %v344 = vmul.f32 %v343, %v306
  %v345 = vmul.f32 %v344, %v343
  %v346 = vmul.f32 0.5, %v345
  %v347 = vsub.f32 1.5, %v346
  %v348 = vmul.f32 %v343, %v347
  %v349 = vmul.f32 %v306, %v348
  %vm350 = vcmp.eq.f32.partialorder %v306, inf
  %v351 = vsel %vm350, %v306, %v349
  %vm352 = vcmp.eq.f32.partialorder %v306, 0.0
  %v353 = vand.u32 %v306, 2147483648
  %v354 = vsel %vm352, %v353, %v351
  %v355 = vmul.f32 %v318, %v113
  %v356 = vmul.f32 %v330, %v113
  %v357 = vmul.f32 %v342, %v113
  %v358 = vmul.f32 %v354, %v113
  %v363 = vunpack.c.l.b16 %v279
  %v364 = vunpack.c.l.b16 %v280
  %v365 = vunpack.c.l.b16 %v281
  %v366 = vunpack.c.l.b16 %v282
  %v367 = vpack.c.b16 %v364, %v363
  %v368 = vpack.c.b16 %v366, %v365
  %v370 = vsel %vm51, %v367, 0
  %v373 = vsel %vm51, %v368, 0
  %375 = vmatpush.bf16.msra.mxu0 0
  %376 = vmatpush.bf16.msra.mxu0 0
  %377 = vmatpush.bf16.msra.mxu0 0
  %378 = vmatpush.bf16.msra.mxu0 0
  %379 = vmatpush.bf16.msra.mxu0 0
  %380 = vmatpush.bf16.msra.mxu0 0
  %381 = vmatpush.bf16.msra.mxu0 0
  %382 = vmatpush.bf16.msra.mxu0 %v137
  %383 = vmatmul.bf16.gmra.mxu0 %v370
  %v384 = vpop.f32.mrf.mxu0
  %v385 = vadd.f32 %v355, %v384
  %v386 = vpop.f32.mrf.mxu0
  %v387 = vadd.f32 %v356, %v386
  %388 = vmatmul.bf16.gmra.mxu0 %v373
  %v389 = vpop.f32.mrf.mxu0
  %v390 = vadd.f32 %v357, %v389
  %v391 = vpop.f32.mrf.mxu0
  %v392 = vadd.f32 %v358, %v391
  %393 = vdwg.mxu0
  %v394 = vmax.f32 %v274, %v385
  %v395 = vmax.f32 %v275, %v387
  %v396 = vmax.f32 %v276, %v390
  %v397 = vmax.f32 %v277, %v392
  %s398 = scalar_lea.vmem %s1, 48
  %v399 = vld [vmem:[%s398] sm:$0xf]
  %v400 = vld [vmem:[%s398 + $0x4] sm:$0xf]
  %v401 = vld [vmem:[%s398 + $0x8] sm:$0xf]
  %v402 = vld [vmem:[%s398 + $0xc] sm:$0xf]
  %v403 = vunpack.c.l.bf16 %v399
  %v404 = vunpack.c.l.bf16 %v400
  %v405 = vunpack.c.l.bf16 %v401
  %v406 = vunpack.c.l.bf16 %v402
  %v407 = vsub.f32 %v403, %v29
  %v408 = vsub.f32 %v404, %v30
  %v409 = vsub.f32 %v405, %v31
  %v410 = vsub.f32 %v406, %v32
  %v411 = vmul.f32 %v407, %v407
  %v412 = vmul.f32 %v408, %v408
  %v413 = vmul.f32 %v409, %v409
  %v414 = vmul.f32 %v410, %v410
  %v415 = vsel %vm51, %v411, 0.0
  %416 = vadd.xlane.f32.xlu0 %v415
  %v417 = vpop.xlane.xlu0 %416
  %v418 = vsel %vm51, %v412, 0.0
  %419 = vadd.xlane.f32.xlu0 %v418
  %v420 = vpop.xlane.xlu0 %419
  %v421 = vsel %vm51, %v413, 0.0
  %422 = vadd.xlane.f32.xlu0 %v421
  %v423 = vpop.xlane.xlu0 %422
  %v424 = vsel %vm51, %v414, 0.0
  %425 = vadd.xlane.f32.xlu0 %v424
  %v426 = vpop.xlane.xlu0 %425
  %v427 = vrsqrt.pop %v417
  %v428 = vmul.f32 %v427, %v417
  %v429 = vmul.f32 %v428, %v427
  %v430 = vmul.f32 0.5, %v429
  %v431 = vsub.f32 1.5, %v430
  %v432 = vmul.f32 %v427, %v431
  %v433 = vmul.f32 %v417, %v432
  %vm434 = vcmp.eq.f32.partialorder %v417, inf
  %v435 = vsel %vm434, %v417, %v433
  %vm436 = vcmp.eq.f32.partialorder %v417, 0.0
  %v437 = vand.u32 %v417, 2147483648
  %v438 = vsel %vm436, %v437, %v435
  %v439 = vrsqrt.pop %v420
  %v440 = vmul.f32 %v439, %v420
  %v441 = vmul.f32 %v440, %v439
  %v442 = vmul.f32 0.5, %v441
  %v443 = vsub.f32 1.5, %v442
  %v444 = vmul.f32 %v439, %v443
  %v445 = vmul.f32 %v420, %v444
  %vm446 = vcmp.eq.f32.partialorder %v420, inf
  %v447 = vsel %vm446, %v420, %v445
  %vm448 = vcmp.eq.f32.partialorder %v420, 0.0
  %v449 = vand.u32 %v420, 2147483648
  %v450 = vsel %vm448, %v449, %v447
  %v451 = vrsqrt.pop %v423
  %v452 = vmul.f32 %v451, %v423
  %v453 = vmul.f32 %v452, %v451
  %v454 = vmul.f32 0.5, %v453
  %v455 = vsub.f32 1.5, %v454
  %v456 = vmul.f32 %v451, %v455
  %v457 = vmul.f32 %v423, %v456
  %vm458 = vcmp.eq.f32.partialorder %v423, inf
  %v459 = vsel %vm458, %v423, %v457
  %vm460 = vcmp.eq.f32.partialorder %v423, 0.0
  %v461 = vand.u32 %v423, 2147483648
  %v462 = vsel %vm460, %v461, %v459
  %v463 = vrsqrt.pop %v426
  %v464 = vmul.f32 %v463, %v426
  %v465 = vmul.f32 %v464, %v463
  %v466 = vmul.f32 0.5, %v465
  %v467 = vsub.f32 1.5, %v466
  %v468 = vmul.f32 %v463, %v467
  %v469 = vmul.f32 %v426, %v468
  %vm470 = vcmp.eq.f32.partialorder %v426, inf
  %v471 = vsel %vm470, %v426, %v469
  %vm472 = vcmp.eq.f32.partialorder %v426, 0.0
  %v473 = vand.u32 %v426, 2147483648
  %v474 = vsel %vm472, %v473, %v471
  %v475 = vmul.f32 %v438, %v113
  %v476 = vmul.f32 %v450, %v113
  %v477 = vmul.f32 %v462, %v113
  %v478 = vmul.f32 %v474, %v113
  %v483 = vunpack.c.l.b16 %v399
  %v484 = vunpack.c.l.b16 %v400
  %v485 = vunpack.c.l.b16 %v401
  %v486 = vunpack.c.l.b16 %v402
  %v487 = vpack.c.b16 %v484, %v483
  %v488 = vpack.c.b16 %v486, %v485
  %v490 = vsel %vm51, %v487, 0
  %v493 = vsel %vm51, %v488, 0
  %495 = vmatpush.bf16.msra.mxu0 0
  %496 = vmatpush.bf16.msra.mxu0 0
  %497 = vmatpush.bf16.msra.mxu0 0
  %498 = vmatpush.bf16.msra.mxu0 0
  %499 = vmatpush.bf16.msra.mxu0 0
  %500 = vmatpush.bf16.msra.mxu0 0
  %501 = vmatpush.bf16.msra.mxu0 0
  %502 = vmatpush.bf16.msra.mxu0 %v137
  %503 = vmatmul.bf16.gmra.mxu0 %v490
  %v504 = vpop.f32.mrf.mxu0
  %v505 = vadd.f32 %v475, %v504
  %v506 = vpop.f32.mrf.mxu0
  %v507 = vadd.f32 %v476, %v506
  %508 = vmatmul.bf16.gmra.mxu0 %v493
  %v509 = vpop.f32.mrf.mxu0
  %v510 = vadd.f32 %v477, %v509
  %v511 = vpop.f32.mrf.mxu0
  %v512 = vadd.f32 %v478, %v511
  %513 = vdwg.mxu0
  %v514 = vmax.f32 %v394, %v505
  %v515 = vmax.f32 %v395, %v507
  %v516 = vmax.f32 %v396, %v510
  %v517 = vmax.f32 %v397, %v512
  %v522 = vunpack.c.l.b16 %v24
  %v523 = vunpack.c.l.b16 %v25
  %v524 = vunpack.c.l.b16 %v26
  %v525 = vunpack.c.l.b16 %v27
  %v526 = vpack.c.b16 %v523, %v522
  %v527 = vpack.c.b16 %v525, %v524
  %v529 = vsel %vm51, %v526, 0
  %v532 = vsel %vm51, %v527, 0
  %v535 = vsel %vm135, %v28, 0
  %537 = vmatpush.bf16.msra.mxu0 0
  %538 = vmatpush.bf16.msra.mxu0 0
  %539 = vmatpush.bf16.msra.mxu0 0
  %540 = vmatpush.bf16.msra.mxu0 0
  %541 = vmatpush.bf16.msra.mxu0 0
  %542 = vmatpush.bf16.msra.mxu0 0
  %543 = vmatpush.bf16.msra.mxu0 0
  %544 = vmatpush.bf16.msra.mxu0 %v535
  %545 = vmatmul.bf16.gmra.mxu0 %v529
  %v546 = vpop.f32.mrf.mxu0
  %v547 = vadd.f32 %v514, %v546
  %v548 = vpop.f32.mrf.mxu0
  %v549 = vadd.f32 %v515, %v548
  %550 = vmatmul.bf16.gmra.mxu0 %v532
  %v551 = vpop.f32.mrf.mxu0
  %v552 = vadd.f32 %v516, %v551
  %v553 = vpop.f32.mrf.mxu0
  %v554 = vadd.f32 %v517, %v553
  %555 = vdwg.mxu0
  %v556 = vld [vmem:[%s5] sm:$0x1]
  %v558 = vperm.slane %v556, 0
  %v560 = vadd.f32 %v547, %v558
  %v561 = vadd.f32 %v549, %v558
  %v562 = vadd.f32 %v552, %v558
  %v563 = vadd.f32 %v554, %v558
  %vm564 = vcmp.gt.f32.partialorder %v560, 0.0
  %vm565 = vcmp.gt.f32.partialorder %v561, 0.0
  %vm566 = vcmp.gt.f32.partialorder %v562, 0.0
  %vm567 = vcmp.gt.f32.partialorder %v563, 0.0
  %v568 = vmul.f32 %v560, 0.01
  %v569 = vmul.f32 %v561, 0.01
  %v570 = vmul.f32 %v562, 0.01
  %v571 = vmul.f32 %v563, 0.01
  %v572 = vsel %vm564, %v560, %v568
  %v573 = vsel %vm565, %v561, %v569
  %v574 = vsel %vm566, %v562, %v570
  %v575 = vsel %vm567, %v563, %v571
  %v576 = vpack.c.bf16 %v572, %v572
  %v577 = vpack.c.bf16 %v573, %v573
  %v578 = vpack.c.bf16 %v574, %v574
  %v579 = vpack.c.bf16 %v575, %v575
  %vm580 = vcmask 125952
  %581 = vst.msk [vmem:[%s6] sm:$0xf] %vm580, %v576
  %582 = vst.msk [vmem:[%s6 + $0x4] sm:$0xf] %vm580, %v577
  %583 = vst.msk [vmem:[%s6 + $0x8] sm:$0xf] %vm580, %v578
  %584 = vst.msk [vmem:[%s6 + $0xc] sm:$0xf] %vm580, %v579
  // Predicated region
  $region26: #{semantic_cnn_forward.25} parent=0 // pred_check
    _
  $region27: #{semantic_cnn_forward.25} parent=0 // pred_check_branch
    %586 = sbr.rel (0) target = $region29
  $region28: #{semantic_cnn_forward.25} parent=0 // pred_region
    _
  $region29: #{semantic_cnn_forward.25} parent=0 // pred_fallthru
    _
  // Predicated region
  $region30: #{semantic_cnn_forward.25} parent=0 // pred_check
    _
  $region31: #{semantic_cnn_forward.25} parent=0 // pred_check_branch
    %588 = sbr.rel (0) target = $region33
  $region32: #{semantic_cnn_forward.25} parent=0 // pred_region
    _
  $region33: #{semantic_cnn_forward.25} parent=0 // pred_fallthru
    _

// kernel: semantic_cnn_forward.26
$region0: #{semantic_cnn_forward.26}
  #allocation0 [shape = 'u32[]', space=smem, size = 0x4, offset = 0x4, fixed_abs, tag = 'smem constant byte address 0x4 - core index']
  #allocation1 [shape = 'u32[72,128]{1,0:T(1,128)}', space=vmem, size = 0x9000, scoped, tag = 'internal scratch']
  #allocation2 [shape = 'bf16[16,8]{1,0:T(8,128)(2,1)}', space=vmem, size = 0x1000, scoped, tag = 'scratch operand']
  #allocation3 [shape = 'bf16[16,8]{1,0:T(8,128)(2,1)}', space=vmem, size = 0x1000, scoped, tag = 'scratch operand']
  %s0 = inlined_call_operand.vmem [shape: bf16[2,16,8], index: 0, kind: input, shape index: {}, may-alias: {0,1}]
  %s1 = inlined_call_operand.vmem [shape: bf16[2,16,8], index: 1, kind: input, shape index: {}, may-alias: {0,1}]
  %s2 = inlined_call_operand.vmem [shape: bf16[2,16,16], index: 2, kind: input, shape index: {}]
  %s3 = inlined_call_operand.vmem [shape: bf16[8,8], index: 3, kind: input, shape index: {}]
  %s4 = inlined_call_operand.vmem [shape: f32[1,8], index: 4, kind: input, shape index: {}]
  %s5 = inlined_call_operand.vmem [shape: bf16[8,8], index: 5, kind: input, shape index: {}]
  %s6 = inlined_call_operand.vmem [shape: f32[1,8], index: 6, kind: input, shape index: {}]
  %s7 = inlined_call_operand.vmem [shape: bf16[8,8], index: 7, kind: input, shape index: {}]
  %s8 = inlined_call_operand.vmem [shape: f32[1,8], index: 8, kind: input, shape index: {}]
  %s9 = inlined_call_operand.vmem [shape: bf16[8,16], index: 9, kind: input, shape index: {}]
  %s10 = inlined_call_operand.vmem [shape: f32[1,16], index: 10, kind: input, shape index: {}]
  %s11 = inlined_call_operand.vmem [shape: bf16[16,16], index: 11, kind: input, shape index: {}]
  %s12 = inlined_call_operand.vmem [shape: bf16[16,16], index: 12, kind: input, shape index: {}]
  %s13 = inlined_call_operand.vmem [shape: f32[1,16], index: 13, kind: input, shape index: {}]
  %s14 = inlined_call_operand.vmem [shape: bf16[2,16,16], index: 14, kind: output, shape index: {}]
  %s15 = sld [smem:[#allocation0]]
  $region93: #{semantic_cnn_forward.26} parent=0
    _
  %s17 = ssub.s32 1, %s15
  %s18 = scalar_select 0, %s17, %s15
  loop: start=0, step=1, limit=4
  $region2: #{semantic_cnn_forward.26} parent=0 // loop_pre_header
    _
  $region3: #{semantic_cnn_forward.26} parent=0 // loop_header
    %s20 = sphi 0, %s24
    %p21 = scmp.ge.s32.totalorder %s20, 4
    %s27 = sphi 0, %s39
    %s28 = sphi 0, %s35
    %s29 = sphi 0, %s27
    %s30 = sphi 0, %s28
    %s31 = sphi 0, %s29
    %s32 = sphi 0, %s30
    %s44 = sphi 0, %s46
    %s47 = sphi 0, %s44
    %s48 = sphi 0, %s47
    %s64 = sphi 0, %s48
    %s70 = sphi 0, %s72
    %s73 = sphi 0, %s70
    %s74 = sphi 0, %s73
    %s90 = sphi 0, %s74
    %s98 = sphi 0, %s100
    %s101 = sphi 0, %s98
    %s102 = sphi 0, %s101
    %s118 = sphi 0, %s102
    %s122 = sphi 0, %s122
    %s124 = sphi 0, %s122
    %s125 = sphi 0, %s124
    %s139 = sphi 0, %s125
    %s143 = sphi 0, %s143
    %s145 = sphi 0, %s143
    %s146 = sphi 0, %s145
    %s160 = sphi 0, %s146
    %s164 = sphi 0, %s164
    %s166 = sphi 0, %s164
    %s167 = sphi 0, %s166
    %s181 = sphi 0, %s167
    %s185 = sphi 0, %s185
    %s187 = sphi 0, %s185
    %s188 = sphi 0, %s187
    %s202 = sphi 0, %s188
    %s206 = sphi 0, %s206
    %s208 = sphi 0, %s206
    %s209 = sphi 0, %s208
    %s223 = sphi 0, %s209
    %s227 = sphi 0, %s227
    %s229 = sphi 0, %s227
    %s230 = sphi 0, %s229
    %s244 = sphi 0, %s230
    %s248 = sphi 0, %s248
    %s250 = sphi 0, %s248
    %s251 = sphi 0, %s250
    %s265 = sphi 0, %s251
    %s269 = sphi 0, %s269
    %s271 = sphi 0, %s269
    %s272 = sphi 0, %s271
    %s286 = sphi 0, %s272
    %s290 = sphi 0, %s290
    %s292 = sphi 0, %s290
    %s293 = sphi 0, %s292
    %s307 = sphi 0, %s293
    %s311 = sphi 0, %s311
    %s313 = sphi 0, %s311
    %s314 = sphi 0, %s313
    %s328 = sphi 0, %s314
    %s332 = sphi 0, %s332
    %s334 = sphi 0, %s332
    %s335 = sphi 0, %s334
    %s349 = sphi 0, %s335
    %s357 = sphi 0, %s359
    %s360 = sphi 0, %s357
    %s361 = sphi 0, %s360
    %s377 = sphi 0, %s361
  $region4: #{semantic_cnn_forward.26} parent=0 // loop_header_branch
    %23 = sbr.rel (%p21) target = $region8
  $region5: #{semantic_cnn_forward.26} parent=0 // loop_body
    %s25 = ssub.s32 %s20, 1
    %s26 = ssub.s32 %s20, 2
    %s33 = sadd.s32 1, %s28
    %p34 = scmp.ge.s32.totalorder %s33, 1
    %s35 = scalar_select %p34, 0, %s33
    %s36 = sadd.s32 1, %s27
    %s37 = scalar_select %p34, %s36, %s27
    %p38 = scmp.ge.s32.totalorder %s37, 2
    %s39 = scalar_select %p38, 0, %s37
    %s40 = ssub.s32 %s27, %s39
    %s41 = ssub.s32 %s28, %s35
    %s42 = sor.u32 %s40, %s41
    %p43 = scmp.eq.s32.totalorder %s42, 0
    %s45 = sadd.s32 %s44, 1
    %s46 = scalar_select %p43, %s44, %s45
    %p49 = pneg %p43
    %p50 = scmp.eq.s32.totalorder %s20, 1
    %p51 = por %p49, %p50
    %p52 = scmp.ne.s32.totalorder %s44, %s47
    %p53 = scmp.eq.s32.totalorder %s20, 0
    %p54 = por %p52, %p53
    %p55 = scmp.ne.s32.totalorder %s44, %s47
    %p56 = scmp.eq.s32.totalorder %s25, 1
    %p57 = por %p55, %p56
    %p58 = scmp.ne.s32.totalorder %s47, %s48
    %p59 = scmp.eq.s32.totalorder %s25, 0
    %p60 = por %p58, %p59
    %p61 = scmp.ne.s32.totalorder %s47, %s48
    %p62 = scmp.eq.s32.totalorder %s26, 1
    %p63 = por %p61, %p62
    %p65 = scmp.ne.s32.totalorder %s48, %s64
    %p66 = scmp.eq.s32.totalorder %s26, 0
    %p67 = por %p65, %p66
    %s68 = ssub.s32 %s27, %s39
    %p69 = scmp.eq.s32.totalorder %s68, 0
    %s71 = sadd.s32 %s70, 1
    %s72 = scalar_select %p69, %s70, %s71
    %p75 = pneg %p69
    %p76 = scmp.eq.s32.totalorder %s20, 1
    %p77 = por %p75, %p76
    %p78 = scmp.ne.s32.totalorder %s70, %s73
    %p79 = scmp.eq.s32.totalorder %s20, 0
    %p80 = por %p78, %p79
    %p81 = scmp.ne.s32.totalorder %s70, %s73
    %p82 = scmp.eq.s32.totalorder %s25, 1
    %p83 = por %p81, %p82
    %p84 = scmp.ne.s32.totalorder %s73, %s74
    %p85 = scmp.eq.s32.totalorder %s25, 0
    %p86 = por %p84, %p85
    %p87 = scmp.ne.s32.totalorder %s73, %s74
    %p88 = scmp.eq.s32.totalorder %s26, 1
    %p89 = por %p87, %p88
    %p91 = scmp.ne.s32.totalorder %s74, %s90
    %p92 = scmp.eq.s32.totalorder %s26, 0
    %p93 = por %p91, %p92
    %s94 = ssub.s32 %s27, %s39
    %s95 = ssub.s32 %s28, %s35
    %s96 = sor.u32 %s94, %s95
    %p97 = scmp.eq.s32.totalorder %s96, 0
    %s99 = sadd.s32 %s98, 1
    %s100 = scalar_select %p97, %s98, %s99
    %p103 = pneg %p97
    %p104 = scmp.eq.s32.totalorder %s20, 1
    %p105 = por %p103, %p104
    %p106 = scmp.ne.s32.totalorder %s98, %s101
    %p107 = scmp.eq.s32.totalorder %s20, 0
    %p108 = por %p106, %p107
    %p109 = scmp.ne.s32.totalorder %s98, %s101
    %p110 = scmp.eq.s32.totalorder %s25, 1
    %p111 = por %p109, %p110
    %p112 = scmp.ne.s32.totalorder %s101, %s102
    %p113 = scmp.eq.s32.totalorder %s25, 0
    %p114 = por %p112, %p113
    %p115 = scmp.ne.s32.totalorder %s101, %s102
    %p116 = scmp.eq.s32.totalorder %s26, 1
    %p117 = por %p115, %p116
    %p119 = scmp.ne.s32.totalorder %s102, %s118
    %p120 = scmp.eq.s32.totalorder %s26, 0
    %p121 = por %p119, %p120
    %s123 = sadd.s32 %s122, 1
    %p126 = scmp.eq.s32.totalorder %s20, 1
    %p127 = scmp.ne.s32.totalorder %s122, %s124
    %p128 = scmp.eq.s32.totalorder %s20, 0
    %p129 = por %p127, %p128
    %p130 = scmp.ne.s32.totalorder %s122, %s124
    %p131 = scmp.eq.s32.totalorder %s25, 1
    %p132 = por %p130, %p131
    %p133 = scmp.ne.s32.totalorder %s124, %s125
    %p134 = scmp.eq.s32.totalorder %s25, 0
    %p135 = por %p133, %p134
    %p136 = scmp.ne.s32.totalorder %s124, %s125
    %p137 = scmp.eq.s32.totalorder %s26, 1
    %p138 = por %p136, %p137
    %p140 = scmp.ne.s32.totalorder %s125, %s139
    %p141 = scmp.eq.s32.totalorder %s26, 0
    %p142 = por %p140, %p141
    %s144 = sadd.s32 %s143, 1
    %p147 = scmp.eq.s32.totalorder %s20, 1
    %p148 = scmp.ne.s32.totalorder %s143, %s145
    %p149 = scmp.eq.s32.totalorder %s20, 0
    %p150 = por %p148, %p149
    %p151 = scmp.ne.s32.totalorder %s143, %s145
    %p152 = scmp.eq.s32.totalorder %s25, 1
    %p153 = por %p151, %p152
    %p154 = scmp.ne.s32.totalorder %s145, %s146
    %p155 = scmp.eq.s32.totalorder %s25, 0
    %p156 = por %p154, %p155
    %p157 = scmp.ne.s32.totalorder %s145, %s146
    %p158 = scmp.eq.s32.totalorder %s26, 1
    %p159 = por %p157, %p158
    %p161 = scmp.ne.s32.totalorder %s146, %s160
    %p162 = scmp.eq.s32.totalorder %s26, 0
    %p163 = por %p161, %p162
    %s165 = sadd.s32 %s164, 1
    %p168 = scmp.eq.s32.totalorder %s20, 1
    %p169 = scmp.ne.s32.totalorder %s164, %s166
    %p170 = scmp.eq.s32.totalorder %s20, 0
    %p171 = por %p169, %p170
    %p172 = scmp.ne.s32.totalorder %s164, %s166
    %p173 = scmp.eq.s32.totalorder %s25, 1
    %p174 = por %p172, %p173
    %p175 = scmp.ne.s32.totalorder %s166, %s167
    %p176 = scmp.eq.s32.totalorder %s25, 0
    %p177 = por %p175, %p176
    %p178 = scmp.ne.s32.totalorder %s166, %s167
    %p179 = scmp.eq.s32.totalorder %s26, 1
    %p180 = por %p178, %p179
    %p182 = scmp.ne.s32.totalorder %s167, %s181
    %p183 = scmp.eq.s32.totalorder %s26, 0
    %p184 = por %p182, %p183
    %s186 = sadd.s32 %s185, 1
    %p189 = scmp.eq.s32.totalorder %s20, 1
    %p190 = scmp.ne.s32.totalorder %s185, %s187
    %p191 = scmp.eq.s32.totalorder %s20, 0
    %p192 = por %p190, %p191
    %p193 = scmp.ne.s32.totalorder %s185, %s187
    %p194 = scmp.eq.s32.totalorder %s25, 1
    %p195 = por %p193, %p194
    %p196 = scmp.ne.s32.totalorder %s187, %s188
    %p197 = scmp.eq.s32.totalorder %s25, 0
    %p198 = por %p196, %p197
    %p199 = scmp.ne.s32.totalorder %s187, %s188
    %p200 = scmp.eq.s32.totalorder %s26, 1
    %p201 = por %p199, %p200
    %p203 = scmp.ne.s32.totalorder %s188, %s202
    %p204 = scmp.eq.s32.totalorder %s26, 0
    %p205 = por %p203, %p204
    %s207 = sadd.s32 %s206, 1
    %p210 = scmp.eq.s32.totalorder %s20, 1
    %p211 = scmp.ne.s32.totalorder %s206, %s208
    %p212 = scmp.eq.s32.totalorder %s20, 0
    %p213 = por %p211, %p212
    %p214 = scmp.ne.s32.totalorder %s206, %s208
    %p215 = scmp.eq.s32.totalorder %s25, 1
    %p216 = por %p214, %p215
    %p217 = scmp.ne.s32.totalorder %s208, %s209
    %p218 = scmp.eq.s32.totalorder %s25, 0
    %p219 = por %p217, %p218
    %p220 = scmp.ne.s32.totalorder %s208, %s209
    %p221 = scmp.eq.s32.totalorder %s26, 1
    %p222 = por %p220, %p221
    %p224 = scmp.ne.s32.totalorder %s209, %s223
    %p225 = scmp.eq.s32.totalorder %s26, 0
    %p226 = por %p224, %p225
    %s228 = sadd.s32 %s227, 1
    %p231 = scmp.eq.s32.totalorder %s20, 1
    %p232 = scmp.ne.s32.totalorder %s227, %s229
    %p233 = scmp.eq.s32.totalorder %s20, 0
    %p234 = por %p232, %p233
    %p235 = scmp.ne.s32.totalorder %s227, %s229
    %p236 = scmp.eq.s32.totalorder %s25, 1
    %p237 = por %p235, %p236
    %p238 = scmp.ne.s32.totalorder %s229, %s230
    %p239 = scmp.eq.s32.totalorder %s25, 0
    %p240 = por %p238, %p239
    %p241 = scmp.ne.s32.totalorder %s229, %s230
    %p242 = scmp.eq.s32.totalorder %s26, 1
    %p243 = por %p241, %p242
    %p245 = scmp.ne.s32.totalorder %s230, %s244
    %p246 = scmp.eq.s32.totalorder %s26, 0
    %p247 = por %p245, %p246
    %s249 = sadd.s32 %s248, 1
    %p252 = scmp.eq.s32.totalorder %s20, 1
    %p253 = scmp.ne.s32.totalorder %s248, %s250
    %p254 = scmp.eq.s32.totalorder %s20, 0
    %p255 = por %p253, %p254
    %p256 = scmp.ne.s32.totalorder %s248, %s250
    %p257 = scmp.eq.s32.totalorder %s25, 1
    %p258 = por %p256, %p257
    %p259 = scmp.ne.s32.totalorder %s250, %s251
    %p260 = scmp.eq.s32.totalorder %s25, 0
    %p261 = por %p259, %p260
    %p262 = scmp.ne.s32.totalorder %s250, %s251
    %p263 = scmp.eq.s32.totalorder %s26, 1
    %p264 = por %p262, %p263
    %p266 = scmp.ne.s32.totalorder %s251, %s265
    %p267 = scmp.eq.s32.totalorder %s26, 0
    %p268 = por %p266, %p267
    %s270 = sadd.s32 %s269, 1
    %p273 = scmp.eq.s32.totalorder %s20, 1
    %p274 = scmp.ne.s32.totalorder %s269, %s271
    %p275 = scmp.eq.s32.totalorder %s20, 0
    %p276 = por %p274, %p275
    %p277 = scmp.ne.s32.totalorder %s269, %s271
    %p278 = scmp.eq.s32.totalorder %s25, 1
    %p279 = por %p277, %p278
    %p280 = scmp.ne.s32.totalorder %s271, %s272
    %p281 = scmp.eq.s32.totalorder %s25, 0
    %p282 = por %p280, %p281
    %p283 = scmp.ne.s32.totalorder %s271, %s272
    %p284 = scmp.eq.s32.totalorder %s26, 1
    %p285 = por %p283, %p284
    %p287 = scmp.ne.s32.totalorder %s272, %s286
    %p288 = scmp.eq.s32.totalorder %s26, 0
    %p289 = por %p287, %p288
    %s291 = sadd.s32 %s290, 1
    %p294 = scmp.eq.s32.totalorder %s20, 1
    %p295 = scmp.ne.s32.totalorder %s290, %s292
    %p296 = scmp.eq.s32.totalorder %s20, 0
    %p297 = por %p295, %p296
    %p298 = scmp.ne.s32.totalorder %s290, %s292
    %p299 = scmp.eq.s32.totalorder %s25, 1
    %p300 = por %p298, %p299
    %p301 = scmp.ne.s32.totalorder %s292, %s293
    %p302 = scmp.eq.s32.totalorder %s25, 0
    %p303 = por %p301, %p302
    %p304 = scmp.ne.s32.totalorder %s292, %s293
    %p305 = scmp.eq.s32.totalorder %s26, 1
    %p306 = por %p304, %p305
    %p308 = scmp.ne.s32.totalorder %s293, %s307
    %p309 = scmp.eq.s32.totalorder %s26, 0
    %p310 = por %p308, %p309
    %s312 = sadd.s32 %s311, 1
    %p315 = scmp.eq.s32.totalorder %s20, 1
    %p316 = scmp.ne.s32.totalorder %s311, %s313
    %p317 = scmp.eq.s32.totalorder %s20, 0
    %p318 = por %p316, %p317
    %p319 = scmp.ne.s32.totalorder %s311, %s313
    %p320 = scmp.eq.s32.totalorder %s25, 1
    %p321 = por %p319, %p320
    %p322 = scmp.ne.s32.totalorder %s313, %s314
    %p323 = scmp.eq.s32.totalorder %s25, 0
    %p324 = por %p322, %p323
    %p325 = scmp.ne.s32.totalorder %s313, %s314
    %p326 = scmp.eq.s32.totalorder %s26, 1
    %p327 = por %p325, %p326
    %p329 = scmp.ne.s32.totalorder %s314, %s328
    %p330 = scmp.eq.s32.totalorder %s26, 0
    %p331 = por %p329, %p330
    %s333 = sadd.s32 %s332, 1
    %p336 = scmp.eq.s32.totalorder %s20, 1
    %p337 = scmp.ne.s32.totalorder %s332, %s334
    %p338 = scmp.eq.s32.totalorder %s20, 0
    %p339 = por %p337, %p338
    %p340 = scmp.ne.s32.totalorder %s332, %s334
    %p341 = scmp.eq.s32.totalorder %s25, 1
    %p342 = por %p340, %p341
    %p343 = scmp.ne.s32.totalorder %s334, %s335
    %p344 = scmp.eq.s32.totalorder %s25, 0
    %p345 = por %p343, %p344
    %p346 = scmp.ne.s32.totalorder %s334, %s335
    %p347 = scmp.eq.s32.totalorder %s26, 1
    %p348 = por %p346, %p347
    %p350 = scmp.ne.s32.totalorder %s335, %s349
    %p351 = scmp.eq.s32.totalorder %s26, 0
    %p352 = por %p350, %p351
    %s353 = ssub.s32 %s27, %s39
    %s354 = ssub.s32 %s28, %s35
    %s355 = sor.u32 %s353, %s354
    %p356 = scmp.eq.s32.totalorder %s355, 0
    %s358 = sadd.s32 %s357, 1
    %s359 = scalar_select %p356, %s357, %s358
    %p362 = pneg %p356
    %p363 = scmp.eq.s32.totalorder %s20, 1
    %p364 = por %p362, %p363
    %p365 = scmp.ne.s32.totalorder %s357, %s360
    %p366 = scmp.eq.s32.totalorder %s20, 0
    %p367 = por %p365, %p366
    %p368 = scmp.ne.s32.totalorder %s357, %s360
    %p369 = scmp.eq.s32.totalorder %s25, 1
    %p370 = por %p368, %p369
    %p371 = scmp.ne.s32.totalorder %s360, %s361
    %p372 = scmp.eq.s32.totalorder %s25, 0
    %p373 = por %p371, %p372
    %p374 = scmp.ne.s32.totalorder %s360, %s361
    %p375 = scmp.eq.s32.totalorder %s26, 1
    %p376 = por %p374, %p375
    %p378 = scmp.ne.s32.totalorder %s361, %s377
    %p379 = scmp.eq.s32.totalorder %s26, 0
    %p380 = por %p378, %p379
    %p381 = scmp.le.s32.totalorder 1, %s20
    %p382 = scmp.lt.s32.totalorder %s20, 3
    %p383 = pnand %p381, %p382
    %p384 = pneg %p383
    // Predicated region
    $region9: #{semantic_cnn_forward.26} parent=5 // pred_check
      _
    $region10: #{semantic_cnn_forward.26} parent=5 // pred_check_branch
      %386 = sbr.rel (%p383) target = $region12
    $region11: #{semantic_cnn_forward.26} parent=5 // pred_region
      %s387 = ssub.s32 %s20, 1
      // Predicated region
      $region13: #{semantic_cnn_forward.26} parent=11 // pred_check
        %p388 = pneg %p135
      $region14: #{semantic_cnn_forward.26} parent=11 // pred_check_branch
        %390 = sbr.rel (%p388) target = $region16
      $region15: #{semantic_cnn_forward.26} parent=11 // pred_region
        _
      $region16: #{semantic_cnn_forward.26} parent=11 // pred_fallthru
        _
      // Predicated region
      $region17: #{semantic_cnn_forward.26} parent=11 // pred_check
        %p391 = pneg %p156
      $region18: #{semantic_cnn_forward.26} parent=11 // pred_check_branch
        %393 = sbr.rel (%p391) target = $region20
      $region19: #{semantic_cnn_forward.26} parent=11 // pred_region
        _
      $region20: #{semantic_cnn_forward.26} parent=11 // pred_fallthru
        _
      // Predicated region
      $region21: #{semantic_cnn_forward.26} parent=11 // pred_check
        %p394 = pneg %p177
      $region22: #{semantic_cnn_forward.26} parent=11 // pred_check_branch
        %396 = sbr.rel (%p394) target = $region24
      $region23: #{semantic_cnn_forward.26} parent=11 // pred_region
        _
      $region24: #{semantic_cnn_forward.26} parent=11 // pred_fallthru
        _
      // Predicated region
      $region25: #{semantic_cnn_forward.26} parent=11 // pred_check
        %p397 = pneg %p198
      $region26: #{semantic_cnn_forward.26} parent=11 // pred_check_branch
        %399 = sbr.rel (%p397) target = $region28
      $region27: #{semantic_cnn_forward.26} parent=11 // pred_region
        _
      $region28: #{semantic_cnn_forward.26} parent=11 // pred_fallthru
        _
      // Predicated region
      $region29: #{semantic_cnn_forward.26} parent=11 // pred_check
        %p400 = pneg %p219
      $region30: #{semantic_cnn_forward.26} parent=11 // pred_check_branch
        %402 = sbr.rel (%p400) target = $region32
      $region31: #{semantic_cnn_forward.26} parent=11 // pred_region
        _
      $region32: #{semantic_cnn_forward.26} parent=11 // pred_fallthru
        _
      // Predicated region
      $region33: #{semantic_cnn_forward.26} parent=11 // pred_check
        %p403 = pneg %p240
      $region34: #{semantic_cnn_forward.26} parent=11 // pred_check_branch
        %405 = sbr.rel (%p403) target = $region36
      $region35: #{semantic_cnn_forward.26} parent=11 // pred_region
        _
      $region36: #{semantic_cnn_forward.26} parent=11 // pred_fallthru
        _
      // Predicated region
      $region37: #{semantic_cnn_forward.26} parent=11 // pred_check
        %p406 = pneg %p261
      $region38: #{semantic_cnn_forward.26} parent=11 // pred_check_branch
        %408 = sbr.rel (%p406) target = $region40
      $region39: #{semantic_cnn_forward.26} parent=11 // pred_region
        _
      $region40: #{semantic_cnn_forward.26} parent=11 // pred_fallthru
        _
      // Predicated region
      $region41: #{semantic_cnn_forward.26} parent=11 // pred_check
        %p409 = pneg %p282
      $region42: #{semantic_cnn_forward.26} parent=11 // pred_check_branch
        %411 = sbr.rel (%p409) target = $region44
      $region43: #{semantic_cnn_forward.26} parent=11 // pred_region
        _
      $region44: #{semantic_cnn_forward.26} parent=11 // pred_fallthru
        _
      // Predicated region
      $region45: #{semantic_cnn_forward.26} parent=11 // pred_check
        %p412 = pneg %p303
      $region46: #{semantic_cnn_forward.26} parent=11 // pred_check_branch
        %414 = sbr.rel (%p412) target = $region48
      $region47: #{semantic_cnn_forward.26} parent=11 // pred_region
        _
      $region48: #{semantic_cnn_forward.26} parent=11 // pred_fallthru
        _
      // Predicated region
      $region49: #{semantic_cnn_forward.26} parent=11 // pred_check
        %p415 = pneg %p324
      $region50: #{semantic_cnn_forward.26} parent=11 // pred_check_branch
        %417 = sbr.rel (%p415) target = $region52
      $region51: #{semantic_cnn_forward.26} parent=11 // pred_region
        _
      $region52: #{semantic_cnn_forward.26} parent=11 // pred_fallthru
        _
      // Predicated region
      $region53: #{semantic_cnn_forward.26} parent=11 // pred_check
        %p418 = pneg %p345
      $region54: #{semantic_cnn_forward.26} parent=11 // pred_check_branch
        %420 = sbr.rel (%p418) target = $region56
      $region55: #{semantic_cnn_forward.26} parent=11 // pred_region
        _
      $region56: #{semantic_cnn_forward.26} parent=11 // pred_fallthru
        _
    $region12: #{semantic_cnn_forward.26} parent=5 // pred_fallthru
      _
    %p421 = scmp.lt.s32.totalorder %s20, 2
    // Predicated region
    $region57: #{semantic_cnn_forward.26} parent=5 // pred_check
      %p422 = pneg %p421
    $region58: #{semantic_cnn_forward.26} parent=5 // pred_check_branch
      %424 = sbr.rel (%p422) target = $region60
    $region59: #{semantic_cnn_forward.26} parent=5 // pred_region
      // Predicated region
      $region61: #{semantic_cnn_forward.26} parent=59 // pred_check
        %p425 = pneg %p54
      $region62: #{semantic_cnn_forward.26} parent=59 // pred_check_branch
        %427 = sbr.rel (%p425) target = $region64
      $region63: #{semantic_cnn_forward.26} parent=59 // pred_region
        %s428 = smul.u32 2, %s28
        %p429 = scmp.lt.s32.totalorder %s27, 1
        %s430 = scalar_select %p429, %s27, 1
        %p431 = scmp.lt.s32.totalorder %s428, 1
        %s432 = scalar_select %p431, %s428, 1
        %s433 = smul.addr %s430, 2
        %s434 = sadd.s32 %s432, %s433
        %s435 = smul.addr %s434, 4
        %s436 = scalar_lea.vmem %s0, %s435
        %s437 = smul.u32 2, %s28
      $region64: #{semantic_cnn_forward.26} parent=59 // pred_fallthru
        _
      // Predicated region
      $region65: #{semantic_cnn_forward.26} parent=59 // pred_check
        %p438 = pneg %p80
      $region66: #{semantic_cnn_forward.26} parent=59 // pred_check_branch
        %440 = sbr.rel (%p438) target = $region68
      $region67: #{semantic_cnn_forward.26} parent=59 // pred_region
        %p441 = scmp.lt.s32.totalorder %s27, 1
        %s442 = scalar_select %p441, %s27, 1
        %s443 = smul.addr %s442, 2
        %s444 = smul.addr %s443, 4
        %s445 = scalar_lea.vmem %s1, %s444
      $region68: #{semantic_cnn_forward.26} parent=59 // pred_fallthru
        _
      // Predicated region
      $region69: #{semantic_cnn_forward.26} parent=59 // pred_check
        %p446 = pneg %p108
      $region70: #{semantic_cnn_forward.26} parent=59 // pred_check_branch
        %448 = sbr.rel (%p446) target = $region72
      $region71: #{semantic_cnn_forward.26} parent=59 // pred_region
        %s449 = smul.u32 2, %s28
        %p450 = scmp.lt.s32.totalorder %s27, 1
        %s451 = scalar_select %p450, %s27, 1
        %p452 = scmp.lt.s32.totalorder %s449, 1
        %s453 = scalar_select %p452, %s449, 1
        %s454 = smul.addr %s451, 2
        %s455 = sadd.s32 %s453, %s454
        %s456 = smul.addr %s455, 4
        %s457 = scalar_lea.vmem %s2, %s456
        %s458 = smul.u32 2, %s28
      $region72: #{semantic_cnn_forward.26} parent=59 // pred_fallthru
        _
    $region60: #{semantic_cnn_forward.26} parent=5 // pred_fallthru
      _
    %p459 = scmp.le.s32.totalorder 1, %s20
    %p460 = scmp.lt.s32.totalorder %s20, 3
    %p461 = pnand %p459, %p460
    %p462 = pneg %p461
    // Predicated region
    $region73: #{semantic_cnn_forward.26} parent=5 // pred_check
      _
    $region74: #{semantic_cnn_forward.26} parent=5 // pred_check_branch
      %464 = sbr.rel (%p461) target = $region76
    $region75: #{semantic_cnn_forward.26} parent=5 // pred_region
      %s465 = ssub.s32 %s20, 1
      %s466 = smul.u32 2, %s30
      %p467 = scmp.lt.s32.totalorder %s29, 1
      %s468 = scalar_select %p467, %s29, 1
      %p469 = scmp.lt.s32.totalorder %s466, 1
      %s470 = scalar_select %p469, %s466, 1
      %s471 = smul.addr %s468, 2
      %s472 = sadd.s32 %s470, %s471
      %s473 = smul.addr %s472, 4
      %s474 = scalar_lea.vmem %s0, %s473
      %p475 = pneg %p60
      %p476 = pneg %p57
      %p477 = scmp.lt.s32.totalorder %s29, 1
      %s478 = scalar_select %p477, %s29, 1
      %s479 = smul.addr %s478, 2
      %s480 = smul.addr %s479, 4
      %s481 = scalar_lea.vmem %s1, %s480
      %p482 = pneg %p86
      %p483 = pneg %p83
      %s484 = smul.u32 2, %s30
      %p485 = scmp.lt.s32.totalorder %s29, 1
      %s486 = scalar_select %p485, %s29, 1
      %p487 = scmp.lt.s32.totalorder %s484, 1
      %s488 = scalar_select %p487, %s484, 1
      %s489 = smul.addr %s486, 2
      %s490 = sadd.s32 %s488, %s489
      %s491 = smul.addr %s490, 4
      %s492 = scalar_lea.vmem %s2, %s491
      %p493 = pneg %p114
      %p494 = pneg %p111
      %p495 = pneg %p135
      %p496 = pneg %p132
      %p497 = pneg %p156
      %p498 = pneg %p153
      %p499 = pneg %p177
      %p500 = pneg %p174
      %p501 = pneg %p198
      %p502 = pneg %p195
      %p503 = pneg %p219
      %p504 = pneg %p216
      %p505 = pneg %p240
      %p506 = pneg %p237
      %p507 = pneg %p261
      %p508 = pneg %p258
      %p509 = pneg %p282
      %p510 = pneg %p279
      %p511 = pneg %p303
      %p512 = pneg %p300
      %p513 = pneg %p324
      %p514 = pneg %p321
      %p515 = pneg %p345
      %p516 = pneg %p342
      %p517 = pneg %p373
      %p518 = pneg %p370
      %s519 = smul.u32 2, %s30
      %p520 = scmp.lt.s32.totalorder %s29, 1
      %s521 = scalar_select %p520, %s29, 1
      %p522 = scmp.lt.s32.totalorder %s519, 1
      %s523 = scalar_select %p522, %s519, 1
      %s524 = smul.addr %s521, 2
      %s525 = sadd.s32 %s523, %s524
      %s526 = smul.addr %s525, 4
      %s527 = scalar_lea.vmem %s14, %s526
      %s528 = smul.u32 2, %s30
      %p529 = scmp.lt.s32.totalorder %s29, 1
      %s530 = scalar_select %p529, %s29, 1
      %p531 = scmp.lt.s32.totalorder %s528, 1
      %s532 = scalar_select %p531, %s528, 1
      %s533 = smul.addr %s530, 2
      %s534 = sadd.s32 %s532, %s533
      %s535 = smul.addr %s534, 4
      %s536 = scalar_lea.vmem %s0, %s535
      %s537 = smul.u32 2, %s30
      %p538 = scmp.lt.s32.totalorder %s29, 1
      %s539 = scalar_select %p538, %s29, 1
      %s540 = smul.addr %s539, 2
      %s541 = smul.addr %s540, 4
      %s542 = scalar_lea.vmem %s1, %s541
      %s543 = smul.u32 2, %s30
      %p544 = scmp.lt.s32.totalorder %s29, 1
      %s545 = scalar_select %p544, %s29, 1
      %p546 = scmp.lt.s32.totalorder %s543, 1
      %s547 = scalar_select %p546, %s543, 1
      %s548 = smul.addr %s545, 2
      %s549 = sadd.s32 %s547, %s548
      %s550 = smul.addr %s549, 4
      %s551 = scalar_lea.vmem %s2, %s550
      %s552 = smul.u32 2, %s30
      %s553 = smul.u32 2, %s30
      %p554 = scmp.lt.s32.totalorder %s29, 1
      %s555 = scalar_select %p554, %s29, 1
      %p556 = scmp.lt.s32.totalorder %s553, 1
      %s557 = scalar_select %p556, %s553, 1
      %s558 = smul.addr %s555, 2
      %s559 = sadd.s32 %s557, %s558
      %s560 = smul.addr %s559, 4
      %s561 = scalar_lea.vmem %s14, %s560
      %s562 = smul.u32 2, %s30
      %p564 = scmp.eq.s32.totalorder %s30, 0
      // Predicated region
      $region77: #{semantic_cnn_forward.26} parent=75 // pred_check
        %p565 = pneg %p564
      $region78: #{semantic_cnn_forward.26} parent=75 // pred_check_branch
        %567 = sbr.rel (%p565) target = $region80
      $region79: #{semantic_cnn_forward.26} parent=75 // pred_region
        %v568 = vld [vmem:[%s542] sm:$0xf]
        %v569 = vld [vmem:[%s542 + $0x4] sm:$0xf]
        %v570 = vld [vmem:[%s5] sm:$0xf]
        %v571 = vld [vmem:[%s6] sm:$0x1]
        %v573 = vperm.slane %v571, 0
        %v577 = vunpack.c.l.b16 %v568
        %v578 = vunpack.c.l.b16 %v569
        %v579 = vpack.c.b16 %v578, %v577
        %vm580 = vcmask 64512
        %v582 = vsel %vm580, %v579, 0
        %vm584 = vcmask 1043456
        %v586 = vsel %vm584, %v570, 0
        %588 = vmatpush.bf16.msra.mxu0 0
        %589 = vmatpush.bf16.msra.mxu0 0
        %590 = vmatpush.bf16.msra.mxu0 0
        %591 = vmatpush.bf16.msra.mxu0 0
        %592 = vmatpush.bf16.msra.mxu0 0
        %593 = vmatpush.bf16.msra.mxu0 0
        %594 = vmatpush.bf16.msra.mxu0 0
        %595 = vmatpush.bf16.msra.mxu0 %v586
        %596 = vmatmul.bf16.gmra.mxu0 %v582
        %v597 = vpop.f32.mrf.mxu0
        %v598 = vadd.f32 %v573, %v597
        %v599 = vpop.f32.mrf.mxu0
        %v600 = vadd.f32 %v573, %v599
        %601 = vdwg.mxu0
        %v602 = vld [vmem:[%s7] sm:$0xf]
        %v603 = vld [vmem:[%s8] sm:$0x1]
        %v605 = vperm.slane %v603, 0
        %v608 = vsel %vm584, %v602, 0
        %610 = vmatpush.bf16.msra.mxu0 0
        %611 = vmatpush.bf16.msra.mxu0 0
        %612 = vmatpush.bf16.msra.mxu0 0
        %613 = vmatpush.bf16.msra.mxu0 0
        %614 = vmatpush.bf16.msra.mxu0 0
        %615 = vmatpush.bf16.msra.mxu0 0
        %616 = vmatpush.bf16.msra.mxu0 0
        %617 = vmatpush.bf16.msra.mxu0 %v608
        %618 = vmatmul.bf16.gmra.mxu0 %v582
        %v619 = vpop.f32.mrf.mxu0
        %v620 = vadd.f32 %v605, %v619
        %v621 = vpop.f32.mrf.mxu0
        %v622 = vadd.f32 %v605, %v621
        %623 = vdwg.mxu0
        %v624 = vpack.c.bf16 %v598, %v598
        %v625 = vpack.c.bf16 %v600, %v600
        %vm626 = vcmask 60416
        %627 = vst.msk [vmem:[#allocation2] sm:$0xf] %vm626, %v624
        %628 = vst.msk [vmem:[#allocation2 + $0x4] sm:$0xf] %vm626, %v625
        %v629 = vpack.c.bf16 %v620, %v620
        %v630 = vpack.c.bf16 %v622, %v622
        %631 = vst.msk [vmem:[#allocation3] sm:$0xf] %vm626, %v629
        %632 = vst.msk [vmem:[#allocation3 + $0x4] sm:$0xf] %vm626, %v630
      $region80: #{semantic_cnn_forward.26} parent=75 // pred_fallthru
        _
      %v633 = vld [vmem:[%s536] sm:$0xf]
      %v634 = vld [vmem:[%s536 + $0x4] sm:$0xf]
      %v635 = vld [vmem:[%s3] sm:$0xf]
      %v636 = vld [vmem:[%s4] sm:$0x1]
      %v638 = vperm.slane %v636, 0
      %v642 = vunpack.c.l.b16 %v633
      %v643 = vunpack.c.l.b16 %v634
      %v644 = vpack.c.b16 %v643, %v642
      %vm645 = vcmask 64512
      %v647 = vsel %vm645, %v644, 0
      %vm649 = vcmask 1043456
      %v651 = vsel %vm649, %v635, 0
      %653 = vmatpush.bf16.msra.mxu0 0
      %654 = vmatpush.bf16.msra.mxu0 0
      %655 = vmatpush.bf16.msra.mxu0 0
      %656 = vmatpush.bf16.msra.mxu0 0
      %657 = vmatpush.bf16.msra.mxu0 0
      %658 = vmatpush.bf16.msra.mxu0 0
      %659 = vmatpush.bf16.msra.mxu0 0
      %660 = vmatpush.bf16.msra.mxu0 %v651
      %661 = vmatmul.bf16.gmra.mxu0 %v647
      %v662 = vpop.f32.mrf.mxu0
      %v663 = vadd.f32 %v638, %v662
      %v664 = vpop.f32.mrf.mxu0
      %v665 = vadd.f32 %v638, %v664
      %666 = vdwg.mxu0
      %v667 = vpack.c.bf16 %v665, %v663
      %v668 = vld [vmem:[#allocation2] sm:$0xf]
      %v669 = vld [vmem:[#allocation2 + $0x4] sm:$0xf]
      %v672 = vunpack.c.l.b16 %v668
      %v673 = vunpack.c.l.b16 %v669
      %v674 = vpack.c.b16 %v673, %v672
      %v676 = vsel %vm645, %v667, 0
      %v679 = vsel %vm645, %v674, 0
      %681 = vmatpush.bf16.xpose.msra.mxu0 0
      %682 = vmatpush.bf16.xpose.msra.mxu0 0
      %683 = vmatpush.bf16.xpose.msra.mxu0 0
      %684 = vmatpush.bf16.xpose.msra.mxu0 0
      %685 = vmatpush.bf16.xpose.msra.mxu0 0
      %686 = vmatpush.bf16.xpose.msra.mxu0 0
      %687 = vmatpush.bf16.xpose.msra.mxu0 0
      %688 = vmatpush.bf16.xpose.msra.mxu0 %v679
      %689 = vmatmul.bf16.gmra.mxu0 %v676
      %v690 = vpop.f32.mrf.mxu0
      %v691 = vadd.f32 0.0, %v690
      %v692 = vpop.f32.mrf.mxu0
      %v693 = vadd.f32 0.0, %v692
      %694 = vdwg.mxu0
      %v695 = vmul.f32 %v691, 0.35355338
      %v696 = vmul.f32 %v693, 0.35355338
      %vm697 = vcmask 130048
      %v698 = vsel %vm697, %v695, -inf
      %699 = vmax.xlane.f32.xlu0 %v698
      %v700 = vpop.xlane.xlu0 %699
      %v701 = vsel %vm697, %v696, -inf
      %702 = vmax.xlane.f32.xlu0 %v701
      %v703 = vpop.xlane.xlu0 %702
      %v704 = vsub.f32 %v695, %v700
      %v705 = vsub.f32 %v696, %v703
      %v706 = vmul.f32 %v704, 1.442695
      %v707 = vpow.pop %v706
      %v708 = vmul.f32 %v705, 1.442695
      %v709 = vpow.pop %v708
      %v710 = vsel %vm697, %v707, 0.0
      %711 = vadd.xlane.f32.xlu0 %v710
      %v712 = vpop.xlane.xlu0 %711
      %v713 = vsel %vm697, %v709, 0.0
      %714 = vadd.xlane.f32.xlu0 %v713
      %v715 = vpop.xlane.xlu0 %714
      %v716 = vrcp.pop %v712
      %v717 = vrcp.pop %v715
      %v718 = vmul.f32 %v707, %v716
      %v719 = vmul.f32 %v709, %v717
      %v720 = vpack.c.bf16 %v719, %v718
      %v721 = vld [vmem:[#allocation3] sm:$0xf]
      %v722 = vld [vmem:[#allocation3 + $0x4] sm:$0xf]
      %v725 = vunpack.c.l.b16 %v721
      %v726 = vunpack.c.l.b16 %v722
      %v727 = vpack.c.b16 %v726, %v725
      %v730 = vsel %vm697, %v720, 0
      %732 = vmatpush.bf16.msra.mxu0 0
      %733 = vmatpush.bf16.msra.mxu0 0
      %734 = vmatpush.bf16.msra.mxu0 0
      %735 = vmatpush.bf16.msra.mxu0 0
      %736 = vmatpush.bf16.msra.mxu0 0
      %737 = vmatpush.bf16.msra.mxu0 0
      %738 = vmatpush.bf16.msra.mxu0 0
      %739 = vmatpush.bf16.msra.mxu0 %v727
      %740 = vmatmul.bf16.gmra.mxu0 %v730
      %v741 = vpop.f32.mrf.mxu0
      %v742 = vadd.f32 0.0, %v741
      %v743 = vpop.f32.mrf.mxu0
      %v744 = vadd.f32 0.0, %v743
      %745 = vdwg.mxu0
      %v746 = vpack.c.bf16 %v744, %v742
      %v747 = vld [vmem:[%s9] sm:$0xf]
      %v748 = vld [vmem:[%s10] sm:$0x1]
      %v750 = vperm.slane %v748, 0
      %v753 = vsel %vm645, %v746, 0
      %v756 = vsel %vm649, %v747, 0
      %758 = vmatpush.bf16.msra.mxu0 0
      %759 = vmatpush.bf16.msra.mxu0 0
      %760 = vmatpush.bf16.msra.mxu0 0
      %761 = vmatpush.bf16.msra.mxu0 0
      %762 = vmatpush.bf16.msra.mxu0 0
      %763 = vmatpush.bf16.msra.mxu0 0
      %764 = vmatpush.bf16.msra.mxu0 0
      %765 = vmatpush.bf16.msra.mxu0 %v756
      %766 = vmatmul.bf16.gmra.mxu0 %v753
      %v767 = vpop.f32.mrf.mxu0
      %v768 = vadd.f32 %v750, %v767
      %v769 = vpop.f32.mrf.mxu0
      %v770 = vadd.f32 %v750, %v769
      %771 = vdwg.mxu0
      %vm772 = vcmp.gt.f32.partialorder %v768, 0.0
      %vm773 = vcmp.gt.f32.partialorder %v770, 0.0
      %v774 = vmul.f32 %v768, 0.01
      %v775 = vmul.f32 %v770, 0.01
      %v776 = vsel %vm772, %v768, %v774
      %v777 = vsel %vm773, %v770, %v775
      %v778 = vld [vmem:[%s551] sm:$0xf]
      %v779 = vld [vmem:[%s551 + $0x4] sm:$0xf]
      %v780 = vld [vmem:[%s11] sm:$0xf]
      %v781 = vld [vmem:[%s11 + $0x4] sm:$0xf]
      %v782 = vpack.c.bf16 %v777, %v776
      %v783 = vld [vmem:[%s12] sm:$0xf]
      %v784 = vld [vmem:[%s12 + $0x4] sm:$0xf]
      %v787 = vunpack.c.l.b16 %v783
      %v788 = vunpack.c.l.b16 %v784
      %v789 = vpack.c.b16 %v788, %v787
      %v792 = vsel %vm697, %v782, 0
      %794 = vmatpush.bf16.msra.mxu0 0
      %795 = vmatpush.bf16.msra.mxu0 0
      %796 = vmatpush.bf16.msra.mxu0 0
      %797 = vmatpush.bf16.msra.mxu0 0
      %798 = vmatpush.bf16.msra.mxu0 0
      %799 = vmatpush.bf16.msra.mxu0 0
      %800 = vmatpush.bf16.msra.mxu0 0
      %801 = vmatpush.bf16.msra.mxu0 %v789
      %802 = vmatmul.bf16.gmra.mxu0 %v792
      %v803 = vpop.f32.mrf.mxu0
      %v804 = vadd.f32 0.0, %v803
      %v805 = vpop.f32.mrf.mxu0
      %v806 = vadd.f32 0.0, %v805
      %807 = vdwg.mxu0
      %v810 = vunpack.c.l.b16 %v778
      %v811 = vunpack.c.l.b16 %v779
      %v812 = vpack.c.b16 %v811, %v810
      %v815 = vunpack.c.l.b16 %v780
      %v816 = vunpack.c.l.b16 %v781
      %v817 = vpack.c.b16 %v816, %v815
      %v820 = vsel %vm697, %v812, 0
      %822 = vmatpush.bf16.msra.mxu0 0
      %823 = vmatpush.bf16.msra.mxu0 0
      %824 = vmatpush.bf16.msra.mxu0 0
      %825 = vmatpush.bf16.msra.mxu0 0
      %826 = vmatpush.bf16.msra.mxu0 0
      %827 = vmatpush.bf16.msra.mxu0 0
      %828 = vmatpush.bf16.msra.mxu0 0
      %829 = vmatpush.bf16.msra.mxu0 %v817
      %830 = vmatmul.bf16.gmra.mxu0 %v820
      %v831 = vpop.f32.mrf.mxu0
      %v832 = vadd.f32 %v804, %v831
      %v833 = vpop.f32.mrf.mxu0
      %v834 = vadd.f32 %v806, %v833
      %835 = vdwg.mxu0
      %v836 = vld [vmem:[%s13] sm:$0x1]
      %v838 = vperm.slane %v836, 0
      %v840 = vadd.f32 %v832, %v838
      %v841 = vadd.f32 %v834, %v838
      %vm842 = vcmp.gt.f32.partialorder %v840, 0.0
      %vm843 = vcmp.gt.f32.partialorder %v841, 0.0
      %v844 = vmul.f32 %v840, 0.01
      %v845 = vmul.f32 %v841, 0.01
      %v846 = vsel %vm842, %v840, %v844
      %v847 = vsel %vm843, %v841, %v845
      %v848 = vpack.c.bf16 %v846, %v846
      %v849 = vpack.c.bf16 %v847, %v847
      %vm850 = vcmask 125952
      %851 = vst.msk [vmem:[%s561] sm:$0xf] %vm850, %v848
      %852 = vst.msk [vmem:[%s561 + $0x4] sm:$0xf] %vm850, %v849
      %s853 = smul.u32 2, %s30
      %p854 = scmp.lt.s32.totalorder %s29, 1
      %s855 = scalar_select %p854, %s29, 1
      %p856 = scmp.lt.s32.totalorder %s853, 1
      %s857 = scalar_select %p856, %s853, 1
      %s858 = smul.addr %s855, 2
      %s859 = sadd.s32 %s857, %s858
      %s860 = smul.addr %s859, 4
      %s861 = scalar_lea.vmem %s14, %s860
      // Predicated region
      $region81: #{semantic_cnn_forward.26} parent=75 // pred_check
        %p862 = pneg %p370
      $region82: #{semantic_cnn_forward.26} parent=75 // pred_check_branch
        %864 = sbr.rel (%p862) target = $region84
      $region83: #{semantic_cnn_forward.26} parent=75 // pred_region
        %s865 = smul.u32 2, %s30
      $region84: #{semantic_cnn_forward.26} parent=75 // pred_fallthru
        _
    $region76: #{semantic_cnn_forward.26} parent=5 // pred_fallthru
      _
    %p866 = scmp.le.s32.totalorder 2, %s20
    // Predicated region
    $region85: #{semantic_cnn_forward.26} parent=5 // pred_check
      %p867 = pneg %p866
    $region86: #{semantic_cnn_forward.26} parent=5 // pred_check_branch
      %869 = sbr.rel (%p867) target = $region88
    $region87: #{semantic_cnn_forward.26} parent=5 // pred_region
      %s870 = ssub.s32 %s20, 2
      // Predicated region
      $region89: #{semantic_cnn_forward.26} parent=87 // pred_check
        %p871 = pneg %p376
      $region90: #{semantic_cnn_forward.26} parent=87 // pred_check_branch
        %873 = sbr.rel (%p871) target = $region92
      $region91: #{semantic_cnn_forward.26} parent=87 // pred_region
        %s874 = smul.u32 2, %s32
        %p875 = scmp.lt.s32.totalorder %s31, 1
        %s876 = scalar_select %p875, %s31, 1
        %p877 = scmp.lt.s32.totalorder %s874, 1
        %s878 = scalar_select %p877, %s874, 1
        %s879 = smul.addr %s876, 2
        %s880 = sadd.s32 %s878, %s879
        %s881 = smul.addr %s880, 4
        %s882 = scalar_lea.vmem %s14, %s881
      $region92: #{semantic_cnn_forward.26} parent=87 // pred_fallthru
        _
    $region88: #{semantic_cnn_forward.26} parent=5 // pred_fallthru
      _
  $region6: #{semantic_cnn_forward.26} parent=0 // loop_footer
    %s24 = sadd.s32 1, %s20
  $region7: #{semantic_cnn_forward.26} parent=0 // loop_footer_branch
    %19 = sbr.rel target = $region3
  $region8: #{semantic_cnn_forward.26} parent=0 // loop_exit
    _

// kernel: semantic_cnn_forward.27
$region0: #{semantic_cnn_forward.27}
  #allocation0 [shape = 'u32[]', space=smem, size = 0x4, offset = 0x4, fixed_abs, tag = 'smem constant byte address 0x4 - core index']
  #allocation1 [shape = 'u32[72,128]{1,0:T(1,128)}', space=vmem, size = 0x9000, scoped, tag = 'internal scratch']
  %s0 = inlined_call_operand.vmem [shape: bf16[2,16,2], index: 0, kind: input, shape index: {}]
  %s1 = inlined_call_operand.vmem [shape: bf16[2,16,2], index: 1, kind: input, shape index: {}]
  %s2 = inlined_call_operand.vmem [shape: bf16[2,16,4], index: 2, kind: input, shape index: {}]
  %s3 = inlined_call_operand.vmem [shape: bf16[2,16,8], index: 3, kind: input, shape index: {}]
  %s4 = inlined_call_operand.vmem [shape: bf16[2,16,16], index: 4, kind: input, shape index: {}]
  %s5 = inlined_call_operand.vmem [shape: bf16[2,32], index: 5, kind: input, shape index: {}]
  %s6 = inlined_call_operand.vmem [shape: bf16[2,32], index: 6, kind: input, shape index: {}]
  %s7 = inlined_call_operand.vmem [shape: bf16[4,32], index: 7, kind: input, shape index: {}]
  %s8 = inlined_call_operand.vmem [shape: bf16[8,32], index: 8, kind: input, shape index: {}]
  %s9 = inlined_call_operand.vmem [shape: bf16[16,32], index: 9, kind: input, shape index: {}]
  %s10 = inlined_call_operand.vmem [shape: f32[1,32], index: 10, kind: input, shape index: {}]
  %s11 = inlined_call_operand.vmem [shape: bf16[32,32], index: 11, kind: input, shape index: {}]
  %s12 = inlined_call_operand.vmem [shape: f32[32,1], index: 12, kind: input, shape index: {}]
  %s13 = inlined_call_operand.vmem [shape: f32[2,32,16], index: 13, kind: output, shape index: {}]
  %s14 = sld [smem:[#allocation0]]
  $region85: #{semantic_cnn_forward.27} parent=0
    _
  %s16 = ssub.s32 1, %s14
  %s17 = scalar_select 0, %s16, %s14
  loop: start=0, step=1, limit=4
  $region2: #{semantic_cnn_forward.27} parent=0 // loop_pre_header
    _
  $region3: #{semantic_cnn_forward.27} parent=0 // loop_header
    %s19 = sphi 0, %s23
    %p20 = scmp.ge.s32.totalorder %s19, 4
    %s26 = sphi 0, %s38
    %s27 = sphi 0, %s34
    %s28 = sphi 0, %s26
    %s29 = sphi 0, %s27
    %s30 = sphi 0, %s28
    %s31 = sphi 0, %s29
    %s43 = sphi 0, %s45
    %s46 = sphi 0, %s43
    %s47 = sphi 0, %s46
    %s63 = sphi 0, %s47
    %s71 = sphi 0, %s73
    %s74 = sphi 0, %s71
    %s75 = sphi 0, %s74
    %s91 = sphi 0, %s75
    %s99 = sphi 0, %s101
    %s102 = sphi 0, %s99
    %s103 = sphi 0, %s102
    %s119 = sphi 0, %s103
    %s127 = sphi 0, %s129
    %s130 = sphi 0, %s127
    %s131 = sphi 0, %s130
    %s147 = sphi 0, %s131
    %s155 = sphi 0, %s157
    %s158 = sphi 0, %s155
    %s159 = sphi 0, %s158
    %s175 = sphi 0, %s159
    %s179 = sphi 0, %s179
    %s181 = sphi 0, %s179
    %s182 = sphi 0, %s181
    %s196 = sphi 0, %s182
    %s200 = sphi 0, %s200
    %s202 = sphi 0, %s200
    %s203 = sphi 0, %s202
    %s217 = sphi 0, %s203
    %s221 = sphi 0, %s221
    %s223 = sphi 0, %s221
    %s224 = sphi 0, %s223
    %s238 = sphi 0, %s224
    %s242 = sphi 0, %s242
    %s244 = sphi 0, %s242
    %s245 = sphi 0, %s244
    %s259 = sphi 0, %s245
    %s263 = sphi 0, %s263
    %s265 = sphi 0, %s263
    %s266 = sphi 0, %s265
    %s280 = sphi 0, %s266
    %s284 = sphi 0, %s284
    %s286 = sphi 0, %s284
    %s287 = sphi 0, %s286
    %s301 = sphi 0, %s287
    %s305 = sphi 0, %s305
    %s307 = sphi 0, %s305
    %s308 = sphi 0, %s307
    %s322 = sphi 0, %s308
    %s326 = sphi 0, %s326
    %s328 = sphi 0, %s326
    %s329 = sphi 0, %s328
    %s343 = sphi 0, %s329
    %s351 = sphi 0, %s353
    %s354 = sphi 0, %s351
    %s355 = sphi 0, %s354
    %s371 = sphi 0, %s355
  $region4: #{semantic_cnn_forward.27} parent=0 // loop_header_branch
    %22 = sbr.rel (%p20) target = $region8
  $region5: #{semantic_cnn_forward.27} parent=0 // loop_body
    %s24 = ssub.s32 %s19, 1
    %s25 = ssub.s32 %s19, 2
    %s32 = sadd.s32 1, %s27
    %p33 = scmp.ge.s32.totalorder %s32, 1
    %s34 = scalar_select %p33, 0, %s32
    %s35 = sadd.s32 1, %s26
    %s36 = scalar_select %p33, %s35, %s26
    %p37 = scmp.ge.s32.totalorder %s36, 2
    %s38 = scalar_select %p37, 0, %s36
    %s39 = ssub.s32 %s26, %s38
    %s40 = ssub.s32 %s27, %s34
    %s41 = sor.u32 %s39, %s40
    %p42 = scmp.eq.s32.totalorder %s41, 0
    %s44 = sadd.s32 %s43, 1
    %s45 = scalar_select %p42, %s43, %s44
    %p48 = pneg %p42
    %p49 = scmp.eq.s32.totalorder %s19, 1
    %p50 = por %p48, %p49
    %p51 = scmp.ne.s32.totalorder %s43, %s46
    %p52 = scmp.eq.s32.totalorder %s19, 0
    %p53 = por %p51, %p52
    %p54 = scmp.ne.s32.totalorder %s43, %s46
    %p55 = scmp.eq.s32.totalorder %s24, 1
    %p56 = por %p54, %p55
    %p57 = scmp.ne.s32.totalorder %s46, %s47
    %p58 = scmp.eq.s32.totalorder %s24, 0
    %p59 = por %p57, %p58
    %p60 = scmp.ne.s32.totalorder %s46, %s47
    %p61 = scmp.eq.s32.totalorder %s25, 1
    %p62 = por %p60, %p61
    %p64 = scmp.ne.s32.totalorder %s47, %s63
    %p65 = scmp.eq.s32.totalorder %s25, 0
    %p66 = por %p64, %p65
    %s67 = ssub.s32 %s26, %s38
    %s68 = ssub.s32 %s27, %s34
    %s69 = sor.u32 %s67, %s68
    %p70 = scmp.eq.s32.totalorder %s69, 0
    %s72 = sadd.s32 %s71, 1
    %s73 = scalar_select %p70, %s71, %s72
    %p76 = pneg %p70
    %p77 = scmp.eq.s32.totalorder %s19, 1
    %p78 = por %p76, %p77
    %p79 = scmp.ne.s32.totalorder %s71, %s74
    %p80 = scmp.eq.s32.totalorder %s19, 0
    %p81 = por %p79, %p80
    %p82 = scmp.ne.s32.totalorder %s71, %s74
    %p83 = scmp.eq.s32.totalorder %s24, 1
    %p84 = por %p82, %p83
    %p85 = scmp.ne.s32.totalorder %s74, %s75
    %p86 = scmp.eq.s32.totalorder %s24, 0
    %p87 = por %p85, %p86
    %p88 = scmp.ne.s32.totalorder %s74, %s75
    %p89 = scmp.eq.s32.totalorder %s25, 1
    %p90 = por %p88, %p89
    %p92 = scmp.ne.s32.totalorder %s75, %s91
    %p93 = scmp.eq.s32.totalorder %s25, 0
    %p94 = por %p92, %p93
    %s95 = ssub.s32 %s26, %s38
    %s96 = ssub.s32 %s27, %s34
    %s97 = sor.u32 %s95, %s96
    %p98 = scmp.eq.s32.totalorder %s97, 0
    %s100 = sadd.s32 %s99, 1
    %s101 = scalar_select %p98, %s99, %s100
    %p104 = pneg %p98
    %p105 = scmp.eq.s32.totalorder %s19, 1
    %p106 = por %p104, %p105
    %p107 = scmp.ne.s32.totalorder %s99, %s102
    %p108 = scmp.eq.s32.totalorder %s19, 0
    %p109 = por %p107, %p108
    %p110 = scmp.ne.s32.totalorder %s99, %s102
    %p111 = scmp.eq.s32.totalorder %s24, 1
    %p112 = por %p110, %p111
    %p113 = scmp.ne.s32.totalorder %s102, %s103
    %p114 = scmp.eq.s32.totalorder %s24, 0
    %p115 = por %p113, %p114
    %p116 = scmp.ne.s32.totalorder %s102, %s103
    %p117 = scmp.eq.s32.totalorder %s25, 1
    %p118 = por %p116, %p117
    %p120 = scmp.ne.s32.totalorder %s103, %s119
    %p121 = scmp.eq.s32.totalorder %s25, 0
    %p122 = por %p120, %p121
    %s123 = ssub.s32 %s26, %s38
    %s124 = ssub.s32 %s27, %s34
    %s125 = sor.u32 %s123, %s124
    %p126 = scmp.eq.s32.totalorder %s125, 0
    %s128 = sadd.s32 %s127, 1
    %s129 = scalar_select %p126, %s127, %s128
    %p132 = pneg %p126
    %p133 = scmp.eq.s32.totalorder %s19, 1
    %p134 = por %p132, %p133
    %p135 = scmp.ne.s32.totalorder %s127, %s130
    %p136 = scmp.eq.s32.totalorder %s19, 0
    %p137 = por %p135, %p136
    %p138 = scmp.ne.s32.totalorder %s127, %s130
    %p139 = scmp.eq.s32.totalorder %s24, 1
    %p140 = por %p138, %p139
    %p141 = scmp.ne.s32.totalorder %s130, %s131
    %p142 = scmp.eq.s32.totalorder %s24, 0
    %p143 = por %p141, %p142
    %p144 = scmp.ne.s32.totalorder %s130, %s131
    %p145 = scmp.eq.s32.totalorder %s25, 1
    %p146 = por %p144, %p145
    %p148 = scmp.ne.s32.totalorder %s131, %s147
    %p149 = scmp.eq.s32.totalorder %s25, 0
    %p150 = por %p148, %p149
    %s151 = ssub.s32 %s26, %s38
    %s152 = ssub.s32 %s27, %s34
    %s153 = sor.u32 %s151, %s152
    %p154 = scmp.eq.s32.totalorder %s153, 0
    %s156 = sadd.s32 %s155, 1
    %s157 = scalar_select %p154, %s155, %s156
    %p160 = pneg %p154
    %p161 = scmp.eq.s32.totalorder %s19, 1
    %p162 = por %p160, %p161
    %p163 = scmp.ne.s32.totalorder %s155, %s158
    %p164 = scmp.eq.s32.totalorder %s19, 0
    %p165 = por %p163, %p164
    %p166 = scmp.ne.s32.totalorder %s155, %s158
    %p167 = scmp.eq.s32.totalorder %s24, 1
    %p168 = por %p166, %p167
    %p169 = scmp.ne.s32.totalorder %s158, %s159
    %p170 = scmp.eq.s32.totalorder %s24, 0
    %p171 = por %p169, %p170
    %p172 = scmp.ne.s32.totalorder %s158, %s159
    %p173 = scmp.eq.s32.totalorder %s25, 1
    %p174 = por %p172, %p173
    %p176 = scmp.ne.s32.totalorder %s159, %s175
    %p177 = scmp.eq.s32.totalorder %s25, 0
    %p178 = por %p176, %p177
    %s180 = sadd.s32 %s179, 1
    %p183 = scmp.eq.s32.totalorder %s19, 1
    %p184 = scmp.ne.s32.totalorder %s179, %s181
    %p185 = scmp.eq.s32.totalorder %s19, 0
    %p186 = por %p184, %p185
    %p187 = scmp.ne.s32.totalorder %s179, %s181
    %p188 = scmp.eq.s32.totalorder %s24, 1
    %p189 = por %p187, %p188
    %p190 = scmp.ne.s32.totalorder %s181, %s182
    %p191 = scmp.eq.s32.totalorder %s24, 0
    %p192 = por %p190, %p191
    %p193 = scmp.ne.s32.totalorder %s181, %s182
    %p194 = scmp.eq.s32.totalorder %s25, 1
    %p195 = por %p193, %p194
    %p197 = scmp.ne.s32.totalorder %s182, %s196
    %p198 = scmp.eq.s32.totalorder %s25, 0
    %p199 = por %p197, %p198
    %s201 = sadd.s32 %s200, 1
    %p204 = scmp.eq.s32.totalorder %s19, 1
    %p205 = scmp.ne.s32.totalorder %s200, %s202
    %p206 = scmp.eq.s32.totalorder %s19, 0
    %p207 = por %p205, %p206
    %p208 = scmp.ne.s32.totalorder %s200, %s202
    %p209 = scmp.eq.s32.totalorder %s24, 1
    %p210 = por %p208, %p209
    %p211 = scmp.ne.s32.totalorder %s202, %s203
    %p212 = scmp.eq.s32.totalorder %s24, 0
    %p213 = por %p211, %p212
    %p214 = scmp.ne.s32.totalorder %s202, %s203
    %p215 = scmp.eq.s32.totalorder %s25, 1
    %p216 = por %p214, %p215
    %p218 = scmp.ne.s32.totalorder %s203, %s217
    %p219 = scmp.eq.s32.totalorder %s25, 0
    %p220 = por %p218, %p219
    %s222 = sadd.s32 %s221, 1
    %p225 = scmp.eq.s32.totalorder %s19, 1
    %p226 = scmp.ne.s32.totalorder %s221, %s223
    %p227 = scmp.eq.s32.totalorder %s19, 0
    %p228 = por %p226, %p227
    %p229 = scmp.ne.s32.totalorder %s221, %s223
    %p230 = scmp.eq.s32.totalorder %s24, 1
    %p231 = por %p229, %p230
    %p232 = scmp.ne.s32.totalorder %s223, %s224
    %p233 = scmp.eq.s32.totalorder %s24, 0
    %p234 = por %p232, %p233
    %p235 = scmp.ne.s32.totalorder %s223, %s224
    %p236 = scmp.eq.s32.totalorder %s25, 1
    %p237 = por %p235, %p236
    %p239 = scmp.ne.s32.totalorder %s224, %s238
    %p240 = scmp.eq.s32.totalorder %s25, 0
    %p241 = por %p239, %p240
    %s243 = sadd.s32 %s242, 1
    %p246 = scmp.eq.s32.totalorder %s19, 1
    %p247 = scmp.ne.s32.totalorder %s242, %s244
    %p248 = scmp.eq.s32.totalorder %s19, 0
    %p249 = por %p247, %p248
    %p250 = scmp.ne.s32.totalorder %s242, %s244
    %p251 = scmp.eq.s32.totalorder %s24, 1
    %p252 = por %p250, %p251
    %p253 = scmp.ne.s32.totalorder %s244, %s245
    %p254 = scmp.eq.s32.totalorder %s24, 0
    %p255 = por %p253, %p254
    %p256 = scmp.ne.s32.totalorder %s244, %s245
    %p257 = scmp.eq.s32.totalorder %s25, 1
    %p258 = por %p256, %p257
    %p260 = scmp.ne.s32.totalorder %s245, %s259
    %p261 = scmp.eq.s32.totalorder %s25, 0
    %p262 = por %p260, %p261
    %s264 = sadd.s32 %s263, 1
    %p267 = scmp.eq.s32.totalorder %s19, 1
    %p268 = scmp.ne.s32.totalorder %s263, %s265
    %p269 = scmp.eq.s32.totalorder %s19, 0
    %p270 = por %p268, %p269
    %p271 = scmp.ne.s32.totalorder %s263, %s265
    %p272 = scmp.eq.s32.totalorder %s24, 1
    %p273 = por %p271, %p272
    %p274 = scmp.ne.s32.totalorder %s265, %s266
    %p275 = scmp.eq.s32.totalorder %s24, 0
    %p276 = por %p274, %p275
    %p277 = scmp.ne.s32.totalorder %s265, %s266
    %p278 = scmp.eq.s32.totalorder %s25, 1
    %p279 = por %p277, %p278
    %p281 = scmp.ne.s32.totalorder %s266, %s280
    %p282 = scmp.eq.s32.totalorder %s25, 0
    %p283 = por %p281, %p282
    %s285 = sadd.s32 %s284, 1
    %p288 = scmp.eq.s32.totalorder %s19, 1
    %p289 = scmp.ne.s32.totalorder %s284, %s286
    %p290 = scmp.eq.s32.totalorder %s19, 0
    %p291 = por %p289, %p290
    %p292 = scmp.ne.s32.totalorder %s284, %s286
    %p293 = scmp.eq.s32.totalorder %s24, 1
    %p294 = por %p292, %p293
    %p295 = scmp.ne.s32.totalorder %s286, %s287
    %p296 = scmp.eq.s32.totalorder %s24, 0
    %p297 = por %p295, %p296
    %p298 = scmp.ne.s32.totalorder %s286, %s287
    %p299 = scmp.eq.s32.totalorder %s25, 1
    %p300 = por %p298, %p299
    %p302 = scmp.ne.s32.totalorder %s287, %s301
    %p303 = scmp.eq.s32.totalorder %s25, 0
    %p304 = por %p302, %p303
    %s306 = sadd.s32 %s305, 1
    %p309 = scmp.eq.s32.totalorder %s19, 1
    %p310 = scmp.ne.s32.totalorder %s305, %s307
    %p311 = scmp.eq.s32.totalorder %s19, 0
    %p312 = por %p310, %p311
    %p313 = scmp.ne.s32.totalorder %s305, %s307
    %p314 = scmp.eq.s32.totalorder %s24, 1
    %p315 = por %p313, %p314
    %p316 = scmp.ne.s32.totalorder %s307, %s308
    %p317 = scmp.eq.s32.totalorder %s24, 0
    %p318 = por %p316, %p317
    %p319 = scmp.ne.s32.totalorder %s307, %s308
    %p320 = scmp.eq.s32.totalorder %s25, 1
    %p321 = por %p319, %p320
    %p323 = scmp.ne.s32.totalorder %s308, %s322
    %p324 = scmp.eq.s32.totalorder %s25, 0
    %p325 = por %p323, %p324
    %s327 = sadd.s32 %s326, 1
    %p330 = scmp.eq.s32.totalorder %s19, 1
    %p331 = scmp.ne.s32.totalorder %s326, %s328
    %p332 = scmp.eq.s32.totalorder %s19, 0
    %p333 = por %p331, %p332
    %p334 = scmp.ne.s32.totalorder %s326, %s328
    %p335 = scmp.eq.s32.totalorder %s24, 1
    %p336 = por %p334, %p335
    %p337 = scmp.ne.s32.totalorder %s328, %s329
    %p338 = scmp.eq.s32.totalorder %s24, 0
    %p339 = por %p337, %p338
    %p340 = scmp.ne.s32.totalorder %s328, %s329
    %p341 = scmp.eq.s32.totalorder %s25, 1
    %p342 = por %p340, %p341
    %p344 = scmp.ne.s32.totalorder %s329, %s343
    %p345 = scmp.eq.s32.totalorder %s25, 0
    %p346 = por %p344, %p345
    %s347 = ssub.s32 %s26, %s38
    %s348 = ssub.s32 %s27, %s34
    %s349 = sor.u32 %s347, %s348
    %p350 = scmp.eq.s32.totalorder %s349, 0
    %s352 = sadd.s32 %s351, 1
    %s353 = scalar_select %p350, %s351, %s352
    %p356 = pneg %p350
    %p357 = scmp.eq.s32.totalorder %s19, 1
    %p358 = por %p356, %p357
    %p359 = scmp.ne.s32.totalorder %s351, %s354
    %p360 = scmp.eq.s32.totalorder %s19, 0
    %p361 = por %p359, %p360
    %p362 = scmp.ne.s32.totalorder %s351, %s354
    %p363 = scmp.eq.s32.totalorder %s24, 1
    %p364 = por %p362, %p363
    %p365 = scmp.ne.s32.totalorder %s354, %s355
    %p366 = scmp.eq.s32.totalorder %s24, 0
    %p367 = por %p365, %p366
    %p368 = scmp.ne.s32.totalorder %s354, %s355
    %p369 = scmp.eq.s32.totalorder %s25, 1
    %p370 = por %p368, %p369
    %p372 = scmp.ne.s32.totalorder %s355, %s371
    %p373 = scmp.eq.s32.totalorder %s25, 0
    %p374 = por %p372, %p373
    %p375 = scmp.le.s32.totalorder 1, %s19
    %p376 = scmp.lt.s32.totalorder %s19, 3
    %p377 = pnand %p375, %p376
    %p378 = pneg %p377
    // Predicated region
    $region9: #{semantic_cnn_forward.27} parent=5 // pred_check
      _
    $region10: #{semantic_cnn_forward.27} parent=5 // pred_check_branch
      %380 = sbr.rel (%p377) target = $region12
    $region11: #{semantic_cnn_forward.27} parent=5 // pred_region
      %s381 = ssub.s32 %s19, 1
      // Predicated region
      $region13: #{semantic_cnn_forward.27} parent=11 // pred_check
        %p382 = pneg %p192
      $region14: #{semantic_cnn_forward.27} parent=11 // pred_check_branch
        %384 = sbr.rel (%p382) target = $region16
      $region15: #{semantic_cnn_forward.27} parent=11 // pred_region
        _
      $region16: #{semantic_cnn_forward.27} parent=11 // pred_fallthru
        _
      // Predicated region
      $region17: #{semantic_cnn_forward.27} parent=11 // pred_check
        %p385 = pneg %p213
      $region18: #{semantic_cnn_forward.27} parent=11 // pred_check_branch
        %387 = sbr.rel (%p385) target = $region20
      $region19: #{semantic_cnn_forward.27} parent=11 // pred_region
        _
      $region20: #{semantic_cnn_forward.27} parent=11 // pred_fallthru
        _
      // Predicated region
      $region21: #{semantic_cnn_forward.27} parent=11 // pred_check
        %p388 = pneg %p234
      $region22: #{semantic_cnn_forward.27} parent=11 // pred_check_branch
        %390 = sbr.rel (%p388) target = $region24
      $region23: #{semantic_cnn_forward.27} parent=11 // pred_region
        _
      $region24: #{semantic_cnn_forward.27} parent=11 // pred_fallthru
        _
      // Predicated region
      $region25: #{semantic_cnn_forward.27} parent=11 // pred_check
        %p391 = pneg %p255
      $region26: #{semantic_cnn_forward.27} parent=11 // pred_check_branch
        %393 = sbr.rel (%p391) target = $region28
      $region27: #{semantic_cnn_forward.27} parent=11 // pred_region
        _
      $region28: #{semantic_cnn_forward.27} parent=11 // pred_fallthru
        _
      // Predicated region
      $region29: #{semantic_cnn_forward.27} parent=11 // pred_check
        %p394 = pneg %p276
      $region30: #{semantic_cnn_forward.27} parent=11 // pred_check_branch
        %396 = sbr.rel (%p394) target = $region32
      $region31: #{semantic_cnn_forward.27} parent=11 // pred_region
        _
      $region32: #{semantic_cnn_forward.27} parent=11 // pred_fallthru
        _
      // Predicated region
      $region33: #{semantic_cnn_forward.27} parent=11 // pred_check
        %p397 = pneg %p297
      $region34: #{semantic_cnn_forward.27} parent=11 // pred_check_branch
        %399 = sbr.rel (%p397) target = $region36
      $region35: #{semantic_cnn_forward.27} parent=11 // pred_region
        _
      $region36: #{semantic_cnn_forward.27} parent=11 // pred_fallthru
        _
      // Predicated region
      $region37: #{semantic_cnn_forward.27} parent=11 // pred_check
        %p400 = pneg %p318
      $region38: #{semantic_cnn_forward.27} parent=11 // pred_check_branch
        %402 = sbr.rel (%p400) target = $region40
      $region39: #{semantic_cnn_forward.27} parent=11 // pred_region
        _
      $region40: #{semantic_cnn_forward.27} parent=11 // pred_fallthru
        _
      // Predicated region
      $region41: #{semantic_cnn_forward.27} parent=11 // pred_check
        %p403 = pneg %p339
      $region42: #{semantic_cnn_forward.27} parent=11 // pred_check_branch
        %405 = sbr.rel (%p403) target = $region44
      $region43: #{semantic_cnn_forward.27} parent=11 // pred_region
        _
      $region44: #{semantic_cnn_forward.27} parent=11 // pred_fallthru
        _
    $region12: #{semantic_cnn_forward.27} parent=5 // pred_fallthru
      _
    %p406 = scmp.lt.s32.totalorder %s19, 2
    // Predicated region
    $region45: #{semantic_cnn_forward.27} parent=5 // pred_check
      %p407 = pneg %p406
    $region46: #{semantic_cnn_forward.27} parent=5 // pred_check_branch
      %409 = sbr.rel (%p407) target = $region48
    $region47: #{semantic_cnn_forward.27} parent=5 // pred_region
      // Predicated region
      $region49: #{semantic_cnn_forward.27} parent=47 // pred_check
        %p410 = pneg %p53
      $region50: #{semantic_cnn_forward.27} parent=47 // pred_check_branch
        %412 = sbr.rel (%p410) target = $region52
      $region51: #{semantic_cnn_forward.27} parent=47 // pred_region
        %s413 = smul.u32 2, %s27
        %p414 = scmp.lt.s32.totalorder %s26, 1
        %s415 = scalar_select %p414, %s26, 1
        %p416 = scmp.lt.s32.totalorder %s413, 1
        %s417 = scalar_select %p416, %s413, 1
        %s418 = smul.addr %s415, 2
        %s419 = sadd.s32 %s417, %s418
        %s420 = smul.addr %s419, 4
        %s421 = scalar_lea.vmem %s0, %s420
        %s422 = smul.u32 2, %s27
      $region52: #{semantic_cnn_forward.27} parent=47 // pred_fallthru
        _
      // Predicated region
      $region53: #{semantic_cnn_forward.27} parent=47 // pred_check
        %p423 = pneg %p81
      $region54: #{semantic_cnn_forward.27} parent=47 // pred_check_branch
        %425 = sbr.rel (%p423) target = $region56
      $region55: #{semantic_cnn_forward.27} parent=47 // pred_region
        %s426 = smul.u32 2, %s27
        %p427 = scmp.lt.s32.totalorder %s26, 1
        %s428 = scalar_select %p427, %s26, 1
        %p429 = scmp.lt.s32.totalorder %s426, 1
        %s430 = scalar_select %p429, %s426, 1
        %s431 = smul.addr %s428, 2
        %s432 = sadd.s32 %s430, %s431
        %s433 = smul.addr %s432, 4
        %s434 = scalar_lea.vmem %s1, %s433
        %s435 = smul.u32 2, %s27
      $region56: #{semantic_cnn_forward.27} parent=47 // pred_fallthru
        _
      // Predicated region
      $region57: #{semantic_cnn_forward.27} parent=47 // pred_check
        %p436 = pneg %p109
      $region58: #{semantic_cnn_forward.27} parent=47 // pred_check_branch
        %438 = sbr.rel (%p436) target = $region60
      $region59: #{semantic_cnn_forward.27} parent=47 // pred_region
        %s439 = smul.u32 2, %s27
        %p440 = scmp.lt.s32.totalorder %s26, 1
        %s441 = scalar_select %p440, %s26, 1
        %p442 = scmp.lt.s32.totalorder %s439, 1
        %s443 = scalar_select %p442, %s439, 1
        %s444 = smul.addr %s441, 2
        %s445 = sadd.s32 %s443, %s444
        %s446 = smul.addr %s445, 4
        %s447 = scalar_lea.vmem %s2, %s446
        %s448 = smul.u32 2, %s27
      $region60: #{semantic_cnn_forward.27} parent=47 // pred_fallthru
        _
      // Predicated region
      $region61: #{semantic_cnn_forward.27} parent=47 // pred_check
        %p449 = pneg %p137
      $region62: #{semantic_cnn_forward.27} parent=47 // pred_check_branch
        %451 = sbr.rel (%p449) target = $region64
      $region63: #{semantic_cnn_forward.27} parent=47 // pred_region
        %s452 = smul.u32 2, %s27
        %p453 = scmp.lt.s32.totalorder %s26, 1
        %s454 = scalar_select %p453, %s26, 1
        %p455 = scmp.lt.s32.totalorder %s452, 1
        %s456 = scalar_select %p455, %s452, 1
        %s457 = smul.addr %s454, 2
        %s458 = sadd.s32 %s456, %s457
        %s459 = smul.addr %s458, 4
        %s460 = scalar_lea.vmem %s3, %s459
        %s461 = smul.u32 2, %s27
      $region64: #{semantic_cnn_forward.27} parent=47 // pred_fallthru
        _
      // Predicated region
      $region65: #{semantic_cnn_forward.27} parent=47 // pred_check
        %p462 = pneg %p165
      $region66: #{semantic_cnn_forward.27} parent=47 // pred_check_branch
        %464 = sbr.rel (%p462) target = $region68
      $region67: #{semantic_cnn_forward.27} parent=47 // pred_region
        %s465 = smul.u32 2, %s27
        %p466 = scmp.lt.s32.totalorder %s26, 1
        %s467 = scalar_select %p466, %s26, 1
        %p468 = scmp.lt.s32.totalorder %s465, 1
        %s469 = scalar_select %p468, %s465, 1
        %s470 = smul.addr %s467, 2
        %s471 = sadd.s32 %s469, %s470
        %s472 = smul.addr %s471, 4
        %s473 = scalar_lea.vmem %s4, %s472
        %s474 = smul.u32 2, %s27
      $region68: #{semantic_cnn_forward.27} parent=47 // pred_fallthru
        _
    $region48: #{semantic_cnn_forward.27} parent=5 // pred_fallthru
      _
    %p475 = scmp.le.s32.totalorder 1, %s19
    %p476 = scmp.lt.s32.totalorder %s19, 3
    %p477 = pnand %p475, %p476
    %p478 = pneg %p477
    // Predicated region
    $region69: #{semantic_cnn_forward.27} parent=5 // pred_check
      _
    $region70: #{semantic_cnn_forward.27} parent=5 // pred_check_branch
      %480 = sbr.rel (%p477) target = $region72
    $region71: #{semantic_cnn_forward.27} parent=5 // pred_region
      %s481 = ssub.s32 %s19, 1
      %s482 = smul.u32 2, %s29
      %p483 = scmp.lt.s32.totalorder %s28, 1
      %s484 = scalar_select %p483, %s28, 1
      %p485 = scmp.lt.s32.totalorder %s482, 1
      %s486 = scalar_select %p485, %s482, 1
      %s487 = smul.addr %s484, 2
      %s488 = sadd.s32 %s486, %s487
      %s489 = smul.addr %s488, 4
      %s490 = scalar_lea.vmem %s0, %s489
      %p491 = pneg %p59
      %p492 = pneg %p56
      %s493 = smul.u32 2, %s29
      %p494 = scmp.lt.s32.totalorder %s28, 1
      %s495 = scalar_select %p494, %s28, 1
      %p496 = scmp.lt.s32.totalorder %s493, 1
      %s497 = scalar_select %p496, %s493, 1
      %s498 = smul.addr %s495, 2
      %s499 = sadd.s32 %s497, %s498
      %s500 = smul.addr %s499, 4
      %s501 = scalar_lea.vmem %s1, %s500
      %p502 = pneg %p87
      %p503 = pneg %p84
      %s504 = smul.u32 2, %s29
      %p505 = scmp.lt.s32.totalorder %s28, 1
      %s506 = scalar_select %p505, %s28, 1
      %p507 = scmp.lt.s32.totalorder %s504, 1
      %s508 = scalar_select %p507, %s504, 1
      %s509 = smul.addr %s506, 2
      %s510 = sadd.s32 %s508, %s509
      %s511 = smul.addr %s510, 4
      %s512 = scalar_lea.vmem %s2, %s511
      %p513 = pneg %p115
      %p514 = pneg %p112
      %s515 = smul.u32 2, %s29
      %p516 = scmp.lt.s32.totalorder %s28, 1
      %s517 = scalar_select %p516, %s28, 1
      %p518 = scmp.lt.s32.totalorder %s515, 1
      %s519 = scalar_select %p518, %s515, 1
      %s520 = smul.addr %s517, 2
      %s521 = sadd.s32 %s519, %s520
      %s522 = smul.addr %s521, 4
      %s523 = scalar_lea.vmem %s3, %s522
      %p524 = pneg %p143
      %p525 = pneg %p140
      %s526 = smul.u32 2, %s29
      %p527 = scmp.lt.s32.totalorder %s28, 1
      %s528 = scalar_select %p527, %s28, 1
      %p529 = scmp.lt.s32.totalorder %s526, 1
      %s530 = scalar_select %p529, %s526, 1
      %s531 = smul.addr %s528, 2
      %s532 = sadd.s32 %s530, %s531
      %s533 = smul.addr %s532, 4
      %s534 = scalar_lea.vmem %s4, %s533
      %p535 = pneg %p171
      %p536 = pneg %p168
      %p537 = pneg %p192
      %p538 = pneg %p189
      %p539 = pneg %p213
      %p540 = pneg %p210
      %p541 = pneg %p234
      %p542 = pneg %p231
      %p543 = pneg %p255
      %p544 = pneg %p252
      %p545 = pneg %p276
      %p546 = pneg %p273
      %p547 = pneg %p297
      %p548 = pneg %p294
      %p549 = pneg %p318
      %p550 = pneg %p315
      %p551 = pneg %p339
      %p552 = pneg %p336
      %p553 = pneg %p367
      %p554 = pneg %p364
      %p555 = scmp.lt.s32.totalorder %s28, 1
      %s556 = scalar_select %p555, %s28, 1
      %p557 = scmp.lt.s32.totalorder %s29, 0
      %s558 = scalar_select %p557, %s29, 0
      %s559 = smul.addr %s556, 4
      %s560 = sadd.s32 %s558, %s559
      %s561 = smul.addr %s560, 8
      %s562 = scalar_lea.vmem %s13, %s561
      %s563 = smul.u32 2, %s29
      %p564 = scmp.lt.s32.totalorder %s28, 1
      %s565 = scalar_select %p564, %s28, 1
      %p566 = scmp.lt.s32.totalorder %s563, 1
      %s567 = scalar_select %p566, %s563, 1
      %s568 = smul.addr %s565, 2
      %s569 = sadd.s32 %s567, %s568
      %s570 = smul.addr %s569, 4
      %s571 = scalar_lea.vmem %s0, %s570
      %s572 = smul.u32 2, %s29
      %s573 = smul.u32 2, %s29
      %p574 = scmp.lt.s32.totalorder %s28, 1
      %s575 = scalar_select %p574, %s28, 1
      %p576 = scmp.lt.s32.totalorder %s573, 1
      %s577 = scalar_select %p576, %s573, 1
      %s578 = smul.addr %s575, 2
      %s579 = sadd.s32 %s577, %s578
      %s580 = smul.addr %s579, 4
      %s581 = scalar_lea.vmem %s1, %s580
      %s582 = smul.u32 2, %s29
      %s583 = smul.u32 2, %s29
      %p584 = scmp.lt.s32.totalorder %s28, 1
      %s585 = scalar_select %p584, %s28, 1
      %p586 = scmp.lt.s32.totalorder %s583, 1
      %s587 = scalar_select %p586, %s583, 1
      %s588 = smul.addr %s585, 2
      %s589 = sadd.s32 %s587, %s588
      %s590 = smul.addr %s589, 4
      %s591 = scalar_lea.vmem %s2, %s590
      %s592 = smul.u32 2, %s29
      %s593 = smul.u32 2, %s29
      %p594 = scmp.lt.s32.totalorder %s28, 1
      %s595 = scalar_select %p594, %s28, 1
      %p596 = scmp.lt.s32.totalorder %s593, 1
      %s597 = scalar_select %p596, %s593, 1
      %s598 = smul.addr %s595, 2
      %s599 = sadd.s32 %s597, %s598
      %s600 = smul.addr %s599, 4
      %s601 = scalar_lea.vmem %s3, %s600
      %s602 = smul.u32 2, %s29
      %s603 = smul.u32 2, %s29
      %p604 = scmp.lt.s32.totalorder %s28, 1
      %s605 = scalar_select %p604, %s28, 1
      %p606 = scmp.lt.s32.totalorder %s603, 1
      %s607 = scalar_select %p606, %s603, 1
      %s608 = smul.addr %s605, 2
      %s609 = sadd.s32 %s607, %s608
      %s610 = smul.addr %s609, 4
      %s611 = scalar_lea.vmem %s4, %s610
      %s612 = smul.u32 2, %s29
      %p613 = scmp.lt.s32.totalorder %s28, 1
      %s614 = scalar_select %p613, %s28, 1
      %p615 = scmp.lt.s32.totalorder %s29, 0
      %s616 = scalar_select %p615, %s29, 0
      %s617 = smul.addr %s614, 4
      %s618 = sadd.s32 %s616, %s617
      %s619 = smul.addr %s618, 8
      %s620 = scalar_lea.vmem %s13, %s619
      %v622 = vld [vmem:[%s571] sm:$0xf]
      %v623 = vld [vmem:[%s571 + $0x4] sm:$0xf]
      %v624 = vld [vmem:[%s5] sm:$0x1]
      %v625 = vld [vmem:[%s581] sm:$0xf]
      %v626 = vld [vmem:[%s581 + $0x4] sm:$0xf]
      %v627 = vld [vmem:[%s6] sm:$0x1]
      %v630 = vunpack.c.l.b16 %v625
      %v631 = vunpack.c.l.b16 %v626
      %v632 = vpack.c.b16 %v631, %v630
      %vm633 = vcmask 15360
      %v635 = vsel %vm633, %v632, 0
      %vm637 = vcmask 1040384
      %v639 = vsel %vm637, %v627, 0
      %641 = vmatpush.bf16.msra.mxu0 0
      %642 = vmatpush.bf16.msra.mxu0 0
      %643 = vmatpush.bf16.msra.mxu0 0
      %644 = vmatpush.bf16.msra.mxu0 0
      %645 = vmatpush.bf16.msra.mxu0 0
      %646 = vmatpush.bf16.msra.mxu0 0
      %647 = vmatpush.bf16.msra.mxu0 0
      %648 = vmatpush.bf16.msra.mxu0 %v639
      %649 = vmatmul.bf16.gmra.mxu0 %v635
      %v650 = vpop.f32.mrf.mxu0
      %v651 = vadd.f32 0.0, %v650
      %v652 = vpop.f32.mrf.mxu0
      %v653 = vadd.f32 0.0, %v652
      %654 = vdwg.mxu0
      %v657 = vunpack.c.l.b16 %v622
      %v658 = vunpack.c.l.b16 %v623
      %v659 = vpack.c.b16 %v658, %v657
      %v661 = vsel %vm633, %v659, 0
      %v664 = vsel %vm637, %v624, 0
      %666 = vmatpush.bf16.msra.mxu0 0
      %667 = vmatpush.bf16.msra.mxu0 0
      %668 = vmatpush.bf16.msra.mxu0 0
      %669 = vmatpush.bf16.msra.mxu0 0
      %670 = vmatpush.bf16.msra.mxu0 0
      %671 = vmatpush.bf16.msra.mxu0 0
      %672 = vmatpush.bf16.msra.mxu0 0
      %673 = vmatpush.bf16.msra.mxu0 %v664
      %674 = vmatmul.bf16.gmra.mxu0 %v661
      %v675 = vpop.f32.mrf.mxu0
      %v676 = vadd.f32 %v651, %v675
      %v677 = vpop.f32.mrf.mxu0
      %v678 = vadd.f32 %v653, %v677
      %679 = vdwg.mxu0
      %v680 = vld [vmem:[%s591] sm:$0xf]
      %v681 = vld [vmem:[%s591 + $0x4] sm:$0xf]
      %v682 = vld [vmem:[%s7] sm:$0x3]
      %v685 = vunpack.c.l.b16 %v680
      %v686 = vunpack.c.l.b16 %v681
      %v687 = vpack.c.b16 %v686, %v685
      %vm688 = vcmask 31744
      %v690 = vsel %vm688, %v687, 0
      %vm692 = vcmask 1041408
      %v694 = vsel %vm692, %v682, 0
      %696 = vmatpush.bf16.msra.mxu0 0
      %697 = vmatpush.bf16.msra.mxu0 0
      %698 = vmatpush.bf16.msra.mxu0 0
      %699 = vmatpush.bf16.msra.mxu0 0
      %700 = vmatpush.bf16.msra.mxu0 0
      %701 = vmatpush.bf16.msra.mxu0 0
      %702 = vmatpush.bf16.msra.mxu0 0
      %703 = vmatpush.bf16.msra.mxu0 %v694
      %704 = vmatmul.bf16.gmra.mxu0 %v690
      %v705 = vpop.f32.mrf.mxu0
      %v706 = vadd.f32 0.0, %v705
      %v707 = vpop.f32.mrf.mxu0
      %v708 = vadd.f32 0.0, %v707
      %709 = vdwg.mxu0
      %v710 = vadd.f32 %v676, %v706
      %v711 = vadd.f32 %v678, %v708
      %v712 = vld [vmem:[%s601] sm:$0xf]
      %v713 = vld [vmem:[%s601 + $0x4] sm:$0xf]
      %v714 = vld [vmem:[%s8] sm:$0xf]
      %v717 = vunpack.c.l.b16 %v712
      %v718 = vunpack.c.l.b16 %v713
      %v719 = vpack.c.b16 %v718, %v717
      %vm720 = vcmask 64512
      %v722 = vsel %vm720, %v719, 0
      %vm724 = vcmask 1043456
      %v726 = vsel %vm724, %v714, 0
      %728 = vmatpush.bf16.msra.mxu0 0
      %729 = vmatpush.bf16.msra.mxu0 0
      %730 = vmatpush.bf16.msra.mxu0 0
      %731 = vmatpush.bf16.msra.mxu0 0
      %732 = vmatpush.bf16.msra.mxu0 0
      %733 = vmatpush.bf16.msra.mxu0 0
      %734 = vmatpush.bf16.msra.mxu0 0
      %735 = vmatpush.bf16.msra.mxu0 %v726
      %736 = vmatmul.bf16.gmra.mxu0 %v722
      %v737 = vpop.f32.mrf.mxu0
      %v738 = vadd.f32 0.0, %v737
      %v739 = vpop.f32.mrf.mxu0
      %v740 = vadd.f32 0.0, %v739
      %741 = vdwg.mxu0
      %v742 = vadd.f32 %v710, %v738
      %v743 = vadd.f32 %v711, %v740
      %v744 = vld [vmem:[%s611] sm:$0xf]
      %v745 = vld [vmem:[%s611 + $0x4] sm:$0xf]
      %v746 = vld [vmem:[%s9] sm:$0xf]
      %v747 = vld [vmem:[%s9 + $0x4] sm:$0xf]
      %v750 = vunpack.c.l.b16 %v744
      %v751 = vunpack.c.l.b16 %v745
      %v752 = vpack.c.b16 %v751, %v750
      %v755 = vunpack.c.l.b16 %v746
      %v756 = vunpack.c.l.b16 %v747
      %v757 = vpack.c.b16 %v756, %v755
      %vm759 = vcmask 130048
      %v761 = vsel %vm759, %v752, 0
      %763 = vmatpush.bf16.msra.mxu0 0
      %764 = vmatpush.bf16.msra.mxu0 0
      %765 = vmatpush.bf16.msra.mxu0 0
      %766 = vmatpush.bf16.msra.mxu0 0
      %767 = vmatpush.bf16.msra.mxu0 0
      %768 = vmatpush.bf16.msra.mxu0 0
      %769 = vmatpush.bf16.msra.mxu0 0
      %770 = vmatpush.bf16.msra.mxu0 %v757
      %771 = vmatmul.bf16.gmra.mxu0 %v761
      %v772 = vpop.f32.mrf.mxu0
      %v773 = vadd.f32 0.0, %v772
      %v774 = vpop.f32.mrf.mxu0
      %v775 = vadd.f32 0.0, %v774
      %776 = vdwg.mxu0
      %v777 = vadd.f32 %v742, %v773
      %v778 = vadd.f32 %v743, %v775
      %v779 = vld [vmem:[%s10] sm:$0x1]
      %v781 = vperm.slane %v779, 0
      %v783 = vadd.f32 %v777, %v781
      %v784 = vadd.f32 %v778, %v781
      %v785 = vmax.f32 %v783, 0.0
      %v786 = vmax.f32 %v784, 0.0
      %v787 = vld [vmem:[%s11] sm:$0xf]
      %v788 = vld [vmem:[%s11 + $0x4] sm:$0xf]
      %v789 = vld [vmem:[%s11 + $0x8] sm:$0xf]
      %v790 = vld [vmem:[%s11 + $0xc] sm:$0xf]
      %v791 = vpack.c.bf16 %v786, %v785
      %v792 = vld [vmem:[%s12] sm:$0xff]
      %v793 = vld [vmem:[%s12 + $0x8] sm:$0xff]
      %v794 = vld [vmem:[%s12 + $0x10] sm:$0xff]
      %v795 = vld [vmem:[%s12 + $0x18] sm:$0xff]
      %797 = vset.pattern.permute.xlu0 0
      %798 = vperm.xlu0 %797, %v792
      %v799 = vpop.permute.xlu0 %798
      %802 = vset.pattern.permute.xlu0 0
      %803 = vperm.xlu0 %802, %v793
      %v804 = vpop.permute.xlu0 %803
      %807 = vset.pattern.permute.xlu0 0
      %808 = vperm.xlu0 %807, %v794
      %v809 = vpop.permute.xlu0 %808
      %812 = vset.pattern.permute.xlu0 0
      %813 = vperm.xlu0 %812, %v795
      %v814 = vpop.permute.xlu0 %813
      %v820 = vunpack.c.l.b16 %v787
      %v821 = vunpack.c.l.b16 %v788
      %v822 = vunpack.c.l.b16 %v789
      %v823 = vunpack.c.l.b16 %v790
      %v824 = vpack.c.b16 %v821, %v820
      %v825 = vpack.c.b16 %v823, %v822
      %vm826 = vcmask 261120
      %v828 = vsel %vm826, %v824, 0
      %v831 = vsel %vm826, %v825, 0
      %v834 = vsel %vm826, %v791, 0
      %836 = vmatpush.bf16.xpose.msra.mxu0 0
      %837 = vmatpush.bf16.xpose.msra.mxu0 0
      %838 = vmatpush.bf16.xpose.msra.mxu0 0
      %839 = vmatpush.bf16.xpose.msra.mxu0 0
      %840 = vmatpush.bf16.xpose.msra.mxu0 0
      %841 = vmatpush.bf16.xpose.msra.mxu0 0
      %842 = vmatpush.bf16.xpose.msra.mxu0 0
      %843 = vmatpush.bf16.xpose.msra.mxu0 %v834
      %844 = vmatmul.bf16.gmra.mxu0 %v828
      %v845 = vpop.f32.mrf.mxu0
      %v846 = vadd.f32 %v799, %v845
      %v847 = vpop.f32.mrf.mxu0
      %v848 = vadd.f32 %v804, %v847
      %849 = vmatmul.bf16.gmra.mxu0 %v831
      %v850 = vpop.f32.mrf.mxu0
      %v851 = vadd.f32 %v809, %v850
      %v852 = vpop.f32.mrf.mxu0
      %v853 = vadd.f32 %v814, %v852
      %854 = vdwg.mxu0
      %855 = vst.msk [vmem:[%s620] sm:$0xff] %vm759, %v846
      %856 = vst.msk [vmem:[%s620 + $0x8] sm:$0xff] %vm759, %v848
      %857 = vst.msk [vmem:[%s620 + $0x10] sm:$0xff] %vm759, %v851
      %858 = vst.msk [vmem:[%s620 + $0x18] sm:$0xff] %vm759, %v853
      %p859 = scmp.lt.s32.totalorder %s28, 1
      %s860 = scalar_select %p859, %s28, 1
      %p861 = scmp.lt.s32.totalorder %s29, 0
      %s862 = scalar_select %p861, %s29, 0
      %s863 = smul.addr %s860, 4
      %s864 = sadd.s32 %s862, %s863
      %s865 = smul.addr %s864, 8
      %s866 = scalar_lea.vmem %s13, %s865
      // Predicated region
      $region73: #{semantic_cnn_forward.27} parent=71 // pred_check
        %p867 = pneg %p364
      $region74: #{semantic_cnn_forward.27} parent=71 // pred_check_branch
        %869 = sbr.rel (%p867) target = $region76
      $region75: #{semantic_cnn_forward.27} parent=71 // pred_region
        _
      $region76: #{semantic_cnn_forward.27} parent=71 // pred_fallthru
        _
    $region72: #{semantic_cnn_forward.27} parent=5 // pred_fallthru
      _
    %p870 = scmp.le.s32.totalorder 2, %s19
    // Predicated region
    $region77: #{semantic_cnn_forward.27} parent=5 // pred_check
      %p871 = pneg %p870
    $region78: #{semantic_cnn_forward.27} parent=5 // pred_check_branch
      %873 = sbr.rel (%p871) target = $region80
    $region79: #{semantic_cnn_forward.27} parent=5 // pred_region
      %s874 = ssub.s32 %s19, 2
      // Predicated region
      $region81: #{semantic_cnn_forward.27} parent=79 // pred_check
        %p875 = pneg %p370
      $region82: #{semantic_cnn_forward.27} parent=79 // pred_check_branch
        %877 = sbr.rel (%p875) target = $region84
      $region83: #{semantic_cnn_forward.27} parent=79 // pred_region
        %p878 = scmp.lt.s32.totalorder %s30, 1
        %s879 = scalar_select %p878, %s30, 1
        %p880 = scmp.lt.s32.totalorder %s31, 0
        %s881 = scalar_select %p880, %s31, 0
        %s882 = smul.addr %s879, 4
        %s883 = sadd.s32 %s881, %s882
        %s884 = smul.addr %s883, 8
        %s885 = scalar_lea.vmem %s13, %s884
      $region84: #{semantic_cnn_forward.27} parent=79 // pred_fallthru
        _
    $region80: #{semantic_cnn_forward.27} parent=5 // pred_fallthru
      _
  $region6: #{semantic_cnn_forward.27} parent=0 // loop_footer
    %s23 = sadd.s32 1, %s19
  $region7: #{semantic_cnn_forward.27} parent=0 // loop_footer_branch
    %18 = sbr.rel target = $region3
  $region8: #{semantic_cnn_forward.27} parent=0 // loop_exit
    _

</llo_original>
